<compile_context>
chip_gen: v7x
topology: tpu7x:2x2x1
jax: 0.10.0
libtpu: 0.0.40
codegen_flags: <defaults>
</compile_context>

<pallas_src>
import jax
import jax.numpy as jnp
from jax import lax
from jax.experimental import pallas as pl
from jax.experimental.pallas import tpu as pltpu

EPS = 1e-5


# ---------------- fused Pallas kernel ----------------

def _pcba_fused_kernel(xc_ref, w_hi_ref, w_lo_ref, b_ref, g_ref, beta_ref,
                       o_ref, pad_ref):
    # xc_ref   : (N, 4, Hp, Wp, Cin)  f32  -- 4 corners of every 2x2 pool window
    # w_hi_ref : (9, CinP, CP)        bf16 -- conv weights, high bf16 half, per tap
    # w_lo_ref : (9, CinP, CP)        bf16 -- conv weights, low  bf16 half, per tap
    # b_ref    : (1, CP) f32   conv bias (lane-padded)
    # g_ref    : (1, CP) f32   BN gamma  (lane-padded)
    # beta_ref : (1, CP) f32   BN beta   (lane-padded)
    # o_ref    : (M, CP) f32   final PCBA output, M = N*Hp*Wp (lane-dense)
    # pad_ref  : (N, Hp+2, Wp+2, CinP) f32 VMEM scratch -- zero-padded pooled map
    N, _, Hp, Wp, Cin = xc_ref.shape
    CinP = pad_ref.shape[3]
    M, CP = o_ref.shape

    # 2x2 max-pool == elementwise max of the 4 pre-gathered corner planes (pure VPU),
    # done in f32 so pooling matches the reference exactly.
    xc = xc_ref[...]
    pooled = jnp.maximum(jnp.maximum(xc[:, 0], xc[:, 1]),
                         jnp.maximum(xc[:, 2], xc[:, 3]))          # (N, Hp, Wp, Cin)

    # Zero-padded (conv padding=1) pooled map; border + lane padding are zero.
    pad_ref[...] = jnp.zeros_like(pad_ref)
    pad_ref[:, 1:Hp + 1, 1:Wp + 1, 0:Cin] = pooled

    # Conv as 9 accumulated MXU matmuls on shifted views of the padded map
    # (no im2col scratch).  f32 accuracy via bf16 hi/lo operand split: 3 passes/tap.
    acc = jnp.zeros((M, CP), jnp.float32)
    for kh in range(3):                          # KH = KW = 3 per module spec
        for kw in range(3):
            t = kh * 3 + kw
            win = pad_ref[:, kh:kh + Hp, kw:kw + Wp, :].reshape(M, CinP)   # f32
            a_hi = win.astype(jnp.bfloat16)
            a_lo = (win - a_hi.astype(jnp.float32)).astype(jnp.bfloat16)
            w_hi = w_hi_ref[t]
            w_lo = w_lo_ref[t]
            acc += jnp.dot(a_hi, w_hi, preferred_element_type=jnp.float32)
            acc += jnp.dot(a_lo, w_hi, preferred_element_type=jnp.float32)
            acc += jnp.dot(a_hi, w_lo, preferred_element_type=jnp.float32)

    # Bias + ReLU.
    y = jnp.maximum(acc + b_ref[...], 0.0)                         # (M, CP)

    # Training-mode BatchNorm2d: biased batch statistics over all M positions,
    # two-pass variance (y is resident, so this is cheap), normalize in place.
    inv_m = 1.0 / M
    mean = jnp.sum(y, axis=0, keepdims=True) * inv_m               # (1, CP)
    d = y - mean
    var = jnp.sum(d * d, axis=0, keepdims=True) * inv_m            # biased variance
    scale = g_ref[...] * lax.rsqrt(var + EPS)
    o_ref[...] = d * scale + beta_ref[...]


# ---------------- wrapper ----------------

def pcba_forward(x_nchw, w_oihw, bias, gamma, beta):
    N, Cin, H, W = x_nchw.shape
    Cout, _, KH, KW = w_oihw.shape
    assert (KH, KW) == (3, 3) and H % 2 == 0 and W % 2 == 0
    Hp, Wp = H // 2, W // 2
    M = N * Hp * Wp
    CP = ((Cout + 127) // 128) * 128          # lane-dense output channels (32 -> 128)
    CinP = ((Cin + 127) // 128) * 128         # lane-aligned input channels (150 -> 256)

    # Glue (one XLA op): NCHW -> pool-corner planes, channels last, still f32.
    # xc[n, 2*dh+dw, i, j, c] == x[n, c, 2*i+dh, 2*j+dw]
    # TODO(synk): fold this corner gather into the kernel via strided sublane reads.
    xc = jnp.transpose(x_nchw.reshape(N, Cin, Hp, 2, Wp, 2),
                       (0, 3, 5, 2, 4, 1)).reshape(N, 4, Hp, Wp, Cin)

    # Weights: OIHW -> (tap, ci, co), zero-padded, split into bf16 hi/lo halves so the
    # in-kernel MXU matmuls reproduce f32 precision.
    w_t = jnp.transpose(w_oihw, (2, 3, 1, 0))                      # (3, 3, Cin, Cout)
    w_t = jnp.pad(w_t, ((0, 0), (0, 0), (0, CinP - Cin), (0, CP - Cout)))
    w_t = w_t.reshape(9, CinP, CP).astype(jnp.float32)
    w_hi = w_t.astype(jnp.bfloat16)
    w_lo = (w_t - w_hi.astype(jnp.float32)).astype(jnp.bfloat16)

    b_p = jnp.pad(bias, (0, CP - Cout)).astype(jnp.float32).reshape(1, CP)
    g_p = jnp.pad(gamma, (0, CP - Cout)).astype(jnp.float32).reshape(1, CP)
    be_p = jnp.pad(beta, (0, CP - Cout)).astype(jnp.float32).reshape(1, CP)

    # Single fused pallas_call: whole problem (~1.8 MiB) lives in VMEM at once.
    # TODO(synk): for large N, grid over M-tiles of 128 rows with per-core partial
    # stats so the batch axis can be split across v7x's two TensorCores.
    out2d = pl.pallas_call(
        _pcba_fused_kernel,
        out_shape=jax.ShapeDtypeStruct((M, CP), jnp.float32),
        scratch_shapes=[pltpu.VMEM((N, Hp + 2, Wp + 2, CinP), jnp.float32)],
    )(xc, w_hi, w_lo, b_p, g_p, be_p)

    # Small output back to PyTorch NCHW.
    out = out2d.reshape(N, Hp, Wp, CP)[..., :Cout]
    return jnp.transpose(out, (0, 3, 1, 2))


# ---------------- pure-JAX reference (correctness check) ----------------

def reference(x, w, b, gamma, beta):
    xp = lax.reduce_window(x, -jnp.inf, lax.max, (1, 1, 2, 2), (1, 1, 2, 2), 'VALID')
    y = lax.conv_general_dilated(xp, w, window_strides=(1, 1),
                                 padding=((1, 1), (1, 1)),
                                 dimension_numbers=('NCHW', 'OIHW', 'NCHW'),
                                 precision=lax.Precision.HIGHEST)
    y = y + b[None, :, None, None]
    y = jnp.maximum(y, 0.0)
    mean = jnp.mean(y, axis=(0, 2, 3), keepdims=True)
    var = jnp.mean(jnp.square(y - mean), axis=(0, 2, 3), keepdims=True)
    return (gamma[None, :, None, None] * (y - mean) * lax.rsqrt(var + EPS)
            + beta[None, :, None, None])


if __name__ == "__main__":
    # Module defaults: in_channels=150, out_channels=32, 3x3 conv, stride 1, pad 1.
    N, Cin, H, W = 2, 150, 16, 16
    Cout, KH, KW = 32, 3, 3

    key = jax.random.PRNGKey(0)
    k1, k2, k3, k4, k5 = jax.random.split(key, 5)
    x = jax.random.normal(k1, (N, Cin, H, W), jnp.float32)

    fan_in = Cin * KH * KW
    bound = float(1.0 / (fan_in ** 0.5))
    w = jax.random.uniform(k2, (Cout, Cin, KH, KW), jnp.float32, -bound, bound)
    b = jax.random.uniform(k3, (Cout,), jnp.float32, -bound, bound)
    gamma = 1.0 + 0.1 * jax.random.normal(k4, (Cout,), jnp.float32)
    beta = 0.1 * jax.random.normal(k5, (Cout,), jnp.float32)
    # TODO(synk): BatchNorm running_mean/running_var (momentum) buffer updates are
    # module-state side effects and do not affect the training-mode forward output.

    out = jax.jit(pcba_forward)(x, w, b, gamma, beta)
    out = jax.block_until_ready(out)

    ref = reference(x, w, b, gamma, beta)
    assert out.shape == (N, Cout, H // 2, W // 2), out.shape
    max_err = float(jnp.max(jnp.abs(out - ref)))
    # f32-accurate path (bf16 hi/lo split matmuls) -> tight tolerance.
    assert max_err < 5e-3, f"max_err={max_err}"

    print("KERNEL_OK")
</pallas_src>

<mosaic_0001>
module attributes {stable_mosaic.version = 11 : i64} {
  func.func @_pcba_fused_kernel(%arg0: memref<2x4x8x8x150xf32, #tpu.memory_space<vmem>>, %arg1: memref<9x256x128xbf16, #tpu.memory_space<vmem>>, %arg2: memref<9x256x128xbf16, #tpu.memory_space<vmem>>, %arg3: memref<1x128xf32, #tpu.memory_space<vmem>>, %arg4: memref<1x128xf32, #tpu.memory_space<vmem>>, %arg5: memref<1x128xf32, #tpu.memory_space<vmem>>, %arg6: memref<128x128xf32, #tpu.memory_space<vmem>>, %arg7: memref<2x10x10x256xf32, #tpu.memory_space<vmem>>) attributes {dimension_semantics = [], scalar_prefetch = 0 : i64, scratch_operands = 1 : i64, tpu.core_type = #tpu.core_type<tc>} {
    %c0 = arith.constant 0 : index
    %c0_0 = arith.constant 0 : index
    %c0_1 = arith.constant 0 : index
    %c0_2 = arith.constant 0 : index
    %c0_3 = arith.constant 0 : index
    %0 = vector.load %arg0[%c0, %c0_0, %c0_1, %c0_2, %c0_3] : memref<2x4x8x8x150xf32, #tpu.memory_space<vmem>>, vector<2x4x8x8x150xf32>
    %1 = vector.extract_strided_slice %0 {offsets = [0, 0, 0, 0, 0], sizes = [2, 1, 8, 8, 150], strides = [1, 1, 1, 1, 1]} : vector<2x4x8x8x150xf32> to vector<2x1x8x8x150xf32>
    %2 = vector.shape_cast %1 : vector<2x1x8x8x150xf32> to vector<2x8x8x150xf32>
    %3 = vector.extract_strided_slice %0 {offsets = [0, 1, 0, 0, 0], sizes = [2, 1, 8, 8, 150], strides = [1, 1, 1, 1, 1]} : vector<2x4x8x8x150xf32> to vector<2x1x8x8x150xf32>
    %4 = vector.shape_cast %3 : vector<2x1x8x8x150xf32> to vector<2x8x8x150xf32>
    %5 = arith.maximumf %2, %4 : vector<2x8x8x150xf32>
    %6 = vector.extract_strided_slice %0 {offsets = [0, 2, 0, 0, 0], sizes = [2, 1, 8, 8, 150], strides = [1, 1, 1, 1, 1]} : vector<2x4x8x8x150xf32> to vector<2x1x8x8x150xf32>
    %7 = vector.shape_cast %6 : vector<2x1x8x8x150xf32> to vector<2x8x8x150xf32>
    %8 = vector.extract_strided_slice %0 {offsets = [0, 3, 0, 0, 0], sizes = [2, 1, 8, 8, 150], strides = [1, 1, 1, 1, 1]} : vector<2x4x8x8x150xf32> to vector<2x1x8x8x150xf32>
    %9 = vector.shape_cast %8 : vector<2x1x8x8x150xf32> to vector<2x8x8x150xf32>
    %10 = arith.maximumf %7, %9 : vector<2x8x8x150xf32>
    %11 = arith.maximumf %5, %10 : vector<2x8x8x150xf32>
    %cst = arith.constant 0.000000e+00 : f32
    %12 = vector.broadcast %cst : f32 to vector<2x10x10x256xf32>
    %c0_4 = arith.constant 0 : index
    %c0_5 = arith.constant 0 : index
    %c0_6 = arith.constant 0 : index
    %c0_7 = arith.constant 0 : index
    %13 = vector.load %arg7[%c0_4, %c0_5, %c0_6, %c0_7] : memref<2x10x10x256xf32, #tpu.memory_space<vmem>>, vector<2x10x10x256xf32>
    tpu.vector_store %arg7[%c0_4, %c0_5, %c0_6, %c0_7], %12 {strides = array<i32>} : memref<2x10x10x256xf32, #tpu.memory_space<vmem>>, vector<2x10x10x256xf32>,
    %c0_8 = arith.constant 0 : index
    %c1 = arith.constant 1 : index
    %c1_9 = arith.constant 1 : index
    %c0_10 = arith.constant 0 : index
    %14 = vector.load %arg7[%c0_8, %c1, %c1_9, %c0_10] : memref<2x10x10x256xf32, #tpu.memory_space<vmem>>, vector<2x8x8x150xf32>
    tpu.vector_store %arg7[%c0_8, %c1, %c1_9, %c0_10], %11 {strides = array<i32>} : memref<2x10x10x256xf32, #tpu.memory_space<vmem>>, vector<2x8x8x150xf32>,
    %cst_11 = arith.constant 0.000000e+00 : f32
    %15 = vector.broadcast %cst_11 : f32 to vector<128x128xf32>
    %c0_12 = arith.constant 0 : index
    %c0_13 = arith.constant 0 : index
    %c0_14 = arith.constant 0 : index
    %c0_15 = arith.constant 0 : index
    %16 = vector.load %arg7[%c0_12, %c0_13, %c0_14, %c0_15] : memref<2x10x10x256xf32, #tpu.memory_space<vmem>>, vector<2x8x8x256xf32>
    %17 = vector.shape_cast %16 : vector<2x8x8x256xf32> to vector<128x256xf32>
    %18 = arith.truncf %17 : vector<128x256xf32> to vector<128x256xbf16>
    %19 = arith.extf %18 : vector<128x256xbf16> to vector<128x256xf32>
    %20 = arith.subf %17, %19 : vector<128x256xf32>
    %21 = arith.truncf %20 : vector<128x256xf32> to vector<128x256xbf16>
    %c0_16 = arith.constant 0 : index
    %c0_17 = arith.constant 0 : index
    %c0_18 = arith.constant 0 : index
    %22 = vector.load %arg1[%c0_16, %c0_17, %c0_18] : memref<9x256x128xbf16, #tpu.memory_space<vmem>>, vector<1x256x128xbf16>
    %23 = vector.shape_cast %22 : vector<1x256x128xbf16> to vector<256x128xbf16>
    %c0_19 = arith.constant 0 : index
    %c0_20 = arith.constant 0 : index
    %c0_21 = arith.constant 0 : index
    %24 = vector.load %arg2[%c0_19, %c0_20, %c0_21] : memref<9x256x128xbf16, #tpu.memory_space<vmem>>, vector<1x256x128xbf16>
    %25 = vector.shape_cast %24 : vector<1x256x128xbf16> to vector<256x128xbf16>
    %cst_22 = arith.constant dense<0.000000e+00> : vector<128x128xf32>
    %26 = tpu.matmul %18, %23, %cst_22 {dimension_numbers = #tpu.dot_dimension_numbers<[1], [0], [0], [1], [0, 0, 1, 1], [], []>} : vector<128x256xbf16>, vector<256x128xbf16>, vector<128x128xf32> -> vector<128x128xf32>
    %27 = arith.addf %15, %26 : vector<128x128xf32>
    %cst_23 = arith.constant dense<0.000000e+00> : vector<128x128xf32>
    %28 = tpu.matmul %21, %23, %cst_23 {dimension_numbers = #tpu.dot_dimension_numbers<[1], [0], [0], [1], [0, 0, 1, 1], [], []>} : vector<128x256xbf16>, vector<256x128xbf16>, vector<128x128xf32> -> vector<128x128xf32>
    %29 = arith.addf %27, %28 : vector<128x128xf32>
    %cst_24 = arith.constant dense<0.000000e+00> : vector<128x128xf32>
    %30 = tpu.matmul %18, %25, %cst_24 {dimension_numbers = #tpu.dot_dimension_numbers<[1], [0], [0], [1], [0, 0, 1, 1], [], []>} : vector<128x256xbf16>, vector<256x128xbf16>, vector<128x128xf32> -> vector<128x128xf32>
    %31 = arith.addf %29, %30 : vector<128x128xf32>
    %c0_25 = arith.constant 0 : index
    %c0_26 = arith.constant 0 : index
    %c1_27 = arith.constant 1 : index
    %c0_28 = arith.constant 0 : index
    %32 = vector.load %arg7[%c0_25, %c0_26, %c1_27, %c0_28] : memref<2x10x10x256xf32, #tpu.memory_space<vmem>>, vector<2x8x8x256xf32>
    %33 = vector.shape_cast %32 : vector<2x8x8x256xf32> to vector<128x256xf32>
    %34 = arith.truncf %33 : vector<128x256xf32> to vector<128x256xbf16>
    %35 = arith.extf %34 : vector<128x256xbf16> to vector<128x256xf32>
    %36 = arith.subf %33, %35 : vector<128x256xf32>
    %37 = arith.truncf %36 : vector<128x256xf32> to vector<128x256xbf16>
    %c1_29 = arith.constant 1 : index
    %c0_30 = arith.constant 0 : index
    %c0_31 = arith.constant 0 : index
    %38 = vector.load %arg1[%c1_29, %c0_30, %c0_31] : memref<9x256x128xbf16, #tpu.memory_space<vmem>>, vector<1x256x128xbf16>
    %39 = vector.shape_cast %38 : vector<1x256x128xbf16> to vector<256x128xbf16>
    %c1_32 = arith.constant 1 : index
    %c0_33 = arith.constant 0 : index
    %c0_34 = arith.constant 0 : index
    %40 = vector.load %arg2[%c1_32, %c0_33, %c0_34] : memref<9x256x128xbf16, #tpu.memory_space<vmem>>, vector<1x256x128xbf16>
    %41 = vector.shape_cast %40 : vector<1x256x128xbf16> to vector<256x128xbf16>
    %cst_35 = arith.constant dense<0.000000e+00> : vector<128x128xf32>
    %42 = tpu.matmul %34, %39, %cst_35 {dimension_numbers = #tpu.dot_dimension_numbers<[1], [0], [0], [1], [0, 0, 1, 1], [], []>} : vector<128x256xbf16>, vector<256x128xbf16>, vector<128x128xf32> -> vector<128x128xf32>
    %43 = arith.addf %31, %42 : vector<128x128xf32>
    %cst_36 = arith.constant dense<0.000000e+00> : vector<128x128xf32>
    %44 = tpu.matmul %37, %39, %cst_36 {dimension_numbers = #tpu.dot_dimension_numbers<[1], [0], [0], [1], [0, 0, 1, 1], [], []>} : vector<128x256xbf16>, vector<256x128xbf16>, vector<128x128xf32> -> vector<128x128xf32>
    %45 = arith.addf %43, %44 : vector<128x128xf32>
    %cst_37 = arith.constant dense<0.000000e+00> : vector<128x128xf32>
    %46 = tpu.matmul %34, %41, %cst_37 {dimension_numbers = #tpu.dot_dimension_numbers<[1], [0], [0], [1], [0, 0, 1, 1], [], []>} : vector<128x256xbf16>, vector<256x128xbf16>, vector<128x128xf32> -> vector<128x128xf32>
    %47 = arith.addf %45, %46 : vector<128x128xf32>
    %c0_38 = arith.constant 0 : index
    %c0_39 = arith.constant 0 : index
    %c2 = arith.constant 2 : index
    %c0_40 = arith.constant 0 : index
    %48 = vector.load %arg7[%c0_38, %c0_39, %c2, %c0_40] : memref<2x10x10x256xf32, #tpu.memory_space<vmem>>, vector<2x8x8x256xf32>
    %49 = vector.shape_cast %48 : vector<2x8x8x256xf32> to vector<128x256xf32>
    %50 = arith.truncf %49 : vector<128x256xf32> to vector<128x256xbf16>
    %51 = arith.extf %50 : vector<128x256xbf16> to vector<128x256xf32>
    %52 = arith.subf %49, %51 : vector<128x256xf32>
    %53 = arith.truncf %52 : vector<128x256xf32> to vector<128x256xbf16>
    %c2_41 = arith.constant 2 : index
    %c0_42 = arith.constant 0 : index
    %c0_43 = arith.constant 0 : index
    %54 = vector.load %arg1[%c2_41, %c0_42, %c0_43] : memref<9x256x128xbf16, #tpu.memory_space<vmem>>, vector<1x256x128xbf16>
    %55 = vector.shape_cast %54 : vector<1x256x128xbf16> to vector<256x128xbf16>
    %c2_44 = arith.constant 2 : index
    %c0_45 = arith.constant 0 : index
    %c0_46 = arith.constant 0 : index
    %56 = vector.load %arg2[%c2_44, %c0_45, %c0_46] : memref<9x256x128xbf16, #tpu.memory_space<vmem>>, vector<1x256x128xbf16>
    %57 = vector.shape_cast %56 : vector<1x256x128xbf16> to vector<256x128xbf16>
    %cst_47 = arith.constant dense<0.000000e+00> : vector<128x128xf32>
    %58 = tpu.matmul %50, %55, %cst_47 {dimension_numbers = #tpu.dot_dimension_numbers<[1], [0], [0], [1], [0, 0, 1, 1], [], []>} : vector<128x256xbf16>, vector<256x128xbf16>, vector<128x128xf32> -> vector<128x128xf32>
    %59 = arith.addf %47, %58 : vector<128x128xf32>
    %cst_48 = arith.constant dense<0.000000e+00> : vector<128x128xf32>
    %60 = tpu.matmul %53, %55, %cst_48 {dimension_numbers = #tpu.dot_dimension_numbers<[1], [0], [0], [1], [0, 0, 1, 1], [], []>} : vector<128x256xbf16>, vector<256x128xbf16>, vector<128x128xf32> -> vector<128x128xf32>
    %61 = arith.addf %59, %60 : vector<128x128xf32>
    %cst_49 = arith.constant dense<0.000000e+00> : vector<128x128xf32>
    %62 = tpu.matmul %50, %57, %cst_49 {dimension_numbers = #tpu.dot_dimension_numbers<[1], [0], [0], [1], [0, 0, 1, 1], [], []>} : vector<128x256xbf16>, vector<256x128xbf16>, vector<128x128xf32> -> vector<128x128xf32>
    %63 = arith.addf %61, %62 : vector<128x128xf32>
    %c0_50 = arith.constant 0 : index
    %c1_51 = arith.constant 1 : index
    %c0_52 = arith.constant 0 : index
    %c0_53 = arith.constant 0 : index
    %64 = vector.load %arg7[%c0_50, %c1_51, %c0_52, %c0_53] : memref<2x10x10x256xf32, #tpu.memory_space<vmem>>, vector<2x8x8x256xf32>
    %65 = vector.shape_cast %64 : vector<2x8x8x256xf32> to vector<128x256xf32>
    %66 = arith.truncf %65 : vector<128x256xf32> to vector<128x256xbf16>
    %67 = arith.extf %66 : vector<128x256xbf16> to vector<128x256xf32>
    %68 = arith.subf %65, %67 : vector<128x256xf32>
    %69 = arith.truncf %68 : vector<128x256xf32> to vector<128x256xbf16>
    %c3 = arith.constant 3 : index
    %c0_54 = arith.constant 0 : index
    %c0_55 = arith.constant 0 : index
    %70 = vector.load %arg1[%c3, %c0_54, %c0_55] : memref<9x256x128xbf16, #tpu.memory_space<vmem>>, vector<1x256x128xbf16>
    %71 = vector.shape_cast %70 : vector<1x256x128xbf16> to vector<256x128xbf16>
    %c3_56 = arith.constant 3 : index
    %c0_57 = arith.constant 0 : index
    %c0_58 = arith.constant 0 : index
    %72 = vector.load %arg2[%c3_56, %c0_57, %c0_58] : memref<9x256x128xbf16, #tpu.memory_space<vmem>>, vector<1x256x128xbf16>
    %73 = vector.shape_cast %72 : vector<1x256x128xbf16> to vector<256x128xbf16>
    %cst_59 = arith.constant dense<0.000000e+00> : vector<128x128xf32>
    %74 = tpu.matmul %66, %71, %cst_59 {dimension_numbers = #tpu.dot_dimension_numbers<[1], [0], [0], [1], [0, 0, 1, 1], [], []>} : vector<128x256xbf16>, vector<256x128xbf16>, vector<128x128xf32> -> vector<128x128xf32>
    %75 = arith.addf %63, %74 : vector<128x128xf32>
    %cst_60 = arith.constant dense<0.000000e+00> : vector<128x128xf32>
    %76 = tpu.matmul %69, %71, %cst_60 {dimension_numbers = #tpu.dot_dimension_numbers<[1], [0], [0], [1], [0, 0, 1, 1], [], []>} : vector<128x256xbf16>, vector<256x128xbf16>, vector<128x128xf32> -> vector<128x128xf32>
    %77 = arith.addf %75, %76 : vector<128x128xf32>
    %cst_61 = arith.constant dense<0.000000e+00> : vector<128x128xf32>
    %78 = tpu.matmul %66, %73, %cst_61 {dimension_numbers = #tpu.dot_dimension_numbers<[1], [0], [0], [1], [0, 0, 1, 1], [], []>} : vector<128x256xbf16>, vector<256x128xbf16>, vector<128x128xf32> -> vector<128x128xf32>
    %79 = arith.addf %77, %78 : vector<128x128xf32>
    %c0_62 = arith.constant 0 : index
    %c1_63 = arith.constant 1 : index
    %c1_64 = arith.constant 1 : index
    %c0_65 = arith.constant 0 : index
    %80 = vector.load %arg7[%c0_62, %c1_63, %c1_64, %c0_65] : memref<2x10x10x256xf32, #tpu.memory_space<vmem>>, vector<2x8x8x256xf32>
    %81 = vector.shape_cast %80 : vector<2x8x8x256xf32> to vector<128x256xf32>
    %82 = arith.truncf %81 : vector<128x256xf32> to vector<128x256xbf16>
    %83 = arith.extf %82 : vector<128x256xbf16> to vector<128x256xf32>
    %84 = arith.subf %81, %83 : vector<128x256xf32>
    %85 = arith.truncf %84 : vector<128x256xf32> to vector<128x256xbf16>
    %c4 = arith.constant 4 : index
    %c0_66 = arith.constant 0 : index
    %c0_67 = arith.constant 0 : index
    %86 = vector.load %arg1[%c4, %c0_66, %c0_67] : memref<9x256x128xbf16, #tpu.memory_space<vmem>>, vector<1x256x128xbf16>
    %87 = vector.shape_cast %86 : vector<1x256x128xbf16> to vector<256x128xbf16>
    %c4_68 = arith.constant 4 : index
    %c0_69 = arith.constant 0 : index
    %c0_70 = arith.constant 0 : index
    %88 = vector.load %arg2[%c4_68, %c0_69, %c0_70] : memref<9x256x128xbf16, #tpu.memory_space<vmem>>, vector<1x256x128xbf16>
    %89 = vector.shape_cast %88 : vector<1x256x128xbf16> to vector<256x128xbf16>
    %cst_71 = arith.constant dense<0.000000e+00> : vector<128x128xf32>
    %90 = tpu.matmul %82, %87, %cst_71 {dimension_numbers = #tpu.dot_dimension_numbers<[1], [0], [0], [1], [0, 0, 1, 1], [], []>} : vector<128x256xbf16>, vector<256x128xbf16>, vector<128x128xf32> -> vector<128x128xf32>
    %91 = arith.addf %79, %90 : vector<128x128xf32>
    %cst_72 = arith.constant dense<0.000000e+00> : vector<128x128xf32>
    %92 = tpu.matmul %85, %87, %cst_72 {dimension_numbers = #tpu.dot_dimension_numbers<[1], [0], [0], [1], [0, 0, 1, 1], [], []>} : vector<128x256xbf16>, vector<256x128xbf16>, vector<128x128xf32> -> vector<128x128xf32>
    %93 = arith.addf %91, %92 : vector<128x128xf32>
    %cst_73 = arith.constant dense<0.000000e+00> : vector<128x128xf32>
    %94 = tpu.matmul %82, %89, %cst_73 {dimension_numbers = #tpu.dot_dimension_numbers<[1], [0], [0], [1], [0, 0, 1, 1], [], []>} : vector<128x256xbf16>, vector<256x128xbf16>, vector<128x128xf32> -> vector<128x128xf32>
    %95 = arith.addf %93, %94 : vector<128x128xf32>
    %c0_74 = arith.constant 0 : index
    %c1_75 = arith.constant 1 : index
    %c2_76 = arith.constant 2 : index
    %c0_77 = arith.constant 0 : index
    %96 = vector.load %arg7[%c0_74, %c1_75, %c2_76, %c0_77] : memref<2x10x10x256xf32, #tpu.memory_space<vmem>>, vector<2x8x8x256xf32>
    %97 = vector.shape_cast %96 : vector<2x8x8x256xf32> to vector<128x256xf32>
    %98 = arith.truncf %97 : vector<128x256xf32> to vector<128x256xbf16>
    %99 = arith.extf %98 : vector<128x256xbf16> to vector<128x256xf32>
    %100 = arith.subf %97, %99 : vector<128x256xf32>
    %101 = arith.truncf %100 : vector<128x256xf32> to vector<128x256xbf16>
    %c5 = arith.constant 5 : index
    %c0_78 = arith.constant 0 : index
    %c0_79 = arith.constant 0 : index
    %102 = vector.load %arg1[%c5, %c0_78, %c0_79] : memref<9x256x128xbf16, #tpu.memory_space<vmem>>, vector<1x256x128xbf16>
    %103 = vector.shape_cast %102 : vector<1x256x128xbf16> to vector<256x128xbf16>
    %c5_80 = arith.constant 5 : index
    %c0_81 = arith.constant 0 : index
    %c0_82 = arith.constant 0 : index
    %104 = vector.load %arg2[%c5_80, %c0_81, %c0_82] : memref<9x256x128xbf16, #tpu.memory_space<vmem>>, vector<1x256x128xbf16>
    %105 = vector.shape_cast %104 : vector<1x256x128xbf16> to vector<256x128xbf16>
    %cst_83 = arith.constant dense<0.000000e+00> : vector<128x128xf32>
    %106 = tpu.matmul %98, %103, %cst_83 {dimension_numbers = #tpu.dot_dimension_numbers<[1], [0], [0], [1], [0, 0, 1, 1], [], []>} : vector<128x256xbf16>, vector<256x128xbf16>, vector<128x128xf32> -> vector<128x128xf32>
    %107 = arith.addf %95, %106 : vector<128x128xf32>
    %cst_84 = arith.constant dense<0.000000e+00> : vector<128x128xf32>
    %108 = tpu.matmul %101, %103, %cst_84 {dimension_numbers = #tpu.dot_dimension_numbers<[1], [0], [0], [1], [0, 0, 1, 1], [], []>} : vector<128x256xbf16>, vector<256x128xbf16>, vector<128x128xf32> -> vector<128x128xf32>
    %109 = arith.addf %107, %108 : vector<128x128xf32>
    %cst_85 = arith.constant dense<0.000000e+00> : vector<128x128xf32>
    %110 = tpu.matmul %98, %105, %cst_85 {dimension_numbers = #tpu.dot_dimension_numbers<[1], [0], [0], [1], [0, 0, 1, 1], [], []>} : vector<128x256xbf16>, vector<256x128xbf16>, vector<128x128xf32> -> vector<128x128xf32>
    %111 = arith.addf %109, %110 : vector<128x128xf32>
    %c0_86 = arith.constant 0 : index
    %c2_87 = arith.constant 2 : index
    %c0_88 = arith.constant 0 : index
    %c0_89 = arith.constant 0 : index
    %112 = vector.load %arg7[%c0_86, %c2_87, %c0_88, %c0_89] : memref<2x10x10x256xf32, #tpu.memory_space<vmem>>, vector<2x8x8x256xf32>
    %113 = vector.shape_cast %112 : vector<2x8x8x256xf32> to vector<128x256xf32>
    %114 = arith.truncf %113 : vector<128x256xf32> to vector<128x256xbf16>
    %115 = arith.extf %114 : vector<128x256xbf16> to vector<128x256xf32>
    %116 = arith.subf %113, %115 : vector<128x256xf32>
    %117 = arith.truncf %116 : vector<128x256xf32> to vector<128x256xbf16>
    %c6 = arith.constant 6 : index
    %c0_90 = arith.constant 0 : index
    %c0_91 = arith.constant 0 : index
    %118 = vector.load %arg1[%c6, %c0_90, %c0_91] : memref<9x256x128xbf16, #tpu.memory_space<vmem>>, vector<1x256x128xbf16>
    %119 = vector.shape_cast %118 : vector<1x256x128xbf16> to vector<256x128xbf16>
    %c6_92 = arith.constant 6 : index
    %c0_93 = arith.constant 0 : index
    %c0_94 = arith.constant 0 : index
    %120 = vector.load %arg2[%c6_92, %c0_93, %c0_94] : memref<9x256x128xbf16, #tpu.memory_space<vmem>>, vector<1x256x128xbf16>
    %121 = vector.shape_cast %120 : vector<1x256x128xbf16> to vector<256x128xbf16>
    %cst_95 = arith.constant dense<0.000000e+00> : vector<128x128xf32>
    %122 = tpu.matmul %114, %119, %cst_95 {dimension_numbers = #tpu.dot_dimension_numbers<[1], [0], [0], [1], [0, 0, 1, 1], [], []>} : vector<128x256xbf16>, vector<256x128xbf16>, vector<128x128xf32> -> vector<128x128xf32>
    %123 = arith.addf %111, %122 : vector<128x128xf32>
    %cst_96 = arith.constant dense<0.000000e+00> : vector<128x128xf32>
    %124 = tpu.matmul %117, %119, %cst_96 {dimension_numbers = #tpu.dot_dimension_numbers<[1], [0], [0], [1], [0, 0, 1, 1], [], []>} : vector<128x256xbf16>, vector<256x128xbf16>, vector<128x128xf32> -> vector<128x128xf32>
    %125 = arith.addf %123, %124 : vector<128x128xf32>
    %cst_97 = arith.constant dense<0.000000e+00> : vector<128x128xf32>
    %126 = tpu.matmul %114, %121, %cst_97 {dimension_numbers = #tpu.dot_dimension_numbers<[1], [0], [0], [1], [0, 0, 1, 1], [], []>} : vector<128x256xbf16>, vector<256x128xbf16>, vector<128x128xf32> -> vector<128x128xf32>
    %127 = arith.addf %125, %126 : vector<128x128xf32>
    %c0_98 = arith.constant 0 : index
    %c2_99 = arith.constant 2 : index
    %c1_100 = arith.constant 1 : index
    %c0_101 = arith.constant 0 : index
    %128 = vector.load %arg7[%c0_98, %c2_99, %c1_100, %c0_101] : memref<2x10x10x256xf32, #tpu.memory_space<vmem>>, vector<2x8x8x256xf32>
    %129 = vector.shape_cast %128 : vector<2x8x8x256xf32> to vector<128x256xf32>
    %130 = arith.truncf %129 : vector<128x256xf32> to vector<128x256xbf16>
    %131 = arith.extf %130 : vector<128x256xbf16> to vector<128x256xf32>
    %132 = arith.subf %129, %131 : vector<128x256xf32>
    %133 = arith.truncf %132 : vector<128x256xf32> to vector<128x256xbf16>
    %c7 = arith.constant 7 : index
    %c0_102 = arith.constant 0 : index
    %c0_103 = arith.constant 0 : index
    %134 = vector.load %arg1[%c7, %c0_102, %c0_103] : memref<9x256x128xbf16, #tpu.memory_space<vmem>>, vector<1x256x128xbf16>
    %135 = vector.shape_cast %134 : vector<1x256x128xbf16> to vector<256x128xbf16>
    %c7_104 = arith.constant 7 : index
    %c0_105 = arith.constant 0 : index
    %c0_106 = arith.constant 0 : index
    %136 = vector.load %arg2[%c7_104, %c0_105, %c0_106] : memref<9x256x128xbf16, #tpu.memory_space<vmem>>, vector<1x256x128xbf16>
    %137 = vector.shape_cast %136 : vector<1x256x128xbf16> to vector<256x128xbf16>
    %cst_107 = arith.constant dense<0.000000e+00> : vector<128x128xf32>
    %138 = tpu.matmul %130, %135, %cst_107 {dimension_numbers = #tpu.dot_dimension_numbers<[1], [0], [0], [1], [0, 0, 1, 1], [], []>} : vector<128x256xbf16>, vector<256x128xbf16>, vector<128x128xf32> -> vector<128x128xf32>
    %139 = arith.addf %127, %138 : vector<128x128xf32>
    %cst_108 = arith.constant dense<0.000000e+00> : vector<128x128xf32>
    %140 = tpu.matmul %133, %135, %cst_108 {dimension_numbers = #tpu.dot_dimension_numbers<[1], [0], [0], [1], [0, 0, 1, 1], [], []>} : vector<128x256xbf16>, vector<256x128xbf16>, vector<128x128xf32> -> vector<128x128xf32>
    %141 = arith.addf %139, %140 : vector<128x128xf32>
    %cst_109 = arith.constant dense<0.000000e+00> : vector<128x128xf32>
    %142 = tpu.matmul %130, %137, %cst_109 {dimension_numbers = #tpu.dot_dimension_numbers<[1], [0], [0], [1], [0, 0, 1, 1], [], []>} : vector<128x256xbf16>, vector<256x128xbf16>, vector<128x128xf32> -> vector<128x128xf32>
    %143 = arith.addf %141, %142 : vector<128x128xf32>
    %c0_110 = arith.constant 0 : index
    %c2_111 = arith.constant 2 : index
    %c2_112 = arith.constant 2 : index
    %c0_113 = arith.constant 0 : index
    %144 = vector.load %arg7[%c0_110, %c2_111, %c2_112, %c0_113] : memref<2x10x10x256xf32, #tpu.memory_space<vmem>>, vector<2x8x8x256xf32>
    %145 = vector.shape_cast %144 : vector<2x8x8x256xf32> to vector<128x256xf32>
    %146 = arith.truncf %145 : vector<128x256xf32> to vector<128x256xbf16>
    %147 = arith.extf %146 : vector<128x256xbf16> to vector<128x256xf32>
    %148 = arith.subf %145, %147 : vector<128x256xf32>
    %149 = arith.truncf %148 : vector<128x256xf32> to vector<128x256xbf16>
    %c8 = arith.constant 8 : index
    %c0_114 = arith.constant 0 : index
    %c0_115 = arith.constant 0 : index
    %150 = vector.load %arg1[%c8, %c0_114, %c0_115] : memref<9x256x128xbf16, #tpu.memory_space<vmem>>, vector<1x256x128xbf16>
    %151 = vector.shape_cast %150 : vector<1x256x128xbf16> to vector<256x128xbf16>
    %c8_116 = arith.constant 8 : index
    %c0_117 = arith.constant 0 : index
    %c0_118 = arith.constant 0 : index
    %152 = vector.load %arg2[%c8_116, %c0_117, %c0_118] : memref<9x256x128xbf16, #tpu.memory_space<vmem>>, vector<1x256x128xbf16>
    %153 = vector.shape_cast %152 : vector<1x256x128xbf16> to vector<256x128xbf16>
    %cst_119 = arith.constant dense<0.000000e+00> : vector<128x128xf32>
    %154 = tpu.matmul %146, %151, %cst_119 {dimension_numbers = #tpu.dot_dimension_numbers<[1], [0], [0], [1], [0, 0, 1, 1], [], []>} : vector<128x256xbf16>, vector<256x128xbf16>, vector<128x128xf32> -> vector<128x128xf32>
    %155 = arith.addf %143, %154 : vector<128x128xf32>
    %cst_120 = arith.constant dense<0.000000e+00> : vector<128x128xf32>
    %156 = tpu.matmul %149, %151, %cst_120 {dimension_numbers = #tpu.dot_dimension_numbers<[1], [0], [0], [1], [0, 0, 1, 1], [], []>} : vector<128x256xbf16>, vector<256x128xbf16>, vector<128x128xf32> -> vector<128x128xf32>
    %157 = arith.addf %155, %156 : vector<128x128xf32>
    %cst_121 = arith.constant dense<0.000000e+00> : vector<128x128xf32>
    %158 = tpu.matmul %146, %153, %cst_121 {dimension_numbers = #tpu.dot_dimension_numbers<[1], [0], [0], [1], [0, 0, 1, 1], [], []>} : vector<128x256xbf16>, vector<256x128xbf16>, vector<128x128xf32> -> vector<128x128xf32>
    %159 = arith.addf %157, %158 : vector<128x128xf32>
    %c0_122 = arith.constant 0 : index
    %c0_123 = arith.constant 0 : index
    %160 = vector.load %arg3[%c0_122, %c0_123] : memref<1x128xf32, #tpu.memory_space<vmem>>, vector<1x128xf32>
    %161 = vector.broadcast %160 : vector<1x128xf32> to vector<128x128xf32>
    %162 = arith.addf %159, %161 : vector<128x128xf32>
    %cst_124 = arith.constant 0.000000e+00 : f32
    %163 = vector.broadcast %cst_124 : f32 to vector<128x128xf32>
    %164 = arith.maximumf %162, %163 : vector<128x128xf32>
    %cst_125 = arith.constant dense<0.000000e+00> : vector<128xf32>
    %165 = vector.multi_reduction <add>, %164, %cst_125 [0] : vector<128x128xf32> to vector<128xf32>
    %166 = vector.shape_cast %165 : vector<128xf32> to vector<1x128xf32>
    %cst_126 = arith.constant 7.812500e-03 : f32
    %167 = vector.broadcast %cst_126 : f32 to vector<1x128xf32>
    %168 = arith.mulf %166, %167 : vector<1x128xf32>
    %169 = vector.broadcast %168 : vector<1x128xf32> to vector<128x128xf32>
    %170 = arith.subf %164, %169 : vector<128x128xf32>
    %171 = arith.mulf %170, %170 : vector<128x128xf32>
    %cst_127 = arith.constant dense<0.000000e+00> : vector<128xf32>
    %172 = vector.multi_reduction <add>, %171, %cst_127 [0] : vector<128x128xf32> to vector<128xf32>
    %173 = vector.shape_cast %172 : vector<128xf32> to vector<1x128xf32>
    %cst_128 = arith.constant 7.812500e-03 : f32
    %174 = vector.broadcast %cst_128 : f32 to vector<1x128xf32>
    %175 = arith.mulf %173, %174 : vector<1x128xf32>
    %c0_129 = arith.constant 0 : index
    %c0_130 = arith.constant 0 : index
    %176 = vector.load %arg4[%c0_129, %c0_130] : memref<1x128xf32, #tpu.memory_space<vmem>>, vector<1x128xf32>
    %cst_131 = arith.constant 9.99999974E-6 : f32
    %177 = vector.broadcast %cst_131 : f32 to vector<1x128xf32>
    %178 = arith.addf %175, %177 : vector<1x128xf32>
    %179 = math.rsqrt %178 : vector<1x128xf32>
    %180 = arith.mulf %176, %179 : vector<1x128xf32>
    %181 = vector.broadcast %180 : vector<1x128xf32> to vector<128x128xf32>
    %182 = arith.mulf %170, %181 : vector<128x128xf32>
    %c0_132 = arith.constant 0 : index
    %c0_133 = arith.constant 0 : index
    %183 = vector.load %arg5[%c0_132, %c0_133] : memref<1x128xf32, #tpu.memory_space<vmem>>, vector<1x128xf32>
    %184 = vector.broadcast %183 : vector<1x128xf32> to vector<128x128xf32>
    %185 = arith.addf %182, %184 : vector<128x128xf32>
    %c0_134 = arith.constant 0 : index
    %c0_135 = arith.constant 0 : index
    %186 = vector.load %arg6[%c0_134, %c0_135] : memref<128x128xf32, #tpu.memory_space<vmem>>, vector<128x128xf32>
    tpu.vector_store %arg6[%c0_134, %c0_135], %185 {strides = array<i32>} : memref<128x128xf32, #tpu.memory_space<vmem>>, vector<128x128xf32>,
    return
  }
}

</mosaic_0001>

<llo_original>
// kernel: pcba_forward.1
$region0: #{pcba_forward.1}
  #allocation0 [shape = 'u32[]', space=smem, size = 0x4, offset = 0x4, fixed_abs, tag = 'smem constant byte address 0x4 - core index']
  #allocation1 [shape = 'u32[144,128]{1,0:T(1,128)}', space=vmem, size = 0x12000, scoped, tag = 'internal scratch']
  #allocation2 [shape = 'f32[2,10,10,256]{3,2,1,0:T(8,128)}', space=vmem, size = 0x50000, scoped, tag = 'scratch operand']
  %s0 = inlined_call_operand.vmem [shape: f32[2,4,8,8,150], index: 0, kind: input, shape index: {}]
  %s1 = inlined_call_operand.vmem [shape: bf16[9,256,128], index: 1, kind: input, shape index: {}]
  %s2 = inlined_call_operand.vmem [shape: bf16[9,256,128], index: 2, kind: input, shape index: {}]
  %s3 = inlined_call_operand.vmem [shape: f32[1,128], index: 3, kind: input, shape index: {}]
  %s4 = inlined_call_operand.vmem [shape: f32[1,128], index: 4, kind: input, shape index: {}]
  %s5 = inlined_call_operand.vmem [shape: f32[1,128], index: 5, kind: input, shape index: {}]
  %s6 = inlined_call_operand.vmem [shape: f32[128,128], index: 6, kind: output, shape index: {}]
  %s7 = sld [smem:[#allocation0]]
  $region34: #{pcba_forward.1} parent=0
    _
  %s9 = ssub.s32 1, %s7
  %s10 = scalar_select 0, %s9, %s7
  // Predicated region
  $region2: #{pcba_forward.1} parent=0 // pred_check
    _
  $region3: #{pcba_forward.1} parent=0 // pred_check_branch
    %12 = sbr.rel (0) target = $region5
  $region4: #{pcba_forward.1} parent=0 // pred_region
    _
  $region5: #{pcba_forward.1} parent=0 // pred_fallthru
    _
  // Predicated region
  $region6: #{pcba_forward.1} parent=0 // pred_check
    _
  $region7: #{pcba_forward.1} parent=0 // pred_check_branch
    %14 = sbr.rel (0) target = $region9
  $region8: #{pcba_forward.1} parent=0 // pred_region
    _
  $region9: #{pcba_forward.1} parent=0 // pred_fallthru
    _
  // Predicated region
  $region10: #{pcba_forward.1} parent=0 // pred_check
    _
  $region11: #{pcba_forward.1} parent=0 // pred_check_branch
    %16 = sbr.rel (0) target = $region13
  $region12: #{pcba_forward.1} parent=0 // pred_region
    _
  $region13: #{pcba_forward.1} parent=0 // pred_fallthru
    _
  // Predicated region
  $region14: #{pcba_forward.1} parent=0 // pred_check
    _
  $region15: #{pcba_forward.1} parent=0 // pred_check_branch
    %18 = sbr.rel (0) target = $region17
  $region16: #{pcba_forward.1} parent=0 // pred_region
    _
  $region17: #{pcba_forward.1} parent=0 // pred_fallthru
    _
  // Predicated region
  $region18: #{pcba_forward.1} parent=0 // pred_check
    _
  $region19: #{pcba_forward.1} parent=0 // pred_check_branch
    %20 = sbr.rel (0) target = $region21
  $region20: #{pcba_forward.1} parent=0 // pred_region
    _
  $region21: #{pcba_forward.1} parent=0 // pred_fallthru
    _
  // Predicated region
  $region22: #{pcba_forward.1} parent=0 // pred_check
    _
  $region23: #{pcba_forward.1} parent=0 // pred_check_branch
    %22 = sbr.rel (0) target = $region25
  $region24: #{pcba_forward.1} parent=0 // pred_region
    _
  $region25: #{pcba_forward.1} parent=0 // pred_fallthru
    _
  %v24 = vld [vmem:[%s0] sm:$0xff]
  %v25 = vld [vmem:[%s0 + $0x8] sm:$0xff]
  %v26 = vld [vmem:[%s0 + $0x10] sm:$0xff]
  %v27 = vld [vmem:[%s0 + $0x18] sm:$0xff]
  %v28 = vld [vmem:[%s0 + $0x20] sm:$0xff]
  %v29 = vld [vmem:[%s0 + $0x28] sm:$0xff]
  %v30 = vld [vmem:[%s0 + $0x30] sm:$0xff]
  %v31 = vld [vmem:[%s0 + $0x38] sm:$0xff]
  %v32 = vld [vmem:[%s0 + $0x40] sm:$0xff]
  %v33 = vld [vmem:[%s0 + $0x48] sm:$0xff]
  %v34 = vld [vmem:[%s0 + $0x50] sm:$0xff]
  %v35 = vld [vmem:[%s0 + $0x58] sm:$0xff]
  %v36 = vld [vmem:[%s0 + $0x60] sm:$0xff]
  %v37 = vld [vmem:[%s0 + $0x68] sm:$0xff]
  %v38 = vld [vmem:[%s0 + $0x70] sm:$0xff]
  %v39 = vld [vmem:[%s0 + $0x78] sm:$0xff]
  %v40 = vld [vmem:[%s0 + $0x80] sm:$0xff]
  %v41 = vld [vmem:[%s0 + $0x88] sm:$0xff]
  %v42 = vld [vmem:[%s0 + $0x90] sm:$0xff]
  %v43 = vld [vmem:[%s0 + $0x98] sm:$0xff]
  %v44 = vld [vmem:[%s0 + $0xa0] sm:$0xff]
  %v45 = vld [vmem:[%s0 + $0xa8] sm:$0xff]
  %v46 = vld [vmem:[%s0 + $0xb0] sm:$0xff]
  %v47 = vld [vmem:[%s0 + $0xb8] sm:$0xff]
  %v48 = vld [vmem:[%s0 + $0xc0] sm:$0xff]
  %v49 = vld [vmem:[%s0 + $0xc8] sm:$0xff]
  %v50 = vld [vmem:[%s0 + $0xd0] sm:$0xff]
  %v51 = vld [vmem:[%s0 + $0xd8] sm:$0xff]
  %v52 = vld [vmem:[%s0 + $0xe0] sm:$0xff]
  %v53 = vld [vmem:[%s0 + $0xe8] sm:$0xff]
  %v54 = vld [vmem:[%s0 + $0xf0] sm:$0xff]
  %v55 = vld [vmem:[%s0 + $0xf8] sm:$0xff]
  %v56 = vld [vmem:[%s0 + $0x100] sm:$0xff]
  %v57 = vld [vmem:[%s0 + $0x108] sm:$0xff]
  %v58 = vld [vmem:[%s0 + $0x110] sm:$0xff]
  %v59 = vld [vmem:[%s0 + $0x118] sm:$0xff]
  %v60 = vld [vmem:[%s0 + $0x120] sm:$0xff]
  %v61 = vld [vmem:[%s0 + $0x128] sm:$0xff]
  %v62 = vld [vmem:[%s0 + $0x130] sm:$0xff]
  %v63 = vld [vmem:[%s0 + $0x138] sm:$0xff]
  %v64 = vld [vmem:[%s0 + $0x140] sm:$0xff]
  %v65 = vld [vmem:[%s0 + $0x148] sm:$0xff]
  %v66 = vld [vmem:[%s0 + $0x150] sm:$0xff]
  %v67 = vld [vmem:[%s0 + $0x158] sm:$0xff]
  %v68 = vld [vmem:[%s0 + $0x160] sm:$0xff]
  %v69 = vld [vmem:[%s0 + $0x168] sm:$0xff]
  %v70 = vld [vmem:[%s0 + $0x170] sm:$0xff]
  %v71 = vld [vmem:[%s0 + $0x178] sm:$0xff]
  %v72 = vld [vmem:[%s0 + $0x180] sm:$0xff]
  %v73 = vld [vmem:[%s0 + $0x188] sm:$0xff]
  %v74 = vld [vmem:[%s0 + $0x190] sm:$0xff]
  %v75 = vld [vmem:[%s0 + $0x198] sm:$0xff]
  %v76 = vld [vmem:[%s0 + $0x1a0] sm:$0xff]
  %v77 = vld [vmem:[%s0 + $0x1a8] sm:$0xff]
  %v78 = vld [vmem:[%s0 + $0x1b0] sm:$0xff]
  %v79 = vld [vmem:[%s0 + $0x1b8] sm:$0xff]
  %v80 = vld [vmem:[%s0 + $0x1c0] sm:$0xff]
  %v81 = vld [vmem:[%s0 + $0x1c8] sm:$0xff]
  %v82 = vld [vmem:[%s0 + $0x1d0] sm:$0xff]
  %v83 = vld [vmem:[%s0 + $0x1d8] sm:$0xff]
  %v84 = vld [vmem:[%s0 + $0x1e0] sm:$0xff]
  %v85 = vld [vmem:[%s0 + $0x1e8] sm:$0xff]
  %v86 = vld [vmem:[%s0 + $0x1f0] sm:$0xff]
  %v87 = vld [vmem:[%s0 + $0x1f8] sm:$0xff]
  %v88 = vld [vmem:[%s0 + $0x200] sm:$0xff]
  %v89 = vld [vmem:[%s0 + $0x208] sm:$0xff]
  %v90 = vld [vmem:[%s0 + $0x210] sm:$0xff]
  %v91 = vld [vmem:[%s0 + $0x218] sm:$0xff]
  %v92 = vld [vmem:[%s0 + $0x220] sm:$0xff]
  %v93 = vld [vmem:[%s0 + $0x228] sm:$0xff]
  %v94 = vld [vmem:[%s0 + $0x230] sm:$0xff]
  %v95 = vld [vmem:[%s0 + $0x238] sm:$0xff]
  %v96 = vld [vmem:[%s0 + $0x240] sm:$0xff]
  %v97 = vld [vmem:[%s0 + $0x248] sm:$0xff]
  %v98 = vld [vmem:[%s0 + $0x250] sm:$0xff]
  %v99 = vld [vmem:[%s0 + $0x258] sm:$0xff]
  %v100 = vld [vmem:[%s0 + $0x260] sm:$0xff]
  %v101 = vld [vmem:[%s0 + $0x268] sm:$0xff]
  %v102 = vld [vmem:[%s0 + $0x270] sm:$0xff]
  %v103 = vld [vmem:[%s0 + $0x278] sm:$0xff]
  %v104 = vld [vmem:[%s0 + $0x280] sm:$0xff]
  %v105 = vld [vmem:[%s0 + $0x288] sm:$0xff]
  %v106 = vld [vmem:[%s0 + $0x290] sm:$0xff]
  %v107 = vld [vmem:[%s0 + $0x298] sm:$0xff]
  %v108 = vld [vmem:[%s0 + $0x2a0] sm:$0xff]
  %v109 = vld [vmem:[%s0 + $0x2a8] sm:$0xff]
  %v110 = vld [vmem:[%s0 + $0x2b0] sm:$0xff]
  %v111 = vld [vmem:[%s0 + $0x2b8] sm:$0xff]
  %v112 = vld [vmem:[%s0 + $0x2c0] sm:$0xff]
  %v113 = vld [vmem:[%s0 + $0x2c8] sm:$0xff]
  %v114 = vld [vmem:[%s0 + $0x2d0] sm:$0xff]
  %v115 = vld [vmem:[%s0 + $0x2d8] sm:$0xff]
  %v116 = vld [vmem:[%s0 + $0x2e0] sm:$0xff]
  %v117 = vld [vmem:[%s0 + $0x2e8] sm:$0xff]
  %v118 = vld [vmem:[%s0 + $0x2f0] sm:$0xff]
  %v119 = vld [vmem:[%s0 + $0x2f8] sm:$0xff]
  %v120 = vld [vmem:[%s0 + $0x300] sm:$0xff]
  %v121 = vld [vmem:[%s0 + $0x308] sm:$0xff]
  %v122 = vld [vmem:[%s0 + $0x310] sm:$0xff]
  %v123 = vld [vmem:[%s0 + $0x318] sm:$0xff]
  %v124 = vld [vmem:[%s0 + $0x320] sm:$0xff]
  %v125 = vld [vmem:[%s0 + $0x328] sm:$0xff]
  %v126 = vld [vmem:[%s0 + $0x330] sm:$0xff]
  %v127 = vld [vmem:[%s0 + $0x338] sm:$0xff]
  %v128 = vld [vmem:[%s0 + $0x340] sm:$0xff]
  %v129 = vld [vmem:[%s0 + $0x348] sm:$0xff]
  %v130 = vld [vmem:[%s0 + $0x350] sm:$0xff]
  %v131 = vld [vmem:[%s0 + $0x358] sm:$0xff]
  %v132 = vld [vmem:[%s0 + $0x360] sm:$0xff]
  %v133 = vld [vmem:[%s0 + $0x368] sm:$0xff]
  %v134 = vld [vmem:[%s0 + $0x370] sm:$0xff]
  %v135 = vld [vmem:[%s0 + $0x378] sm:$0xff]
  %v136 = vld [vmem:[%s0 + $0x380] sm:$0xff]
  %v137 = vld [vmem:[%s0 + $0x388] sm:$0xff]
  %v138 = vld [vmem:[%s0 + $0x390] sm:$0xff]
  %v139 = vld [vmem:[%s0 + $0x398] sm:$0xff]
  %v140 = vld [vmem:[%s0 + $0x3a0] sm:$0xff]
  %v141 = vld [vmem:[%s0 + $0x3a8] sm:$0xff]
  %v142 = vld [vmem:[%s0 + $0x3b0] sm:$0xff]
  %v143 = vld [vmem:[%s0 + $0x3b8] sm:$0xff]
  %v144 = vld [vmem:[%s0 + $0x3c0] sm:$0xff]
  %v145 = vld [vmem:[%s0 + $0x3c8] sm:$0xff]
  %v146 = vld [vmem:[%s0 + $0x3d0] sm:$0xff]
  %v147 = vld [vmem:[%s0 + $0x3d8] sm:$0xff]
  %v148 = vld [vmem:[%s0 + $0x3e0] sm:$0xff]
  %v149 = vld [vmem:[%s0 + $0x3e8] sm:$0xff]
  %v150 = vld [vmem:[%s0 + $0x3f0] sm:$0xff]
  %v151 = vld [vmem:[%s0 + $0x3f8] sm:$0xff]
  %v152 = vmax.f32 %v24, %v40
  %v153 = vmax.f32 %v25, %v41
  %v154 = vmax.f32 %v26, %v42
  %v155 = vmax.f32 %v27, %v43
  %v156 = vmax.f32 %v28, %v44
  %v157 = vmax.f32 %v29, %v45
  %v158 = vmax.f32 %v30, %v46
  %v159 = vmax.f32 %v31, %v47
  %v160 = vmax.f32 %v32, %v48
  %v161 = vmax.f32 %v33, %v49
  %v162 = vmax.f32 %v34, %v50
  %v163 = vmax.f32 %v35, %v51
  %v164 = vmax.f32 %v36, %v52
  %v165 = vmax.f32 %v37, %v53
  %v166 = vmax.f32 %v38, %v54
  %v167 = vmax.f32 %v39, %v55
  %v168 = vmax.f32 %v88, %v104
  %v169 = vmax.f32 %v89, %v105
  %v170 = vmax.f32 %v90, %v106
  %v171 = vmax.f32 %v91, %v107
  %v172 = vmax.f32 %v92, %v108
  %v173 = vmax.f32 %v93, %v109
  %v174 = vmax.f32 %v94, %v110
  %v175 = vmax.f32 %v95, %v111
  %v176 = vmax.f32 %v96, %v112
  %v177 = vmax.f32 %v97, %v113
  %v178 = vmax.f32 %v98, %v114
  %v179 = vmax.f32 %v99, %v115
  %v180 = vmax.f32 %v100, %v116
  %v181 = vmax.f32 %v101, %v117
  %v182 = vmax.f32 %v102, %v118
  %v183 = vmax.f32 %v103, %v119
  %v184 = vmax.f32 %v56, %v72
  %v185 = vmax.f32 %v57, %v73
  %v186 = vmax.f32 %v58, %v74
  %v187 = vmax.f32 %v59, %v75
  %v188 = vmax.f32 %v60, %v76
  %v189 = vmax.f32 %v61, %v77
  %v190 = vmax.f32 %v62, %v78
  %v191 = vmax.f32 %v63, %v79
  %v192 = vmax.f32 %v64, %v80
  %v193 = vmax.f32 %v65, %v81
  %v194 = vmax.f32 %v66, %v82
  %v195 = vmax.f32 %v67, %v83
  %v196 = vmax.f32 %v68, %v84
  %v197 = vmax.f32 %v69, %v85
  %v198 = vmax.f32 %v70, %v86
  %v199 = vmax.f32 %v71, %v87
  %v200 = vmax.f32 %v120, %v136
  %v201 = vmax.f32 %v121, %v137
  %v202 = vmax.f32 %v122, %v138
  %v203 = vmax.f32 %v123, %v139
  %v204 = vmax.f32 %v124, %v140
  %v205 = vmax.f32 %v125, %v141
  %v206 = vmax.f32 %v126, %v142
  %v207 = vmax.f32 %v127, %v143
  %v208 = vmax.f32 %v128, %v144
  %v209 = vmax.f32 %v129, %v145
  %v210 = vmax.f32 %v130, %v146
  %v211 = vmax.f32 %v131, %v147
  %v212 = vmax.f32 %v132, %v148
  %v213 = vmax.f32 %v133, %v149
  %v214 = vmax.f32 %v134, %v150
  %v215 = vmax.f32 %v135, %v151
  %v216 = vmax.f32 %v152, %v184
  %v217 = vmax.f32 %v153, %v185
  %v218 = vmax.f32 %v154, %v186
  %v219 = vmax.f32 %v155, %v187
  %v220 = vmax.f32 %v156, %v188
  %v221 = vmax.f32 %v157, %v189
  %v222 = vmax.f32 %v158, %v190
  %v223 = vmax.f32 %v159, %v191
  %v224 = vmax.f32 %v160, %v192
  %v225 = vmax.f32 %v161, %v193
  %v226 = vmax.f32 %v162, %v194
  %v227 = vmax.f32 %v163, %v195
  %v228 = vmax.f32 %v164, %v196
  %v229 = vmax.f32 %v165, %v197
  %v230 = vmax.f32 %v166, %v198
  %v231 = vmax.f32 %v167, %v199
  %v232 = vmax.f32 %v168, %v200
  %v233 = vmax.f32 %v169, %v201
  %v234 = vmax.f32 %v170, %v202
  %v235 = vmax.f32 %v171, %v203
  %v236 = vmax.f32 %v172, %v204
  %v237 = vmax.f32 %v173, %v205
  %v238 = vmax.f32 %v174, %v206
  %v239 = vmax.f32 %v175, %v207
  %v240 = vmax.f32 %v176, %v208
  %v241 = vmax.f32 %v177, %v209
  %v242 = vmax.f32 %v178, %v210
  %v243 = vmax.f32 %v179, %v211
  %v244 = vmax.f32 %v180, %v212
  %v245 = vmax.f32 %v181, %v213
  %v246 = vmax.f32 %v182, %v214
  %v247 = vmax.f32 %v183, %v215
  %248 = vst [vmem:[#allocation2] sm:$0xff] 0.0
  %249 = vst [vmem:[#allocation2 + $0x8] sm:$0xff] 0.0
  %250 = vst [vmem:[#allocation2 + $0x10] sm:$0x3] 0.0
  %251 = vst [vmem:[#allocation2 + $0x18] sm:$0x3] 0.0
  %252 = vst [vmem:[#allocation2 + $0x20] sm:$0xff] 0.0
  %253 = vst [vmem:[#allocation2 + $0x28] sm:$0xff] 0.0
  %254 = vst [vmem:[#allocation2 + $0x30] sm:$0x3] 0.0
  %255 = vst [vmem:[#allocation2 + $0x38] sm:$0x3] 0.0
  %256 = vst [vmem:[#allocation2 + $0x40] sm:$0xff] 0.0
  %257 = vst [vmem:[#allocation2 + $0x48] sm:$0xff] 0.0
  %258 = vst [vmem:[#allocation2 + $0x50] sm:$0x3] 0.0
  %259 = vst [vmem:[#allocation2 + $0x58] sm:$0x3] 0.0
  %260 = vst [vmem:[#allocation2 + $0x60] sm:$0xff] 0.0
  %261 = vst [vmem:[#allocation2 + $0x68] sm:$0xff] 0.0
  %262 = vst [vmem:[#allocation2 + $0x70] sm:$0x3] 0.0
  %263 = vst [vmem:[#allocation2 + $0x78] sm:$0x3] 0.0
  %264 = vst [vmem:[#allocation2 + $0x80] sm:$0xff] 0.0
  %265 = vst [vmem:[#allocation2 + $0x88] sm:$0xff] 0.0
  %266 = vst [vmem:[#allocation2 + $0x90] sm:$0x3] 0.0
  %267 = vst [vmem:[#allocation2 + $0x98] sm:$0x3] 0.0
  %268 = vst [vmem:[#allocation2 + $0xa0] sm:$0xff] 0.0
  %269 = vst [vmem:[#allocation2 + $0xa8] sm:$0xff] 0.0
  %270 = vst [vmem:[#allocation2 + $0xb0] sm:$0x3] 0.0
  %271 = vst [vmem:[#allocation2 + $0xb8] sm:$0x3] 0.0
  %272 = vst [vmem:[#allocation2 + $0xc0] sm:$0xff] 0.0
  %273 = vst [vmem:[#allocation2 + $0xc8] sm:$0xff] 0.0
  %274 = vst [vmem:[#allocation2 + $0xd0] sm:$0x3] 0.0
  %275 = vst [vmem:[#allocation2 + $0xd8] sm:$0x3] 0.0
  %276 = vst [vmem:[#allocation2 + $0xe0] sm:$0xff] 0.0
  %277 = vst [vmem:[#allocation2 + $0xe8] sm:$0xff] 0.0
  %278 = vst [vmem:[#allocation2 + $0xf0] sm:$0x3] 0.0
  %279 = vst [vmem:[#allocation2 + $0xf8] sm:$0x3] 0.0
  %280 = vst [vmem:[#allocation2 + $0x100] sm:$0xff] 0.0
  %281 = vst [vmem:[#allocation2 + $0x108] sm:$0xff] 0.0
  %282 = vst [vmem:[#allocation2 + $0x110] sm:$0x3] 0.0
  %283 = vst [vmem:[#allocation2 + $0x118] sm:$0x3] 0.0
  %284 = vst [vmem:[#allocation2 + $0x120] sm:$0xff] 0.0
  %285 = vst [vmem:[#allocation2 + $0x128] sm:$0xff] 0.0
  %286 = vst [vmem:[#allocation2 + $0x130] sm:$0x3] 0.0
  %287 = vst [vmem:[#allocation2 + $0x138] sm:$0x3] 0.0
  %288 = vst [vmem:[#allocation2 + $0x140] sm:$0xff] 0.0
  %289 = vst [vmem:[#allocation2 + $0x148] sm:$0xff] 0.0
  %290 = vst [vmem:[#allocation2 + $0x150] sm:$0x3] 0.0
  %291 = vst [vmem:[#allocation2 + $0x158] sm:$0x3] 0.0
  %292 = vst [vmem:[#allocation2 + $0x160] sm:$0xff] 0.0
  %293 = vst [vmem:[#allocation2 + $0x168] sm:$0xff] 0.0
  %294 = vst [vmem:[#allocation2 + $0x170] sm:$0x3] 0.0
  %295 = vst [vmem:[#allocation2 + $0x178] sm:$0x3] 0.0
  %296 = vst [vmem:[#allocation2 + $0x180] sm:$0xff] 0.0
  %297 = vst [vmem:[#allocation2 + $0x188] sm:$0xff] 0.0
  %298 = vst [vmem:[#allocation2 + $0x190] sm:$0x3] 0.0
  %299 = vst [vmem:[#allocation2 + $0x198] sm:$0x3] 0.0
  %300 = vst [vmem:[#allocation2 + $0x1a0] sm:$0xff] 0.0
  %301 = vst [vmem:[#allocation2 + $0x1a8] sm:$0xff] 0.0
  %302 = vst [vmem:[#allocation2 + $0x1b0] sm:$0x3] 0.0
  %303 = vst [vmem:[#allocation2 + $0x1b8] sm:$0x3] 0.0
  %304 = vst [vmem:[#allocation2 + $0x1c0] sm:$0xff] 0.0
  %305 = vst [vmem:[#allocation2 + $0x1c8] sm:$0xff] 0.0
  %306 = vst [vmem:[#allocation2 + $0x1d0] sm:$0x3] 0.0
  %307 = vst [vmem:[#allocation2 + $0x1d8] sm:$0x3] 0.0
  %308 = vst [vmem:[#allocation2 + $0x1e0] sm:$0xff] 0.0
  %309 = vst [vmem:[#allocation2 + $0x1e8] sm:$0xff] 0.0
  %310 = vst [vmem:[#allocation2 + $0x1f0] sm:$0x3] 0.0
  %311 = vst [vmem:[#allocation2 + $0x1f8] sm:$0x3] 0.0
  %312 = vst [vmem:[#allocation2 + $0x200] sm:$0xff] 0.0
  %313 = vst [vmem:[#allocation2 + $0x208] sm:$0xff] 0.0
  %314 = vst [vmem:[#allocation2 + $0x210] sm:$0x3] 0.0
  %315 = vst [vmem:[#allocation2 + $0x218] sm:$0x3] 0.0
  %316 = vst [vmem:[#allocation2 + $0x220] sm:$0xff] 0.0
  %317 = vst [vmem:[#allocation2 + $0x228] sm:$0xff] 0.0
  %318 = vst [vmem:[#allocation2 + $0x230] sm:$0x3] 0.0
  %319 = vst [vmem:[#allocation2 + $0x238] sm:$0x3] 0.0
  %320 = vst [vmem:[#allocation2 + $0x240] sm:$0xff] 0.0
  %321 = vst [vmem:[#allocation2 + $0x248] sm:$0xff] 0.0
  %322 = vst [vmem:[#allocation2 + $0x250] sm:$0x3] 0.0
  %323 = vst [vmem:[#allocation2 + $0x258] sm:$0x3] 0.0
  %324 = vst [vmem:[#allocation2 + $0x260] sm:$0xff] 0.0
  %325 = vst [vmem:[#allocation2 + $0x268] sm:$0xff] 0.0
  %326 = vst [vmem:[#allocation2 + $0x270] sm:$0x3] 0.0
  %327 = vst [vmem:[#allocation2 + $0x278] sm:$0x3] 0.0
  %v360 = vrot.slane %v216, 7
  %v361 = vrot.slane %v217, 7
  %v362 = vrot.slane %v218, 7
  %v363 = vrot.slane %v219, 7
  %v364 = vrot.slane %v220, 7
  %v365 = vrot.slane %v221, 7
  %v366 = vrot.slane %v222, 7
  %v367 = vrot.slane %v223, 7
  %v368 = vrot.slane %v224, 7
  %v369 = vrot.slane %v225, 7
  %v370 = vrot.slane %v226, 7
  %v371 = vrot.slane %v227, 7
  %v372 = vrot.slane %v228, 7
  %v373 = vrot.slane %v229, 7
  %v374 = vrot.slane %v230, 7
  %v375 = vrot.slane %v231, 7
  %v376 = vrot.slane %v232, 7
  %v377 = vrot.slane %v233, 7
  %v378 = vrot.slane %v234, 7
  %v379 = vrot.slane %v235, 7
  %v380 = vrot.slane %v236, 7
  %v381 = vrot.slane %v237, 7
  %v382 = vrot.slane %v238, 7
  %v383 = vrot.slane %v239, 7
  %v384 = vrot.slane %v240, 7
  %v385 = vrot.slane %v241, 7
  %v386 = vrot.slane %v242, 7
  %v387 = vrot.slane %v243, 7
  %v388 = vrot.slane %v244, 7
  %v389 = vrot.slane %v245, 7
  %v390 = vrot.slane %v246, 7
  %v391 = vrot.slane %v247, 7
  %s424 = scalar_lea.vmem [#allocation2], 32
  %425 = vst [vmem:[%s424] sm:$0xfe] %v360
  %vm426 = vcmask 179201
  %427 = vst.msk [vmem:[%s424 + $0x8] sm:$0xfe] %vm426, %v361
  %428 = vst [vmem:[%s424 + $0x10] sm:$0x1] %v360
  %vm429 = vcmask 172032
  %430 = vst.msk [vmem:[%s424 + $0x18] sm:$0x1] %vm429, %v361
  %431 = vst [vmem:[%s424 + $0x20] sm:$0xfe] %v362
  %432 = vst.msk [vmem:[%s424 + $0x28] sm:$0xfe] %vm426, %v363
  %433 = vst [vmem:[%s424 + $0x30] sm:$0x1] %v362
  %434 = vst.msk [vmem:[%s424 + $0x38] sm:$0x1] %vm429, %v363
  %435 = vst [vmem:[%s424 + $0x40] sm:$0xfe] %v364
  %436 = vst.msk [vmem:[%s424 + $0x48] sm:$0xfe] %vm426, %v365
  %437 = vst [vmem:[%s424 + $0x50] sm:$0x1] %v364
  %438 = vst.msk [vmem:[%s424 + $0x58] sm:$0x1] %vm429, %v365
  %439 = vst [vmem:[%s424 + $0x60] sm:$0xfe] %v366
  %440 = vst.msk [vmem:[%s424 + $0x68] sm:$0xfe] %vm426, %v367
  %441 = vst [vmem:[%s424 + $0x70] sm:$0x1] %v366
  %442 = vst.msk [vmem:[%s424 + $0x78] sm:$0x1] %vm429, %v367
  %443 = vst [vmem:[%s424 + $0x80] sm:$0xfe] %v368
  %444 = vst.msk [vmem:[%s424 + $0x88] sm:$0xfe] %vm426, %v369
  %445 = vst [vmem:[%s424 + $0x90] sm:$0x1] %v368
  %446 = vst.msk [vmem:[%s424 + $0x98] sm:$0x1] %vm429, %v369
  %447 = vst [vmem:[%s424 + $0xa0] sm:$0xfe] %v370
  %448 = vst.msk [vmem:[%s424 + $0xa8] sm:$0xfe] %vm426, %v371
  %449 = vst [vmem:[%s424 + $0xb0] sm:$0x1] %v370
  %450 = vst.msk [vmem:[%s424 + $0xb8] sm:$0x1] %vm429, %v371
  %451 = vst [vmem:[%s424 + $0xc0] sm:$0xfe] %v372
  %452 = vst.msk [vmem:[%s424 + $0xc8] sm:$0xfe] %vm426, %v373
  %453 = vst [vmem:[%s424 + $0xd0] sm:$0x1] %v372
  %454 = vst.msk [vmem:[%s424 + $0xd8] sm:$0x1] %vm429, %v373
  %455 = vst [vmem:[%s424 + $0xe0] sm:$0xfe] %v374
  %456 = vst.msk [vmem:[%s424 + $0xe8] sm:$0xfe] %vm426, %v375
  %457 = vst [vmem:[%s424 + $0xf0] sm:$0x1] %v374
  %458 = vst.msk [vmem:[%s424 + $0xf8] sm:$0x1] %vm429, %v375
  %459 = vst [vmem:[%s424 + $0x140] sm:$0xfe] %v376
  %460 = vst.msk [vmem:[%s424 + $0x148] sm:$0xfe] %vm426, %v377
  %461 = vst [vmem:[%s424 + $0x150] sm:$0x1] %v376
  %462 = vst.msk [vmem:[%s424 + $0x158] sm:$0x1] %vm429, %v377
  %463 = vst [vmem:[%s424 + $0x160] sm:$0xfe] %v378
  %464 = vst.msk [vmem:[%s424 + $0x168] sm:$0xfe] %vm426, %v379
  %465 = vst [vmem:[%s424 + $0x170] sm:$0x1] %v378
  %466 = vst.msk [vmem:[%s424 + $0x178] sm:$0x1] %vm429, %v379
  %467 = vst [vmem:[%s424 + $0x180] sm:$0xfe] %v380
  %468 = vst.msk [vmem:[%s424 + $0x188] sm:$0xfe] %vm426, %v381
  %469 = vst [vmem:[%s424 + $0x190] sm:$0x1] %v380
  %470 = vst.msk [vmem:[%s424 + $0x198] sm:$0x1] %vm429, %v381
  %471 = vst [vmem:[%s424 + $0x1a0] sm:$0xfe] %v382
  %472 = vst.msk [vmem:[%s424 + $0x1a8] sm:$0xfe] %vm426, %v383
  %473 = vst [vmem:[%s424 + $0x1b0] sm:$0x1] %v382
  %474 = vst.msk [vmem:[%s424 + $0x1b8] sm:$0x1] %vm429, %v383
  %475 = vst [vmem:[%s424 + $0x1c0] sm:$0xfe] %v384
  %476 = vst.msk [vmem:[%s424 + $0x1c8] sm:$0xfe] %vm426, %v385
  %477 = vst [vmem:[%s424 + $0x1d0] sm:$0x1] %v384
  %478 = vst.msk [vmem:[%s424 + $0x1d8] sm:$0x1] %vm429, %v385
  %479 = vst [vmem:[%s424 + $0x1e0] sm:$0xfe] %v386
  %480 = vst.msk [vmem:[%s424 + $0x1e8] sm:$0xfe] %vm426, %v387
  %481 = vst [vmem:[%s424 + $0x1f0] sm:$0x1] %v386
  %482 = vst.msk [vmem:[%s424 + $0x1f8] sm:$0x1] %vm429, %v387
  %483 = vst [vmem:[%s424 + $0x200] sm:$0xfe] %v388
  %484 = vst.msk [vmem:[%s424 + $0x208] sm:$0xfe] %vm426, %v389
  %485 = vst [vmem:[%s424 + $0x210] sm:$0x1] %v388
  %486 = vst.msk [vmem:[%s424 + $0x218] sm:$0x1] %vm429, %v389
  %487 = vst [vmem:[%s424 + $0x220] sm:$0xfe] %v390
  %488 = vst.msk [vmem:[%s424 + $0x228] sm:$0xfe] %vm426, %v391
  %489 = vst [vmem:[%s424 + $0x230] sm:$0x1] %v390
  %490 = vst.msk [vmem:[%s424 + $0x238] sm:$0x1] %vm429, %v391
  %v491 = vld [vmem:[#allocation2] sm:$0xff]
  %v492 = vld [vmem:[#allocation2 + $0x8] sm:$0xff]
  %v493 = vld [vmem:[#allocation2 + $0x20] sm:$0xff]
  %v494 = vld [vmem:[#allocation2 + $0x28] sm:$0xff]
  %v495 = vld [vmem:[#allocation2 + $0x40] sm:$0xff]
  %v496 = vld [vmem:[#allocation2 + $0x48] sm:$0xff]
  %v497 = vld [vmem:[#allocation2 + $0x60] sm:$0xff]
  %v498 = vld [vmem:[#allocation2 + $0x68] sm:$0xff]
  %v499 = vld [vmem:[#allocation2 + $0x80] sm:$0xff]
  %v500 = vld [vmem:[#allocation2 + $0x88] sm:$0xff]
  %v501 = vld [vmem:[#allocation2 + $0xa0] sm:$0xff]
  %v502 = vld [vmem:[#allocation2 + $0xa8] sm:$0xff]
  %v503 = vld [vmem:[#allocation2 + $0xc0] sm:$0xff]
  %v504 = vld [vmem:[#allocation2 + $0xc8] sm:$0xff]
  %v505 = vld [vmem:[#allocation2 + $0xe0] sm:$0xff]
  %v506 = vld [vmem:[#allocation2 + $0xe8] sm:$0xff]
  %v507 = vld [vmem:[#allocation2 + $0x140] sm:$0xff]
  %v508 = vld [vmem:[#allocation2 + $0x148] sm:$0xff]
  %v509 = vld [vmem:[#allocation2 + $0x160] sm:$0xff]
  %v510 = vld [vmem:[#allocation2 + $0x168] sm:$0xff]
  %v511 = vld [vmem:[#allocation2 + $0x180] sm:$0xff]
  %v512 = vld [vmem:[#allocation2 + $0x188] sm:$0xff]
  %v513 = vld [vmem:[#allocation2 + $0x1a0] sm:$0xff]
  %v514 = vld [vmem:[#allocation2 + $0x1a8] sm:$0xff]
  %v515 = vld [vmem:[#allocation2 + $0x1c0] sm:$0xff]
  %v516 = vld [vmem:[#allocation2 + $0x1c8] sm:$0xff]
  %v517 = vld [vmem:[#allocation2 + $0x1e0] sm:$0xff]
  %v518 = vld [vmem:[#allocation2 + $0x1e8] sm:$0xff]
  %v519 = vld [vmem:[#allocation2 + $0x200] sm:$0xff]
  %v520 = vld [vmem:[#allocation2 + $0x208] sm:$0xff]
  %v521 = vld [vmem:[#allocation2 + $0x220] sm:$0xff]
  %v522 = vld [vmem:[#allocation2 + $0x228] sm:$0xff]
  %v523 = vpack.c.bf16 %v493, %v491
  %v524 = vpack.c.bf16 %v494, %v492
  %v525 = vpack.c.bf16 %v497, %v495
  %v526 = vpack.c.bf16 %v498, %v496
  %v527 = vpack.c.bf16 %v501, %v499
  %v528 = vpack.c.bf16 %v502, %v500
  %v529 = vpack.c.bf16 %v505, %v503
  %v530 = vpack.c.bf16 %v506, %v504
  %v531 = vpack.c.bf16 %v509, %v507
  %v532 = vpack.c.bf16 %v510, %v508
  %v533 = vpack.c.bf16 %v513, %v511
  %v534 = vpack.c.bf16 %v514, %v512
  %v535 = vpack.c.bf16 %v517, %v515
  %v536 = vpack.c.bf16 %v518, %v516
  %v537 = vpack.c.bf16 %v521, %v519
  %v538 = vpack.c.bf16 %v522, %v520
  %v539 = vunpack.c.l.bf16 %v523
  %v540 = vunpack.c.l.bf16 %v524
  %v541 = vunpack.c.h.bf16 %v523
  %v542 = vunpack.c.h.bf16 %v524
  %v543 = vunpack.c.l.bf16 %v525
  %v544 = vunpack.c.l.bf16 %v526
  %v545 = vunpack.c.h.bf16 %v525
  %v546 = vunpack.c.h.bf16 %v526
  %v547 = vunpack.c.l.bf16 %v527
  %v548 = vunpack.c.l.bf16 %v528
  %v549 = vunpack.c.h.bf16 %v527
  %v550 = vunpack.c.h.bf16 %v528
  %v551 = vunpack.c.l.bf16 %v529
  %v552 = vunpack.c.l.bf16 %v530
  %v553 = vunpack.c.h.bf16 %v529
  %v554 = vunpack.c.h.bf16 %v530
  %v555 = vunpack.c.l.bf16 %v531
  %v556 = vunpack.c.l.bf16 %v532
  %v557 = vunpack.c.h.bf16 %v531
  %v558 = vunpack.c.h.bf16 %v532
  %v559 = vunpack.c.l.bf16 %v533
  %v560 = vunpack.c.l.bf16 %v534
  %v561 = vunpack.c.h.bf16 %v533
  %v562 = vunpack.c.h.bf16 %v534
  %v563 = vunpack.c.l.bf16 %v535
  %v564 = vunpack.c.l.bf16 %v536
  %v565 = vunpack.c.h.bf16 %v535
  %v566 = vunpack.c.h.bf16 %v536
  %v567 = vunpack.c.l.bf16 %v537
  %v568 = vunpack.c.l.bf16 %v538
  %v569 = vunpack.c.h.bf16 %v537
  %v570 = vunpack.c.h.bf16 %v538
  %v571 = vsub.f32 %v491, %v539
  %v572 = vsub.f32 %v492, %v540
  %v573 = vsub.f32 %v493, %v541
  %v574 = vsub.f32 %v494, %v542
  %v575 = vsub.f32 %v495, %v543
  %v576 = vsub.f32 %v496, %v544
  %v577 = vsub.f32 %v497, %v545
  %v578 = vsub.f32 %v498, %v546
  %v579 = vsub.f32 %v499, %v547
  %v580 = vsub.f32 %v500, %v548
  %v581 = vsub.f32 %v501, %v549
  %v582 = vsub.f32 %v502, %v550
  %v583 = vsub.f32 %v503, %v551
  %v584 = vsub.f32 %v504, %v552
  %v585 = vsub.f32 %v505, %v553
  %v586 = vsub.f32 %v506, %v554
  %v587 = vsub.f32 %v507, %v555
  %v588 = vsub.f32 %v508, %v556
  %v589 = vsub.f32 %v509, %v557
  %v590 = vsub.f32 %v510, %v558
  %v591 = vsub.f32 %v511, %v559
  %v592 = vsub.f32 %v512, %v560
  %v593 = vsub.f32 %v513, %v561
  %v594 = vsub.f32 %v514, %v562
  %v595 = vsub.f32 %v515, %v563
  %v596 = vsub.f32 %v516, %v564
  %v597 = vsub.f32 %v517, %v565
  %v598 = vsub.f32 %v518, %v566
  %v599 = vsub.f32 %v519, %v567
  %v600 = vsub.f32 %v520, %v568
  %v601 = vsub.f32 %v521, %v569
  %v602 = vsub.f32 %v522, %v570
  %v603 = vpack.c.bf16 %v573, %v571
  %v604 = vpack.c.bf16 %v574, %v572
  %v605 = vpack.c.bf16 %v577, %v575
  %v606 = vpack.c.bf16 %v578, %v576
  %v607 = vpack.c.bf16 %v581, %v579
  %v608 = vpack.c.bf16 %v582, %v580
  %v609 = vpack.c.bf16 %v585, %v583
  %v610 = vpack.c.bf16 %v586, %v584
  %v611 = vpack.c.bf16 %v589, %v587
  %v612 = vpack.c.bf16 %v590, %v588
  %v613 = vpack.c.bf16 %v593, %v591
  %v614 = vpack.c.bf16 %v594, %v592
  %v615 = vpack.c.bf16 %v597, %v595
  %v616 = vpack.c.bf16 %v598, %v596
  %v617 = vpack.c.bf16 %v601, %v599
  %v618 = vpack.c.bf16 %v602, %v600
  %v619 = vld [vmem:[%s1] sm:$0xf]
  %v620 = vld [vmem:[%s1 + $0x4] sm:$0xf]
  %v621 = vld [vmem:[%s1 + $0x8] sm:$0xf]
  %v622 = vld [vmem:[%s1 + $0xc] sm:$0xf]
  %v623 = vld [vmem:[%s1 + $0x10] sm:$0xf]
  %v624 = vld [vmem:[%s1 + $0x14] sm:$0xf]
  %v625 = vld [vmem:[%s1 + $0x18] sm:$0xf]
  %v626 = vld [vmem:[%s1 + $0x1c] sm:$0xf]
  %v627 = vld [vmem:[%s1 + $0x20] sm:$0xf]
  %v628 = vld [vmem:[%s1 + $0x24] sm:$0xf]
  %v629 = vld [vmem:[%s1 + $0x28] sm:$0xf]
  %v630 = vld [vmem:[%s1 + $0x2c] sm:$0xf]
  %v631 = vld [vmem:[%s1 + $0x30] sm:$0xf]
  %v632 = vld [vmem:[%s1 + $0x34] sm:$0xf]
  %v633 = vld [vmem:[%s1 + $0x38] sm:$0xf]
  %v634 = vld [vmem:[%s1 + $0x3c] sm:$0xf]
  %v635 = vld [vmem:[%s1 + $0x40] sm:$0xf]
  %v636 = vld [vmem:[%s1 + $0x44] sm:$0xf]
  %v637 = vld [vmem:[%s1 + $0x48] sm:$0xf]
  %v638 = vld [vmem:[%s1 + $0x4c] sm:$0xf]
  %v639 = vld [vmem:[%s1 + $0x50] sm:$0xf]
  %v640 = vld [vmem:[%s1 + $0x54] sm:$0xf]
  %v641 = vld [vmem:[%s1 + $0x58] sm:$0xf]
  %v642 = vld [vmem:[%s1 + $0x5c] sm:$0xf]
  %v643 = vld [vmem:[%s1 + $0x60] sm:$0xf]
  %v644 = vld [vmem:[%s1 + $0x64] sm:$0xf]
  %v645 = vld [vmem:[%s1 + $0x68] sm:$0xf]
  %v646 = vld [vmem:[%s1 + $0x6c] sm:$0xf]
  %v647 = vld [vmem:[%s1 + $0x70] sm:$0xf]
  %v648 = vld [vmem:[%s1 + $0x74] sm:$0xf]
  %v649 = vld [vmem:[%s1 + $0x78] sm:$0xf]
  %v650 = vld [vmem:[%s1 + $0x7c] sm:$0xf]
  %v651 = vld [vmem:[%s2] sm:$0xf]
  %v652 = vld [vmem:[%s2 + $0x4] sm:$0xf]
  %v653 = vld [vmem:[%s2 + $0x8] sm:$0xf]
  %v654 = vld [vmem:[%s2 + $0xc] sm:$0xf]
  %v655 = vld [vmem:[%s2 + $0x10] sm:$0xf]
  %v656 = vld [vmem:[%s2 + $0x14] sm:$0xf]
  %v657 = vld [vmem:[%s2 + $0x18] sm:$0xf]
  %v658 = vld [vmem:[%s2 + $0x1c] sm:$0xf]
  %v659 = vld [vmem:[%s2 + $0x20] sm:$0xf]
  %v660 = vld [vmem:[%s2 + $0x24] sm:$0xf]
  %v661 = vld [vmem:[%s2 + $0x28] sm:$0xf]
  %v662 = vld [vmem:[%s2 + $0x2c] sm:$0xf]
  %v663 = vld [vmem:[%s2 + $0x30] sm:$0xf]
  %v664 = vld [vmem:[%s2 + $0x34] sm:$0xf]
  %v665 = vld [vmem:[%s2 + $0x38] sm:$0xf]
  %v666 = vld [vmem:[%s2 + $0x3c] sm:$0xf]
  %v667 = vld [vmem:[%s2 + $0x40] sm:$0xf]
  %v668 = vld [vmem:[%s2 + $0x44] sm:$0xf]
  %v669 = vld [vmem:[%s2 + $0x48] sm:$0xf]
  %v670 = vld [vmem:[%s2 + $0x4c] sm:$0xf]
  %v671 = vld [vmem:[%s2 + $0x50] sm:$0xf]
  %v672 = vld [vmem:[%s2 + $0x54] sm:$0xf]
  %v673 = vld [vmem:[%s2 + $0x58] sm:$0xf]
  %v674 = vld [vmem:[%s2 + $0x5c] sm:$0xf]
  %v675 = vld [vmem:[%s2 + $0x60] sm:$0xf]
  %v676 = vld [vmem:[%s2 + $0x64] sm:$0xf]
  %v677 = vld [vmem:[%s2 + $0x68] sm:$0xf]
  %v678 = vld [vmem:[%s2 + $0x6c] sm:$0xf]
  %v679 = vld [vmem:[%s2 + $0x70] sm:$0xf]
  %v680 = vld [vmem:[%s2 + $0x74] sm:$0xf]
  %v681 = vld [vmem:[%s2 + $0x78] sm:$0xf]
  %v682 = vld [vmem:[%s2 + $0x7c] sm:$0xf]
  %v715 = vunpack.c.l.b16 %v619
  %v716 = vunpack.c.l.b16 %v620
  %v717 = vunpack.c.l.b16 %v621
  %v718 = vunpack.c.l.b16 %v622
  %v719 = vunpack.c.l.b16 %v623
  %v720 = vunpack.c.l.b16 %v624
  %v721 = vunpack.c.l.b16 %v625
  %v722 = vunpack.c.l.b16 %v626
  %v723 = vunpack.c.l.b16 %v627
  %v724 = vunpack.c.l.b16 %v628
  %v725 = vunpack.c.l.b16 %v629
  %v726 = vunpack.c.l.b16 %v630
  %v727 = vunpack.c.l.b16 %v631
  %v728 = vunpack.c.l.b16 %v632
  %v729 = vunpack.c.l.b16 %v633
  %v730 = vunpack.c.l.b16 %v634
  %v731 = vunpack.c.l.b16 %v635
  %v732 = vunpack.c.l.b16 %v636
  %v733 = vunpack.c.l.b16 %v637
  %v734 = vunpack.c.l.b16 %v638
  %v735 = vunpack.c.l.b16 %v639
  %v736 = vunpack.c.l.b16 %v640
  %v737 = vunpack.c.l.b16 %v641
  %v738 = vunpack.c.l.b16 %v642
  %v739 = vunpack.c.l.b16 %v643
  %v740 = vunpack.c.l.b16 %v644
  %v741 = vunpack.c.l.b16 %v645
  %v742 = vunpack.c.l.b16 %v646
  %v743 = vunpack.c.l.b16 %v647
  %v744 = vunpack.c.l.b16 %v648
  %v745 = vunpack.c.l.b16 %v649
  %v746 = vunpack.c.l.b16 %v650
  %v747 = vpack.c.b16 %v716, %v715
  %v748 = vpack.c.b16 %v718, %v717
  %v749 = vpack.c.b16 %v720, %v719
  %v750 = vpack.c.b16 %v722, %v721
  %v751 = vpack.c.b16 %v724, %v723
  %v752 = vpack.c.b16 %v726, %v725
  %v753 = vpack.c.b16 %v728, %v727
  %v754 = vpack.c.b16 %v730, %v729
  %v755 = vpack.c.b16 %v732, %v731
  %v756 = vpack.c.b16 %v734, %v733
  %v757 = vpack.c.b16 %v736, %v735
  %v758 = vpack.c.b16 %v738, %v737
  %v759 = vpack.c.b16 %v740, %v739
  %v760 = vpack.c.b16 %v742, %v741
  %v761 = vpack.c.b16 %v744, %v743
  %v762 = vpack.c.b16 %v746, %v745
  %779 = vmatprep.subr.bf16.mxu0 0
  %780 = vmatpush1.bf16.msra.mxu0 %v747
  %781 = vmatprep.subr.bf16.mxu0 0
  %782 = vmatpush1.bf16.msra.mxu0 %v748
  %783 = vmatprep.subr.bf16.mxu0 0
  %784 = vmatpush1.bf16.msra.mxu0 %v749
  %785 = vmatprep.subr.bf16.mxu0 0
  %786 = vmatpush1.bf16.msra.mxu0 %v750
  %787 = vmatprep.subr.bf16.mxu0 0
  %788 = vmatpush1.bf16.msra.mxu0 %v751
  %789 = vmatprep.subr.bf16.mxu0 0
  %790 = vmatpush1.bf16.msra.mxu0 %v752
  %791 = vmatprep.subr.bf16.mxu0 0
  %792 = vmatpush1.bf16.msra.mxu0 %v753
  %793 = vmatprep.subr.bf16.mxu0 0
  %794 = vmatpush1.bf16.msra.mxu0 %v754
  %795 = vmatprep.subr.bf16.mxu0 0
  %796 = vmatpush1.bf16.msra.mxu0 %v755
  %797 = vmatprep.subr.bf16.mxu0 0
  %798 = vmatpush1.bf16.msra.mxu0 %v756
  %799 = vmatprep.subr.bf16.mxu0 0
  %800 = vmatpush1.bf16.msra.mxu0 %v757
  %801 = vmatprep.subr.bf16.mxu0 0
  %802 = vmatpush1.bf16.msra.mxu0 %v758
  %803 = vmatprep.subr.bf16.mxu0 0
  %804 = vmatpush1.bf16.msra.mxu0 %v759
  %805 = vmatprep.subr.bf16.mxu0 0
  %806 = vmatpush1.bf16.msra.mxu0 %v760
  %807 = vmatprep.subr.bf16.mxu0 0
  %808 = vmatpush1.bf16.msra.mxu0 %v761
  %809 = vmatprep.subr.bf16.mxu0 0
  %810 = vmatpush1.bf16.msra.mxu0 %v762
  %811 = vmatprep.mubr.bf16.mxu0 %v604
  %812 = vmatmul.mubr.bf16.gmra.mrb[0].mxu0 %v603
  %v813 = vpop.f32.mrb[0].mxu0
  %v814 = vadd.f32 0.0, %v813
  %v815 = vpop.f32.mrb[0].mxu0
  %v816 = vpop.f32.mrb[0].mxu0
  %v817 = vadd.f32 0.0, %v816
  %v818 = vpop.f32.mrb[0].mxu0
  %819 = vmatprep.mubr.bf16.mxu0 %v606
  %820 = vmatmul.mubr.bf16.gmra.mrb[0].mxu0 %v605
  %v821 = vpop.f32.mrb[0].mxu0
  %v822 = vadd.f32 0.0, %v821
  %v823 = vpop.f32.mrb[0].mxu0
  %v824 = vpop.f32.mrb[0].mxu0
  %v825 = vadd.f32 0.0, %v824
  %v826 = vpop.f32.mrb[0].mxu0
  %827 = vmatprep.mubr.bf16.mxu0 %v608
  %828 = vmatmul.mubr.bf16.gmra.mrb[0].mxu0 %v607
  %v829 = vpop.f32.mrb[0].mxu0
  %v830 = vadd.f32 0.0, %v829
  %v831 = vpop.f32.mrb[0].mxu0
  %v832 = vpop.f32.mrb[0].mxu0
  %v833 = vadd.f32 0.0, %v832
  %v834 = vpop.f32.mrb[0].mxu0
  %835 = vmatprep.mubr.bf16.mxu0 %v610
  %836 = vmatmul.mubr.bf16.gmra.mrb[0].mxu0 %v609
  %v837 = vpop.f32.mrb[0].mxu0
  %v838 = vadd.f32 0.0, %v837
  %v839 = vpop.f32.mrb[0].mxu0
  %v840 = vpop.f32.mrb[0].mxu0
  %v841 = vadd.f32 0.0, %v840
  %v842 = vpop.f32.mrb[0].mxu0
  %843 = vmatprep.mubr.bf16.mxu0 %v612
  %844 = vmatmul.mubr.bf16.gmra.mrb[0].mxu0 %v611
  %v845 = vpop.f32.mrb[0].mxu0
  %v846 = vadd.f32 0.0, %v845
  %v847 = vpop.f32.mrb[0].mxu0
  %v848 = vpop.f32.mrb[0].mxu0
  %v849 = vadd.f32 0.0, %v848
  %v850 = vpop.f32.mrb[0].mxu0
  %851 = vmatprep.mubr.bf16.mxu0 %v614
  %852 = vmatmul.mubr.bf16.gmra.mrb[0].mxu0 %v613
  %v853 = vpop.f32.mrb[0].mxu0
  %v854 = vadd.f32 0.0, %v853
  %v855 = vpop.f32.mrb[0].mxu0
  %v856 = vpop.f32.mrb[0].mxu0
  %v857 = vadd.f32 0.0, %v856
  %v858 = vpop.f32.mrb[0].mxu0
  %859 = vmatprep.mubr.bf16.mxu0 %v616
  %860 = vmatmul.mubr.bf16.gmra.mrb[0].mxu0 %v615
  %v861 = vpop.f32.mrb[0].mxu0
  %v862 = vadd.f32 0.0, %v861
  %v863 = vpop.f32.mrb[0].mxu0
  %v864 = vpop.f32.mrb[0].mxu0
  %v865 = vadd.f32 0.0, %v864
  %v866 = vpop.f32.mrb[0].mxu0
  %867 = vmatprep.mubr.bf16.mxu0 %v618
  %868 = vmatmul.mubr.bf16.gmra.mrb[0].mxu0 %v617
  %v869 = vpop.f32.mrb[0].mxu0
  %v870 = vadd.f32 0.0, %v869
  %v871 = vpop.f32.mrb[0].mxu0
  %v872 = vpop.f32.mrb[0].mxu0
  %v873 = vadd.f32 0.0, %v872
  %v874 = vpop.f32.mrb[0].mxu0
  %875 = vdwg.mxu0
  %876 = vmatprep.subr.bf16.mxu0 0
  %877 = vmatpush1.bf16.msra.mxu0 %v747
  %878 = vmatprep.subr.bf16.mxu0 0
  %879 = vmatpush1.bf16.msra.mxu0 %v748
  %880 = vmatprep.subr.bf16.mxu0 0
  %881 = vmatpush1.bf16.msra.mxu0 %v749
  %882 = vmatprep.subr.bf16.mxu0 0
  %883 = vmatpush1.bf16.msra.mxu0 %v750
  %884 = vmatprep.subr.bf16.mxu0 0
  %885 = vmatpush1.bf16.msra.mxu0 %v751
  %886 = vmatprep.subr.bf16.mxu0 0
  %887 = vmatpush1.bf16.msra.mxu0 %v752
  %888 = vmatprep.subr.bf16.mxu0 0
  %889 = vmatpush1.bf16.msra.mxu0 %v753
  %890 = vmatprep.subr.bf16.mxu0 0
  %891 = vmatpush1.bf16.msra.mxu0 %v754
  %892 = vmatprep.subr.bf16.mxu0 0
  %893 = vmatpush1.bf16.msra.mxu0 %v755
  %894 = vmatprep.subr.bf16.mxu0 0
  %895 = vmatpush1.bf16.msra.mxu0 %v756
  %896 = vmatprep.subr.bf16.mxu0 0
  %897 = vmatpush1.bf16.msra.mxu0 %v757
  %898 = vmatprep.subr.bf16.mxu0 0
  %899 = vmatpush1.bf16.msra.mxu0 %v758
  %900 = vmatprep.subr.bf16.mxu0 0
  %901 = vmatpush1.bf16.msra.mxu0 %v759
  %902 = vmatprep.subr.bf16.mxu0 0
  %903 = vmatpush1.bf16.msra.mxu0 %v760
  %904 = vmatprep.subr.bf16.mxu0 0
  %905 = vmatpush1.bf16.msra.mxu0 %v761
  %906 = vmatprep.subr.bf16.mxu0 0
  %907 = vmatpush1.bf16.msra.mxu0 %v762
  %908 = vmatprep.mubr.bf16.mxu0 %v524
  %909 = vmatmul.mubr.bf16.gmra.mrb[0].mxu0 %v523
  %v910 = vpop.f32.mrb[0].mxu0
  %v911 = vadd.f32 %v814, %v910
  %v912 = vpop.f32.mrb[0].mxu0
  %v913 = vpop.f32.mrb[0].mxu0
  %v914 = vadd.f32 %v817, %v913
  %v915 = vpop.f32.mrb[0].mxu0
  %916 = vmatprep.mubr.bf16.mxu0 %v526
  %917 = vmatmul.mubr.bf16.gmra.mrb[0].mxu0 %v525
  %v918 = vpop.f32.mrb[0].mxu0
  %v919 = vadd.f32 %v822, %v918
  %v920 = vpop.f32.mrb[0].mxu0
  %v921 = vpop.f32.mrb[0].mxu0
  %v922 = vadd.f32 %v825, %v921
  %v923 = vpop.f32.mrb[0].mxu0
  %924 = vmatprep.mubr.bf16.mxu0 %v528
  %925 = vmatmul.mubr.bf16.gmra.mrb[0].mxu0 %v527
  %v926 = vpop.f32.mrb[0].mxu0
  %v927 = vadd.f32 %v830, %v926
  %v928 = vpop.f32.mrb[0].mxu0
  %v929 = vpop.f32.mrb[0].mxu0
  %v930 = vadd.f32 %v833, %v929
  %v931 = vpop.f32.mrb[0].mxu0
  %932 = vmatprep.mubr.bf16.mxu0 %v530
  %933 = vmatmul.mubr.bf16.gmra.mrb[0].mxu0 %v529
  %v934 = vpop.f32.mrb[0].mxu0
  %v935 = vadd.f32 %v838, %v934
  %v936 = vpop.f32.mrb[0].mxu0
  %v937 = vpop.f32.mrb[0].mxu0
  %v938 = vadd.f32 %v841, %v937
  %v939 = vpop.f32.mrb[0].mxu0
  %940 = vmatprep.mubr.bf16.mxu0 %v532
  %941 = vmatmul.mubr.bf16.gmra.mrb[0].mxu0 %v531
  %v942 = vpop.f32.mrb[0].mxu0
  %v943 = vadd.f32 %v846, %v942
  %v944 = vpop.f32.mrb[0].mxu0
  %v945 = vpop.f32.mrb[0].mxu0
  %v946 = vadd.f32 %v849, %v945
  %v947 = vpop.f32.mrb[0].mxu0
  %948 = vmatprep.mubr.bf16.mxu0 %v534
  %949 = vmatmul.mubr.bf16.gmra.mrb[0].mxu0 %v533
  %v950 = vpop.f32.mrb[0].mxu0
  %v951 = vadd.f32 %v854, %v950
  %v952 = vpop.f32.mrb[0].mxu0
  %v953 = vpop.f32.mrb[0].mxu0
  %v954 = vadd.f32 %v857, %v953
  %v955 = vpop.f32.mrb[0].mxu0
  %956 = vmatprep.mubr.bf16.mxu0 %v536
  %957 = vmatmul.mubr.bf16.gmra.mrb[0].mxu0 %v535
  %v958 = vpop.f32.mrb[0].mxu0
  %v959 = vadd.f32 %v862, %v958
  %v960 = vpop.f32.mrb[0].mxu0
  %v961 = vpop.f32.mrb[0].mxu0
  %v962 = vadd.f32 %v865, %v961
  %v963 = vpop.f32.mrb[0].mxu0
  %964 = vmatprep.mubr.bf16.mxu0 %v538
  %965 = vmatmul.mubr.bf16.gmra.mrb[0].mxu0 %v537
  %v966 = vpop.f32.mrb[0].mxu0
  %v967 = vadd.f32 %v870, %v966
  %v968 = vpop.f32.mrb[0].mxu0
  %v969 = vpop.f32.mrb[0].mxu0
  %v970 = vadd.f32 %v873, %v969
  %v971 = vpop.f32.mrb[0].mxu0
  %972 = vdwg.mxu0
  %v1005 = vunpack.c.l.b16 %v651
  %v1006 = vunpack.c.l.b16 %v652
  %v1007 = vunpack.c.l.b16 %v653
  %v1008 = vunpack.c.l.b16 %v654
  %v1009 = vunpack.c.l.b16 %v655
  %v1010 = vunpack.c.l.b16 %v656
  %v1011 = vunpack.c.l.b16 %v657
  %v1012 = vunpack.c.l.b16 %v658
  %v1013 = vunpack.c.l.b16 %v659
  %v1014 = vunpack.c.l.b16 %v660
  %v1015 = vunpack.c.l.b16 %v661
  %v1016 = vunpack.c.l.b16 %v662
  %v1017 = vunpack.c.l.b16 %v663
  %v1018 = vunpack.c.l.b16 %v664
  %v1019 = vunpack.c.l.b16 %v665
  %v1020 = vunpack.c.l.b16 %v666
  %v1021 = vunpack.c.l.b16 %v667
  %v1022 = vunpack.c.l.b16 %v668
  %v1023 = vunpack.c.l.b16 %v669
  %v1024 = vunpack.c.l.b16 %v670
  %v1025 = vunpack.c.l.b16 %v671
  %v1026 = vunpack.c.l.b16 %v672
  %v1027 = vunpack.c.l.b16 %v673
  %v1028 = vunpack.c.l.b16 %v674
  %v1029 = vunpack.c.l.b16 %v675
  %v1030 = vunpack.c.l.b16 %v676
  %v1031 = vunpack.c.l.b16 %v677
  %v1032 = vunpack.c.l.b16 %v678
  %v1033 = vunpack.c.l.b16 %v679
  %v1034 = vunpack.c.l.b16 %v680
  %v1035 = vunpack.c.l.b16 %v681
  %v1036 = vunpack.c.l.b16 %v682
  %v1037 = vpack.c.b16 %v1006, %v1005
  %v1038 = vpack.c.b16 %v1008, %v1007
  %v1039 = vpack.c.b16 %v1010, %v1009
  %v1040 = vpack.c.b16 %v1012, %v1011
  %v1041 = vpack.c.b16 %v1014, %v1013
  %v1042 = vpack.c.b16 %v1016, %v1015
  %v1043 = vpack.c.b16 %v1018, %v1017
  %v1044 = vpack.c.b16 %v1020, %v1019
  %v1045 = vpack.c.b16 %v1022, %v1021
  %v1046 = vpack.c.b16 %v1024, %v1023
  %v1047 = vpack.c.b16 %v1026, %v1025
  %v1048 = vpack.c.b16 %v1028, %v1027
  %v1049 = vpack.c.b16 %v1030, %v1029
  %v1050 = vpack.c.b16 %v1032, %v1031
  %v1051 = vpack.c.b16 %v1034, %v1033
  %v1052 = vpack.c.b16 %v1036, %v1035
  %1069 = vmatprep.subr.bf16.mxu0 0
  %1070 = vmatpush1.bf16.msra.mxu0 %v1037
  %1071 = vmatprep.subr.bf16.mxu0 0
  %1072 = vmatpush1.bf16.msra.mxu0 %v1038
  %1073 = vmatprep.subr.bf16.mxu0 0
  %1074 = vmatpush1.bf16.msra.mxu0 %v1039
  %1075 = vmatprep.subr.bf16.mxu0 0
  %1076 = vmatpush1.bf16.msra.mxu0 %v1040
  %1077 = vmatprep.subr.bf16.mxu0 0
  %1078 = vmatpush1.bf16.msra.mxu0 %v1041
  %1079 = vmatprep.subr.bf16.mxu0 0
  %1080 = vmatpush1.bf16.msra.mxu0 %v1042
  %1081 = vmatprep.subr.bf16.mxu0 0
  %1082 = vmatpush1.bf16.msra.mxu0 %v1043
  %1083 = vmatprep.subr.bf16.mxu0 0
  %1084 = vmatpush1.bf16.msra.mxu0 %v1044
  %1085 = vmatprep.subr.bf16.mxu0 0
  %1086 = vmatpush1.bf16.msra.mxu0 %v1045
  %1087 = vmatprep.subr.bf16.mxu0 0
  %1088 = vmatpush1.bf16.msra.mxu0 %v1046
  %1089 = vmatprep.subr.bf16.mxu0 0
  %1090 = vmatpush1.bf16.msra.mxu0 %v1047
  %1091 = vmatprep.subr.bf16.mxu0 0
  %1092 = vmatpush1.bf16.msra.mxu0 %v1048
  %1093 = vmatprep.subr.bf16.mxu0 0
  %1094 = vmatpush1.bf16.msra.mxu0 %v1049
  %1095 = vmatprep.subr.bf16.mxu0 0
  %1096 = vmatpush1.bf16.msra.mxu0 %v1050
  %1097 = vmatprep.subr.bf16.mxu0 0
  %1098 = vmatpush1.bf16.msra.mxu0 %v1051
  %1099 = vmatprep.subr.bf16.mxu0 0
  %1100 = vmatpush1.bf16.msra.mxu0 %v1052
  %1101 = vmatprep.mubr.bf16.mxu0 %v524
  %1102 = vmatmul.mubr.bf16.gmra.mrb[0].mxu0 %v523
  %v1103 = vpop.f32.mrb[0].mxu0
  %v1104 = vadd.f32 0.0, %v1103
  %v1105 = vpop.f32.mrb[0].mxu0
  %v1106 = vpop.f32.mrb[0].mxu0
  %v1107 = vadd.f32 0.0, %v1106
  %v1108 = vpop.f32.mrb[0].mxu0
  %1109 = vmatprep.mubr.bf16.mxu0 %v526
  %1110 = vmatmul.mubr.bf16.gmra.mrb[0].mxu0 %v525
  %v1111 = vpop.f32.mrb[0].mxu0
  %v1112 = vadd.f32 0.0, %v1111
  %v1113 = vpop.f32.mrb[0].mxu0
  %v1114 = vpop.f32.mrb[0].mxu0
  %v1115 = vadd.f32 0.0, %v1114
  %v1116 = vpop.f32.mrb[0].mxu0
  %1117 = vmatprep.mubr.bf16.mxu0 %v528
  %1118 = vmatmul.mubr.bf16.gmra.mrb[0].mxu0 %v527
  %v1119 = vpop.f32.mrb[0].mxu0
  %v1120 = vadd.f32 0.0, %v1119
  %v1121 = vpop.f32.mrb[0].mxu0
  %v1122 = vpop.f32.mrb[0].mxu0
  %v1123 = vadd.f32 0.0, %v1122
  %v1124 = vpop.f32.mrb[0].mxu0
  %1125 = vmatprep.mubr.bf16.mxu0 %v530
  %1126 = vmatmul.mubr.bf16.gmra.mrb[0].mxu0 %v529
  %v1127 = vpop.f32.mrb[0].mxu0
  %v1128 = vadd.f32 0.0, %v1127
  %v1129 = vpop.f32.mrb[0].mxu0
  %v1130 = vpop.f32.mrb[0].mxu0
  %v1131 = vadd.f32 0.0, %v1130
  %v1132 = vpop.f32.mrb[0].mxu0
  %1133 = vmatprep.mubr.bf16.mxu0 %v532
  %1134 = vmatmul.mubr.bf16.gmra.mrb[0].mxu0 %v531
  %v1135 = vpop.f32.mrb[0].mxu0
  %v1136 = vadd.f32 0.0, %v1135
  %v1137 = vpop.f32.mrb[0].mxu0
  %v1138 = vpop.f32.mrb[0].mxu0
  %v1139 = vadd.f32 0.0, %v1138
  %v1140 = vpop.f32.mrb[0].mxu0
  %1141 = vmatprep.mubr.bf16.mxu0 %v534
  %1142 = vmatmul.mubr.bf16.gmra.mrb[0].mxu0 %v533
  %v1143 = vpop.f32.mrb[0].mxu0
  %v1144 = vadd.f32 0.0, %v1143
  %v1145 = vpop.f32.mrb[0].mxu0
  %v1146 = vpop.f32.mrb[0].mxu0
  %v1147 = vadd.f32 0.0, %v1146
  %v1148 = vpop.f32.mrb[0].mxu0
  %1149 = vmatprep.mubr.bf16.mxu0 %v536
  %1150 = vmatmul.mubr.bf16.gmra.mrb[0].mxu0 %v535
  %v1151 = vpop.f32.mrb[0].mxu0
  %v1152 = vadd.f32 0.0, %v1151
  %v1153 = vpop.f32.mrb[0].mxu0
  %v1154 = vpop.f32.mrb[0].mxu0
  %v1155 = vadd.f32 0.0, %v1154
  %v1156 = vpop.f32.mrb[0].mxu0
  %1157 = vmatprep.mubr.bf16.mxu0 %v538
  %1158 = vmatmul.mubr.bf16.gmra.mrb[0].mxu0 %v537
  %v1159 = vpop.f32.mrb[0].mxu0
  %v1160 = vadd.f32 0.0, %v1159
  %v1161 = vpop.f32.mrb[0].mxu0
  %v1162 = vpop.f32.mrb[0].mxu0
  %v1163 = vadd.f32 0.0, %v1162
  %v1164 = vpop.f32.mrb[0].mxu0
  %1165 = vdwg.mxu0
  %v1166 = vadd.f32 %v911, %v1104
  %v1167 = vadd.f32 %v914, %v1107
  %v1168 = vadd.f32 %v919, %v1112
  %v1169 = vadd.f32 %v922, %v1115
  %v1170 = vadd.f32 %v927, %v1120
  %v1171 = vadd.f32 %v930, %v1123
  %v1172 = vadd.f32 %v935, %v1128
  %v1173 = vadd.f32 %v938, %v1131
  %v1174 = vadd.f32 %v943, %v1136
  %v1175 = vadd.f32 %v946, %v1139
  %v1176 = vadd.f32 %v951, %v1144
  %v1177 = vadd.f32 %v954, %v1147
  %v1178 = vadd.f32 %v959, %v1152
  %v1179 = vadd.f32 %v962, %v1155
  %v1180 = vadd.f32 %v967, %v1160
  %v1181 = vadd.f32 %v970, %v1163
  %v1182 = vld [vmem:[#allocation2] sm:$0xfe]
  %v1183 = vld [vmem:[#allocation2 + $0x8] sm:$0xfe]
  %v1184 = vld [vmem:[#allocation2 + $0x10] sm:$0x1]
  %v1185 = vld [vmem:[#allocation2 + $0x18] sm:$0x1]
  %v1186 = vld [vmem:[#allocation2 + $0x20] sm:$0xfe]
  %v1187 = vld [vmem:[#allocation2 + $0x28] sm:$0xfe]
  %v1188 = vld [vmem:[#allocation2 + $0x30] sm:$0x1]
  %v1189 = vld [vmem:[#allocation2 + $0x38] sm:$0x1]
  %v1190 = vld [vmem:[#allocation2 + $0x40] sm:$0xfe]
  %v1191 = vld [vmem:[#allocation2 + $0x48] sm:$0xfe]
  %v1192 = vld [vmem:[#allocation2 + $0x50] sm:$0x1]
  %v1193 = vld [vmem:[#allocation2 + $0x58] sm:$0x1]
  %v1194 = vld [vmem:[#allocation2 + $0x60] sm:$0xfe]
  %v1195 = vld [vmem:[#allocation2 + $0x68] sm:$0xfe]
  %v1196 = vld [vmem:[#allocation2 + $0x70] sm:$0x1]
  %v1197 = vld [vmem:[#allocation2 + $0x78] sm:$0x1]
  %v1198 = vld [vmem:[#allocation2 + $0x80] sm:$0xfe]
  %v1199 = vld [vmem:[#allocation2 + $0x88] sm:$0xfe]
  %v1200 = vld [vmem:[#allocation2 + $0x90] sm:$0x1]
  %v1201 = vld [vmem:[#allocation2 + $0x98] sm:$0x1]
  %v1202 = vld [vmem:[#allocation2 + $0xa0] sm:$0xfe]
  %v1203 = vld [vmem:[#allocation2 + $0xa8] sm:$0xfe]
  %v1204 = vld [vmem:[#allocation2 + $0xb0] sm:$0x1]
  %v1205 = vld [vmem:[#allocation2 + $0xb8] sm:$0x1]
  %v1206 = vld [vmem:[#allocation2 + $0xc0] sm:$0xfe]
  %v1207 = vld [vmem:[#allocation2 + $0xc8] sm:$0xfe]
  %v1208 = vld [vmem:[#allocation2 + $0xd0] sm:$0x1]
  %v1209 = vld [vmem:[#allocation2 + $0xd8] sm:$0x1]
  %v1210 = vld [vmem:[#allocation2 + $0xe0] sm:$0xfe]
  %v1211 = vld [vmem:[#allocation2 + $0xe8] sm:$0xfe]
  %v1212 = vld [vmem:[#allocation2 + $0xf0] sm:$0x1]
  %v1213 = vld [vmem:[#allocation2 + $0xf8] sm:$0x1]
  %v1214 = vld [vmem:[#allocation2 + $0x140] sm:$0xfe]
  %v1215 = vld [vmem:[#allocation2 + $0x148] sm:$0xfe]
  %v1216 = vld [vmem:[#allocation2 + $0x150] sm:$0x1]
  %v1217 = vld [vmem:[#allocation2 + $0x158] sm:$0x1]
  %v1218 = vld [vmem:[#allocation2 + $0x160] sm:$0xfe]
  %v1219 = vld [vmem:[#allocation2 + $0x168] sm:$0xfe]
  %v1220 = vld [vmem:[#allocation2 + $0x170] sm:$0x1]
  %v1221 = vld [vmem:[#allocation2 + $0x178] sm:$0x1]
  %v1222 = vld [vmem:[#allocation2 + $0x180] sm:$0xfe]
  %v1223 = vld [vmem:[#allocation2 + $0x188] sm:$0xfe]
  %v1224 = vld [vmem:[#allocation2 + $0x190] sm:$0x1]
  %v1225 = vld [vmem:[#allocation2 + $0x198] sm:$0x1]
  %v1226 = vld [vmem:[#allocation2 + $0x1a0] sm:$0xfe]
  %v1227 = vld [vmem:[#allocation2 + $0x1a8] sm:$0xfe]
  %v1228 = vld [vmem:[#allocation2 + $0x1b0] sm:$0x1]
  %v1229 = vld [vmem:[#allocation2 + $0x1b8] sm:$0x1]
  %v1230 = vld [vmem:[#allocation2 + $0x1c0] sm:$0xfe]
  %v1231 = vld [vmem:[#allocation2 + $0x1c8] sm:$0xfe]
  %v1232 = vld [vmem:[#allocation2 + $0x1d0] sm:$0x1]
  %v1233 = vld [vmem:[#allocation2 + $0x1d8] sm:$0x1]
  %v1234 = vld [vmem:[#allocation2 + $0x1e0] sm:$0xfe]
  %v1235 = vld [vmem:[#allocation2 + $0x1e8] sm:$0xfe]
  %v1236 = vld [vmem:[#allocation2 + $0x1f0] sm:$0x1]
  %v1237 = vld [vmem:[#allocation2 + $0x1f8] sm:$0x1]
  %v1238 = vld [vmem:[#allocation2 + $0x200] sm:$0xfe]
  %v1239 = vld [vmem:[#allocation2 + $0x208] sm:$0xfe]
  %v1240 = vld [vmem:[#allocation2 + $0x210] sm:$0x1]
  %v1241 = vld [vmem:[#allocation2 + $0x218] sm:$0x1]
  %v1242 = vld [vmem:[#allocation2 + $0x220] sm:$0xfe]
  %v1243 = vld [vmem:[#allocation2 + $0x228] sm:$0xfe]
  %v1244 = vld [vmem:[#allocation2 + $0x230] sm:$0x1]
  %v1245 = vld [vmem:[#allocation2 + $0x238] sm:$0x1]
  %vm1310 = vcmask 1046528
  %v1311 = vrot.slane %v1182, 1
  %v1312 = vrot.slane %v1184, 1
  %v1313 = vsel %vm1310, %v1311, %v1312
  %v1314 = vrot.slane %v1183, 1
  %v1315 = vrot.slane %v1185, 1
  %v1316 = vsel %vm1310, %v1314, %v1315
  %v1317 = vrot.slane %v1186, 1
  %v1318 = vrot.slane %v1188, 1
  %v1319 = vsel %vm1310, %v1317, %v1318
  %v1320 = vrot.slane %v1187, 1
  %v1321 = vrot.slane %v1189, 1
  %v1322 = vsel %vm1310, %v1320, %v1321
  %v1323 = vrot.slane %v1190, 1
  %v1324 = vrot.slane %v1192, 1
  %v1325 = vsel %vm1310, %v1323, %v1324
  %v1326 = vrot.slane %v1191, 1
  %v1327 = vrot.slane %v1193, 1
  %v1328 = vsel %vm1310, %v1326, %v1327
  %v1329 = vrot.slane %v1194, 1
  %v1330 = vrot.slane %v1196, 1
  %v1331 = vsel %vm1310, %v1329, %v1330
  %v1332 = vrot.slane %v1195, 1
  %v1333 = vrot.slane %v1197, 1
  %v1334 = vsel %vm1310, %v1332, %v1333
  %v1335 = vrot.slane %v1198, 1
  %v1336 = vrot.slane %v1200, 1
  %v1337 = vsel %vm1310, %v1335, %v1336
  %v1338 = vrot.slane %v1199, 1
  %v1339 = vrot.slane %v1201, 1
  %v1340 = vsel %vm1310, %v1338, %v1339
  %v1341 = vrot.slane %v1202, 1
  %v1342 = vrot.slane %v1204, 1
  %v1343 = vsel %vm1310, %v1341, %v1342
  %v1344 = vrot.slane %v1203, 1
  %v1345 = vrot.slane %v1205, 1
  %v1346 = vsel %vm1310, %v1344, %v1345
  %v1347 = vrot.slane %v1206, 1
  %v1348 = vrot.slane %v1208, 1
  %v1349 = vsel %vm1310, %v1347, %v1348
  %v1350 = vrot.slane %v1207, 1
  %v1351 = vrot.slane %v1209, 1
  %v1352 = vsel %vm1310, %v1350, %v1351
  %v1353 = vrot.slane %v1210, 1
  %v1354 = vrot.slane %v1212, 1
  %v1355 = vsel %vm1310, %v1353, %v1354
  %v1356 = vrot.slane %v1211, 1
  %v1357 = vrot.slane %v1213, 1
  %v1358 = vsel %vm1310, %v1356, %v1357
  %v1359 = vrot.slane %v1214, 1
  %v1360 = vrot.slane %v1216, 1
  %v1361 = vsel %vm1310, %v1359, %v1360
  %v1362 = vrot.slane %v1215, 1
  %v1363 = vrot.slane %v1217, 1
  %v1364 = vsel %vm1310, %v1362, %v1363
  %v1365 = vrot.slane %v1218, 1
  %v1366 = vrot.slane %v1220, 1
  %v1367 = vsel %vm1310, %v1365, %v1366
  %v1368 = vrot.slane %v1219, 1
  %v1369 = vrot.slane %v1221, 1
  %v1370 = vsel %vm1310, %v1368, %v1369
  %v1371 = vrot.slane %v1222, 1
  %v1372 = vrot.slane %v1224, 1
  %v1373 = vsel %vm1310, %v1371, %v1372
  %v1374 = vrot.slane %v1223, 1
  %v1375 = vrot.slane %v1225, 1
  %v1376 = vsel %vm1310, %v1374, %v1375
  %v1377 = vrot.slane %v1226, 1
  %v1378 = vrot.slane %v1228, 1
  %v1379 = vsel %vm1310, %v1377, %v1378
  %v1380 = vrot.slane %v1227, 1
  %v1381 = vrot.slane %v1229, 1
  %v1382 = vsel %vm1310, %v1380, %v1381
  %v1383 = vrot.slane %v1230, 1
  %v1384 = vrot.slane %v1232, 1
  %v1385 = vsel %vm1310, %v1383, %v1384
  %v1386 = vrot.slane %v1231, 1
  %v1387 = vrot.slane %v1233, 1
  %v1388 = vsel %vm1310, %v1386, %v1387
  %v1389 = vrot.slane %v1234, 1
  %v1390 = vrot.slane %v1236, 1
  %v1391 = vsel %vm1310, %v1389, %v1390
  %v1392 = vrot.slane %v1235, 1
  %v1393 = vrot.slane %v1237, 1
  %v1394 = vsel %vm1310, %v1392, %v1393
  %v1395 = vrot.slane %v1238, 1
  %v1396 = vrot.slane %v1240, 1
  %v1397 = vsel %vm1310, %v1395, %v1396
  %v1398 = vrot.slane %v1239, 1
  %v1399 = vrot.slane %v1241, 1
  %v1400 = vsel %vm1310, %v1398, %v1399
  %v1401 = vrot.slane %v1242, 1
  %v1402 = vrot.slane %v1244, 1
  %v1403 = vsel %vm1310, %v1401, %v1402
  %v1404 = vrot.slane %v1243, 1
  %v1405 = vrot.slane %v1245, 1
  %v1406 = vsel %vm1310, %v1404, %v1405
  %v1439 = vpack.c.bf16 %v1319, %v1313
  %v1440 = vpack.c.bf16 %v1322, %v1316
  %v1441 = vpack.c.bf16 %v1331, %v1325
  %v1442 = vpack.c.bf16 %v1334, %v1328
  %v1443 = vpack.c.bf16 %v1343, %v1337
  %v1444 = vpack.c.bf16 %v1346, %v1340
  %v1445 = vpack.c.bf16 %v1355, %v1349
  %v1446 = vpack.c.bf16 %v1358, %v1352
  %v1447 = vpack.c.bf16 %v1367, %v1361
  %v1448 = vpack.c.bf16 %v1370, %v1364
  %v1449 = vpack.c.bf16 %v1379, %v1373
  %v1450 = vpack.c.bf16 %v1382, %v1376
  %v1451 = vpack.c.bf16 %v1391, %v1385
  %v1452 = vpack.c.bf16 %v1394, %v1388
  %v1453 = vpack.c.bf16 %v1403, %v1397
  %v1454 = vpack.c.bf16 %v1406, %v1400
  %v1455 = vunpack.c.l.bf16 %v1439
  %v1456 = vunpack.c.l.bf16 %v1440
  %v1457 = vunpack.c.h.bf16 %v1439
  %v1458 = vunpack.c.h.bf16 %v1440
  %v1459 = vunpack.c.l.bf16 %v1441
  %v1460 = vunpack.c.l.bf16 %v1442
  %v1461 = vunpack.c.h.bf16 %v1441
  %v1462 = vunpack.c.h.bf16 %v1442
  %v1463 = vunpack.c.l.bf16 %v1443
  %v1464 = vunpack.c.l.bf16 %v1444
  %v1465 = vunpack.c.h.bf16 %v1443
  %v1466 = vunpack.c.h.bf16 %v1444
  %v1467 = vunpack.c.l.bf16 %v1445
  %v1468 = vunpack.c.l.bf16 %v1446
  %v1469 = vunpack.c.h.bf16 %v1445
  %v1470 = vunpack.c.h.bf16 %v1446
  %v1471 = vunpack.c.l.bf16 %v1447
  %v1472 = vunpack.c.l.bf16 %v1448
  %v1473 = vunpack.c.h.bf16 %v1447
  %v1474 = vunpack.c.h.bf16 %v1448
  %v1475 = vunpack.c.l.bf16 %v1449
  %v1476 = vunpack.c.l.bf16 %v1450
  %v1477 = vunpack.c.h.bf16 %v1449
  %v1478 = vunpack.c.h.bf16 %v1450
  %v1479 = vunpack.c.l.bf16 %v1451
  %v1480 = vunpack.c.l.bf16 %v1452
  %v1481 = vunpack.c.h.bf16 %v1451
  %v1482 = vunpack.c.h.bf16 %v1452
  %v1483 = vunpack.c.l.bf16 %v1453
  %v1484 = vunpack.c.l.bf16 %v1454
  %v1485 = vunpack.c.h.bf16 %v1453
  %v1486 = vunpack.c.h.bf16 %v1454
  %v1487 = vsub.f32 %v1313, %v1455
  %v1488 = vsub.f32 %v1316, %v1456
  %v1489 = vsub.f32 %v1319, %v1457
  %v1490 = vsub.f32 %v1322, %v1458
  %v1491 = vsub.f32 %v1325, %v1459
  %v1492 = vsub.f32 %v1328, %v1460
  %v1493 = vsub.f32 %v1331, %v1461
  %v1494 = vsub.f32 %v1334, %v1462
  %v1495 = vsub.f32 %v1337, %v1463
  %v1496 = vsub.f32 %v1340, %v1464
  %v1497 = vsub.f32 %v1343, %v1465
  %v1498 = vsub.f32 %v1346, %v1466
  %v1499 = vsub.f32 %v1349, %v1467
  %v1500 = vsub.f32 %v1352, %v1468
  %v1501 = vsub.f32 %v1355, %v1469
  %v1502 = vsub.f32 %v1358, %v1470
  %v1503 = vsub.f32 %v1361, %v1471
  %v1504 = vsub.f32 %v1364, %v1472
  %v1505 = vsub.f32 %v1367, %v1473
  %v1506 = vsub.f32 %v1370, %v1474
  %v1507 = vsub.f32 %v1373, %v1475
  %v1508 = vsub.f32 %v1376, %v1476
  %v1509 = vsub.f32 %v1379, %v1477
  %v1510 = vsub.f32 %v1382, %v1478
  %v1511 = vsub.f32 %v1385, %v1479
  %v1512 = vsub.f32 %v1388, %v1480
  %v1513 = vsub.f32 %v1391, %v1481
  %v1514 = vsub.f32 %v1394, %v1482
  %v1515 = vsub.f32 %v1397, %v1483
  %v1516 = vsub.f32 %v1400, %v1484
  %v1517 = vsub.f32 %v1403, %v1485
  %v1518 = vsub.f32 %v1406, %v1486
  %v1519 = vpack.c.bf16 %v1489, %v1487
  %v1520 = vpack.c.bf16 %v1490, %v1488
  %v1521 = vpack.c.bf16 %v1493, %v1491
  %v1522 = vpack.c.bf16 %v1494, %v1492
  %v1523 = vpack.c.bf16 %v1497, %v1495
  %v1524 = vpack.c.bf16 %v1498, %v1496
  %v1525 = vpack.c.bf16 %v1501, %v1499
  %v1526 = vpack.c.bf16 %v1502, %v1500
  %v1527 = vpack.c.bf16 %v1505, %v1503
  %v1528 = vpack.c.bf16 %v1506, %v1504
  %v1529 = vpack.c.bf16 %v1509, %v1507
  %v1530 = vpack.c.bf16 %v1510, %v1508
  %v1531 = vpack.c.bf16 %v1513, %v1511
  %v1532 = vpack.c.bf16 %v1514, %v1512
  %v1533 = vpack.c.bf16 %v1517, %v1515
  %v1534 = vpack.c.bf16 %v1518, %v1516
  %s1535 = scalar_lea.vmem %s1, 128
  %v1536 = vld [vmem:[%s1535] sm:$0xf]
  %v1537 = vld [vmem:[%s1535 + $0x4] sm:$0xf]
  %v1538 = vld [vmem:[%s1535 + $0x8] sm:$0xf]
  %v1539 = vld [vmem:[%s1535 + $0xc] sm:$0xf]
  %v1540 = vld [vmem:[%s1535 + $0x10] sm:$0xf]
  %v1541 = vld [vmem:[%s1535 + $0x14] sm:$0xf]
  %v1542 = vld [vmem:[%s1535 + $0x18] sm:$0xf]
  %v1543 = vld [vmem:[%s1535 + $0x1c] sm:$0xf]
  %v1544 = vld [vmem:[%s1535 + $0x20] sm:$0xf]
  %v1545 = vld [vmem:[%s1535 + $0x24] sm:$0xf]
  %v1546 = vld [vmem:[%s1535 + $0x28] sm:$0xf]
  %v1547 = vld [vmem:[%s1535 + $0x2c] sm:$0xf]
  %v1548 = vld [vmem:[%s1535 + $0x30] sm:$0xf]
  %v1549 = vld [vmem:[%s1535 + $0x34] sm:$0xf]
  %v1550 = vld [vmem:[%s1535 + $0x38] sm:$0xf]
  %v1551 = vld [vmem:[%s1535 + $0x3c] sm:$0xf]
  %v1552 = vld [vmem:[%s1535 + $0x40] sm:$0xf]
  %v1553 = vld [vmem:[%s1535 + $0x44] sm:$0xf]
  %v1554 = vld [vmem:[%s1535 + $0x48] sm:$0xf]
  %v1555 = vld [vmem:[%s1535 + $0x4c] sm:$0xf]
  %v1556 = vld [vmem:[%s1535 + $0x50] sm:$0xf]
  %v1557 = vld [vmem:[%s1535 + $0x54] sm:$0xf]
  %v1558 = vld [vmem:[%s1535 + $0x58] sm:$0xf]
  %v1559 = vld [vmem:[%s1535 + $0x5c] sm:$0xf]
  %v1560 = vld [vmem:[%s1535 + $0x60] sm:$0xf]
  %v1561 = vld [vmem:[%s1535 + $0x64] sm:$0xf]
  %v1562 = vld [vmem:[%s1535 + $0x68] sm:$0xf]
  %v1563 = vld [vmem:[%s1535 + $0x6c] sm:$0xf]
  %v1564 = vld [vmem:[%s1535 + $0x70] sm:$0xf]
  %v1565 = vld [vmem:[%s1535 + $0x74] sm:$0xf]
  %v1566 = vld [vmem:[%s1535 + $0x78] sm:$0xf]
  %v1567 = vld [vmem:[%s1535 + $0x7c] sm:$0xf]
  %s1568 = scalar_lea.vmem %s2, 128
  %v1569 = vld [vmem:[%s1568] sm:$0xf]
  %v1570 = vld [vmem:[%s1568 + $0x4] sm:$0xf]
  %v1571 = vld [vmem:[%s1568 + $0x8] sm:$0xf]
  %v1572 = vld [vmem:[%s1568 + $0xc] sm:$0xf]
  %v1573 = vld [vmem:[%s1568 + $0x10] sm:$0xf]
  %v1574 = vld [vmem:[%s1568 + $0x14] sm:$0xf]
  %v1575 = vld [vmem:[%s1568 + $0x18] sm:$0xf]
  %v1576 = vld [vmem:[%s1568 + $0x1c] sm:$0xf]
  %v1577 = vld [vmem:[%s1568 + $0x20] sm:$0xf]
  %v1578 = vld [vmem:[%s1568 + $0x24] sm:$0xf]
  %v1579 = vld [vmem:[%s1568 + $0x28] sm:$0xf]
  %v1580 = vld [vmem:[%s1568 + $0x2c] sm:$0xf]
  %v1581 = vld [vmem:[%s1568 + $0x30] sm:$0xf]
  %v1582 = vld [vmem:[%s1568 + $0x34] sm:$0xf]
  %v1583 = vld [vmem:[%s1568 + $0x38] sm:$0xf]
  %v1584 = vld [vmem:[%s1568 + $0x3c] sm:$0xf]
  %v1585 = vld [vmem:[%s1568 + $0x40] sm:$0xf]
  %v1586 = vld [vmem:[%s1568 + $0x44] sm:$0xf]
  %v1587 = vld [vmem:[%s1568 + $0x48] sm:$0xf]
  %v1588 = vld [vmem:[%s1568 + $0x4c] sm:$0xf]
  %v1589 = vld [vmem:[%s1568 + $0x50] sm:$0xf]
  %v1590 = vld [vmem:[%s1568 + $0x54] sm:$0xf]
  %v1591 = vld [vmem:[%s1568 + $0x58] sm:$0xf]
  %v1592 = vld [vmem:[%s1568 + $0x5c] sm:$0xf]
  %v1593 = vld [vmem:[%s1568 + $0x60] sm:$0xf]
  %v1594 = vld [vmem:[%s1568 + $0x64] sm:$0xf]
  %v1595 = vld [vmem:[%s1568 + $0x68] sm:$0xf]
  %v1596 = vld [vmem:[%s1568 + $0x6c] sm:$0xf]
  %v1597 = vld [vmem:[%s1568 + $0x70] sm:$0xf]
  %v1598 = vld [vmem:[%s1568 + $0x74] sm:$0xf]
  %v1599 = vld [vmem:[%s1568 + $0x78] sm:$0xf]
  %v1600 = vld [vmem:[%s1568 + $0x7c] sm:$0xf]
  %v1633 = vunpack.c.l.b16 %v1536
  %v1634 = vunpack.c.l.b16 %v1537
  %v1635 = vunpack.c.l.b16 %v1538
  %v1636 = vunpack.c.l.b16 %v1539
  %v1637 = vunpack.c.l.b16 %v1540
  %v1638 = vunpack.c.l.b16 %v1541
  %v1639 = vunpack.c.l.b16 %v1542
  %v1640 = vunpack.c.l.b16 %v1543
  %v1641 = vunpack.c.l.b16 %v1544
  %v1642 = vunpack.c.l.b16 %v1545
  %v1643 = vunpack.c.l.b16 %v1546
  %v1644 = vunpack.c.l.b16 %v1547
  %v1645 = vunpack.c.l.b16 %v1548
  %v1646 = vunpack.c.l.b16 %v1549
  %v1647 = vunpack.c.l.b16 %v1550
  %v1648 = vunpack.c.l.b16 %v1551
  %v1649 = vunpack.c.l.b16 %v1552
  %v1650 = vunpack.c.l.b16 %v1553
  %v1651 = vunpack.c.l.b16 %v1554
  %v1652 = vunpack.c.l.b16 %v1555
  %v1653 = vunpack.c.l.b16 %v1556
  %v1654 = vunpack.c.l.b16 %v1557
  %v1655 = vunpack.c.l.b16 %v1558
  %v1656 = vunpack.c.l.b16 %v1559
  %v1657 = vunpack.c.l.b16 %v1560
  %v1658 = vunpack.c.l.b16 %v1561
  %v1659 = vunpack.c.l.b16 %v1562
  %v1660 = vunpack.c.l.b16 %v1563
  %v1661 = vunpack.c.l.b16 %v1564
  %v1662 = vunpack.c.l.b16 %v1565
  %v1663 = vunpack.c.l.b16 %v1566
  %v1664 = vunpack.c.l.b16 %v1567
  %v1665 = vpack.c.b16 %v1634, %v1633
  %v1666 = vpack.c.b16 %v1636, %v1635
  %v1667 = vpack.c.b16 %v1638, %v1637
  %v1668 = vpack.c.b16 %v1640, %v1639
  %v1669 = vpack.c.b16 %v1642, %v1641
  %v1670 = vpack.c.b16 %v1644, %v1643
  %v1671 = vpack.c.b16 %v1646, %v1645
  %v1672 = vpack.c.b16 %v1648, %v1647
  %v1673 = vpack.c.b16 %v1650, %v1649
  %v1674 = vpack.c.b16 %v1652, %v1651
  %v1675 = vpack.c.b16 %v1654, %v1653
  %v1676 = vpack.c.b16 %v1656, %v1655
  %v1677 = vpack.c.b16 %v1658, %v1657
  %v1678 = vpack.c.b16 %v1660, %v1659
  %v1679 = vpack.c.b16 %v1662, %v1661
  %v1680 = vpack.c.b16 %v1664, %v1663
  %1697 = vmatprep.subr.bf16.mxu0 0
  %1698 = vmatpush1.bf16.msra.mxu0 %v1665
  %1699 = vmatprep.subr.bf16.mxu0 0
  %1700 = vmatpush1.bf16.msra.mxu0 %v1666
  %1701 = vmatprep.subr.bf16.mxu0 0
  %1702 = vmatpush1.bf16.msra.mxu0 %v1667
  %1703 = vmatprep.subr.bf16.mxu0 0
  %1704 = vmatpush1.bf16.msra.mxu0 %v1668
  %1705 = vmatprep.subr.bf16.mxu0 0
  %1706 = vmatpush1.bf16.msra.mxu0 %v1669
  %1707 = vmatprep.subr.bf16.mxu0 0
  %1708 = vmatpush1.bf16.msra.mxu0 %v1670
  %1709 = vmatprep.subr.bf16.mxu0 0
  %1710 = vmatpush1.bf16.msra.mxu0 %v1671
  %1711 = vmatprep.subr.bf16.mxu0 0
  %1712 = vmatpush1.bf16.msra.mxu0 %v1672
  %1713 = vmatprep.subr.bf16.mxu0 0
  %1714 = vmatpush1.bf16.msra.mxu0 %v1673
  %1715 = vmatprep.subr.bf16.mxu0 0
  %1716 = vmatpush1.bf16.msra.mxu0 %v1674
  %1717 = vmatprep.subr.bf16.mxu0 0
  %1718 = vmatpush1.bf16.msra.mxu0 %v1675
  %1719 = vmatprep.subr.bf16.mxu0 0
  %1720 = vmatpush1.bf16.msra.mxu0 %v1676
  %1721 = vmatprep.subr.bf16.mxu0 0
  %1722 = vmatpush1.bf16.msra.mxu0 %v1677
  %1723 = vmatprep.subr.bf16.mxu0 0
  %1724 = vmatpush1.bf16.msra.mxu0 %v1678
  %1725 = vmatprep.subr.bf16.mxu0 0
  %1726 = vmatpush1.bf16.msra.mxu0 %v1679
  %1727 = vmatprep.subr.bf16.mxu0 0
  %1728 = vmatpush1.bf16.msra.mxu0 %v1680
  %1729 = vmatprep.mubr.bf16.mxu0 %v1440
  %1730 = vmatmul.mubr.bf16.gmra.mrb[0].mxu0 %v1439
  %v1731 = vpop.f32.mrb[0].mxu0
  %v1732 = vadd.f32 0.0, %v1731
  %v1733 = vpop.f32.mrb[0].mxu0
  %v1734 = vpop.f32.mrb[0].mxu0
  %v1735 = vadd.f32 0.0, %v1734
  %v1736 = vpop.f32.mrb[0].mxu0
  %1737 = vmatprep.mubr.bf16.mxu0 %v1442
  %1738 = vmatmul.mubr.bf16.gmra.mrb[0].mxu0 %v1441
  %v1739 = vpop.f32.mrb[0].mxu0
  %v1740 = vadd.f32 0.0, %v1739
  %v1741 = vpop.f32.mrb[0].mxu0
  %v1742 = vpop.f32.mrb[0].mxu0
  %v1743 = vadd.f32 0.0, %v1742
  %v1744 = vpop.f32.mrb[0].mxu0
  %1745 = vmatprep.mubr.bf16.mxu0 %v1444
  %1746 = vmatmul.mubr.bf16.gmra.mrb[0].mxu0 %v1443
  %v1747 = vpop.f32.mrb[0].mxu0
  %v1748 = vadd.f32 0.0, %v1747
  %v1749 = vpop.f32.mrb[0].mxu0
  %v1750 = vpop.f32.mrb[0].mxu0
  %v1751 = vadd.f32 0.0, %v1750
  %v1752 = vpop.f32.mrb[0].mxu0
  %1753 = vmatprep.mubr.bf16.mxu0 %v1446
  %1754 = vmatmul.mubr.bf16.gmra.mrb[0].mxu0 %v1445
  %v1755 = vpop.f32.mrb[0].mxu0
  %v1756 = vadd.f32 0.0, %v1755
  %v1757 = vpop.f32.mrb[0].mxu0
  %v1758 = vpop.f32.mrb[0].mxu0
  %v1759 = vadd.f32 0.0, %v1758
  %v1760 = vpop.f32.mrb[0].mxu0
  %1761 = vmatprep.mubr.bf16.mxu0 %v1448
  %1762 = vmatmul.mubr.bf16.gmra.mrb[0].mxu0 %v1447
  %v1763 = vpop.f32.mrb[0].mxu0
  %v1764 = vadd.f32 0.0, %v1763
  %v1765 = vpop.f32.mrb[0].mxu0
  %v1766 = vpop.f32.mrb[0].mxu0
  %v1767 = vadd.f32 0.0, %v1766
  %v1768 = vpop.f32.mrb[0].mxu0
  %1769 = vmatprep.mubr.bf16.mxu0 %v1450
  %1770 = vmatmul.mubr.bf16.gmra.mrb[0].mxu0 %v1449
  %v1771 = vpop.f32.mrb[0].mxu0
  %v1772 = vadd.f32 0.0, %v1771
  %v1773 = vpop.f32.mrb[0].mxu0
  %v1774 = vpop.f32.mrb[0].mxu0
  %v1775 = vadd.f32 0.0, %v1774
  %v1776 = vpop.f32.mrb[0].mxu0
  %1777 = vmatprep.mubr.bf16.mxu0 %v1452
  %1778 = vmatmul.mubr.bf16.gmra.mrb[0].mxu0 %v1451
  %v1779 = vpop.f32.mrb[0].mxu0
  %v1780 = vadd.f32 0.0, %v1779
  %v1781 = vpop.f32.mrb[0].mxu0
  %v1782 = vpop.f32.mrb[0].mxu0
  %v1783 = vadd.f32 0.0, %v1782
  %v1784 = vpop.f32.mrb[0].mxu0
  %1785 = vmatprep.mubr.bf16.mxu0 %v1454
  %1786 = vmatmul.mubr.bf16.gmra.mrb[0].mxu0 %v1453
  %v1787 = vpop.f32.mrb[0].mxu0
  %v1788 = vadd.f32 0.0, %v1787
  %v1789 = vpop.f32.mrb[0].mxu0
  %v1790 = vpop.f32.mrb[0].mxu0
  %v1791 = vadd.f32 0.0, %v1790
  %v1792 = vpop.f32.mrb[0].mxu0
  %1793 = vdwg.mxu0
  %v1794 = vadd.f32 %v1166, %v1732
  %v1795 = vadd.f32 %v1167, %v1735
  %v1796 = vadd.f32 %v1168, %v1740
  %v1797 = vadd.f32 %v1169, %v1743
  %v1798 = vadd.f32 %v1170, %v1748
  %v1799 = vadd.f32 %v1171, %v1751
  %v1800 = vadd.f32 %v1172, %v1756
  %v1801 = vadd.f32 %v1173, %v1759
  %v1802 = vadd.f32 %v1174, %v1764
  %v1803 = vadd.f32 %v1175, %v1767
  %v1804 = vadd.f32 %v1176, %v1772
  %v1805 = vadd.f32 %v1177, %v1775
  %v1806 = vadd.f32 %v1178, %v1780
  %v1807 = vadd.f32 %v1179, %v1783
  %v1808 = vadd.f32 %v1180, %v1788
  %v1809 = vadd.f32 %v1181, %v1791
  %1810 = vmatprep.subr.bf16.mxu0 0
  %1811 = vmatpush1.bf16.msra.mxu0 %v1665
  %1812 = vmatprep.subr.bf16.mxu0 0
  %1813 = vmatpush1.bf16.msra.mxu0 %v1666
  %1814 = vmatprep.subr.bf16.mxu0 0
  %1815 = vmatpush1.bf16.msra.mxu0 %v1667
  %1816 = vmatprep.subr.bf16.mxu0 0
  %1817 = vmatpush1.bf16.msra.mxu0 %v1668
  %1818 = vmatprep.subr.bf16.mxu0 0
  %1819 = vmatpush1.bf16.msra.mxu0 %v1669
  %1820 = vmatprep.subr.bf16.mxu0 0
  %1821 = vmatpush1.bf16.msra.mxu0 %v1670
  %1822 = vmatprep.subr.bf16.mxu0 0
  %1823 = vmatpush1.bf16.msra.mxu0 %v1671
  %1824 = vmatprep.subr.bf16.mxu0 0
  %1825 = vmatpush1.bf16.msra.mxu0 %v1672
  %1826 = vmatprep.subr.bf16.mxu0 0
  %1827 = vmatpush1.bf16.msra.mxu0 %v1673
  %1828 = vmatprep.subr.bf16.mxu0 0
  %1829 = vmatpush1.bf16.msra.mxu0 %v1674
  %1830 = vmatprep.subr.bf16.mxu0 0
  %1831 = vmatpush1.bf16.msra.mxu0 %v1675
  %1832 = vmatprep.subr.bf16.mxu0 0
  %1833 = vmatpush1.bf16.msra.mxu0 %v1676
  %1834 = vmatprep.subr.bf16.mxu0 0
  %1835 = vmatpush1.bf16.msra.mxu0 %v1677
  %1836 = vmatprep.subr.bf16.mxu0 0
  %1837 = vmatpush1.bf16.msra.mxu0 %v1678
  %1838 = vmatprep.subr.bf16.mxu0 0
  %1839 = vmatpush1.bf16.msra.mxu0 %v1679
  %1840 = vmatprep.subr.bf16.mxu0 0
  %1841 = vmatpush1.bf16.msra.mxu0 %v1680
  %1842 = vmatprep.mubr.bf16.mxu0 %v1520
  %1843 = vmatmul.mubr.bf16.gmra.mrb[0].mxu0 %v1519
  %v1844 = vpop.f32.mrb[0].mxu0
  %v1845 = vadd.f32 0.0, %v1844
  %v1846 = vpop.f32.mrb[0].mxu0
  %v1847 = vpop.f32.mrb[0].mxu0
  %v1848 = vadd.f32 0.0, %v1847
  %v1849 = vpop.f32.mrb[0].mxu0
  %1850 = vmatprep.mubr.bf16.mxu0 %v1522
  %1851 = vmatmul.mubr.bf16.gmra.mrb[0].mxu0 %v1521
  %v1852 = vpop.f32.mrb[0].mxu0
  %v1853 = vadd.f32 0.0, %v1852
  %v1854 = vpop.f32.mrb[0].mxu0
  %v1855 = vpop.f32.mrb[0].mxu0
  %v1856 = vadd.f32 0.0, %v1855
  %v1857 = vpop.f32.mrb[0].mxu0
  %1858 = vmatprep.mubr.bf16.mxu0 %v1524
  %1859 = vmatmul.mubr.bf16.gmra.mrb[0].mxu0 %v1523
  %v1860 = vpop.f32.mrb[0].mxu0
  %v1861 = vadd.f32 0.0, %v1860
  %v1862 = vpop.f32.mrb[0].mxu0
  %v1863 = vpop.f32.mrb[0].mxu0
  %v1864 = vadd.f32 0.0, %v1863
  %v1865 = vpop.f32.mrb[0].mxu0
  %1866 = vmatprep.mubr.bf16.mxu0 %v1526
  %1867 = vmatmul.mubr.bf16.gmra.mrb[0].mxu0 %v1525
  %v1868 = vpop.f32.mrb[0].mxu0
  %v1869 = vadd.f32 0.0, %v1868
  %v1870 = vpop.f32.mrb[0].mxu0
  %v1871 = vpop.f32.mrb[0].mxu0
  %v1872 = vadd.f32 0.0, %v1871
  %v1873 = vpop.f32.mrb[0].mxu0
  %1874 = vmatprep.mubr.bf16.mxu0 %v1528
  %1875 = vmatmul.mubr.bf16.gmra.mrb[0].mxu0 %v1527
  %v1876 = vpop.f32.mrb[0].mxu0
  %v1877 = vadd.f32 0.0, %v1876
  %v1878 = vpop.f32.mrb[0].mxu0
  %v1879 = vpop.f32.mrb[0].mxu0
  %v1880 = vadd.f32 0.0, %v1879
  %v1881 = vpop.f32.mrb[0].mxu0
  %1882 = vmatprep.mubr.bf16.mxu0 %v1530
  %1883 = vmatmul.mubr.bf16.gmra.mrb[0].mxu0 %v1529
  %v1884 = vpop.f32.mrb[0].mxu0
  %v1885 = vadd.f32 0.0, %v1884
  %v1886 = vpop.f32.mrb[0].mxu0
  %v1887 = vpop.f32.mrb[0].mxu0
  %v1888 = vadd.f32 0.0, %v1887
  %v1889 = vpop.f32.mrb[0].mxu0
  %1890 = vmatprep.mubr.bf16.mxu0 %v1532
  %1891 = vmatmul.mubr.bf16.gmra.mrb[0].mxu0 %v1531
  %v1892 = vpop.f32.mrb[0].mxu0
  %v1893 = vadd.f32 0.0, %v1892
  %v1894 = vpop.f32.mrb[0].mxu0
  %v1895 = vpop.f32.mrb[0].mxu0
  %v1896 = vadd.f32 0.0, %v1895
  %v1897 = vpop.f32.mrb[0].mxu0
  %1898 = vmatprep.mubr.bf16.mxu0 %v1534
  %1899 = vmatmul.mubr.bf16.gmra.mrb[0].mxu0 %v1533
  %v1900 = vpop.f32.mrb[0].mxu0
  %v1901 = vadd.f32 0.0, %v1900
  %v1902 = vpop.f32.mrb[0].mxu0
  %v1903 = vpop.f32.mrb[0].mxu0
  %v1904 = vadd.f32 0.0, %v1903
  %v1905 = vpop.f32.mrb[0].mxu0
  %1906 = vdwg.mxu0
  %v1907 = vadd.f32 %v1794, %v1845
  %v1908 = vadd.f32 %v1795, %v1848
  %v1909 = vadd.f32 %v1796, %v1853
  %v1910 = vadd.f32 %v1797, %v1856
  %v1911 = vadd.f32 %v1798, %v1861
  %v1912 = vadd.f32 %v1799, %v1864
  %v1913 = vadd.f32 %v1800, %v1869
  %v1914 = vadd.f32 %v1801, %v1872
  %v1915 = vadd.f32 %v1802, %v1877
  %v1916 = vadd.f32 %v1803, %v1880
  %v1917 = vadd.f32 %v1804, %v1885
  %v1918 = vadd.f32 %v1805, %v1888
  %v1919 = vadd.f32 %v1806, %v1893
  %v1920 = vadd.f32 %v1807, %v1896
  %v1921 = vadd.f32 %v1808, %v1901
  %v1922 = vadd.f32 %v1809, %v1904
  %v1955 = vunpack.c.l.b16 %v1569
  %v1956 = vunpack.c.l.b16 %v1570
  %v1957 = vunpack.c.l.b16 %v1571
  %v1958 = vunpack.c.l.b16 %v1572
  %v1959 = vunpack.c.l.b16 %v1573
  %v1960 = vunpack.c.l.b16 %v1574
  %v1961 = vunpack.c.l.b16 %v1575
  %v1962 = vunpack.c.l.b16 %v1576
  %v1963 = vunpack.c.l.b16 %v1577
  %v1964 = vunpack.c.l.b16 %v1578
  %v1965 = vunpack.c.l.b16 %v1579
  %v1966 = vunpack.c.l.b16 %v1580
  %v1967 = vunpack.c.l.b16 %v1581
  %v1968 = vunpack.c.l.b16 %v1582
  %v1969 = vunpack.c.l.b16 %v1583
  %v1970 = vunpack.c.l.b16 %v1584
  %v1971 = vunpack.c.l.b16 %v1585
  %v1972 = vunpack.c.l.b16 %v1586
  %v1973 = vunpack.c.l.b16 %v1587
  %v1974 = vunpack.c.l.b16 %v1588
  %v1975 = vunpack.c.l.b16 %v1589
  %v1976 = vunpack.c.l.b16 %v1590
  %v1977 = vunpack.c.l.b16 %v1591
  %v1978 = vunpack.c.l.b16 %v1592
  %v1979 = vunpack.c.l.b16 %v1593
  %v1980 = vunpack.c.l.b16 %v1594
  %v1981 = vunpack.c.l.b16 %v1595
  %v1982 = vunpack.c.l.b16 %v1596
  %v1983 = vunpack.c.l.b16 %v1597
  %v1984 = vunpack.c.l.b16 %v1598
  %v1985 = vunpack.c.l.b16 %v1599
  %v1986 = vunpack.c.l.b16 %v1600
  %v1987 = vpack.c.b16 %v1956, %v1955
  %v1988 = vpack.c.b16 %v1958, %v1957
  %v1989 = vpack.c.b16 %v1960, %v1959
  %v1990 = vpack.c.b16 %v1962, %v1961
  %v1991 = vpack.c.b16 %v1964, %v1963
  %v1992 = vpack.c.b16 %v1966, %v1965
  %v1993 = vpack.c.b16 %v1968, %v1967
  %v1994 = vpack.c.b16 %v1970, %v1969
  %v1995 = vpack.c.b16 %v1972, %v1971
  %v1996 = vpack.c.b16 %v1974, %v1973
  %v1997 = vpack.c.b16 %v1976, %v1975
  %v1998 = vpack.c.b16 %v1978, %v1977
  %v1999 = vpack.c.b16 %v1980, %v1979
  %v2000 = vpack.c.b16 %v1982, %v1981
  %v2001 = vpack.c.b16 %v1984, %v1983
  %v2002 = vpack.c.b16 %v1986, %v1985
  %2019 = vmatprep.subr.bf16.mxu0 0
  %2020 = vmatpush1.bf16.msra.mxu0 %v1987
  %2021 = vmatprep.subr.bf16.mxu0 0
  %2022 = vmatpush1.bf16.msra.mxu0 %v1988
  %2023 = vmatprep.subr.bf16.mxu0 0
  %2024 = vmatpush1.bf16.msra.mxu0 %v1989
  %2025 = vmatprep.subr.bf16.mxu0 0
  %2026 = vmatpush1.bf16.msra.mxu0 %v1990
  %2027 = vmatprep.subr.bf16.mxu0 0
  %2028 = vmatpush1.bf16.msra.mxu0 %v1991
  %2029 = vmatprep.subr.bf16.mxu0 0
  %2030 = vmatpush1.bf16.msra.mxu0 %v1992
  %2031 = vmatprep.subr.bf16.mxu0 0
  %2032 = vmatpush1.bf16.msra.mxu0 %v1993
  %2033 = vmatprep.subr.bf16.mxu0 0
  %2034 = vmatpush1.bf16.msra.mxu0 %v1994
  %2035 = vmatprep.subr.bf16.mxu0 0
  %2036 = vmatpush1.bf16.msra.mxu0 %v1995
  %2037 = vmatprep.subr.bf16.mxu0 0
  %2038 = vmatpush1.bf16.msra.mxu0 %v1996
  %2039 = vmatprep.subr.bf16.mxu0 0
  %2040 = vmatpush1.bf16.msra.mxu0 %v1997
  %2041 = vmatprep.subr.bf16.mxu0 0
  %2042 = vmatpush1.bf16.msra.mxu0 %v1998
  %2043 = vmatprep.subr.bf16.mxu0 0
  %2044 = vmatpush1.bf16.msra.mxu0 %v1999
  %2045 = vmatprep.subr.bf16.mxu0 0
  %2046 = vmatpush1.bf16.msra.mxu0 %v2000
  %2047 = vmatprep.subr.bf16.mxu0 0
  %2048 = vmatpush1.bf16.msra.mxu0 %v2001
  %2049 = vmatprep.subr.bf16.mxu0 0
  %2050 = vmatpush1.bf16.msra.mxu0 %v2002
  %2051 = vmatprep.mubr.bf16.mxu0 %v1440
  %2052 = vmatmul.mubr.bf16.gmra.mrb[0].mxu0 %v1439
  %v2053 = vpop.f32.mrb[0].mxu0
  %v2054 = vadd.f32 0.0, %v2053
  %v2055 = vpop.f32.mrb[0].mxu0
  %v2056 = vpop.f32.mrb[0].mxu0
  %v2057 = vadd.f32 0.0, %v2056
  %v2058 = vpop.f32.mrb[0].mxu0
  %2059 = vmatprep.mubr.bf16.mxu0 %v1442
  %2060 = vmatmul.mubr.bf16.gmra.mrb[0].mxu0 %v1441
  %v2061 = vpop.f32.mrb[0].mxu0
  %v2062 = vadd.f32 0.0, %v2061
  %v2063 = vpop.f32.mrb[0].mxu0
  %v2064 = vpop.f32.mrb[0].mxu0
  %v2065 = vadd.f32 0.0, %v2064
  %v2066 = vpop.f32.mrb[0].mxu0
  %2067 = vmatprep.mubr.bf16.mxu0 %v1444
  %2068 = vmatmul.mubr.bf16.gmra.mrb[0].mxu0 %v1443
  %v2069 = vpop.f32.mrb[0].mxu0
  %v2070 = vadd.f32 0.0, %v2069
  %v2071 = vpop.f32.mrb[0].mxu0
  %v2072 = vpop.f32.mrb[0].mxu0
  %v2073 = vadd.f32 0.0, %v2072
  %v2074 = vpop.f32.mrb[0].mxu0
  %2075 = vmatprep.mubr.bf16.mxu0 %v1446
  %2076 = vmatmul.mubr.bf16.gmra.mrb[0].mxu0 %v1445
  %v2077 = vpop.f32.mrb[0].mxu0
  %v2078 = vadd.f32 0.0, %v2077
  %v2079 = vpop.f32.mrb[0].mxu0
  %v2080 = vpop.f32.mrb[0].mxu0
  %v2081 = vadd.f32 0.0, %v2080
  %v2082 = vpop.f32.mrb[0].mxu0
  %2083 = vmatprep.mubr.bf16.mxu0 %v1448
  %2084 = vmatmul.mubr.bf16.gmra.mrb[0].mxu0 %v1447
  %v2085 = vpop.f32.mrb[0].mxu0
  %v2086 = vadd.f32 0.0, %v2085
  %v2087 = vpop.f32.mrb[0].mxu0
  %v2088 = vpop.f32.mrb[0].mxu0
  %v2089 = vadd.f32 0.0, %v2088
  %v2090 = vpop.f32.mrb[0].mxu0
  %2091 = vmatprep.mubr.bf16.mxu0 %v1450
  %2092 = vmatmul.mubr.bf16.gmra.mrb[0].mxu0 %v1449
  %v2093 = vpop.f32.mrb[0].mxu0
  %v2094 = vadd.f32 0.0, %v2093
  %v2095 = vpop.f32.mrb[0].mxu0
  %v2096 = vpop.f32.mrb[0].mxu0
  %v2097 = vadd.f32 0.0, %v2096
  %v2098 = vpop.f32.mrb[0].mxu0
  %2099 = vmatprep.mubr.bf16.mxu0 %v1452
  %2100 = vmatmul.mubr.bf16.gmra.mrb[0].mxu0 %v1451
  %v2101 = vpop.f32.mrb[0].mxu0
  %v2102 = vadd.f32 0.0, %v2101
  %v2103 = vpop.f32.mrb[0].mxu0
  %v2104 = vpop.f32.mrb[0].mxu0
  %v2105 = vadd.f32 0.0, %v2104
  %v2106 = vpop.f32.mrb[0].mxu0
  %2107 = vmatprep.mubr.bf16.mxu0 %v1454
  %2108 = vmatmul.mubr.bf16.gmra.mrb[0].mxu0 %v1453
  %v2109 = vpop.f32.mrb[0].mxu0
  %v2110 = vadd.f32 0.0, %v2109
  %v2111 = vpop.f32.mrb[0].mxu0
  %v2112 = vpop.f32.mrb[0].mxu0
  %v2113 = vadd.f32 0.0, %v2112
  %v2114 = vpop.f32.mrb[0].mxu0
  %2115 = vdwg.mxu0
  %v2116 = vadd.f32 %v1907, %v2054
  %v2117 = vadd.f32 %v1908, %v2057
  %v2118 = vadd.f32 %v1909, %v2062
  %v2119 = vadd.f32 %v1910, %v2065
  %v2120 = vadd.f32 %v1911, %v2070
  %v2121 = vadd.f32 %v1912, %v2073
  %v2122 = vadd.f32 %v1913, %v2078
  %v2123 = vadd.f32 %v1914, %v2081
  %v2124 = vadd.f32 %v1915, %v2086
  %v2125 = vadd.f32 %v1916, %v2089
  %v2126 = vadd.f32 %v1917, %v2094
  %v2127 = vadd.f32 %v1918, %v2097
  %v2128 = vadd.f32 %v1919, %v2102
  %v2129 = vadd.f32 %v1920, %v2105
  %v2130 = vadd.f32 %v1921, %v2110
  %v2131 = vadd.f32 %v1922, %v2113
  %v2132 = vld [vmem:[#allocation2] sm:$0xfc]
  %v2133 = vld [vmem:[#allocation2 + $0x8] sm:$0xfc]
  %v2134 = vld [vmem:[#allocation2 + $0x10] sm:$0x3]
  %v2135 = vld [vmem:[#allocation2 + $0x18] sm:$0x3]
  %v2136 = vld [vmem:[#allocation2 + $0x20] sm:$0xfc]
  %v2137 = vld [vmem:[#allocation2 + $0x28] sm:$0xfc]
  %v2138 = vld [vmem:[#allocation2 + $0x30] sm:$0x3]
  %v2139 = vld [vmem:[#allocation2 + $0x38] sm:$0x3]
  %v2140 = vld [vmem:[#allocation2 + $0x40] sm:$0xfc]
  %v2141 = vld [vmem:[#allocation2 + $0x48] sm:$0xfc]
  %v2142 = vld [vmem:[#allocation2 + $0x50] sm:$0x3]
  %v2143 = vld [vmem:[#allocation2 + $0x58] sm:$0x3]
  %v2144 = vld [vmem:[#allocation2 + $0x60] sm:$0xfc]
  %v2145 = vld [vmem:[#allocation2 + $0x68] sm:$0xfc]
  %v2146 = vld [vmem:[#allocation2 + $0x70] sm:$0x3]
  %v2147 = vld [vmem:[#allocation2 + $0x78] sm:$0x3]
  %v2148 = vld [vmem:[#allocation2 + $0x80] sm:$0xfc]
  %v2149 = vld [vmem:[#allocation2 + $0x88] sm:$0xfc]
  %v2150 = vld [vmem:[#allocation2 + $0x90] sm:$0x3]
  %v2151 = vld [vmem:[#allocation2 + $0x98] sm:$0x3]
  %v2152 = vld [vmem:[#allocation2 + $0xa0] sm:$0xfc]
  %v2153 = vld [vmem:[#allocation2 + $0xa8] sm:$0xfc]
  %v2154 = vld [vmem:[#allocation2 + $0xb0] sm:$0x3]
  %v2155 = vld [vmem:[#allocation2 + $0xb8] sm:$0x3]
  %v2156 = vld [vmem:[#allocation2 + $0xc0] sm:$0xfc]
  %v2157 = vld [vmem:[#allocation2 + $0xc8] sm:$0xfc]
  %v2158 = vld [vmem:[#allocation2 + $0xd0] sm:$0x3]
  %v2159 = vld [vmem:[#allocation2 + $0xd8] sm:$0x3]
  %v2160 = vld [vmem:[#allocation2 + $0xe0] sm:$0xfc]
  %v2161 = vld [vmem:[#allocation2 + $0xe8] sm:$0xfc]
  %v2162 = vld [vmem:[#allocation2 + $0xf0] sm:$0x3]
  %v2163 = vld [vmem:[#allocation2 + $0xf8] sm:$0x3]
  %v2164 = vld [vmem:[#allocation2 + $0x140] sm:$0xfc]
  %v2165 = vld [vmem:[#allocation2 + $0x148] sm:$0xfc]
  %v2166 = vld [vmem:[#allocation2 + $0x150] sm:$0x3]
  %v2167 = vld [vmem:[#allocation2 + $0x158] sm:$0x3]
  %v2168 = vld [vmem:[#allocation2 + $0x160] sm:$0xfc]
  %v2169 = vld [vmem:[#allocation2 + $0x168] sm:$0xfc]
  %v2170 = vld [vmem:[#allocation2 + $0x170] sm:$0x3]
  %v2171 = vld [vmem:[#allocation2 + $0x178] sm:$0x3]
  %v2172 = vld [vmem:[#allocation2 + $0x180] sm:$0xfc]
  %v2173 = vld [vmem:[#allocation2 + $0x188] sm:$0xfc]
  %v2174 = vld [vmem:[#allocation2 + $0x190] sm:$0x3]
  %v2175 = vld [vmem:[#allocation2 + $0x198] sm:$0x3]
  %v2176 = vld [vmem:[#allocation2 + $0x1a0] sm:$0xfc]
  %v2177 = vld [vmem:[#allocation2 + $0x1a8] sm:$0xfc]
  %v2178 = vld [vmem:[#allocation2 + $0x1b0] sm:$0x3]
  %v2179 = vld [vmem:[#allocation2 + $0x1b8] sm:$0x3]
  %v2180 = vld [vmem:[#allocation2 + $0x1c0] sm:$0xfc]
  %v2181 = vld [vmem:[#allocation2 + $0x1c8] sm:$0xfc]
  %v2182 = vld [vmem:[#allocation2 + $0x1d0] sm:$0x3]
  %v2183 = vld [vmem:[#allocation2 + $0x1d8] sm:$0x3]
  %v2184 = vld [vmem:[#allocation2 + $0x1e0] sm:$0xfc]
  %v2185 = vld [vmem:[#allocation2 + $0x1e8] sm:$0xfc]
  %v2186 = vld [vmem:[#allocation2 + $0x1f0] sm:$0x3]
  %v2187 = vld [vmem:[#allocation2 + $0x1f8] sm:$0x3]
  %v2188 = vld [vmem:[#allocation2 + $0x200] sm:$0xfc]
  %v2189 = vld [vmem:[#allocation2 + $0x208] sm:$0xfc]
  %v2190 = vld [vmem:[#allocation2 + $0x210] sm:$0x3]
  %v2191 = vld [vmem:[#allocation2 + $0x218] sm:$0x3]
  %v2192 = vld [vmem:[#allocation2 + $0x220] sm:$0xfc]
  %v2193 = vld [vmem:[#allocation2 + $0x228] sm:$0xfc]
  %v2194 = vld [vmem:[#allocation2 + $0x230] sm:$0x3]
  %v2195 = vld [vmem:[#allocation2 + $0x238] sm:$0x3]
  %vm2260 = vcmask 1045504
  %v2261 = vrot.slane %v2132, 2
  %v2262 = vrot.slane %v2134, 2
  %v2263 = vsel %vm2260, %v2261, %v2262
  %v2264 = vrot.slane %v2133, 2
  %v2265 = vrot.slane %v2135, 2
  %v2266 = vsel %vm2260, %v2264, %v2265
  %v2267 = vrot.slane %v2136, 2
  %v2268 = vrot.slane %v2138, 2
  %v2269 = vsel %vm2260, %v2267, %v2268
  %v2270 = vrot.slane %v2137, 2
  %v2271 = vrot.slane %v2139, 2
  %v2272 = vsel %vm2260, %v2270, %v2271
  %v2273 = vrot.slane %v2140, 2
  %v2274 = vrot.slane %v2142, 2
  %v2275 = vsel %vm2260, %v2273, %v2274
  %v2276 = vrot.slane %v2141, 2
  %v2277 = vrot.slane %v2143, 2
  %v2278 = vsel %vm2260, %v2276, %v2277
  %v2279 = vrot.slane %v2144, 2
  %v2280 = vrot.slane %v2146, 2
  %v2281 = vsel %vm2260, %v2279, %v2280
  %v2282 = vrot.slane %v2145, 2
  %v2283 = vrot.slane %v2147, 2
  %v2284 = vsel %vm2260, %v2282, %v2283
  %v2285 = vrot.slane %v2148, 2
  %v2286 = vrot.slane %v2150, 2
  %v2287 = vsel %vm2260, %v2285, %v2286
  %v2288 = vrot.slane %v2149, 2
  %v2289 = vrot.slane %v2151, 2
  %v2290 = vsel %vm2260, %v2288, %v2289
  %v2291 = vrot.slane %v2152, 2
  %v2292 = vrot.slane %v2154, 2
  %v2293 = vsel %vm2260, %v2291, %v2292
  %v2294 = vrot.slane %v2153, 2
  %v2295 = vrot.slane %v2155, 2
  %v2296 = vsel %vm2260, %v2294, %v2295
  %v2297 = vrot.slane %v2156, 2
  %v2298 = vrot.slane %v2158, 2
  %v2299 = vsel %vm2260, %v2297, %v2298
  %v2300 = vrot.slane %v2157, 2
  %v2301 = vrot.slane %v2159, 2
  %v2302 = vsel %vm2260, %v2300, %v2301
  %v2303 = vrot.slane %v2160, 2
  %v2304 = vrot.slane %v2162, 2
  %v2305 = vsel %vm2260, %v2303, %v2304
  %v2306 = vrot.slane %v2161, 2
  %v2307 = vrot.slane %v2163, 2
  %v2308 = vsel %vm2260, %v2306, %v2307
  %v2309 = vrot.slane %v2164, 2
  %v2310 = vrot.slane %v2166, 2
  %v2311 = vsel %vm2260, %v2309, %v2310
  %v2312 = vrot.slane %v2165, 2
  %v2313 = vrot.slane %v2167, 2
  %v2314 = vsel %vm2260, %v2312, %v2313
  %v2315 = vrot.slane %v2168, 2
  %v2316 = vrot.slane %v2170, 2
  %v2317 = vsel %vm2260, %v2315, %v2316
  %v2318 = vrot.slane %v2169, 2
  %v2319 = vrot.slane %v2171, 2
  %v2320 = vsel %vm2260, %v2318, %v2319
  %v2321 = vrot.slane %v2172, 2
  %v2322 = vrot.slane %v2174, 2
  %v2323 = vsel %vm2260, %v2321, %v2322
  %v2324 = vrot.slane %v2173, 2
  %v2325 = vrot.slane %v2175, 2
  %v2326 = vsel %vm2260, %v2324, %v2325
  %v2327 = vrot.slane %v2176, 2
  %v2328 = vrot.slane %v2178, 2
  %v2329 = vsel %vm2260, %v2327, %v2328
  %v2330 = vrot.slane %v2177, 2
  %v2331 = vrot.slane %v2179, 2
  %v2332 = vsel %vm2260, %v2330, %v2331
  %v2333 = vrot.slane %v2180, 2
  %v2334 = vrot.slane %v2182, 2
  %v2335 = vsel %vm2260, %v2333, %v2334
  %v2336 = vrot.slane %v2181, 2
  %v2337 = vrot.slane %v2183, 2
  %v2338 = vsel %vm2260, %v2336, %v2337
  %v2339 = vrot.slane %v2184, 2
  %v2340 = vrot.slane %v2186, 2
  %v2341 = vsel %vm2260, %v2339, %v2340
  %v2342 = vrot.slane %v2185, 2
  %v2343 = vrot.slane %v2187, 2
  %v2344 = vsel %vm2260, %v2342, %v2343
  %v2345 = vrot.slane %v2188, 2
  %v2346 = vrot.slane %v2190, 2
  %v2347 = vsel %vm2260, %v2345, %v2346
  %v2348 = vrot.slane %v2189, 2
  %v2349 = vrot.slane %v2191, 2
  %v2350 = vsel %vm2260, %v2348, %v2349
  %v2351 = vrot.slane %v2192, 2
  %v2352 = vrot.slane %v2194, 2
  %v2353 = vsel %vm2260, %v2351, %v2352
  %v2354 = vrot.slane %v2193, 2
  %v2355 = vrot.slane %v2195, 2
  %v2356 = vsel %vm2260, %v2354, %v2355
  %v2389 = vpack.c.bf16 %v2269, %v2263
  %v2390 = vpack.c.bf16 %v2272, %v2266
  %v2391 = vpack.c.bf16 %v2281, %v2275
  %v2392 = vpack.c.bf16 %v2284, %v2278
  %v2393 = vpack.c.bf16 %v2293, %v2287
  %v2394 = vpack.c.bf16 %v2296, %v2290
  %v2395 = vpack.c.bf16 %v2305, %v2299
  %v2396 = vpack.c.bf16 %v2308, %v2302
  %v2397 = vpack.c.bf16 %v2317, %v2311
  %v2398 = vpack.c.bf16 %v2320, %v2314
  %v2399 = vpack.c.bf16 %v2329, %v2323
  %v2400 = vpack.c.bf16 %v2332, %v2326
  %v2401 = vpack.c.bf16 %v2341, %v2335
  %v2402 = vpack.c.bf16 %v2344, %v2338
  %v2403 = vpack.c.bf16 %v2353, %v2347
  %v2404 = vpack.c.bf16 %v2356, %v2350
  %v2405 = vunpack.c.l.bf16 %v2389
  %v2406 = vunpack.c.l.bf16 %v2390
  %v2407 = vunpack.c.h.bf16 %v2389
  %v2408 = vunpack.c.h.bf16 %v2390
  %v2409 = vunpack.c.l.bf16 %v2391
  %v2410 = vunpack.c.l.bf16 %v2392
  %v2411 = vunpack.c.h.bf16 %v2391
  %v2412 = vunpack.c.h.bf16 %v2392
  %v2413 = vunpack.c.l.bf16 %v2393
  %v2414 = vunpack.c.l.bf16 %v2394
  %v2415 = vunpack.c.h.bf16 %v2393
  %v2416 = vunpack.c.h.bf16 %v2394
  %v2417 = vunpack.c.l.bf16 %v2395
  %v2418 = vunpack.c.l.bf16 %v2396
  %v2419 = vunpack.c.h.bf16 %v2395
  %v2420 = vunpack.c.h.bf16 %v2396
  %v2421 = vunpack.c.l.bf16 %v2397
  %v2422 = vunpack.c.l.bf16 %v2398
  %v2423 = vunpack.c.h.bf16 %v2397
  %v2424 = vunpack.c.h.bf16 %v2398
  %v2425 = vunpack.c.l.bf16 %v2399
  %v2426 = vunpack.c.l.bf16 %v2400
  %v2427 = vunpack.c.h.bf16 %v2399
  %v2428 = vunpack.c.h.bf16 %v2400
  %v2429 = vunpack.c.l.bf16 %v2401
  %v2430 = vunpack.c.l.bf16 %v2402
  %v2431 = vunpack.c.h.bf16 %v2401
  %v2432 = vunpack.c.h.bf16 %v2402
  %v2433 = vunpack.c.l.bf16 %v2403
  %v2434 = vunpack.c.l.bf16 %v2404
  %v2435 = vunpack.c.h.bf16 %v2403
  %v2436 = vunpack.c.h.bf16 %v2404
  %v2437 = vsub.f32 %v2263, %v2405
  %v2438 = vsub.f32 %v2266, %v2406
  %v2439 = vsub.f32 %v2269, %v2407
  %v2440 = vsub.f32 %v2272, %v2408
  %v2441 = vsub.f32 %v2275, %v2409
  %v2442 = vsub.f32 %v2278, %v2410
  %v2443 = vsub.f32 %v2281, %v2411
  %v2444 = vsub.f32 %v2284, %v2412
  %v2445 = vsub.f32 %v2287, %v2413
  %v2446 = vsub.f32 %v2290, %v2414
  %v2447 = vsub.f32 %v2293, %v2415
  %v2448 = vsub.f32 %v2296, %v2416
  %v2449 = vsub.f32 %v2299, %v2417
  %v2450 = vsub.f32 %v2302, %v2418
  %v2451 = vsub.f32 %v2305, %v2419
  %v2452 = vsub.f32 %v2308, %v2420
  %v2453 = vsub.f32 %v2311, %v2421
  %v2454 = vsub.f32 %v2314, %v2422
  %v2455 = vsub.f32 %v2317, %v2423
  %v2456 = vsub.f32 %v2320, %v2424
  %v2457 = vsub.f32 %v2323, %v2425
  %v2458 = vsub.f32 %v2326, %v2426
  %v2459 = vsub.f32 %v2329, %v2427
  %v2460 = vsub.f32 %v2332, %v2428
  %v2461 = vsub.f32 %v2335, %v2429
  %v2462 = vsub.f32 %v2338, %v2430
  %v2463 = vsub.f32 %v2341, %v2431
  %v2464 = vsub.f32 %v2344, %v2432
  %v2465 = vsub.f32 %v2347, %v2433
  %v2466 = vsub.f32 %v2350, %v2434
  %v2467 = vsub.f32 %v2353, %v2435
  %v2468 = vsub.f32 %v2356, %v2436
  %v2469 = vpack.c.bf16 %v2439, %v2437
  %v2470 = vpack.c.bf16 %v2440, %v2438
  %v2471 = vpack.c.bf16 %v2443, %v2441
  %v2472 = vpack.c.bf16 %v2444, %v2442
  %v2473 = vpack.c.bf16 %v2447, %v2445
  %v2474 = vpack.c.bf16 %v2448, %v2446
  %v2475 = vpack.c.bf16 %v2451, %v2449
  %v2476 = vpack.c.bf16 %v2452, %v2450
  %v2477 = vpack.c.bf16 %v2455, %v2453
  %v2478 = vpack.c.bf16 %v2456, %v2454
  %v2479 = vpack.c.bf16 %v2459, %v2457
  %v2480 = vpack.c.bf16 %v2460, %v2458
  %v2481 = vpack.c.bf16 %v2463, %v2461
  %v2482 = vpack.c.bf16 %v2464, %v2462
  %v2483 = vpack.c.bf16 %v2467, %v2465
  %v2484 = vpack.c.bf16 %v2468, %v2466
  %s2485 = scalar_lea.vmem %s1, 256
  %v2486 = vld [vmem:[%s2485] sm:$0xf]
  %v2487 = vld [vmem:[%s2485 + $0x4] sm:$0xf]
  %v2488 = vld [vmem:[%s2485 + $0x8] sm:$0xf]
  %v2489 = vld [vmem:[%s2485 + $0xc] sm:$0xf]
  %v2490 = vld [vmem:[%s2485 + $0x10] sm:$0xf]
  %v2491 = vld [vmem:[%s2485 + $0x14] sm:$0xf]
  %v2492 = vld [vmem:[%s2485 + $0x18] sm:$0xf]
  %v2493 = vld [vmem:[%s2485 + $0x1c] sm:$0xf]
  %v2494 = vld [vmem:[%s2485 + $0x20] sm:$0xf]
  %v2495 = vld [vmem:[%s2485 + $0x24] sm:$0xf]
  %v2496 = vld [vmem:[%s2485 + $0x28] sm:$0xf]
  %v2497 = vld [vmem:[%s2485 + $0x2c] sm:$0xf]
  %v2498 = vld [vmem:[%s2485 + $0x30] sm:$0xf]
  %v2499 = vld [vmem:[%s2485 + $0x34] sm:$0xf]
  %v2500 = vld [vmem:[%s2485 + $0x38] sm:$0xf]
  %v2501 = vld [vmem:[%s2485 + $0x3c] sm:$0xf]
  %v2502 = vld [vmem:[%s2485 + $0x40] sm:$0xf]
  %v2503 = vld [vmem:[%s2485 + $0x44] sm:$0xf]
  %v2504 = vld [vmem:[%s2485 + $0x48] sm:$0xf]
  %v2505 = vld [vmem:[%s2485 + $0x4c] sm:$0xf]
  %v2506 = vld [vmem:[%s2485 + $0x50] sm:$0xf]
  %v2507 = vld [vmem:[%s2485 + $0x54] sm:$0xf]
  %v2508 = vld [vmem:[%s2485 + $0x58] sm:$0xf]
  %v2509 = vld [vmem:[%s2485 + $0x5c] sm:$0xf]
  %v2510 = vld [vmem:[%s2485 + $0x60] sm:$0xf]
  %v2511 = vld [vmem:[%s2485 + $0x64] sm:$0xf]
  %v2512 = vld [vmem:[%s2485 + $0x68] sm:$0xf]
  %v2513 = vld [vmem:[%s2485 + $0x6c] sm:$0xf]
  %v2514 = vld [vmem:[%s2485 + $0x70] sm:$0xf]
  %v2515 = vld [vmem:[%s2485 + $0x74] sm:$0xf]
  %v2516 = vld [vmem:[%s2485 + $0x78] sm:$0xf]
  %v2517 = vld [vmem:[%s2485 + $0x7c] sm:$0xf]
  %s2518 = scalar_lea.vmem %s2, 256
  %v2519 = vld [vmem:[%s2518] sm:$0xf]
  %v2520 = vld [vmem:[%s2518 + $0x4] sm:$0xf]
  %v2521 = vld [vmem:[%s2518 + $0x8] sm:$0xf]
  %v2522 = vld [vmem:[%s2518 + $0xc] sm:$0xf]
  %v2523 = vld [vmem:[%s2518 + $0x10] sm:$0xf]
  %v2524 = vld [vmem:[%s2518 + $0x14] sm:$0xf]
  %v2525 = vld [vmem:[%s2518 + $0x18] sm:$0xf]
  %v2526 = vld [vmem:[%s2518 + $0x1c] sm:$0xf]
  %v2527 = vld [vmem:[%s2518 + $0x20] sm:$0xf]
  %v2528 = vld [vmem:[%s2518 + $0x24] sm:$0xf]
  %v2529 = vld [vmem:[%s2518 + $0x28] sm:$0xf]
  %v2530 = vld [vmem:[%s2518 + $0x2c] sm:$0xf]
  %v2531 = vld [vmem:[%s2518 + $0x30] sm:$0xf]
  %v2532 = vld [vmem:[%s2518 + $0x34] sm:$0xf]
  %v2533 = vld [vmem:[%s2518 + $0x38] sm:$0xf]
  %v2534 = vld [vmem:[%s2518 + $0x3c] sm:$0xf]
  %v2535 = vld [vmem:[%s2518 + $0x40] sm:$0xf]
  %v2536 = vld [vmem:[%s2518 + $0x44] sm:$0xf]
  %v2537 = vld [vmem:[%s2518 + $0x48] sm:$0xf]
  %v2538 = vld [vmem:[%s2518 + $0x4c] sm:$0xf]
  %v2539 = vld [vmem:[%s2518 + $0x50] sm:$0xf]
  %v2540 = vld [vmem:[%s2518 + $0x54] sm:$0xf]
  %v2541 = vld [vmem:[%s2518 + $0x58] sm:$0xf]
  %v2542 = vld [vmem:[%s2518 + $0x5c] sm:$0xf]
  %v2543 = vld [vmem:[%s2518 + $0x60] sm:$0xf]
  %v2544 = vld [vmem:[%s2518 + $0x64] sm:$0xf]
  %v2545 = vld [vmem:[%s2518 + $0x68] sm:$0xf]
  %v2546 = vld [vmem:[%s2518 + $0x6c] sm:$0xf]
  %v2547 = vld [vmem:[%s2518 + $0x70] sm:$0xf]
  %v2548 = vld [vmem:[%s2518 + $0x74] sm:$0xf]
  %v2549 = vld [vmem:[%s2518 + $0x78] sm:$0xf]
  %v2550 = vld [vmem:[%s2518 + $0x7c] sm:$0xf]
  %v2583 = vunpack.c.l.b16 %v2486
  %v2584 = vunpack.c.l.b16 %v2487
  %v2585 = vunpack.c.l.b16 %v2488
  %v2586 = vunpack.c.l.b16 %v2489
  %v2587 = vunpack.c.l.b16 %v2490
  %v2588 = vunpack.c.l.b16 %v2491
  %v2589 = vunpack.c.l.b16 %v2492
  %v2590 = vunpack.c.l.b16 %v2493
  %v2591 = vunpack.c.l.b16 %v2494
  %v2592 = vunpack.c.l.b16 %v2495
  %v2593 = vunpack.c.l.b16 %v2496
  %v2594 = vunpack.c.l.b16 %v2497
  %v2595 = vunpack.c.l.b16 %v2498
  %v2596 = vunpack.c.l.b16 %v2499
  %v2597 = vunpack.c.l.b16 %v2500
  %v2598 = vunpack.c.l.b16 %v2501
  %v2599 = vunpack.c.l.b16 %v2502
  %v2600 = vunpack.c.l.b16 %v2503
  %v2601 = vunpack.c.l.b16 %v2504
  %v2602 = vunpack.c.l.b16 %v2505
  %v2603 = vunpack.c.l.b16 %v2506
  %v2604 = vunpack.c.l.b16 %v2507
  %v2605 = vunpack.c.l.b16 %v2508
  %v2606 = vunpack.c.l.b16 %v2509
  %v2607 = vunpack.c.l.b16 %v2510
  %v2608 = vunpack.c.l.b16 %v2511
  %v2609 = vunpack.c.l.b16 %v2512
  %v2610 = vunpack.c.l.b16 %v2513
  %v2611 = vunpack.c.l.b16 %v2514
  %v2612 = vunpack.c.l.b16 %v2515
  %v2613 = vunpack.c.l.b16 %v2516
  %v2614 = vunpack.c.l.b16 %v2517
  %v2615 = vpack.c.b16 %v2584, %v2583
  %v2616 = vpack.c.b16 %v2586, %v2585
  %v2617 = vpack.c.b16 %v2588, %v2587
  %v2618 = vpack.c.b16 %v2590, %v2589
  %v2619 = vpack.c.b16 %v2592, %v2591
  %v2620 = vpack.c.b16 %v2594, %v2593
  %v2621 = vpack.c.b16 %v2596, %v2595
  %v2622 = vpack.c.b16 %v2598, %v2597
  %v2623 = vpack.c.b16 %v2600, %v2599
  %v2624 = vpack.c.b16 %v2602, %v2601
  %v2625 = vpack.c.b16 %v2604, %v2603
  %v2626 = vpack.c.b16 %v2606, %v2605
  %v2627 = vpack.c.b16 %v2608, %v2607
  %v2628 = vpack.c.b16 %v2610, %v2609
  %v2629 = vpack.c.b16 %v2612, %v2611
  %v2630 = vpack.c.b16 %v2614, %v2613
  %2647 = vmatprep.subr.bf16.mxu0 0
  %2648 = vmatpush1.bf16.msra.mxu0 %v2615
  %2649 = vmatprep.subr.bf16.mxu0 0
  %2650 = vmatpush1.bf16.msra.mxu0 %v2616
  %2651 = vmatprep.subr.bf16.mxu0 0
  %2652 = vmatpush1.bf16.msra.mxu0 %v2617
  %2653 = vmatprep.subr.bf16.mxu0 0
  %2654 = vmatpush1.bf16.msra.mxu0 %v2618
  %2655 = vmatprep.subr.bf16.mxu0 0
  %2656 = vmatpush1.bf16.msra.mxu0 %v2619
  %2657 = vmatprep.subr.bf16.mxu0 0
  %2658 = vmatpush1.bf16.msra.mxu0 %v2620
  %2659 = vmatprep.subr.bf16.mxu0 0
  %2660 = vmatpush1.bf16.msra.mxu0 %v2621
  %2661 = vmatprep.subr.bf16.mxu0 0
  %2662 = vmatpush1.bf16.msra.mxu0 %v2622
  %2663 = vmatprep.subr.bf16.mxu0 0
  %2664 = vmatpush1.bf16.msra.mxu0 %v2623
  %2665 = vmatprep.subr.bf16.mxu0 0
  %2666 = vmatpush1.bf16.msra.mxu0 %v2624
  %2667 = vmatprep.subr.bf16.mxu0 0
  %2668 = vmatpush1.bf16.msra.mxu0 %v2625
  %2669 = vmatprep.subr.bf16.mxu0 0
  %2670 = vmatpush1.bf16.msra.mxu0 %v2626
  %2671 = vmatprep.subr.bf16.mxu0 0
  %2672 = vmatpush1.bf16.msra.mxu0 %v2627
  %2673 = vmatprep.subr.bf16.mxu0 0
  %2674 = vmatpush1.bf16.msra.mxu0 %v2628
  %2675 = vmatprep.subr.bf16.mxu0 0
  %2676 = vmatpush1.bf16.msra.mxu0 %v2629
  %2677 = vmatprep.subr.bf16.mxu0 0
  %2678 = vmatpush1.bf16.msra.mxu0 %v2630
  %2679 = vmatprep.mubr.bf16.mxu0 %v2390
  %2680 = vmatmul.mubr.bf16.gmra.mrb[0].mxu0 %v2389
  %v2681 = vpop.f32.mrb[0].mxu0
  %v2682 = vadd.f32 0.0, %v2681
  %v2683 = vpop.f32.mrb[0].mxu0
  %v2684 = vpop.f32.mrb[0].mxu0
  %v2685 = vadd.f32 0.0, %v2684
  %v2686 = vpop.f32.mrb[0].mxu0
  %2687 = vmatprep.mubr.bf16.mxu0 %v2392
  %2688 = vmatmul.mubr.bf16.gmra.mrb[0].mxu0 %v2391
  %v2689 = vpop.f32.mrb[0].mxu0
  %v2690 = vadd.f32 0.0, %v2689
  %v2691 = vpop.f32.mrb[0].mxu0
  %v2692 = vpop.f32.mrb[0].mxu0
  %v2693 = vadd.f32 0.0, %v2692
  %v2694 = vpop.f32.mrb[0].mxu0
  %2695 = vmatprep.mubr.bf16.mxu0 %v2394
  %2696 = vmatmul.mubr.bf16.gmra.mrb[0].mxu0 %v2393
  %v2697 = vpop.f32.mrb[0].mxu0
  %v2698 = vadd.f32 0.0, %v2697
  %v2699 = vpop.f32.mrb[0].mxu0
  %v2700 = vpop.f32.mrb[0].mxu0
  %v2701 = vadd.f32 0.0, %v2700
  %v2702 = vpop.f32.mrb[0].mxu0
  %2703 = vmatprep.mubr.bf16.mxu0 %v2396
  %2704 = vmatmul.mubr.bf16.gmra.mrb[0].mxu0 %v2395
  %v2705 = vpop.f32.mrb[0].mxu0
  %v2706 = vadd.f32 0.0, %v2705
  %v2707 = vpop.f32.mrb[0].mxu0
  %v2708 = vpop.f32.mrb[0].mxu0
  %v2709 = vadd.f32 0.0, %v2708
  %v2710 = vpop.f32.mrb[0].mxu0
  %2711 = vmatprep.mubr.bf16.mxu0 %v2398
  %2712 = vmatmul.mubr.bf16.gmra.mrb[0].mxu0 %v2397
  %v2713 = vpop.f32.mrb[0].mxu0
  %v2714 = vadd.f32 0.0, %v2713
  %v2715 = vpop.f32.mrb[0].mxu0
  %v2716 = vpop.f32.mrb[0].mxu0
  %v2717 = vadd.f32 0.0, %v2716
  %v2718 = vpop.f32.mrb[0].mxu0
  %2719 = vmatprep.mubr.bf16.mxu0 %v2400
  %2720 = vmatmul.mubr.bf16.gmra.mrb[0].mxu0 %v2399
  %v2721 = vpop.f32.mrb[0].mxu0
  %v2722 = vadd.f32 0.0, %v2721
  %v2723 = vpop.f32.mrb[0].mxu0
  %v2724 = vpop.f32.mrb[0].mxu0
  %v2725 = vadd.f32 0.0, %v2724
  %v2726 = vpop.f32.mrb[0].mxu0
  %2727 = vmatprep.mubr.bf16.mxu0 %v2402
  %2728 = vmatmul.mubr.bf16.gmra.mrb[0].mxu0 %v2401
  %v2729 = vpop.f32.mrb[0].mxu0
  %v2730 = vadd.f32 0.0, %v2729
  %v2731 = vpop.f32.mrb[0].mxu0
  %v2732 = vpop.f32.mrb[0].mxu0
  %v2733 = vadd.f32 0.0, %v2732
  %v2734 = vpop.f32.mrb[0].mxu0
  %2735 = vmatprep.mubr.bf16.mxu0 %v2404
  %2736 = vmatmul.mubr.bf16.gmra.mrb[0].mxu0 %v2403
  %v2737 = vpop.f32.mrb[0].mxu0
  %v2738 = vadd.f32 0.0, %v2737
  %v2739 = vpop.f32.mrb[0].mxu0
  %v2740 = vpop.f32.mrb[0].mxu0
  %v2741 = vadd.f32 0.0, %v2740
  %v2742 = vpop.f32.mrb[0].mxu0
  %2743 = vdwg.mxu0
  %v2744 = vadd.f32 %v2116, %v2682
  %v2745 = vadd.f32 %v2117, %v2685
  %v2746 = vadd.f32 %v2118, %v2690
  %v2747 = vadd.f32 %v2119, %v2693
  %v2748 = vadd.f32 %v2120, %v2698
  %v2749 = vadd.f32 %v2121, %v2701
  %v2750 = vadd.f32 %v2122, %v2706
  %v2751 = vadd.f32 %v2123, %v2709
  %v2752 = vadd.f32 %v2124, %v2714
  %v2753 = vadd.f32 %v2125, %v2717
  %v2754 = vadd.f32 %v2126, %v2722
  %v2755 = vadd.f32 %v2127, %v2725
  %v2756 = vadd.f32 %v2128, %v2730
  %v2757 = vadd.f32 %v2129, %v2733
  %v2758 = vadd.f32 %v2130, %v2738
  %v2759 = vadd.f32 %v2131, %v2741
  %2760 = vmatprep.subr.bf16.mxu0 0
  %2761 = vmatpush1.bf16.msra.mxu0 %v2615
  %2762 = vmatprep.subr.bf16.mxu0 0
  %2763 = vmatpush1.bf16.msra.mxu0 %v2616
  %2764 = vmatprep.subr.bf16.mxu0 0
  %2765 = vmatpush1.bf16.msra.mxu0 %v2617
  %2766 = vmatprep.subr.bf16.mxu0 0
  %2767 = vmatpush1.bf16.msra.mxu0 %v2618
  %2768 = vmatprep.subr.bf16.mxu0 0
  %2769 = vmatpush1.bf16.msra.mxu0 %v2619
  %2770 = vmatprep.subr.bf16.mxu0 0
  %2771 = vmatpush1.bf16.msra.mxu0 %v2620
  %2772 = vmatprep.subr.bf16.mxu0 0
  %2773 = vmatpush1.bf16.msra.mxu0 %v2621
  %2774 = vmatprep.subr.bf16.mxu0 0
  %2775 = vmatpush1.bf16.msra.mxu0 %v2622
  %2776 = vmatprep.subr.bf16.mxu0 0
  %2777 = vmatpush1.bf16.msra.mxu0 %v2623
  %2778 = vmatprep.subr.bf16.mxu0 0
  %2779 = vmatpush1.bf16.msra.mxu0 %v2624
  %2780 = vmatprep.subr.bf16.mxu0 0
  %2781 = vmatpush1.bf16.msra.mxu0 %v2625
  %2782 = vmatprep.subr.bf16.mxu0 0
  %2783 = vmatpush1.bf16.msra.mxu0 %v2626
  %2784 = vmatprep.subr.bf16.mxu0 0
  %2785 = vmatpush1.bf16.msra.mxu0 %v2627
  %2786 = vmatprep.subr.bf16.mxu0 0
  %2787 = vmatpush1.bf16.msra.mxu0 %v2628
  %2788 = vmatprep.subr.bf16.mxu0 0
  %2789 = vmatpush1.bf16.msra.mxu0 %v2629
  %2790 = vmatprep.subr.bf16.mxu0 0
  %2791 = vmatpush1.bf16.msra.mxu0 %v2630
  %2792 = vmatprep.mubr.bf16.mxu0 %v2470
  %2793 = vmatmul.mubr.bf16.gmra.mrb[0].mxu0 %v2469
  %v2794 = vpop.f32.mrb[0].mxu0
  %v2795 = vadd.f32 0.0, %v2794
  %v2796 = vpop.f32.mrb[0].mxu0
  %v2797 = vpop.f32.mrb[0].mxu0
  %v2798 = vadd.f32 0.0, %v2797
  %v2799 = vpop.f32.mrb[0].mxu0
  %2800 = vmatprep.mubr.bf16.mxu0 %v2472
  %2801 = vmatmul.mubr.bf16.gmra.mrb[0].mxu0 %v2471
  %v2802 = vpop.f32.mrb[0].mxu0
  %v2803 = vadd.f32 0.0, %v2802
  %v2804 = vpop.f32.mrb[0].mxu0
  %v2805 = vpop.f32.mrb[0].mxu0
  %v2806 = vadd.f32 0.0, %v2805
  %v2807 = vpop.f32.mrb[0].mxu0
  %2808 = vmatprep.mubr.bf16.mxu0 %v2474
  %2809 = vmatmul.mubr.bf16.gmra.mrb[0].mxu0 %v2473
  %v2810 = vpop.f32.mrb[0].mxu0
  %v2811 = vadd.f32 0.0, %v2810
  %v2812 = vpop.f32.mrb[0].mxu0
  %v2813 = vpop.f32.mrb[0].mxu0
  %v2814 = vadd.f32 0.0, %v2813
  %v2815 = vpop.f32.mrb[0].mxu0
  %2816 = vmatprep.mubr.bf16.mxu0 %v2476
  %2817 = vmatmul.mubr.bf16.gmra.mrb[0].mxu0 %v2475
  %v2818 = vpop.f32.mrb[0].mxu0
  %v2819 = vadd.f32 0.0, %v2818
  %v2820 = vpop.f32.mrb[0].mxu0
  %v2821 = vpop.f32.mrb[0].mxu0
  %v2822 = vadd.f32 0.0, %v2821
  %v2823 = vpop.f32.mrb[0].mxu0
  %2824 = vmatprep.mubr.bf16.mxu0 %v2478
  %2825 = vmatmul.mubr.bf16.gmra.mrb[0].mxu0 %v2477
  %v2826 = vpop.f32.mrb[0].mxu0
  %v2827 = vadd.f32 0.0, %v2826
  %v2828 = vpop.f32.mrb[0].mxu0
  %v2829 = vpop.f32.mrb[0].mxu0
  %v2830 = vadd.f32 0.0, %v2829
  %v2831 = vpop.f32.mrb[0].mxu0
  %2832 = vmatprep.mubr.bf16.mxu0 %v2480
  %2833 = vmatmul.mubr.bf16.gmra.mrb[0].mxu0 %v2479
  %v2834 = vpop.f32.mrb[0].mxu0
  %v2835 = vadd.f32 0.0, %v2834
  %v2836 = vpop.f32.mrb[0].mxu0
  %v2837 = vpop.f32.mrb[0].mxu0
  %v2838 = vadd.f32 0.0, %v2837
  %v2839 = vpop.f32.mrb[0].mxu0
  %2840 = vmatprep.mubr.bf16.mxu0 %v2482
  %2841 = vmatmul.mubr.bf16.gmra.mrb[0].mxu0 %v2481
  %v2842 = vpop.f32.mrb[0].mxu0
  %v2843 = vadd.f32 0.0, %v2842
  %v2844 = vpop.f32.mrb[0].mxu0
  %v2845 = vpop.f32.mrb[0].mxu0
  %v2846 = vadd.f32 0.0, %v2845
  %v2847 = vpop.f32.mrb[0].mxu0
  %2848 = vmatprep.mubr.bf16.mxu0 %v2484
  %2849 = vmatmul.mubr.bf16.gmra.mrb[0].mxu0 %v2483
  %v2850 = vpop.f32.mrb[0].mxu0
  %v2851 = vadd.f32 0.0, %v2850
  %v2852 = vpop.f32.mrb[0].mxu0
  %v2853 = vpop.f32.mrb[0].mxu0
  %v2854 = vadd.f32 0.0, %v2853
  %v2855 = vpop.f32.mrb[0].mxu0
  %2856 = vdwg.mxu0
  %v2857 = vadd.f32 %v2744, %v2795
  %v2858 = vadd.f32 %v2745, %v2798
  %v2859 = vadd.f32 %v2746, %v2803
  %v2860 = vadd.f32 %v2747, %v2806
  %v2861 = vadd.f32 %v2748, %v2811
  %v2862 = vadd.f32 %v2749, %v2814
  %v2863 = vadd.f32 %v2750, %v2819
  %v2864 = vadd.f32 %v2751, %v2822
  %v2865 = vadd.f32 %v2752, %v2827
  %v2866 = vadd.f32 %v2753, %v2830
  %v2867 = vadd.f32 %v2754, %v2835
  %v2868 = vadd.f32 %v2755, %v2838
  %v2869 = vadd.f32 %v2756, %v2843
  %v2870 = vadd.f32 %v2757, %v2846
  %v2871 = vadd.f32 %v2758, %v2851
  %v2872 = vadd.f32 %v2759, %v2854
  %v2905 = vunpack.c.l.b16 %v2519
  %v2906 = vunpack.c.l.b16 %v2520
  %v2907 = vunpack.c.l.b16 %v2521
  %v2908 = vunpack.c.l.b16 %v2522
  %v2909 = vunpack.c.l.b16 %v2523
  %v2910 = vunpack.c.l.b16 %v2524
  %v2911 = vunpack.c.l.b16 %v2525
  %v2912 = vunpack.c.l.b16 %v2526
  %v2913 = vunpack.c.l.b16 %v2527
  %v2914 = vunpack.c.l.b16 %v2528
  %v2915 = vunpack.c.l.b16 %v2529
  %v2916 = vunpack.c.l.b16 %v2530
  %v2917 = vunpack.c.l.b16 %v2531
  %v2918 = vunpack.c.l.b16 %v2532
  %v2919 = vunpack.c.l.b16 %v2533
  %v2920 = vunpack.c.l.b16 %v2534
  %v2921 = vunpack.c.l.b16 %v2535
  %v2922 = vunpack.c.l.b16 %v2536
  %v2923 = vunpack.c.l.b16 %v2537
  %v2924 = vunpack.c.l.b16 %v2538
  %v2925 = vunpack.c.l.b16 %v2539
  %v2926 = vunpack.c.l.b16 %v2540
  %v2927 = vunpack.c.l.b16 %v2541
  %v2928 = vunpack.c.l.b16 %v2542
  %v2929 = vunpack.c.l.b16 %v2543
  %v2930 = vunpack.c.l.b16 %v2544
  %v2931 = vunpack.c.l.b16 %v2545
  %v2932 = vunpack.c.l.b16 %v2546
  %v2933 = vunpack.c.l.b16 %v2547
  %v2934 = vunpack.c.l.b16 %v2548
  %v2935 = vunpack.c.l.b16 %v2549
  %v2936 = vunpack.c.l.b16 %v2550
  %v2937 = vpack.c.b16 %v2906, %v2905
  %v2938 = vpack.c.b16 %v2908, %v2907
  %v2939 = vpack.c.b16 %v2910, %v2909
  %v2940 = vpack.c.b16 %v2912, %v2911
  %v2941 = vpack.c.b16 %v2914, %v2913
  %v2942 = vpack.c.b16 %v2916, %v2915
  %v2943 = vpack.c.b16 %v2918, %v2917
  %v2944 = vpack.c.b16 %v2920, %v2919
  %v2945 = vpack.c.b16 %v2922, %v2921
  %v2946 = vpack.c.b16 %v2924, %v2923
  %v2947 = vpack.c.b16 %v2926, %v2925
  %v2948 = vpack.c.b16 %v2928, %v2927
  %v2949 = vpack.c.b16 %v2930, %v2929
  %v2950 = vpack.c.b16 %v2932, %v2931
  %v2951 = vpack.c.b16 %v2934, %v2933
  %v2952 = vpack.c.b16 %v2936, %v2935
  %2969 = vmatprep.subr.bf16.mxu0 0
  %2970 = vmatpush1.bf16.msra.mxu0 %v2937
  %2971 = vmatprep.subr.bf16.mxu0 0
  %2972 = vmatpush1.bf16.msra.mxu0 %v2938
  %2973 = vmatprep.subr.bf16.mxu0 0
  %2974 = vmatpush1.bf16.msra.mxu0 %v2939
  %2975 = vmatprep.subr.bf16.mxu0 0
  %2976 = vmatpush1.bf16.msra.mxu0 %v2940
  %2977 = vmatprep.subr.bf16.mxu0 0
  %2978 = vmatpush1.bf16.msra.mxu0 %v2941
  %2979 = vmatprep.subr.bf16.mxu0 0
  %2980 = vmatpush1.bf16.msra.mxu0 %v2942
  %2981 = vmatprep.subr.bf16.mxu0 0
  %2982 = vmatpush1.bf16.msra.mxu0 %v2943
  %2983 = vmatprep.subr.bf16.mxu0 0
  %2984 = vmatpush1.bf16.msra.mxu0 %v2944
  %2985 = vmatprep.subr.bf16.mxu0 0
  %2986 = vmatpush1.bf16.msra.mxu0 %v2945
  %2987 = vmatprep.subr.bf16.mxu0 0
  %2988 = vmatpush1.bf16.msra.mxu0 %v2946
  %2989 = vmatprep.subr.bf16.mxu0 0
  %2990 = vmatpush1.bf16.msra.mxu0 %v2947
  %2991 = vmatprep.subr.bf16.mxu0 0
  %2992 = vmatpush1.bf16.msra.mxu0 %v2948
  %2993 = vmatprep.subr.bf16.mxu0 0
  %2994 = vmatpush1.bf16.msra.mxu0 %v2949
  %2995 = vmatprep.subr.bf16.mxu0 0
  %2996 = vmatpush1.bf16.msra.mxu0 %v2950
  %2997 = vmatprep.subr.bf16.mxu0 0
  %2998 = vmatpush1.bf16.msra.mxu0 %v2951
  %2999 = vmatprep.subr.bf16.mxu0 0
  %3000 = vmatpush1.bf16.msra.mxu0 %v2952
  %3001 = vmatprep.mubr.bf16.mxu0 %v2390
  %3002 = vmatmul.mubr.bf16.gmra.mrb[0].mxu0 %v2389
  %v3003 = vpop.f32.mrb[0].mxu0
  %v3004 = vadd.f32 0.0, %v3003
  %v3005 = vpop.f32.mrb[0].mxu0
  %v3006 = vpop.f32.mrb[0].mxu0
  %v3007 = vadd.f32 0.0, %v3006
  %v3008 = vpop.f32.mrb[0].mxu0
  %3009 = vmatprep.mubr.bf16.mxu0 %v2392
  %3010 = vmatmul.mubr.bf16.gmra.mrb[0].mxu0 %v2391
  %v3011 = vpop.f32.mrb[0].mxu0
  %v3012 = vadd.f32 0.0, %v3011
  %v3013 = vpop.f32.mrb[0].mxu0
  %v3014 = vpop.f32.mrb[0].mxu0
  %v3015 = vadd.f32 0.0, %v3014
  %v3016 = vpop.f32.mrb[0].mxu0
  %3017 = vmatprep.mubr.bf16.mxu0 %v2394
  %3018 = vmatmul.mubr.bf16.gmra.mrb[0].mxu0 %v2393
  %v3019 = vpop.f32.mrb[0].mxu0
  %v3020 = vadd.f32 0.0, %v3019
  %v3021 = vpop.f32.mrb[0].mxu0
  %v3022 = vpop.f32.mrb[0].mxu0
  %v3023 = vadd.f32 0.0, %v3022
  %v3024 = vpop.f32.mrb[0].mxu0
  %3025 = vmatprep.mubr.bf16.mxu0 %v2396
  %3026 = vmatmul.mubr.bf16.gmra.mrb[0].mxu0 %v2395
  %v3027 = vpop.f32.mrb[0].mxu0
  %v3028 = vadd.f32 0.0, %v3027
  %v3029 = vpop.f32.mrb[0].mxu0
  %v3030 = vpop.f32.mrb[0].mxu0
  %v3031 = vadd.f32 0.0, %v3030
  %v3032 = vpop.f32.mrb[0].mxu0
  %3033 = vmatprep.mubr.bf16.mxu0 %v2398
  %3034 = vmatmul.mubr.bf16.gmra.mrb[0].mxu0 %v2397
  %v3035 = vpop.f32.mrb[0].mxu0
  %v3036 = vadd.f32 0.0, %v3035
  %v3037 = vpop.f32.mrb[0].mxu0
  %v3038 = vpop.f32.mrb[0].mxu0
  %v3039 = vadd.f32 0.0, %v3038
  %v3040 = vpop.f32.mrb[0].mxu0
  %3041 = vmatprep.mubr.bf16.mxu0 %v2400
  %3042 = vmatmul.mubr.bf16.gmra.mrb[0].mxu0 %v2399
  %v3043 = vpop.f32.mrb[0].mxu0
  %v3044 = vadd.f32 0.0, %v3043
  %v3045 = vpop.f32.mrb[0].mxu0
  %v3046 = vpop.f32.mrb[0].mxu0
  %v3047 = vadd.f32 0.0, %v3046
  %v3048 = vpop.f32.mrb[0].mxu0
  %3049 = vmatprep.mubr.bf16.mxu0 %v2402
  %3050 = vmatmul.mubr.bf16.gmra.mrb[0].mxu0 %v2401
  %v3051 = vpop.f32.mrb[0].mxu0
  %v3052 = vadd.f32 0.0, %v3051
  %v3053 = vpop.f32.mrb[0].mxu0
  %v3054 = vpop.f32.mrb[0].mxu0
  %v3055 = vadd.f32 0.0, %v3054
  %v3056 = vpop.f32.mrb[0].mxu0
  %3057 = vmatprep.mubr.bf16.mxu0 %v2404
  %3058 = vmatmul.mubr.bf16.gmra.mrb[0].mxu0 %v2403
  %v3059 = vpop.f32.mrb[0].mxu0
  %v3060 = vadd.f32 0.0, %v3059
  %v3061 = vpop.f32.mrb[0].mxu0
  %v3062 = vpop.f32.mrb[0].mxu0
  %v3063 = vadd.f32 0.0, %v3062
  %v3064 = vpop.f32.mrb[0].mxu0
  %3065 = vdwg.mxu0
  %v3066 = vadd.f32 %v2857, %v3004
  %v3067 = vadd.f32 %v2858, %v3007
  %v3068 = vadd.f32 %v2859, %v3012
  %v3069 = vadd.f32 %v2860, %v3015
  %v3070 = vadd.f32 %v2861, %v3020
  %v3071 = vadd.f32 %v2862, %v3023
  %v3072 = vadd.f32 %v2863, %v3028
  %v3073 = vadd.f32 %v2864, %v3031
  %v3074 = vadd.f32 %v2865, %v3036
  %v3075 = vadd.f32 %v2866, %v3039
  %v3076 = vadd.f32 %v2867, %v3044
  %v3077 = vadd.f32 %v2868, %v3047
  %v3078 = vadd.f32 %v2869, %v3052
  %v3079 = vadd.f32 %v2870, %v3055
  %v3080 = vadd.f32 %v2871, %v3060
  %v3081 = vadd.f32 %v2872, %v3063
  %v3082 = vld [vmem:[%s424] sm:$0xff]
  %v3083 = vld [vmem:[%s424 + $0x8] sm:$0xff]
  %v3084 = vld [vmem:[%s424 + $0x20] sm:$0xff]
  %v3085 = vld [vmem:[%s424 + $0x28] sm:$0xff]
  %v3086 = vld [vmem:[%s424 + $0x40] sm:$0xff]
  %v3087 = vld [vmem:[%s424 + $0x48] sm:$0xff]
  %v3088 = vld [vmem:[%s424 + $0x60] sm:$0xff]
  %v3089 = vld [vmem:[%s424 + $0x68] sm:$0xff]
  %v3090 = vld [vmem:[%s424 + $0x80] sm:$0xff]
  %v3091 = vld [vmem:[%s424 + $0x88] sm:$0xff]
  %v3092 = vld [vmem:[%s424 + $0xa0] sm:$0xff]
  %v3093 = vld [vmem:[%s424 + $0xa8] sm:$0xff]
  %v3094 = vld [vmem:[%s424 + $0xc0] sm:$0xff]
  %v3095 = vld [vmem:[%s424 + $0xc8] sm:$0xff]
  %v3096 = vld [vmem:[%s424 + $0xe0] sm:$0xff]
  %v3097 = vld [vmem:[%s424 + $0xe8] sm:$0xff]
  %v3098 = vld [vmem:[%s424 + $0x140] sm:$0xff]
  %v3099 = vld [vmem:[%s424 + $0x148] sm:$0xff]
  %v3100 = vld [vmem:[%s424 + $0x160] sm:$0xff]
  %v3101 = vld [vmem:[%s424 + $0x168] sm:$0xff]
  %v3102 = vld [vmem:[%s424 + $0x180] sm:$0xff]
  %v3103 = vld [vmem:[%s424 + $0x188] sm:$0xff]
  %v3104 = vld [vmem:[%s424 + $0x1a0] sm:$0xff]
  %v3105 = vld [vmem:[%s424 + $0x1a8] sm:$0xff]
  %v3106 = vld [vmem:[%s424 + $0x1c0] sm:$0xff]
  %v3107 = vld [vmem:[%s424 + $0x1c8] sm:$0xff]
  %v3108 = vld [vmem:[%s424 + $0x1e0] sm:$0xff]
  %v3109 = vld [vmem:[%s424 + $0x1e8] sm:$0xff]
  %v3110 = vld [vmem:[%s424 + $0x200] sm:$0xff]
  %v3111 = vld [vmem:[%s424 + $0x208] sm:$0xff]
  %v3112 = vld [vmem:[%s424 + $0x220] sm:$0xff]
  %v3113 = vld [vmem:[%s424 + $0x228] sm:$0xff]
  %v3114 = vpack.c.bf16 %v3084, %v3082
  %v3115 = vpack.c.bf16 %v3085, %v3083
  %v3116 = vpack.c.bf16 %v3088, %v3086
  %v3117 = vpack.c.bf16 %v3089, %v3087
  %v3118 = vpack.c.bf16 %v3092, %v3090
  %v3119 = vpack.c.bf16 %v3093, %v3091
  %v3120 = vpack.c.bf16 %v3096, %v3094
  %v3121 = vpack.c.bf16 %v3097, %v3095
  %v3122 = vpack.c.bf16 %v3100, %v3098
  %v3123 = vpack.c.bf16 %v3101, %v3099
  %v3124 = vpack.c.bf16 %v3104, %v3102
  %v3125 = vpack.c.bf16 %v3105, %v3103
  %v3126 = vpack.c.bf16 %v3108, %v3106
  %v3127 = vpack.c.bf16 %v3109, %v3107
  %v3128 = vpack.c.bf16 %v3112, %v3110
  %v3129 = vpack.c.bf16 %v3113, %v3111
  %v3130 = vunpack.c.l.bf16 %v3114
  %v3131 = vunpack.c.l.bf16 %v3115
  %v3132 = vunpack.c.h.bf16 %v3114
  %v3133 = vunpack.c.h.bf16 %v3115
  %v3134 = vunpack.c.l.bf16 %v3116
  %v3135 = vunpack.c.l.bf16 %v3117
  %v3136 = vunpack.c.h.bf16 %v3116
  %v3137 = vunpack.c.h.bf16 %v3117
  %v3138 = vunpack.c.l.bf16 %v3118
  %v3139 = vunpack.c.l.bf16 %v3119
  %v3140 = vunpack.c.h.bf16 %v3118
  %v3141 = vunpack.c.h.bf16 %v3119
  %v3142 = vunpack.c.l.bf16 %v3120
  %v3143 = vunpack.c.l.bf16 %v3121
  %v3144 = vunpack.c.h.bf16 %v3120
  %v3145 = vunpack.c.h.bf16 %v3121
  %v3146 = vunpack.c.l.bf16 %v3122
  %v3147 = vunpack.c.l.bf16 %v3123
  %v3148 = vunpack.c.h.bf16 %v3122
  %v3149 = vunpack.c.h.bf16 %v3123
  %v3150 = vunpack.c.l.bf16 %v3124
  %v3151 = vunpack.c.l.bf16 %v3125
  %v3152 = vunpack.c.h.bf16 %v3124
  %v3153 = vunpack.c.h.bf16 %v3125
  %v3154 = vunpack.c.l.bf16 %v3126
  %v3155 = vunpack.c.l.bf16 %v3127
  %v3156 = vunpack.c.h.bf16 %v3126
  %v3157 = vunpack.c.h.bf16 %v3127
  %v3158 = vunpack.c.l.bf16 %v3128
  %v3159 = vunpack.c.l.bf16 %v3129
  %v3160 = vunpack.c.h.bf16 %v3128
  %v3161 = vunpack.c.h.bf16 %v3129
  %v3162 = vsub.f32 %v3082, %v3130
  %v3163 = vsub.f32 %v3083, %v3131
  %v3164 = vsub.f32 %v3084, %v3132
  %v3165 = vsub.f32 %v3085, %v3133
  %v3166 = vsub.f32 %v3086, %v3134
  %v3167 = vsub.f32 %v3087, %v3135
  %v3168 = vsub.f32 %v3088, %v3136
  %v3169 = vsub.f32 %v3089, %v3137
  %v3170 = vsub.f32 %v3090, %v3138
  %v3171 = vsub.f32 %v3091, %v3139
  %v3172 = vsub.f32 %v3092, %v3140
  %v3173 = vsub.f32 %v3093, %v3141
  %v3174 = vsub.f32 %v3094, %v3142
  %v3175 = vsub.f32 %v3095, %v3143
  %v3176 = vsub.f32 %v3096, %v3144
  %v3177 = vsub.f32 %v3097, %v3145
  %v3178 = vsub.f32 %v3098, %v3146
  %v3179 = vsub.f32 %v3099, %v3147
  %v3180 = vsub.f32 %v3100, %v3148
  %v3181 = vsub.f32 %v3101, %v3149
  %v3182 = vsub.f32 %v3102, %v3150
  %v3183 = vsub.f32 %v3103, %v3151
  %v3184 = vsub.f32 %v3104, %v3152
  %v3185 = vsub.f32 %v3105, %v3153
  %v3186 = vsub.f32 %v3106, %v3154
  %v3187 = vsub.f32 %v3107, %v3155
  %v3188 = vsub.f32 %v3108, %v3156
  %v3189 = vsub.f32 %v3109, %v3157
  %v3190 = vsub.f32 %v3110, %v3158
  %v3191 = vsub.f32 %v3111, %v3159
  %v3192 = vsub.f32 %v3112, %v3160
  %v3193 = vsub.f32 %v3113, %v3161
  %v3194 = vpack.c.bf16 %v3164, %v3162
  %v3195 = vpack.c.bf16 %v3165, %v3163
  %v3196 = vpack.c.bf16 %v3168, %v3166
  %v3197 = vpack.c.bf16 %v3169, %v3167
  %v3198 = vpack.c.bf16 %v3172, %v3170
  %v3199 = vpack.c.bf16 %v3173, %v3171
  %v3200 = vpack.c.bf16 %v3176, %v3174
  %v3201 = vpack.c.bf16 %v3177, %v3175
  %v3202 = vpack.c.bf16 %v3180, %v3178
  %v3203 = vpack.c.bf16 %v3181, %v3179
  %v3204 = vpack.c.bf16 %v3184, %v3182
  %v3205 = vpack.c.bf16 %v3185, %v3183
  %v3206 = vpack.c.bf16 %v3188, %v3186
  %v3207 = vpack.c.bf16 %v3189, %v3187
  %v3208 = vpack.c.bf16 %v3192, %v3190
  %v3209 = vpack.c.bf16 %v3193, %v3191
  %s3210 = scalar_lea.vmem %s1, 384
  %v3211 = vld [vmem:[%s3210] sm:$0xf]
  %v3212 = vld [vmem:[%s3210 + $0x4] sm:$0xf]
  %v3213 = vld [vmem:[%s3210 + $0x8] sm:$0xf]
  %v3214 = vld [vmem:[%s3210 + $0xc] sm:$0xf]
  %v3215 = vld [vmem:[%s3210 + $0x10] sm:$0xf]
  %v3216 = vld [vmem:[%s3210 + $0x14] sm:$0xf]
  %v3217 = vld [vmem:[%s3210 + $0x18] sm:$0xf]
  %v3218 = vld [vmem:[%s3210 + $0x1c] sm:$0xf]
  %v3219 = vld [vmem:[%s3210 + $0x20] sm:$0xf]
  %v3220 = vld [vmem:[%s3210 + $0x24] sm:$0xf]
  %v3221 = vld [vmem:[%s3210 + $0x28] sm:$0xf]
  %v3222 = vld [vmem:[%s3210 + $0x2c] sm:$0xf]
  %v3223 = vld [vmem:[%s3210 + $0x30] sm:$0xf]
  %v3224 = vld [vmem:[%s3210 + $0x34] sm:$0xf]
  %v3225 = vld [vmem:[%s3210 + $0x38] sm:$0xf]
  %v3226 = vld [vmem:[%s3210 + $0x3c] sm:$0xf]
  %v3227 = vld [vmem:[%s3210 + $0x40] sm:$0xf]
  %v3228 = vld [vmem:[%s3210 + $0x44] sm:$0xf]
  %v3229 = vld [vmem:[%s3210 + $0x48] sm:$0xf]
  %v3230 = vld [vmem:[%s3210 + $0x4c] sm:$0xf]
  %v3231 = vld [vmem:[%s3210 + $0x50] sm:$0xf]
  %v3232 = vld [vmem:[%s3210 + $0x54] sm:$0xf]
  %v3233 = vld [vmem:[%s3210 + $0x58] sm:$0xf]
  %v3234 = vld [vmem:[%s3210 + $0x5c] sm:$0xf]
  %v3235 = vld [vmem:[%s3210 + $0x60] sm:$0xf]
  %v3236 = vld [vmem:[%s3210 + $0x64] sm:$0xf]
  %v3237 = vld [vmem:[%s3210 + $0x68] sm:$0xf]
  %v3238 = vld [vmem:[%s3210 + $0x6c] sm:$0xf]
  %v3239 = vld [vmem:[%s3210 + $0x70] sm:$0xf]
  %v3240 = vld [vmem:[%s3210 + $0x74] sm:$0xf]
  %v3241 = vld [vmem:[%s3210 + $0x78] sm:$0xf]
  %v3242 = vld [vmem:[%s3210 + $0x7c] sm:$0xf]
  %s3243 = scalar_lea.vmem %s2, 384
  %v3244 = vld [vmem:[%s3243] sm:$0xf]
  %v3245 = vld [vmem:[%s3243 + $0x4] sm:$0xf]
  %v3246 = vld [vmem:[%s3243 + $0x8] sm:$0xf]
  %v3247 = vld [vmem:[%s3243 + $0xc] sm:$0xf]
  %v3248 = vld [vmem:[%s3243 + $0x10] sm:$0xf]
  %v3249 = vld [vmem:[%s3243 + $0x14] sm:$0xf]
  %v3250 = vld [vmem:[%s3243 + $0x18] sm:$0xf]
  %v3251 = vld [vmem:[%s3243 + $0x1c] sm:$0xf]
  %v3252 = vld [vmem:[%s3243 + $0x20] sm:$0xf]
  %v3253 = vld [vmem:[%s3243 + $0x24] sm:$0xf]
  %v3254 = vld [vmem:[%s3243 + $0x28] sm:$0xf]
  %v3255 = vld [vmem:[%s3243 + $0x2c] sm:$0xf]
  %v3256 = vld [vmem:[%s3243 + $0x30] sm:$0xf]
  %v3257 = vld [vmem:[%s3243 + $0x34] sm:$0xf]
  %v3258 = vld [vmem:[%s3243 + $0x38] sm:$0xf]
  %v3259 = vld [vmem:[%s3243 + $0x3c] sm:$0xf]
  %v3260 = vld [vmem:[%s3243 + $0x40] sm:$0xf]
  %v3261 = vld [vmem:[%s3243 + $0x44] sm:$0xf]
  %v3262 = vld [vmem:[%s3243 + $0x48] sm:$0xf]
  %v3263 = vld [vmem:[%s3243 + $0x4c] sm:$0xf]
  %v3264 = vld [vmem:[%s3243 + $0x50] sm:$0xf]
  %v3265 = vld [vmem:[%s3243 + $0x54] sm:$0xf]
  %v3266 = vld [vmem:[%s3243 + $0x58] sm:$0xf]
  %v3267 = vld [vmem:[%s3243 + $0x5c] sm:$0xf]
  %v3268 = vld [vmem:[%s3243 + $0x60] sm:$0xf]
  %v3269 = vld [vmem:[%s3243 + $0x64] sm:$0xf]
  %v3270 = vld [vmem:[%s3243 + $0x68] sm:$0xf]
  %v3271 = vld [vmem:[%s3243 + $0x6c] sm:$0xf]
  %v3272 = vld [vmem:[%s3243 + $0x70] sm:$0xf]
  %v3273 = vld [vmem:[%s3243 + $0x74] sm:$0xf]
  %v3274 = vld [vmem:[%s3243 + $0x78] sm:$0xf]
  %v3275 = vld [vmem:[%s3243 + $0x7c] sm:$0xf]
  %v3308 = vunpack.c.l.b16 %v3211
  %v3309 = vunpack.c.l.b16 %v3212
  %v3310 = vunpack.c.l.b16 %v3213
  %v3311 = vunpack.c.l.b16 %v3214
  %v3312 = vunpack.c.l.b16 %v3215
  %v3313 = vunpack.c.l.b16 %v3216
  %v3314 = vunpack.c.l.b16 %v3217
  %v3315 = vunpack.c.l.b16 %v3218
  %v3316 = vunpack.c.l.b16 %v3219
  %v3317 = vunpack.c.l.b16 %v3220
  %v3318 = vunpack.c.l.b16 %v3221
  %v3319 = vunpack.c.l.b16 %v3222
  %v3320 = vunpack.c.l.b16 %v3223
  %v3321 = vunpack.c.l.b16 %v3224
  %v3322 = vunpack.c.l.b16 %v3225
  %v3323 = vunpack.c.l.b16 %v3226
  %v3324 = vunpack.c.l.b16 %v3227
  %v3325 = vunpack.c.l.b16 %v3228
  %v3326 = vunpack.c.l.b16 %v3229
  %v3327 = vunpack.c.l.b16 %v3230
  %v3328 = vunpack.c.l.b16 %v3231
  %v3329 = vunpack.c.l.b16 %v3232
  %v3330 = vunpack.c.l.b16 %v3233
  %v3331 = vunpack.c.l.b16 %v3234
  %v3332 = vunpack.c.l.b16 %v3235
  %v3333 = vunpack.c.l.b16 %v3236
  %v3334 = vunpack.c.l.b16 %v3237
  %v3335 = vunpack.c.l.b16 %v3238
  %v3336 = vunpack.c.l.b16 %v3239
  %v3337 = vunpack.c.l.b16 %v3240
  %v3338 = vunpack.c.l.b16 %v3241
  %v3339 = vunpack.c.l.b16 %v3242
  %v3340 = vpack.c.b16 %v3309, %v3308
  %v3341 = vpack.c.b16 %v3311, %v3310
  %v3342 = vpack.c.b16 %v3313, %v3312
  %v3343 = vpack.c.b16 %v3315, %v3314
  %v3344 = vpack.c.b16 %v3317, %v3316
  %v3345 = vpack.c.b16 %v3319, %v3318
  %v3346 = vpack.c.b16 %v3321, %v3320
  %v3347 = vpack.c.b16 %v3323, %v3322
  %v3348 = vpack.c.b16 %v3325, %v3324
  %v3349 = vpack.c.b16 %v3327, %v3326
  %v3350 = vpack.c.b16 %v3329, %v3328
  %v3351 = vpack.c.b16 %v3331, %v3330
  %v3352 = vpack.c.b16 %v3333, %v3332
  %v3353 = vpack.c.b16 %v3335, %v3334
  %v3354 = vpack.c.b16 %v3337, %v3336
  %v3355 = vpack.c.b16 %v3339, %v3338
  %3372 = vmatprep.subr.bf16.mxu0 0
  %3373 = vmatpush1.bf16.msra.mxu0 %v3340
  %3374 = vmatprep.subr.bf16.mxu0 0
  %3375 = vmatpush1.bf16.msra.mxu0 %v3341
  %3376 = vmatprep.subr.bf16.mxu0 0
  %3377 = vmatpush1.bf16.msra.mxu0 %v3342
  %3378 = vmatprep.subr.bf16.mxu0 0
  %3379 = vmatpush1.bf16.msra.mxu0 %v3343
  %3380 = vmatprep.subr.bf16.mxu0 0
  %3381 = vmatpush1.bf16.msra.mxu0 %v3344
  %3382 = vmatprep.subr.bf16.mxu0 0
  %3383 = vmatpush1.bf16.msra.mxu0 %v3345
  %3384 = vmatprep.subr.bf16.mxu0 0
  %3385 = vmatpush1.bf16.msra.mxu0 %v3346
  %3386 = vmatprep.subr.bf16.mxu0 0
  %3387 = vmatpush1.bf16.msra.mxu0 %v3347
  %3388 = vmatprep.subr.bf16.mxu0 0
  %3389 = vmatpush1.bf16.msra.mxu0 %v3348
  %3390 = vmatprep.subr.bf16.mxu0 0
  %3391 = vmatpush1.bf16.msra.mxu0 %v3349
  %3392 = vmatprep.subr.bf16.mxu0 0
  %3393 = vmatpush1.bf16.msra.mxu0 %v3350
  %3394 = vmatprep.subr.bf16.mxu0 0
  %3395 = vmatpush1.bf16.msra.mxu0 %v3351
  %3396 = vmatprep.subr.bf16.mxu0 0
  %3397 = vmatpush1.bf16.msra.mxu0 %v3352
  %3398 = vmatprep.subr.bf16.mxu0 0
  %3399 = vmatpush1.bf16.msra.mxu0 %v3353
  %3400 = vmatprep.subr.bf16.mxu0 0
  %3401 = vmatpush1.bf16.msra.mxu0 %v3354
  %3402 = vmatprep.subr.bf16.mxu0 0
  %3403 = vmatpush1.bf16.msra.mxu0 %v3355
  %3404 = vmatprep.mubr.bf16.mxu0 %v3115
  %3405 = vmatmul.mubr.bf16.gmra.mrb[0].mxu0 %v3114
  %v3406 = vpop.f32.mrb[0].mxu0
  %v3407 = vadd.f32 0.0, %v3406
  %v3408 = vpop.f32.mrb[0].mxu0
  %v3409 = vpop.f32.mrb[0].mxu0
  %v3410 = vadd.f32 0.0, %v3409
  %v3411 = vpop.f32.mrb[0].mxu0
  %3412 = vmatprep.mubr.bf16.mxu0 %v3117
  %3413 = vmatmul.mubr.bf16.gmra.mrb[0].mxu0 %v3116
  %v3414 = vpop.f32.mrb[0].mxu0
  %v3415 = vadd.f32 0.0, %v3414
  %v3416 = vpop.f32.mrb[0].mxu0
  %v3417 = vpop.f32.mrb[0].mxu0
  %v3418 = vadd.f32 0.0, %v3417
  %v3419 = vpop.f32.mrb[0].mxu0
  %3420 = vmatprep.mubr.bf16.mxu0 %v3119
  %3421 = vmatmul.mubr.bf16.gmra.mrb[0].mxu0 %v3118
  %v3422 = vpop.f32.mrb[0].mxu0
  %v3423 = vadd.f32 0.0, %v3422
  %v3424 = vpop.f32.mrb[0].mxu0
  %v3425 = vpop.f32.mrb[0].mxu0
  %v3426 = vadd.f32 0.0, %v3425
  %v3427 = vpop.f32.mrb[0].mxu0
  %3428 = vmatprep.mubr.bf16.mxu0 %v3121
  %3429 = vmatmul.mubr.bf16.gmra.mrb[0].mxu0 %v3120
  %v3430 = vpop.f32.mrb[0].mxu0
  %v3431 = vadd.f32 0.0, %v3430
  %v3432 = vpop.f32.mrb[0].mxu0
  %v3433 = vpop.f32.mrb[0].mxu0
  %v3434 = vadd.f32 0.0, %v3433
  %v3435 = vpop.f32.mrb[0].mxu0
  %3436 = vmatprep.mubr.bf16.mxu0 %v3123
  %3437 = vmatmul.mubr.bf16.gmra.mrb[0].mxu0 %v3122
  %v3438 = vpop.f32.mrb[0].mxu0
  %v3439 = vadd.f32 0.0, %v3438
  %v3440 = vpop.f32.mrb[0].mxu0
  %v3441 = vpop.f32.mrb[0].mxu0
  %v3442 = vadd.f32 0.0, %v3441
  %v3443 = vpop.f32.mrb[0].mxu0
  %3444 = vmatprep.mubr.bf16.mxu0 %v3125
  %3445 = vmatmul.mubr.bf16.gmra.mrb[0].mxu0 %v3124
  %v3446 = vpop.f32.mrb[0].mxu0
  %v3447 = vadd.f32 0.0, %v3446
  %v3448 = vpop.f32.mrb[0].mxu0
  %v3449 = vpop.f32.mrb[0].mxu0
  %v3450 = vadd.f32 0.0, %v3449
  %v3451 = vpop.f32.mrb[0].mxu0
  %3452 = vmatprep.mubr.bf16.mxu0 %v3127
  %3453 = vmatmul.mubr.bf16.gmra.mrb[0].mxu0 %v3126
  %v3454 = vpop.f32.mrb[0].mxu0
  %v3455 = vadd.f32 0.0, %v3454
  %v3456 = vpop.f32.mrb[0].mxu0
  %v3457 = vpop.f32.mrb[0].mxu0
  %v3458 = vadd.f32 0.0, %v3457
  %v3459 = vpop.f32.mrb[0].mxu0
  %3460 = vmatprep.mubr.bf16.mxu0 %v3129
  %3461 = vmatmul.mubr.bf16.gmra.mrb[0].mxu0 %v3128
  %v3462 = vpop.f32.mrb[0].mxu0
  %v3463 = vadd.f32 0.0, %v3462
  %v3464 = vpop.f32.mrb[0].mxu0
  %v3465 = vpop.f32.mrb[0].mxu0
  %v3466 = vadd.f32 0.0, %v3465
  %v3467 = vpop.f32.mrb[0].mxu0
  %3468 = vdwg.mxu0
  %v3469 = vadd.f32 %v3066, %v3407
  %v3470 = vadd.f32 %v3067, %v3410
  %v3471 = vadd.f32 %v3068, %v3415
  %v3472 = vadd.f32 %v3069, %v3418
  %v3473 = vadd.f32 %v3070, %v3423
  %v3474 = vadd.f32 %v3071, %v3426
  %v3475 = vadd.f32 %v3072, %v3431
  %v3476 = vadd.f32 %v3073, %v3434
  %v3477 = vadd.f32 %v3074, %v3439
  %v3478 = vadd.f32 %v3075, %v3442
  %v3479 = vadd.f32 %v3076, %v3447
  %v3480 = vadd.f32 %v3077, %v3450
  %v3481 = vadd.f32 %v3078, %v3455
  %v3482 = vadd.f32 %v3079, %v3458
  %v3483 = vadd.f32 %v3080, %v3463
  %v3484 = vadd.f32 %v3081, %v3466
  %3485 = vmatprep.subr.bf16.mxu0 0
  %3486 = vmatpush1.bf16.msra.mxu0 %v3340
  %3487 = vmatprep.subr.bf16.mxu0 0
  %3488 = vmatpush1.bf16.msra.mxu0 %v3341
  %3489 = vmatprep.subr.bf16.mxu0 0
  %3490 = vmatpush1.bf16.msra.mxu0 %v3342
  %3491 = vmatprep.subr.bf16.mxu0 0
  %3492 = vmatpush1.bf16.msra.mxu0 %v3343
  %3493 = vmatprep.subr.bf16.mxu0 0
  %3494 = vmatpush1.bf16.msra.mxu0 %v3344
  %3495 = vmatprep.subr.bf16.mxu0 0
  %3496 = vmatpush1.bf16.msra.mxu0 %v3345
  %3497 = vmatprep.subr.bf16.mxu0 0
  %3498 = vmatpush1.bf16.msra.mxu0 %v3346
  %3499 = vmatprep.subr.bf16.mxu0 0
  %3500 = vmatpush1.bf16.msra.mxu0 %v3347
  %3501 = vmatprep.subr.bf16.mxu0 0
  %3502 = vmatpush1.bf16.msra.mxu0 %v3348
  %3503 = vmatprep.subr.bf16.mxu0 0
  %3504 = vmatpush1.bf16.msra.mxu0 %v3349
  %3505 = vmatprep.subr.bf16.mxu0 0
  %3506 = vmatpush1.bf16.msra.mxu0 %v3350
  %3507 = vmatprep.subr.bf16.mxu0 0
  %3508 = vmatpush1.bf16.msra.mxu0 %v3351
  %3509 = vmatprep.subr.bf16.mxu0 0
  %3510 = vmatpush1.bf16.msra.mxu0 %v3352
  %3511 = vmatprep.subr.bf16.mxu0 0
  %3512 = vmatpush1.bf16.msra.mxu0 %v3353
  %3513 = vmatprep.subr.bf16.mxu0 0
  %3514 = vmatpush1.bf16.msra.mxu0 %v3354
  %3515 = vmatprep.subr.bf16.mxu0 0
  %3516 = vmatpush1.bf16.msra.mxu0 %v3355
  %3517 = vmatprep.mubr.bf16.mxu0 %v3195
  %3518 = vmatmul.mubr.bf16.gmra.mrb[0].mxu0 %v3194
  %v3519 = vpop.f32.mrb[0].mxu0
  %v3520 = vadd.f32 0.0, %v3519
  %v3521 = vpop.f32.mrb[0].mxu0
  %v3522 = vpop.f32.mrb[0].mxu0
  %v3523 = vadd.f32 0.0, %v3522
  %v3524 = vpop.f32.mrb[0].mxu0
  %3525 = vmatprep.mubr.bf16.mxu0 %v3197
  %3526 = vmatmul.mubr.bf16.gmra.mrb[0].mxu0 %v3196
  %v3527 = vpop.f32.mrb[0].mxu0
  %v3528 = vadd.f32 0.0, %v3527
  %v3529 = vpop.f32.mrb[0].mxu0
  %v3530 = vpop.f32.mrb[0].mxu0
  %v3531 = vadd.f32 0.0, %v3530
  %v3532 = vpop.f32.mrb[0].mxu0
  %3533 = vmatprep.mubr.bf16.mxu0 %v3199
  %3534 = vmatmul.mubr.bf16.gmra.mrb[0].mxu0 %v3198
  %v3535 = vpop.f32.mrb[0].mxu0
  %v3536 = vadd.f32 0.0, %v3535
  %v3537 = vpop.f32.mrb[0].mxu0
  %v3538 = vpop.f32.mrb[0].mxu0
  %v3539 = vadd.f32 0.0, %v3538
  %v3540 = vpop.f32.mrb[0].mxu0
  %3541 = vmatprep.mubr.bf16.mxu0 %v3201
  %3542 = vmatmul.mubr.bf16.gmra.mrb[0].mxu0 %v3200
  %v3543 = vpop.f32.mrb[0].mxu0
  %v3544 = vadd.f32 0.0, %v3543
  %v3545 = vpop.f32.mrb[0].mxu0
  %v3546 = vpop.f32.mrb[0].mxu0
  %v3547 = vadd.f32 0.0, %v3546
  %v3548 = vpop.f32.mrb[0].mxu0
  %3549 = vmatprep.mubr.bf16.mxu0 %v3203
  %3550 = vmatmul.mubr.bf16.gmra.mrb[0].mxu0 %v3202
  %v3551 = vpop.f32.mrb[0].mxu0
  %v3552 = vadd.f32 0.0, %v3551
  %v3553 = vpop.f32.mrb[0].mxu0
  %v3554 = vpop.f32.mrb[0].mxu0
  %v3555 = vadd.f32 0.0, %v3554
  %v3556 = vpop.f32.mrb[0].mxu0
  %3557 = vmatprep.mubr.bf16.mxu0 %v3205
  %3558 = vmatmul.mubr.bf16.gmra.mrb[0].mxu0 %v3204
  %v3559 = vpop.f32.mrb[0].mxu0
  %v3560 = vadd.f32 0.0, %v3559
  %v3561 = vpop.f32.mrb[0].mxu0
  %v3562 = vpop.f32.mrb[0].mxu0
  %v3563 = vadd.f32 0.0, %v3562
  %v3564 = vpop.f32.mrb[0].mxu0
  %3565 = vmatprep.mubr.bf16.mxu0 %v3207
  %3566 = vmatmul.mubr.bf16.gmra.mrb[0].mxu0 %v3206
  %v3567 = vpop.f32.mrb[0].mxu0
  %v3568 = vadd.f32 0.0, %v3567
  %v3569 = vpop.f32.mrb[0].mxu0
  %v3570 = vpop.f32.mrb[0].mxu0
  %v3571 = vadd.f32 0.0, %v3570
  %v3572 = vpop.f32.mrb[0].mxu0
  %3573 = vmatprep.mubr.bf16.mxu0 %v3209
  %3574 = vmatmul.mubr.bf16.gmra.mrb[0].mxu0 %v3208
  %v3575 = vpop.f32.mrb[0].mxu0
  %v3576 = vadd.f32 0.0, %v3575
  %v3577 = vpop.f32.mrb[0].mxu0
  %v3578 = vpop.f32.mrb[0].mxu0
  %v3579 = vadd.f32 0.0, %v3578
  %v3580 = vpop.f32.mrb[0].mxu0
  %3581 = vdwg.mxu0
  %v3582 = vadd.f32 %v3469, %v3520
  %v3583 = vadd.f32 %v3470, %v3523
  %v3584 = vadd.f32 %v3471, %v3528
  %v3585 = vadd.f32 %v3472, %v3531
  %v3586 = vadd.f32 %v3473, %v3536
  %v3587 = vadd.f32 %v3474, %v3539
  %v3588 = vadd.f32 %v3475, %v3544
  %v3589 = vadd.f32 %v3476, %v3547
  %v3590 = vadd.f32 %v3477, %v3552
  %v3591 = vadd.f32 %v3478, %v3555
  %v3592 = vadd.f32 %v3479, %v3560
  %v3593 = vadd.f32 %v3480, %v3563
  %v3594 = vadd.f32 %v3481, %v3568
  %v3595 = vadd.f32 %v3482, %v3571
  %v3596 = vadd.f32 %v3483, %v3576
  %v3597 = vadd.f32 %v3484, %v3579
  %v3630 = vunpack.c.l.b16 %v3244
  %v3631 = vunpack.c.l.b16 %v3245
  %v3632 = vunpack.c.l.b16 %v3246
  %v3633 = vunpack.c.l.b16 %v3247
  %v3634 = vunpack.c.l.b16 %v3248
  %v3635 = vunpack.c.l.b16 %v3249
  %v3636 = vunpack.c.l.b16 %v3250
  %v3637 = vunpack.c.l.b16 %v3251
  %v3638 = vunpack.c.l.b16 %v3252
  %v3639 = vunpack.c.l.b16 %v3253
  %v3640 = vunpack.c.l.b16 %v3254
  %v3641 = vunpack.c.l.b16 %v3255
  %v3642 = vunpack.c.l.b16 %v3256
  %v3643 = vunpack.c.l.b16 %v3257
  %v3644 = vunpack.c.l.b16 %v3258
  %v3645 = vunpack.c.l.b16 %v3259
  %v3646 = vunpack.c.l.b16 %v3260
  %v3647 = vunpack.c.l.b16 %v3261
  %v3648 = vunpack.c.l.b16 %v3262
  %v3649 = vunpack.c.l.b16 %v3263
  %v3650 = vunpack.c.l.b16 %v3264
  %v3651 = vunpack.c.l.b16 %v3265
  %v3652 = vunpack.c.l.b16 %v3266
  %v3653 = vunpack.c.l.b16 %v3267
  %v3654 = vunpack.c.l.b16 %v3268
  %v3655 = vunpack.c.l.b16 %v3269
  %v3656 = vunpack.c.l.b16 %v3270
  %v3657 = vunpack.c.l.b16 %v3271
  %v3658 = vunpack.c.l.b16 %v3272
  %v3659 = vunpack.c.l.b16 %v3273
  %v3660 = vunpack.c.l.b16 %v3274
  %v3661 = vunpack.c.l.b16 %v3275
  %v3662 = vpack.c.b16 %v3631, %v3630
  %v3663 = vpack.c.b16 %v3633, %v3632
  %v3664 = vpack.c.b16 %v3635, %v3634
  %v3665 = vpack.c.b16 %v3637, %v3636
  %v3666 = vpack.c.b16 %v3639, %v3638
  %v3667 = vpack.c.b16 %v3641, %v3640
  %v3668 = vpack.c.b16 %v3643, %v3642
  %v3669 = vpack.c.b16 %v3645, %v3644
  %v3670 = vpack.c.b16 %v3647, %v3646
  %v3671 = vpack.c.b16 %v3649, %v3648
  %v3672 = vpack.c.b16 %v3651, %v3650
  %v3673 = vpack.c.b16 %v3653, %v3652
  %v3674 = vpack.c.b16 %v3655, %v3654
  %v3675 = vpack.c.b16 %v3657, %v3656
  %v3676 = vpack.c.b16 %v3659, %v3658
  %v3677 = vpack.c.b16 %v3661, %v3660
  %3694 = vmatprep.subr.bf16.mxu0 0
  %3695 = vmatpush1.bf16.msra.mxu0 %v3662
  %3696 = vmatprep.subr.bf16.mxu0 0
  %3697 = vmatpush1.bf16.msra.mxu0 %v3663
  %3698 = vmatprep.subr.bf16.mxu0 0
  %3699 = vmatpush1.bf16.msra.mxu0 %v3664
  %3700 = vmatprep.subr.bf16.mxu0 0
  %3701 = vmatpush1.bf16.msra.mxu0 %v3665
  %3702 = vmatprep.subr.bf16.mxu0 0
  %3703 = vmatpush1.bf16.msra.mxu0 %v3666
  %3704 = vmatprep.subr.bf16.mxu0 0
  %3705 = vmatpush1.bf16.msra.mxu0 %v3667
  %3706 = vmatprep.subr.bf16.mxu0 0
  %3707 = vmatpush1.bf16.msra.mxu0 %v3668
  %3708 = vmatprep.subr.bf16.mxu0 0
  %3709 = vmatpush1.bf16.msra.mxu0 %v3669
  %3710 = vmatprep.subr.bf16.mxu0 0
  %3711 = vmatpush1.bf16.msra.mxu0 %v3670
  %3712 = vmatprep.subr.bf16.mxu0 0
  %3713 = vmatpush1.bf16.msra.mxu0 %v3671
  %3714 = vmatprep.subr.bf16.mxu0 0
  %3715 = vmatpush1.bf16.msra.mxu0 %v3672
  %3716 = vmatprep.subr.bf16.mxu0 0
  %3717 = vmatpush1.bf16.msra.mxu0 %v3673
  %3718 = vmatprep.subr.bf16.mxu0 0
  %3719 = vmatpush1.bf16.msra.mxu0 %v3674
  %3720 = vmatprep.subr.bf16.mxu0 0
  %3721 = vmatpush1.bf16.msra.mxu0 %v3675
  %3722 = vmatprep.subr.bf16.mxu0 0
  %3723 = vmatpush1.bf16.msra.mxu0 %v3676
  %3724 = vmatprep.subr.bf16.mxu0 0
  %3725 = vmatpush1.bf16.msra.mxu0 %v3677
  %3726 = vmatprep.mubr.bf16.mxu0 %v3115
  %3727 = vmatmul.mubr.bf16.gmra.mrb[0].mxu0 %v3114
  %v3728 = vpop.f32.mrb[0].mxu0
  %v3729 = vadd.f32 0.0, %v3728
  %v3730 = vpop.f32.mrb[0].mxu0
  %v3731 = vpop.f32.mrb[0].mxu0
  %v3732 = vadd.f32 0.0, %v3731
  %v3733 = vpop.f32.mrb[0].mxu0
  %3734 = vmatprep.mubr.bf16.mxu0 %v3117
  %3735 = vmatmul.mubr.bf16.gmra.mrb[0].mxu0 %v3116
  %v3736 = vpop.f32.mrb[0].mxu0
  %v3737 = vadd.f32 0.0, %v3736
  %v3738 = vpop.f32.mrb[0].mxu0
  %v3739 = vpop.f32.mrb[0].mxu0
  %v3740 = vadd.f32 0.0, %v3739
  %v3741 = vpop.f32.mrb[0].mxu0
  %3742 = vmatprep.mubr.bf16.mxu0 %v3119
  %3743 = vmatmul.mubr.bf16.gmra.mrb[0].mxu0 %v3118
  %v3744 = vpop.f32.mrb[0].mxu0
  %v3745 = vadd.f32 0.0, %v3744
  %v3746 = vpop.f32.mrb[0].mxu0
  %v3747 = vpop.f32.mrb[0].mxu0
  %v3748 = vadd.f32 0.0, %v3747
  %v3749 = vpop.f32.mrb[0].mxu0
  %3750 = vmatprep.mubr.bf16.mxu0 %v3121
  %3751 = vmatmul.mubr.bf16.gmra.mrb[0].mxu0 %v3120
  %v3752 = vpop.f32.mrb[0].mxu0
  %v3753 = vadd.f32 0.0, %v3752
  %v3754 = vpop.f32.mrb[0].mxu0
  %v3755 = vpop.f32.mrb[0].mxu0
  %v3756 = vadd.f32 0.0, %v3755
  %v3757 = vpop.f32.mrb[0].mxu0
  %3758 = vmatprep.mubr.bf16.mxu0 %v3123
  %3759 = vmatmul.mubr.bf16.gmra.mrb[0].mxu0 %v3122
  %v3760 = vpop.f32.mrb[0].mxu0
  %v3761 = vadd.f32 0.0, %v3760
  %v3762 = vpop.f32.mrb[0].mxu0
  %v3763 = vpop.f32.mrb[0].mxu0
  %v3764 = vadd.f32 0.0, %v3763
  %v3765 = vpop.f32.mrb[0].mxu0
  %3766 = vmatprep.mubr.bf16.mxu0 %v3125
  %3767 = vmatmul.mubr.bf16.gmra.mrb[0].mxu0 %v3124
  %v3768 = vpop.f32.mrb[0].mxu0
  %v3769 = vadd.f32 0.0, %v3768
  %v3770 = vpop.f32.mrb[0].mxu0
  %v3771 = vpop.f32.mrb[0].mxu0
  %v3772 = vadd.f32 0.0, %v3771
  %v3773 = vpop.f32.mrb[0].mxu0
  %3774 = vmatprep.mubr.bf16.mxu0 %v3127
  %3775 = vmatmul.mubr.bf16.gmra.mrb[0].mxu0 %v3126
  %v3776 = vpop.f32.mrb[0].mxu0
  %v3777 = vadd.f32 0.0, %v3776
  %v3778 = vpop.f32.mrb[0].mxu0
  %v3779 = vpop.f32.mrb[0].mxu0
  %v3780 = vadd.f32 0.0, %v3779
  %v3781 = vpop.f32.mrb[0].mxu0
  %3782 = vmatprep.mubr.bf16.mxu0 %v3129
  %3783 = vmatmul.mubr.bf16.gmra.mrb[0].mxu0 %v3128
  %v3784 = vpop.f32.mrb[0].mxu0
  %v3785 = vadd.f32 0.0, %v3784
  %v3786 = vpop.f32.mrb[0].mxu0
  %v3787 = vpop.f32.mrb[0].mxu0
  %v3788 = vadd.f32 0.0, %v3787
  %v3789 = vpop.f32.mrb[0].mxu0
  %3790 = vdwg.mxu0
  %v3791 = vadd.f32 %v3582, %v3729
  %v3792 = vadd.f32 %v3583, %v3732
  %v3793 = vadd.f32 %v3584, %v3737
  %v3794 = vadd.f32 %v3585, %v3740
  %v3795 = vadd.f32 %v3586, %v3745
  %v3796 = vadd.f32 %v3587, %v3748
  %v3797 = vadd.f32 %v3588, %v3753
  %v3798 = vadd.f32 %v3589, %v3756
  %v3799 = vadd.f32 %v3590, %v3761
  %v3800 = vadd.f32 %v3591, %v3764
  %v3801 = vadd.f32 %v3592, %v3769
  %v3802 = vadd.f32 %v3593, %v3772
  %v3803 = vadd.f32 %v3594, %v3777
  %v3804 = vadd.f32 %v3595, %v3780
  %v3805 = vadd.f32 %v3596, %v3785
  %v3806 = vadd.f32 %v3597, %v3788
  %v3807 = vld [vmem:[%s424] sm:$0xfe]
  %v3808 = vld [vmem:[%s424 + $0x8] sm:$0xfe]
  %v3809 = vld [vmem:[%s424 + $0x10] sm:$0x1]
  %v3810 = vld [vmem:[%s424 + $0x18] sm:$0x1]
  %v3811 = vld [vmem:[%s424 + $0x20] sm:$0xfe]
  %v3812 = vld [vmem:[%s424 + $0x28] sm:$0xfe]
  %v3813 = vld [vmem:[%s424 + $0x30] sm:$0x1]
  %v3814 = vld [vmem:[%s424 + $0x38] sm:$0x1]
  %v3815 = vld [vmem:[%s424 + $0x40] sm:$0xfe]
  %v3816 = vld [vmem:[%s424 + $0x48] sm:$0xfe]
  %v3817 = vld [vmem:[%s424 + $0x50] sm:$0x1]
  %v3818 = vld [vmem:[%s424 + $0x58] sm:$0x1]
  %v3819 = vld [vmem:[%s424 + $0x60] sm:$0xfe]
  %v3820 = vld [vmem:[%s424 + $0x68] sm:$0xfe]
  %v3821 = vld [vmem:[%s424 + $0x70] sm:$0x1]
  %v3822 = vld [vmem:[%s424 + $0x78] sm:$0x1]
  %v3823 = vld [vmem:[%s424 + $0x80] sm:$0xfe]
  %v3824 = vld [vmem:[%s424 + $0x88] sm:$0xfe]
  %v3825 = vld [vmem:[%s424 + $0x90] sm:$0x1]
  %v3826 = vld [vmem:[%s424 + $0x98] sm:$0x1]
  %v3827 = vld [vmem:[%s424 + $0xa0] sm:$0xfe]
  %v3828 = vld [vmem:[%s424 + $0xa8] sm:$0xfe]
  %v3829 = vld [vmem:[%s424 + $0xb0] sm:$0x1]
  %v3830 = vld [vmem:[%s424 + $0xb8] sm:$0x1]
  %v3831 = vld [vmem:[%s424 + $0xc0] sm:$0xfe]
  %v3832 = vld [vmem:[%s424 + $0xc8] sm:$0xfe]
  %v3833 = vld [vmem:[%s424 + $0xd0] sm:$0x1]
  %v3834 = vld [vmem:[%s424 + $0xd8] sm:$0x1]
  %v3835 = vld [vmem:[%s424 + $0xe0] sm:$0xfe]
  %v3836 = vld [vmem:[%s424 + $0xe8] sm:$0xfe]
  %v3837 = vld [vmem:[%s424 + $0xf0] sm:$0x1]
  %v3838 = vld [vmem:[%s424 + $0xf8] sm:$0x1]
  %v3839 = vld [vmem:[%s424 + $0x140] sm:$0xfe]
  %v3840 = vld [vmem:[%s424 + $0x148] sm:$0xfe]
  %v3841 = vld [vmem:[%s424 + $0x150] sm:$0x1]
  %v3842 = vld [vmem:[%s424 + $0x158] sm:$0x1]
  %v3843 = vld [vmem:[%s424 + $0x160] sm:$0xfe]
  %v3844 = vld [vmem:[%s424 + $0x168] sm:$0xfe]
  %v3845 = vld [vmem:[%s424 + $0x170] sm:$0x1]
  %v3846 = vld [vmem:[%s424 + $0x178] sm:$0x1]
  %v3847 = vld [vmem:[%s424 + $0x180] sm:$0xfe]
  %v3848 = vld [vmem:[%s424 + $0x188] sm:$0xfe]
  %v3849 = vld [vmem:[%s424 + $0x190] sm:$0x1]
  %v3850 = vld [vmem:[%s424 + $0x198] sm:$0x1]
  %v3851 = vld [vmem:[%s424 + $0x1a0] sm:$0xfe]
  %v3852 = vld [vmem:[%s424 + $0x1a8] sm:$0xfe]
  %v3853 = vld [vmem:[%s424 + $0x1b0] sm:$0x1]
  %v3854 = vld [vmem:[%s424 + $0x1b8] sm:$0x1]
  %v3855 = vld [vmem:[%s424 + $0x1c0] sm:$0xfe]
  %v3856 = vld [vmem:[%s424 + $0x1c8] sm:$0xfe]
  %v3857 = vld [vmem:[%s424 + $0x1d0] sm:$0x1]
  %v3858 = vld [vmem:[%s424 + $0x1d8] sm:$0x1]
  %v3859 = vld [vmem:[%s424 + $0x1e0] sm:$0xfe]
  %v3860 = vld [vmem:[%s424 + $0x1e8] sm:$0xfe]
  %v3861 = vld [vmem:[%s424 + $0x1f0] sm:$0x1]
  %v3862 = vld [vmem:[%s424 + $0x1f8] sm:$0x1]
  %v3863 = vld [vmem:[%s424 + $0x200] sm:$0xfe]
  %v3864 = vld [vmem:[%s424 + $0x208] sm:$0xfe]
  %v3865 = vld [vmem:[%s424 + $0x210] sm:$0x1]
  %v3866 = vld [vmem:[%s424 + $0x218] sm:$0x1]
  %v3867 = vld [vmem:[%s424 + $0x220] sm:$0xfe]
  %v3868 = vld [vmem:[%s424 + $0x228] sm:$0xfe]
  %v3869 = vld [vmem:[%s424 + $0x230] sm:$0x1]
  %v3870 = vld [vmem:[%s424 + $0x238] sm:$0x1]
  %v3935 = vrot.slane %v3807, 1
  %v3936 = vrot.slane %v3809, 1
  %v3937 = vsel %vm1310, %v3935, %v3936
  %v3938 = vrot.slane %v3808, 1
  %v3939 = vrot.slane %v3810, 1
  %v3940 = vsel %vm1310, %v3938, %v3939
  %v3941 = vrot.slane %v3811, 1
  %v3942 = vrot.slane %v3813, 1
  %v3943 = vsel %vm1310, %v3941, %v3942
  %v3944 = vrot.slane %v3812, 1
  %v3945 = vrot.slane %v3814, 1
  %v3946 = vsel %vm1310, %v3944, %v3945
  %v3947 = vrot.slane %v3815, 1
  %v3948 = vrot.slane %v3817, 1
  %v3949 = vsel %vm1310, %v3947, %v3948
  %v3950 = vrot.slane %v3816, 1
  %v3951 = vrot.slane %v3818, 1
  %v3952 = vsel %vm1310, %v3950, %v3951
  %v3953 = vrot.slane %v3819, 1
  %v3954 = vrot.slane %v3821, 1
  %v3955 = vsel %vm1310, %v3953, %v3954
  %v3956 = vrot.slane %v3820, 1
  %v3957 = vrot.slane %v3822, 1
  %v3958 = vsel %vm1310, %v3956, %v3957
  %v3959 = vrot.slane %v3823, 1
  %v3960 = vrot.slane %v3825, 1
  %v3961 = vsel %vm1310, %v3959, %v3960
  %v3962 = vrot.slane %v3824, 1
  %v3963 = vrot.slane %v3826, 1
  %v3964 = vsel %vm1310, %v3962, %v3963
  %v3965 = vrot.slane %v3827, 1
  %v3966 = vrot.slane %v3829, 1
  %v3967 = vsel %vm1310, %v3965, %v3966
  %v3968 = vrot.slane %v3828, 1
  %v3969 = vrot.slane %v3830, 1
  %v3970 = vsel %vm1310, %v3968, %v3969
  %v3971 = vrot.slane %v3831, 1
  %v3972 = vrot.slane %v3833, 1
  %v3973 = vsel %vm1310, %v3971, %v3972
  %v3974 = vrot.slane %v3832, 1
  %v3975 = vrot.slane %v3834, 1
  %v3976 = vsel %vm1310, %v3974, %v3975
  %v3977 = vrot.slane %v3835, 1
  %v3978 = vrot.slane %v3837, 1
  %v3979 = vsel %vm1310, %v3977, %v3978
  %v3980 = vrot.slane %v3836, 1
  %v3981 = vrot.slane %v3838, 1
  %v3982 = vsel %vm1310, %v3980, %v3981
  %v3983 = vrot.slane %v3839, 1
  %v3984 = vrot.slane %v3841, 1
  %v3985 = vsel %vm1310, %v3983, %v3984
  %v3986 = vrot.slane %v3840, 1
  %v3987 = vrot.slane %v3842, 1
  %v3988 = vsel %vm1310, %v3986, %v3987
  %v3989 = vrot.slane %v3843, 1
  %v3990 = vrot.slane %v3845, 1
  %v3991 = vsel %vm1310, %v3989, %v3990
  %v3992 = vrot.slane %v3844, 1
  %v3993 = vrot.slane %v3846, 1
  %v3994 = vsel %vm1310, %v3992, %v3993
  %v3995 = vrot.slane %v3847, 1
  %v3996 = vrot.slane %v3849, 1
  %v3997 = vsel %vm1310, %v3995, %v3996
  %v3998 = vrot.slane %v3848, 1
  %v3999 = vrot.slane %v3850, 1
  %v4000 = vsel %vm1310, %v3998, %v3999
  %v4001 = vrot.slane %v3851, 1
  %v4002 = vrot.slane %v3853, 1
  %v4003 = vsel %vm1310, %v4001, %v4002
  %v4004 = vrot.slane %v3852, 1
  %v4005 = vrot.slane %v3854, 1
  %v4006 = vsel %vm1310, %v4004, %v4005
  %v4007 = vrot.slane %v3855, 1
  %v4008 = vrot.slane %v3857, 1
  %v4009 = vsel %vm1310, %v4007, %v4008
  %v4010 = vrot.slane %v3856, 1
  %v4011 = vrot.slane %v3858, 1
  %v4012 = vsel %vm1310, %v4010, %v4011
  %v4013 = vrot.slane %v3859, 1
  %v4014 = vrot.slane %v3861, 1
  %v4015 = vsel %vm1310, %v4013, %v4014
  %v4016 = vrot.slane %v3860, 1
  %v4017 = vrot.slane %v3862, 1
  %v4018 = vsel %vm1310, %v4016, %v4017
  %v4019 = vrot.slane %v3863, 1
  %v4020 = vrot.slane %v3865, 1
  %v4021 = vsel %vm1310, %v4019, %v4020
  %v4022 = vrot.slane %v3864, 1
  %v4023 = vrot.slane %v3866, 1
  %v4024 = vsel %vm1310, %v4022, %v4023
  %v4025 = vrot.slane %v3867, 1
  %v4026 = vrot.slane %v3869, 1
  %v4027 = vsel %vm1310, %v4025, %v4026
  %v4028 = vrot.slane %v3868, 1
  %v4029 = vrot.slane %v3870, 1
  %v4030 = vsel %vm1310, %v4028, %v4029
  %v4063 = vpack.c.bf16 %v3943, %v3937
  %v4064 = vpack.c.bf16 %v3946, %v3940
  %v4065 = vpack.c.bf16 %v3955, %v3949
  %v4066 = vpack.c.bf16 %v3958, %v3952
  %v4067 = vpack.c.bf16 %v3967, %v3961
  %v4068 = vpack.c.bf16 %v3970, %v3964
  %v4069 = vpack.c.bf16 %v3979, %v3973
  %v4070 = vpack.c.bf16 %v3982, %v3976
  %v4071 = vpack.c.bf16 %v3991, %v3985
  %v4072 = vpack.c.bf16 %v3994, %v3988
  %v4073 = vpack.c.bf16 %v4003, %v3997
  %v4074 = vpack.c.bf16 %v4006, %v4000
  %v4075 = vpack.c.bf16 %v4015, %v4009
  %v4076 = vpack.c.bf16 %v4018, %v4012
  %v4077 = vpack.c.bf16 %v4027, %v4021
  %v4078 = vpack.c.bf16 %v4030, %v4024
  %v4079 = vunpack.c.l.bf16 %v4063
  %v4080 = vunpack.c.l.bf16 %v4064
  %v4081 = vunpack.c.h.bf16 %v4063
  %v4082 = vunpack.c.h.bf16 %v4064
  %v4083 = vunpack.c.l.bf16 %v4065
  %v4084 = vunpack.c.l.bf16 %v4066
  %v4085 = vunpack.c.h.bf16 %v4065
  %v4086 = vunpack.c.h.bf16 %v4066
  %v4087 = vunpack.c.l.bf16 %v4067
  %v4088 = vunpack.c.l.bf16 %v4068
  %v4089 = vunpack.c.h.bf16 %v4067
  %v4090 = vunpack.c.h.bf16 %v4068
  %v4091 = vunpack.c.l.bf16 %v4069
  %v4092 = vunpack.c.l.bf16 %v4070
  %v4093 = vunpack.c.h.bf16 %v4069
  %v4094 = vunpack.c.h.bf16 %v4070
  %v4095 = vunpack.c.l.bf16 %v4071
  %v4096 = vunpack.c.l.bf16 %v4072
  %v4097 = vunpack.c.h.bf16 %v4071
  %v4098 = vunpack.c.h.bf16 %v4072
  %v4099 = vunpack.c.l.bf16 %v4073
  %v4100 = vunpack.c.l.bf16 %v4074
  %v4101 = vunpack.c.h.bf16 %v4073
  %v4102 = vunpack.c.h.bf16 %v4074
  %v4103 = vunpack.c.l.bf16 %v4075
  %v4104 = vunpack.c.l.bf16 %v4076
  %v4105 = vunpack.c.h.bf16 %v4075
  %v4106 = vunpack.c.h.bf16 %v4076
  %v4107 = vunpack.c.l.bf16 %v4077
  %v4108 = vunpack.c.l.bf16 %v4078
  %v4109 = vunpack.c.h.bf16 %v4077
  %v4110 = vunpack.c.h.bf16 %v4078
  %v4111 = vsub.f32 %v3937, %v4079
  %v4112 = vsub.f32 %v3940, %v4080
  %v4113 = vsub.f32 %v3943, %v4081
  %v4114 = vsub.f32 %v3946, %v4082
  %v4115 = vsub.f32 %v3949, %v4083
  %v4116 = vsub.f32 %v3952, %v4084
  %v4117 = vsub.f32 %v3955, %v4085
  %v4118 = vsub.f32 %v3958, %v4086
  %v4119 = vsub.f32 %v3961, %v4087
  %v4120 = vsub.f32 %v3964, %v4088
  %v4121 = vsub.f32 %v3967, %v4089
  %v4122 = vsub.f32 %v3970, %v4090
  %v4123 = vsub.f32 %v3973, %v4091
  %v4124 = vsub.f32 %v3976, %v4092
  %v4125 = vsub.f32 %v3979, %v4093
  %v4126 = vsub.f32 %v3982, %v4094
  %v4127 = vsub.f32 %v3985, %v4095
  %v4128 = vsub.f32 %v3988, %v4096
  %v4129 = vsub.f32 %v3991, %v4097
  %v4130 = vsub.f32 %v3994, %v4098
  %v4131 = vsub.f32 %v3997, %v4099
  %v4132 = vsub.f32 %v4000, %v4100
  %v4133 = vsub.f32 %v4003, %v4101
  %v4134 = vsub.f32 %v4006, %v4102
  %v4135 = vsub.f32 %v4009, %v4103
  %v4136 = vsub.f32 %v4012, %v4104
  %v4137 = vsub.f32 %v4015, %v4105
  %v4138 = vsub.f32 %v4018, %v4106
  %v4139 = vsub.f32 %v4021, %v4107
  %v4140 = vsub.f32 %v4024, %v4108
  %v4141 = vsub.f32 %v4027, %v4109
  %v4142 = vsub.f32 %v4030, %v4110
  %v4143 = vpack.c.bf16 %v4113, %v4111
  %v4144 = vpack.c.bf16 %v4114, %v4112
  %v4145 = vpack.c.bf16 %v4117, %v4115
  %v4146 = vpack.c.bf16 %v4118, %v4116
  %v4147 = vpack.c.bf16 %v4121, %v4119
  %v4148 = vpack.c.bf16 %v4122, %v4120
  %v4149 = vpack.c.bf16 %v4125, %v4123
  %v4150 = vpack.c.bf16 %v4126, %v4124
  %v4151 = vpack.c.bf16 %v4129, %v4127
  %v4152 = vpack.c.bf16 %v4130, %v4128
  %v4153 = vpack.c.bf16 %v4133, %v4131
  %v4154 = vpack.c.bf16 %v4134, %v4132
  %v4155 = vpack.c.bf16 %v4137, %v4135
  %v4156 = vpack.c.bf16 %v4138, %v4136
  %v4157 = vpack.c.bf16 %v4141, %v4139
  %v4158 = vpack.c.bf16 %v4142, %v4140
  %s4159 = scalar_lea.vmem %s1, 512
  %v4160 = vld [vmem:[%s4159] sm:$0xf]
  %v4161 = vld [vmem:[%s4159 + $0x4] sm:$0xf]
  %v4162 = vld [vmem:[%s4159 + $0x8] sm:$0xf]
  %v4163 = vld [vmem:[%s4159 + $0xc] sm:$0xf]
  %v4164 = vld [vmem:[%s4159 + $0x10] sm:$0xf]
  %v4165 = vld [vmem:[%s4159 + $0x14] sm:$0xf]
  %v4166 = vld [vmem:[%s4159 + $0x18] sm:$0xf]
  %v4167 = vld [vmem:[%s4159 + $0x1c] sm:$0xf]
  %v4168 = vld [vmem:[%s4159 + $0x20] sm:$0xf]
  %v4169 = vld [vmem:[%s4159 + $0x24] sm:$0xf]
  %v4170 = vld [vmem:[%s4159 + $0x28] sm:$0xf]
  %v4171 = vld [vmem:[%s4159 + $0x2c] sm:$0xf]
  %v4172 = vld [vmem:[%s4159 + $0x30] sm:$0xf]
  %v4173 = vld [vmem:[%s4159 + $0x34] sm:$0xf]
  %v4174 = vld [vmem:[%s4159 + $0x38] sm:$0xf]
  %v4175 = vld [vmem:[%s4159 + $0x3c] sm:$0xf]
  %v4176 = vld [vmem:[%s4159 + $0x40] sm:$0xf]
  %v4177 = vld [vmem:[%s4159 + $0x44] sm:$0xf]
  %v4178 = vld [vmem:[%s4159 + $0x48] sm:$0xf]
  %v4179 = vld [vmem:[%s4159 + $0x4c] sm:$0xf]
  %v4180 = vld [vmem:[%s4159 + $0x50] sm:$0xf]
  %v4181 = vld [vmem:[%s4159 + $0x54] sm:$0xf]
  %v4182 = vld [vmem:[%s4159 + $0x58] sm:$0xf]
  %v4183 = vld [vmem:[%s4159 + $0x5c] sm:$0xf]
  %v4184 = vld [vmem:[%s4159 + $0x60] sm:$0xf]
  %v4185 = vld [vmem:[%s4159 + $0x64] sm:$0xf]
  %v4186 = vld [vmem:[%s4159 + $0x68] sm:$0xf]
  %v4187 = vld [vmem:[%s4159 + $0x6c] sm:$0xf]
  %v4188 = vld [vmem:[%s4159 + $0x70] sm:$0xf]
  %v4189 = vld [vmem:[%s4159 + $0x74] sm:$0xf]
  %v4190 = vld [vmem:[%s4159 + $0x78] sm:$0xf]
  %v4191 = vld [vmem:[%s4159 + $0x7c] sm:$0xf]
  %s4192 = scalar_lea.vmem %s2, 512
  %v4193 = vld [vmem:[%s4192] sm:$0xf]
  %v4194 = vld [vmem:[%s4192 + $0x4] sm:$0xf]
  %v4195 = vld [vmem:[%s4192 + $0x8] sm:$0xf]
  %v4196 = vld [vmem:[%s4192 + $0xc] sm:$0xf]
  %v4197 = vld [vmem:[%s4192 + $0x10] sm:$0xf]
  %v4198 = vld [vmem:[%s4192 + $0x14] sm:$0xf]
  %v4199 = vld [vmem:[%s4192 + $0x18] sm:$0xf]
  %v4200 = vld [vmem:[%s4192 + $0x1c] sm:$0xf]
  %v4201 = vld [vmem:[%s4192 + $0x20] sm:$0xf]
  %v4202 = vld [vmem:[%s4192 + $0x24] sm:$0xf]
  %v4203 = vld [vmem:[%s4192 + $0x28] sm:$0xf]
  %v4204 = vld [vmem:[%s4192 + $0x2c] sm:$0xf]
  %v4205 = vld [vmem:[%s4192 + $0x30] sm:$0xf]
  %v4206 = vld [vmem:[%s4192 + $0x34] sm:$0xf]
  %v4207 = vld [vmem:[%s4192 + $0x38] sm:$0xf]
  %v4208 = vld [vmem:[%s4192 + $0x3c] sm:$0xf]
  %v4209 = vld [vmem:[%s4192 + $0x40] sm:$0xf]
  %v4210 = vld [vmem:[%s4192 + $0x44] sm:$0xf]
  %v4211 = vld [vmem:[%s4192 + $0x48] sm:$0xf]
  %v4212 = vld [vmem:[%s4192 + $0x4c] sm:$0xf]
  %v4213 = vld [vmem:[%s4192 + $0x50] sm:$0xf]
  %v4214 = vld [vmem:[%s4192 + $0x54] sm:$0xf]
  %v4215 = vld [vmem:[%s4192 + $0x58] sm:$0xf]
  %v4216 = vld [vmem:[%s4192 + $0x5c] sm:$0xf]
  %v4217 = vld [vmem:[%s4192 + $0x60] sm:$0xf]
  %v4218 = vld [vmem:[%s4192 + $0x64] sm:$0xf]
  %v4219 = vld [vmem:[%s4192 + $0x68] sm:$0xf]
  %v4220 = vld [vmem:[%s4192 + $0x6c] sm:$0xf]
  %v4221 = vld [vmem:[%s4192 + $0x70] sm:$0xf]
  %v4222 = vld [vmem:[%s4192 + $0x74] sm:$0xf]
  %v4223 = vld [vmem:[%s4192 + $0x78] sm:$0xf]
  %v4224 = vld [vmem:[%s4192 + $0x7c] sm:$0xf]
  %v4257 = vunpack.c.l.b16 %v4160
  %v4258 = vunpack.c.l.b16 %v4161
  %v4259 = vunpack.c.l.b16 %v4162
  %v4260 = vunpack.c.l.b16 %v4163
  %v4261 = vunpack.c.l.b16 %v4164
  %v4262 = vunpack.c.l.b16 %v4165
  %v4263 = vunpack.c.l.b16 %v4166
  %v4264 = vunpack.c.l.b16 %v4167
  %v4265 = vunpack.c.l.b16 %v4168
  %v4266 = vunpack.c.l.b16 %v4169
  %v4267 = vunpack.c.l.b16 %v4170
  %v4268 = vunpack.c.l.b16 %v4171
  %v4269 = vunpack.c.l.b16 %v4172
  %v4270 = vunpack.c.l.b16 %v4173
  %v4271 = vunpack.c.l.b16 %v4174
  %v4272 = vunpack.c.l.b16 %v4175
  %v4273 = vunpack.c.l.b16 %v4176
  %v4274 = vunpack.c.l.b16 %v4177
  %v4275 = vunpack.c.l.b16 %v4178
  %v4276 = vunpack.c.l.b16 %v4179
  %v4277 = vunpack.c.l.b16 %v4180
  %v4278 = vunpack.c.l.b16 %v4181
  %v4279 = vunpack.c.l.b16 %v4182
  %v4280 = vunpack.c.l.b16 %v4183
  %v4281 = vunpack.c.l.b16 %v4184
  %v4282 = vunpack.c.l.b16 %v4185
  %v4283 = vunpack.c.l.b16 %v4186
  %v4284 = vunpack.c.l.b16 %v4187
  %v4285 = vunpack.c.l.b16 %v4188
  %v4286 = vunpack.c.l.b16 %v4189
  %v4287 = vunpack.c.l.b16 %v4190
  %v4288 = vunpack.c.l.b16 %v4191
  %v4289 = vpack.c.b16 %v4258, %v4257
  %v4290 = vpack.c.b16 %v4260, %v4259
  %v4291 = vpack.c.b16 %v4262, %v4261
  %v4292 = vpack.c.b16 %v4264, %v4263
  %v4293 = vpack.c.b16 %v4266, %v4265
  %v4294 = vpack.c.b16 %v4268, %v4267
  %v4295 = vpack.c.b16 %v4270, %v4269
  %v4296 = vpack.c.b16 %v4272, %v4271
  %v4297 = vpack.c.b16 %v4274, %v4273
  %v4298 = vpack.c.b16 %v4276, %v4275
  %v4299 = vpack.c.b16 %v4278, %v4277
  %v4300 = vpack.c.b16 %v4280, %v4279
  %v4301 = vpack.c.b16 %v4282, %v4281
  %v4302 = vpack.c.b16 %v4284, %v4283
  %v4303 = vpack.c.b16 %v4286, %v4285
  %v4304 = vpack.c.b16 %v4288, %v4287
  %4321 = vmatprep.subr.bf16.mxu0 0
  %4322 = vmatpush1.bf16.msra.mxu0 %v4289
  %4323 = vmatprep.subr.bf16.mxu0 0
  %4324 = vmatpush1.bf16.msra.mxu0 %v4290
  %4325 = vmatprep.subr.bf16.mxu0 0
  %4326 = vmatpush1.bf16.msra.mxu0 %v4291
  %4327 = vmatprep.subr.bf16.mxu0 0
  %4328 = vmatpush1.bf16.msra.mxu0 %v4292
  %4329 = vmatprep.subr.bf16.mxu0 0
  %4330 = vmatpush1.bf16.msra.mxu0 %v4293
  %4331 = vmatprep.subr.bf16.mxu0 0
  %4332 = vmatpush1.bf16.msra.mxu0 %v4294
  %4333 = vmatprep.subr.bf16.mxu0 0
  %4334 = vmatpush1.bf16.msra.mxu0 %v4295
  %4335 = vmatprep.subr.bf16.mxu0 0
  %4336 = vmatpush1.bf16.msra.mxu0 %v4296
  %4337 = vmatprep.subr.bf16.mxu0 0
  %4338 = vmatpush1.bf16.msra.mxu0 %v4297
  %4339 = vmatprep.subr.bf16.mxu0 0
  %4340 = vmatpush1.bf16.msra.mxu0 %v4298
  %4341 = vmatprep.subr.bf16.mxu0 0
  %4342 = vmatpush1.bf16.msra.mxu0 %v4299
  %4343 = vmatprep.subr.bf16.mxu0 0
  %4344 = vmatpush1.bf16.msra.mxu0 %v4300
  %4345 = vmatprep.subr.bf16.mxu0 0
  %4346 = vmatpush1.bf16.msra.mxu0 %v4301
  %4347 = vmatprep.subr.bf16.mxu0 0
  %4348 = vmatpush1.bf16.msra.mxu0 %v4302
  %4349 = vmatprep.subr.bf16.mxu0 0
  %4350 = vmatpush1.bf16.msra.mxu0 %v4303
  %4351 = vmatprep.subr.bf16.mxu0 0
  %4352 = vmatpush1.bf16.msra.mxu0 %v4304
  %4353 = vmatprep.mubr.bf16.mxu0 %v4064
  %4354 = vmatmul.mubr.bf16.gmra.mrb[0].mxu0 %v4063
  %v4355 = vpop.f32.mrb[0].mxu0
  %v4356 = vadd.f32 0.0, %v4355
  %v4357 = vpop.f32.mrb[0].mxu0
  %v4358 = vpop.f32.mrb[0].mxu0
  %v4359 = vadd.f32 0.0, %v4358
  %v4360 = vpop.f32.mrb[0].mxu0
  %4361 = vmatprep.mubr.bf16.mxu0 %v4066
  %4362 = vmatmul.mubr.bf16.gmra.mrb[0].mxu0 %v4065
  %v4363 = vpop.f32.mrb[0].mxu0
  %v4364 = vadd.f32 0.0, %v4363
  %v4365 = vpop.f32.mrb[0].mxu0
  %v4366 = vpop.f32.mrb[0].mxu0
  %v4367 = vadd.f32 0.0, %v4366
  %v4368 = vpop.f32.mrb[0].mxu0
  %4369 = vmatprep.mubr.bf16.mxu0 %v4068
  %4370 = vmatmul.mubr.bf16.gmra.mrb[0].mxu0 %v4067
  %v4371 = vpop.f32.mrb[0].mxu0
  %v4372 = vadd.f32 0.0, %v4371
  %v4373 = vpop.f32.mrb[0].mxu0
  %v4374 = vpop.f32.mrb[0].mxu0
  %v4375 = vadd.f32 0.0, %v4374
  %v4376 = vpop.f32.mrb[0].mxu0
  %4377 = vmatprep.mubr.bf16.mxu0 %v4070
  %4378 = vmatmul.mubr.bf16.gmra.mrb[0].mxu0 %v4069
  %v4379 = vpop.f32.mrb[0].mxu0
  %v4380 = vadd.f32 0.0, %v4379
  %v4381 = vpop.f32.mrb[0].mxu0
  %v4382 = vpop.f32.mrb[0].mxu0
  %v4383 = vadd.f32 0.0, %v4382
  %v4384 = vpop.f32.mrb[0].mxu0
  %4385 = vmatprep.mubr.bf16.mxu0 %v4072
  %4386 = vmatmul.mubr.bf16.gmra.mrb[0].mxu0 %v4071
  %v4387 = vpop.f32.mrb[0].mxu0
  %v4388 = vadd.f32 0.0, %v4387
  %v4389 = vpop.f32.mrb[0].mxu0
  %v4390 = vpop.f32.mrb[0].mxu0
  %v4391 = vadd.f32 0.0, %v4390
  %v4392 = vpop.f32.mrb[0].mxu0
  %4393 = vmatprep.mubr.bf16.mxu0 %v4074
  %4394 = vmatmul.mubr.bf16.gmra.mrb[0].mxu0 %v4073
  %v4395 = vpop.f32.mrb[0].mxu0
  %v4396 = vadd.f32 0.0, %v4395
  %v4397 = vpop.f32.mrb[0].mxu0
  %v4398 = vpop.f32.mrb[0].mxu0
  %v4399 = vadd.f32 0.0, %v4398
  %v4400 = vpop.f32.mrb[0].mxu0
  %4401 = vmatprep.mubr.bf16.mxu0 %v4076
  %4402 = vmatmul.mubr.bf16.gmra.mrb[0].mxu0 %v4075
  %v4403 = vpop.f32.mrb[0].mxu0
  %v4404 = vadd.f32 0.0, %v4403
  %v4405 = vpop.f32.mrb[0].mxu0
  %v4406 = vpop.f32.mrb[0].mxu0
  %v4407 = vadd.f32 0.0, %v4406
  %v4408 = vpop.f32.mrb[0].mxu0
  %4409 = vmatprep.mubr.bf16.mxu0 %v4078
  %4410 = vmatmul.mubr.bf16.gmra.mrb[0].mxu0 %v4077
  %v4411 = vpop.f32.mrb[0].mxu0
  %v4412 = vadd.f32 0.0, %v4411
  %v4413 = vpop.f32.mrb[0].mxu0
  %v4414 = vpop.f32.mrb[0].mxu0
  %v4415 = vadd.f32 0.0, %v4414
  %v4416 = vpop.f32.mrb[0].mxu0
  %4417 = vdwg.mxu0
  %v4418 = vadd.f32 %v3791, %v4356
  %v4419 = vadd.f32 %v3792, %v4359
  %v4420 = vadd.f32 %v3793, %v4364
  %v4421 = vadd.f32 %v3794, %v4367
  %v4422 = vadd.f32 %v3795, %v4372
  %v4423 = vadd.f32 %v3796, %v4375
  %v4424 = vadd.f32 %v3797, %v4380
  %v4425 = vadd.f32 %v3798, %v4383
  %v4426 = vadd.f32 %v3799, %v4388
  %v4427 = vadd.f32 %v3800, %v4391
  %v4428 = vadd.f32 %v3801, %v4396
  %v4429 = vadd.f32 %v3802, %v4399
  %v4430 = vadd.f32 %v3803, %v4404
  %v4431 = vadd.f32 %v3804, %v4407
  %v4432 = vadd.f32 %v3805, %v4412
  %v4433 = vadd.f32 %v3806, %v4415
  %4434 = vmatprep.subr.bf16.mxu0 0
  %4435 = vmatpush1.bf16.msra.mxu0 %v4289
  %4436 = vmatprep.subr.bf16.mxu0 0
  %4437 = vmatpush1.bf16.msra.mxu0 %v4290
  %4438 = vmatprep.subr.bf16.mxu0 0
  %4439 = vmatpush1.bf16.msra.mxu0 %v4291
  %4440 = vmatprep.subr.bf16.mxu0 0
  %4441 = vmatpush1.bf16.msra.mxu0 %v4292
  %4442 = vmatprep.subr.bf16.mxu0 0
  %4443 = vmatpush1.bf16.msra.mxu0 %v4293
  %4444 = vmatprep.subr.bf16.mxu0 0
  %4445 = vmatpush1.bf16.msra.mxu0 %v4294
  %4446 = vmatprep.subr.bf16.mxu0 0
  %4447 = vmatpush1.bf16.msra.mxu0 %v4295
  %4448 = vmatprep.subr.bf16.mxu0 0
  %4449 = vmatpush1.bf16.msra.mxu0 %v4296
  %4450 = vmatprep.subr.bf16.mxu0 0
  %4451 = vmatpush1.bf16.msra.mxu0 %v4297
  %4452 = vmatprep.subr.bf16.mxu0 0
  %4453 = vmatpush1.bf16.msra.mxu0 %v4298
  %4454 = vmatprep.subr.bf16.mxu0 0
  %4455 = vmatpush1.bf16.msra.mxu0 %v4299
  %4456 = vmatprep.subr.bf16.mxu0 0
  %4457 = vmatpush1.bf16.msra.mxu0 %v4300
  %4458 = vmatprep.subr.bf16.mxu0 0
  %4459 = vmatpush1.bf16.msra.mxu0 %v4301
  %4460 = vmatprep.subr.bf16.mxu0 0
  %4461 = vmatpush1.bf16.msra.mxu0 %v4302
  %4462 = vmatprep.subr.bf16.mxu0 0
  %4463 = vmatpush1.bf16.msra.mxu0 %v4303
  %4464 = vmatprep.subr.bf16.mxu0 0
  %4465 = vmatpush1.bf16.msra.mxu0 %v4304
  %4466 = vmatprep.mubr.bf16.mxu0 %v4144
  %4467 = vmatmul.mubr.bf16.gmra.mrb[0].mxu0 %v4143
  %v4468 = vpop.f32.mrb[0].mxu0
  %v4469 = vadd.f32 0.0, %v4468
  %v4470 = vpop.f32.mrb[0].mxu0
  %v4471 = vpop.f32.mrb[0].mxu0
  %v4472 = vadd.f32 0.0, %v4471
  %v4473 = vpop.f32.mrb[0].mxu0
  %4474 = vmatprep.mubr.bf16.mxu0 %v4146
  %4475 = vmatmul.mubr.bf16.gmra.mrb[0].mxu0 %v4145
  %v4476 = vpop.f32.mrb[0].mxu0
  %v4477 = vadd.f32 0.0, %v4476
  %v4478 = vpop.f32.mrb[0].mxu0
  %v4479 = vpop.f32.mrb[0].mxu0
  %v4480 = vadd.f32 0.0, %v4479
  %v4481 = vpop.f32.mrb[0].mxu0
  %4482 = vmatprep.mubr.bf16.mxu0 %v4148
  %4483 = vmatmul.mubr.bf16.gmra.mrb[0].mxu0 %v4147
  %v4484 = vpop.f32.mrb[0].mxu0
  %v4485 = vadd.f32 0.0, %v4484
  %v4486 = vpop.f32.mrb[0].mxu0
  %v4487 = vpop.f32.mrb[0].mxu0
  %v4488 = vadd.f32 0.0, %v4487
  %v4489 = vpop.f32.mrb[0].mxu0
  %4490 = vmatprep.mubr.bf16.mxu0 %v4150
  %4491 = vmatmul.mubr.bf16.gmra.mrb[0].mxu0 %v4149
  %v4492 = vpop.f32.mrb[0].mxu0
  %v4493 = vadd.f32 0.0, %v4492
  %v4494 = vpop.f32.mrb[0].mxu0
  %v4495 = vpop.f32.mrb[0].mxu0
  %v4496 = vadd.f32 0.0, %v4495
  %v4497 = vpop.f32.mrb[0].mxu0
  %4498 = vmatprep.mubr.bf16.mxu0 %v4152
  %4499 = vmatmul.mubr.bf16.gmra.mrb[0].mxu0 %v4151
  %v4500 = vpop.f32.mrb[0].mxu0
  %v4501 = vadd.f32 0.0, %v4500
  %v4502 = vpop.f32.mrb[0].mxu0
  %v4503 = vpop.f32.mrb[0].mxu0
  %v4504 = vadd.f32 0.0, %v4503
  %v4505 = vpop.f32.mrb[0].mxu0
  %4506 = vmatprep.mubr.bf16.mxu0 %v4154
  %4507 = vmatmul.mubr.bf16.gmra.mrb[0].mxu0 %v4153
  %v4508 = vpop.f32.mrb[0].mxu0
  %v4509 = vadd.f32 0.0, %v4508
  %v4510 = vpop.f32.mrb[0].mxu0
  %v4511 = vpop.f32.mrb[0].mxu0
  %v4512 = vadd.f32 0.0, %v4511
  %v4513 = vpop.f32.mrb[0].mxu0
  %4514 = vmatprep.mubr.bf16.mxu0 %v4156
  %4515 = vmatmul.mubr.bf16.gmra.mrb[0].mxu0 %v4155
  %v4516 = vpop.f32.mrb[0].mxu0
  %v4517 = vadd.f32 0.0, %v4516
  %v4518 = vpop.f32.mrb[0].mxu0
  %v4519 = vpop.f32.mrb[0].mxu0
  %v4520 = vadd.f32 0.0, %v4519
  %v4521 = vpop.f32.mrb[0].mxu0
  %4522 = vmatprep.mubr.bf16.mxu0 %v4158
  %4523 = vmatmul.mubr.bf16.gmra.mrb[0].mxu0 %v4157
  %v4524 = vpop.f32.mrb[0].mxu0
  %v4525 = vadd.f32 0.0, %v4524
  %v4526 = vpop.f32.mrb[0].mxu0
  %v4527 = vpop.f32.mrb[0].mxu0
  %v4528 = vadd.f32 0.0, %v4527
  %v4529 = vpop.f32.mrb[0].mxu0
  %4530 = vdwg.mxu0
  %v4531 = vadd.f32 %v4418, %v4469
  %v4532 = vadd.f32 %v4419, %v4472
  %v4533 = vadd.f32 %v4420, %v4477
  %v4534 = vadd.f32 %v4421, %v4480
  %v4535 = vadd.f32 %v4422, %v4485
  %v4536 = vadd.f32 %v4423, %v4488
  %v4537 = vadd.f32 %v4424, %v4493
  %v4538 = vadd.f32 %v4425, %v4496
  %v4539 = vadd.f32 %v4426, %v4501
  %v4540 = vadd.f32 %v4427, %v4504
  %v4541 = vadd.f32 %v4428, %v4509
  %v4542 = vadd.f32 %v4429, %v4512
  %v4543 = vadd.f32 %v4430, %v4517
  %v4544 = vadd.f32 %v4431, %v4520
  %v4545 = vadd.f32 %v4432, %v4525
  %v4546 = vadd.f32 %v4433, %v4528
  %v4579 = vunpack.c.l.b16 %v4193
  %v4580 = vunpack.c.l.b16 %v4194
  %v4581 = vunpack.c.l.b16 %v4195
  %v4582 = vunpack.c.l.b16 %v4196
  %v4583 = vunpack.c.l.b16 %v4197
  %v4584 = vunpack.c.l.b16 %v4198
  %v4585 = vunpack.c.l.b16 %v4199
  %v4586 = vunpack.c.l.b16 %v4200
  %v4587 = vunpack.c.l.b16 %v4201
  %v4588 = vunpack.c.l.b16 %v4202
  %v4589 = vunpack.c.l.b16 %v4203
  %v4590 = vunpack.c.l.b16 %v4204
  %v4591 = vunpack.c.l.b16 %v4205
  %v4592 = vunpack.c.l.b16 %v4206
  %v4593 = vunpack.c.l.b16 %v4207
  %v4594 = vunpack.c.l.b16 %v4208
  %v4595 = vunpack.c.l.b16 %v4209
  %v4596 = vunpack.c.l.b16 %v4210
  %v4597 = vunpack.c.l.b16 %v4211
  %v4598 = vunpack.c.l.b16 %v4212
  %v4599 = vunpack.c.l.b16 %v4213
  %v4600 = vunpack.c.l.b16 %v4214
  %v4601 = vunpack.c.l.b16 %v4215
  %v4602 = vunpack.c.l.b16 %v4216
  %v4603 = vunpack.c.l.b16 %v4217
  %v4604 = vunpack.c.l.b16 %v4218
  %v4605 = vunpack.c.l.b16 %v4219
  %v4606 = vunpack.c.l.b16 %v4220
  %v4607 = vunpack.c.l.b16 %v4221
  %v4608 = vunpack.c.l.b16 %v4222
  %v4609 = vunpack.c.l.b16 %v4223
  %v4610 = vunpack.c.l.b16 %v4224
  %v4611 = vpack.c.b16 %v4580, %v4579
  %v4612 = vpack.c.b16 %v4582, %v4581
  %v4613 = vpack.c.b16 %v4584, %v4583
  %v4614 = vpack.c.b16 %v4586, %v4585
  %v4615 = vpack.c.b16 %v4588, %v4587
  %v4616 = vpack.c.b16 %v4590, %v4589
  %v4617 = vpack.c.b16 %v4592, %v4591
  %v4618 = vpack.c.b16 %v4594, %v4593
  %v4619 = vpack.c.b16 %v4596, %v4595
  %v4620 = vpack.c.b16 %v4598, %v4597
  %v4621 = vpack.c.b16 %v4600, %v4599
  %v4622 = vpack.c.b16 %v4602, %v4601
  %v4623 = vpack.c.b16 %v4604, %v4603
  %v4624 = vpack.c.b16 %v4606, %v4605
  %v4625 = vpack.c.b16 %v4608, %v4607
  %v4626 = vpack.c.b16 %v4610, %v4609
  %4643 = vmatprep.subr.bf16.mxu0 0
  %4644 = vmatpush1.bf16.msra.mxu0 %v4611
  %4645 = vmatprep.subr.bf16.mxu0 0
  %4646 = vmatpush1.bf16.msra.mxu0 %v4612
  %4647 = vmatprep.subr.bf16.mxu0 0
  %4648 = vmatpush1.bf16.msra.mxu0 %v4613
  %4649 = vmatprep.subr.bf16.mxu0 0
  %4650 = vmatpush1.bf16.msra.mxu0 %v4614
  %4651 = vmatprep.subr.bf16.mxu0 0
  %4652 = vmatpush1.bf16.msra.mxu0 %v4615
  %4653 = vmatprep.subr.bf16.mxu0 0
  %4654 = vmatpush1.bf16.msra.mxu0 %v4616
  %4655 = vmatprep.subr.bf16.mxu0 0
  %4656 = vmatpush1.bf16.msra.mxu0 %v4617
  %4657 = vmatprep.subr.bf16.mxu0 0
  %4658 = vmatpush1.bf16.msra.mxu0 %v4618
  %4659 = vmatprep.subr.bf16.mxu0 0
  %4660 = vmatpush1.bf16.msra.mxu0 %v4619
  %4661 = vmatprep.subr.bf16.mxu0 0
  %4662 = vmatpush1.bf16.msra.mxu0 %v4620
  %4663 = vmatprep.subr.bf16.mxu0 0
  %4664 = vmatpush1.bf16.msra.mxu0 %v4621
  %4665 = vmatprep.subr.bf16.mxu0 0
  %4666 = vmatpush1.bf16.msra.mxu0 %v4622
  %4667 = vmatprep.subr.bf16.mxu0 0
  %4668 = vmatpush1.bf16.msra.mxu0 %v4623
  %4669 = vmatprep.subr.bf16.mxu0 0
  %4670 = vmatpush1.bf16.msra.mxu0 %v4624
  %4671 = vmatprep.subr.bf16.mxu0 0
  %4672 = vmatpush1.bf16.msra.mxu0 %v4625
  %4673 = vmatprep.subr.bf16.mxu0 0
  %4674 = vmatpush1.bf16.msra.mxu0 %v4626
  %4675 = vmatprep.mubr.bf16.mxu0 %v4064
  %4676 = vmatmul.mubr.bf16.gmra.mrb[0].mxu0 %v4063
  %v4677 = vpop.f32.mrb[0].mxu0
  %v4678 = vadd.f32 0.0, %v4677
  %v4679 = vpop.f32.mrb[0].mxu0
  %v4680 = vpop.f32.mrb[0].mxu0
  %v4681 = vadd.f32 0.0, %v4680
  %v4682 = vpop.f32.mrb[0].mxu0
  %4683 = vmatprep.mubr.bf16.mxu0 %v4066
  %4684 = vmatmul.mubr.bf16.gmra.mrb[0].mxu0 %v4065
  %v4685 = vpop.f32.mrb[0].mxu0
  %v4686 = vadd.f32 0.0, %v4685
  %v4687 = vpop.f32.mrb[0].mxu0
  %v4688 = vpop.f32.mrb[0].mxu0
  %v4689 = vadd.f32 0.0, %v4688
  %v4690 = vpop.f32.mrb[0].mxu0
  %4691 = vmatprep.mubr.bf16.mxu0 %v4068
  %4692 = vmatmul.mubr.bf16.gmra.mrb[0].mxu0 %v4067
  %v4693 = vpop.f32.mrb[0].mxu0
  %v4694 = vadd.f32 0.0, %v4693
  %v4695 = vpop.f32.mrb[0].mxu0
  %v4696 = vpop.f32.mrb[0].mxu0
  %v4697 = vadd.f32 0.0, %v4696
  %v4698 = vpop.f32.mrb[0].mxu0
  %4699 = vmatprep.mubr.bf16.mxu0 %v4070
  %4700 = vmatmul.mubr.bf16.gmra.mrb[0].mxu0 %v4069
  %v4701 = vpop.f32.mrb[0].mxu0
  %v4702 = vadd.f32 0.0, %v4701
  %v4703 = vpop.f32.mrb[0].mxu0
  %v4704 = vpop.f32.mrb[0].mxu0
  %v4705 = vadd.f32 0.0, %v4704
  %v4706 = vpop.f32.mrb[0].mxu0
  %4707 = vmatprep.mubr.bf16.mxu0 %v4072
  %4708 = vmatmul.mubr.bf16.gmra.mrb[0].mxu0 %v4071
  %v4709 = vpop.f32.mrb[0].mxu0
  %v4710 = vadd.f32 0.0, %v4709
  %v4711 = vpop.f32.mrb[0].mxu0
  %v4712 = vpop.f32.mrb[0].mxu0
  %v4713 = vadd.f32 0.0, %v4712
  %v4714 = vpop.f32.mrb[0].mxu0
  %4715 = vmatprep.mubr.bf16.mxu0 %v4074
  %4716 = vmatmul.mubr.bf16.gmra.mrb[0].mxu0 %v4073
  %v4717 = vpop.f32.mrb[0].mxu0
  %v4718 = vadd.f32 0.0, %v4717
  %v4719 = vpop.f32.mrb[0].mxu0
  %v4720 = vpop.f32.mrb[0].mxu0
  %v4721 = vadd.f32 0.0, %v4720
  %v4722 = vpop.f32.mrb[0].mxu0
  %4723 = vmatprep.mubr.bf16.mxu0 %v4076
  %4724 = vmatmul.mubr.bf16.gmra.mrb[0].mxu0 %v4075
  %v4725 = vpop.f32.mrb[0].mxu0
  %v4726 = vadd.f32 0.0, %v4725
  %v4727 = vpop.f32.mrb[0].mxu0
  %v4728 = vpop.f32.mrb[0].mxu0
  %v4729 = vadd.f32 0.0, %v4728
  %v4730 = vpop.f32.mrb[0].mxu0
  %4731 = vmatprep.mubr.bf16.mxu0 %v4078
  %4732 = vmatmul.mubr.bf16.gmra.mrb[0].mxu0 %v4077
  %v4733 = vpop.f32.mrb[0].mxu0
  %v4734 = vadd.f32 0.0, %v4733
  %v4735 = vpop.f32.mrb[0].mxu0
  %v4736 = vpop.f32.mrb[0].mxu0
  %v4737 = vadd.f32 0.0, %v4736
  %v4738 = vpop.f32.mrb[0].mxu0
  %4739 = vdwg.mxu0
  %v4740 = vadd.f32 %v4531, %v4678
  %v4741 = vadd.f32 %v4532, %v4681
  %v4742 = vadd.f32 %v4533, %v4686
  %v4743 = vadd.f32 %v4534, %v4689
  %v4744 = vadd.f32 %v4535, %v4694
  %v4745 = vadd.f32 %v4536, %v4697
  %v4746 = vadd.f32 %v4537, %v4702
  %v4747 = vadd.f32 %v4538, %v4705
  %v4748 = vadd.f32 %v4539, %v4710
  %v4749 = vadd.f32 %v4540, %v4713
  %v4750 = vadd.f32 %v4541, %v4718
  %v4751 = vadd.f32 %v4542, %v4721
  %v4752 = vadd.f32 %v4543, %v4726
  %v4753 = vadd.f32 %v4544, %v4729
  %v4754 = vadd.f32 %v4545, %v4734
  %v4755 = vadd.f32 %v4546, %v4737
  %v4756 = vld [vmem:[%s424] sm:$0xfc]
  %v4757 = vld [vmem:[%s424 + $0x8] sm:$0xfc]
  %v4758 = vld [vmem:[%s424 + $0x10] sm:$0x3]
  %v4759 = vld [vmem:[%s424 + $0x18] sm:$0x3]
  %v4760 = vld [vmem:[%s424 + $0x20] sm:$0xfc]
  %v4761 = vld [vmem:[%s424 + $0x28] sm:$0xfc]
  %v4762 = vld [vmem:[%s424 + $0x30] sm:$0x3]
  %v4763 = vld [vmem:[%s424 + $0x38] sm:$0x3]
  %v4764 = vld [vmem:[%s424 + $0x40] sm:$0xfc]
  %v4765 = vld [vmem:[%s424 + $0x48] sm:$0xfc]
  %v4766 = vld [vmem:[%s424 + $0x50] sm:$0x3]
  %v4767 = vld [vmem:[%s424 + $0x58] sm:$0x3]
  %v4768 = vld [vmem:[%s424 + $0x60] sm:$0xfc]
  %v4769 = vld [vmem:[%s424 + $0x68] sm:$0xfc]
  %v4770 = vld [vmem:[%s424 + $0x70] sm:$0x3]
  %v4771 = vld [vmem:[%s424 + $0x78] sm:$0x3]
  %v4772 = vld [vmem:[%s424 + $0x80] sm:$0xfc]
  %v4773 = vld [vmem:[%s424 + $0x88] sm:$0xfc]
  %v4774 = vld [vmem:[%s424 + $0x90] sm:$0x3]
  %v4775 = vld [vmem:[%s424 + $0x98] sm:$0x3]
  %v4776 = vld [vmem:[%s424 + $0xa0] sm:$0xfc]
  %v4777 = vld [vmem:[%s424 + $0xa8] sm:$0xfc]
  %v4778 = vld [vmem:[%s424 + $0xb0] sm:$0x3]
  %v4779 = vld [vmem:[%s424 + $0xb8] sm:$0x3]
  %v4780 = vld [vmem:[%s424 + $0xc0] sm:$0xfc]
  %v4781 = vld [vmem:[%s424 + $0xc8] sm:$0xfc]
  %v4782 = vld [vmem:[%s424 + $0xd0] sm:$0x3]
  %v4783 = vld [vmem:[%s424 + $0xd8] sm:$0x3]
  %v4784 = vld [vmem:[%s424 + $0xe0] sm:$0xfc]
  %v4785 = vld [vmem:[%s424 + $0xe8] sm:$0xfc]
  %v4786 = vld [vmem:[%s424 + $0xf0] sm:$0x3]
  %v4787 = vld [vmem:[%s424 + $0xf8] sm:$0x3]
  %v4788 = vld [vmem:[%s424 + $0x140] sm:$0xfc]
  %v4789 = vld [vmem:[%s424 + $0x148] sm:$0xfc]
  %v4790 = vld [vmem:[%s424 + $0x150] sm:$0x3]
  %v4791 = vld [vmem:[%s424 + $0x158] sm:$0x3]
  %v4792 = vld [vmem:[%s424 + $0x160] sm:$0xfc]
  %v4793 = vld [vmem:[%s424 + $0x168] sm:$0xfc]
  %v4794 = vld [vmem:[%s424 + $0x170] sm:$0x3]
  %v4795 = vld [vmem:[%s424 + $0x178] sm:$0x3]
  %v4796 = vld [vmem:[%s424 + $0x180] sm:$0xfc]
  %v4797 = vld [vmem:[%s424 + $0x188] sm:$0xfc]
  %v4798 = vld [vmem:[%s424 + $0x190] sm:$0x3]
  %v4799 = vld [vmem:[%s424 + $0x198] sm:$0x3]
  %v4800 = vld [vmem:[%s424 + $0x1a0] sm:$0xfc]
  %v4801 = vld [vmem:[%s424 + $0x1a8] sm:$0xfc]
  %v4802 = vld [vmem:[%s424 + $0x1b0] sm:$0x3]
  %v4803 = vld [vmem:[%s424 + $0x1b8] sm:$0x3]
  %v4804 = vld [vmem:[%s424 + $0x1c0] sm:$0xfc]
  %v4805 = vld [vmem:[%s424 + $0x1c8] sm:$0xfc]
  %v4806 = vld [vmem:[%s424 + $0x1d0] sm:$0x3]
  %v4807 = vld [vmem:[%s424 + $0x1d8] sm:$0x3]
  %v4808 = vld [vmem:[%s424 + $0x1e0] sm:$0xfc]
  %v4809 = vld [vmem:[%s424 + $0x1e8] sm:$0xfc]
  %v4810 = vld [vmem:[%s424 + $0x1f0] sm:$0x3]
  %v4811 = vld [vmem:[%s424 + $0x1f8] sm:$0x3]
  %v4812 = vld [vmem:[%s424 + $0x200] sm:$0xfc]
  %v4813 = vld [vmem:[%s424 + $0x208] sm:$0xfc]
  %v4814 = vld [vmem:[%s424 + $0x210] sm:$0x3]
  %v4815 = vld [vmem:[%s424 + $0x218] sm:$0x3]
  %v4816 = vld [vmem:[%s424 + $0x220] sm:$0xfc]
  %v4817 = vld [vmem:[%s424 + $0x228] sm:$0xfc]
  %v4818 = vld [vmem:[%s424 + $0x230] sm:$0x3]
  %v4819 = vld [vmem:[%s424 + $0x238] sm:$0x3]
  %v4884 = vrot.slane %v4756, 2
  %v4885 = vrot.slane %v4758, 2
  %v4886 = vsel %vm2260, %v4884, %v4885
  %v4887 = vrot.slane %v4757, 2
  %v4888 = vrot.slane %v4759, 2
  %v4889 = vsel %vm2260, %v4887, %v4888
  %v4890 = vrot.slane %v4760, 2
  %v4891 = vrot.slane %v4762, 2
  %v4892 = vsel %vm2260, %v4890, %v4891
  %v4893 = vrot.slane %v4761, 2
  %v4894 = vrot.slane %v4763, 2
  %v4895 = vsel %vm2260, %v4893, %v4894
  %v4896 = vrot.slane %v4764, 2
  %v4897 = vrot.slane %v4766, 2
  %v4898 = vsel %vm2260, %v4896, %v4897
  %v4899 = vrot.slane %v4765, 2
  %v4900 = vrot.slane %v4767, 2
  %v4901 = vsel %vm2260, %v4899, %v4900
  %v4902 = vrot.slane %v4768, 2
  %v4903 = vrot.slane %v4770, 2
  %v4904 = vsel %vm2260, %v4902, %v4903
  %v4905 = vrot.slane %v4769, 2
  %v4906 = vrot.slane %v4771, 2
  %v4907 = vsel %vm2260, %v4905, %v4906
  %v4908 = vrot.slane %v4772, 2
  %v4909 = vrot.slane %v4774, 2
  %v4910 = vsel %vm2260, %v4908, %v4909
  %v4911 = vrot.slane %v4773, 2
  %v4912 = vrot.slane %v4775, 2
  %v4913 = vsel %vm2260, %v4911, %v4912
  %v4914 = vrot.slane %v4776, 2
  %v4915 = vrot.slane %v4778, 2
  %v4916 = vsel %vm2260, %v4914, %v4915
  %v4917 = vrot.slane %v4777, 2
  %v4918 = vrot.slane %v4779, 2
  %v4919 = vsel %vm2260, %v4917, %v4918
  %v4920 = vrot.slane %v4780, 2
  %v4921 = vrot.slane %v4782, 2
  %v4922 = vsel %vm2260, %v4920, %v4921
  %v4923 = vrot.slane %v4781, 2
  %v4924 = vrot.slane %v4783, 2
  %v4925 = vsel %vm2260, %v4923, %v4924
  %v4926 = vrot.slane %v4784, 2
  %v4927 = vrot.slane %v4786, 2
  %v4928 = vsel %vm2260, %v4926, %v4927
  %v4929 = vrot.slane %v4785, 2
  %v4930 = vrot.slane %v4787, 2
  %v4931 = vsel %vm2260, %v4929, %v4930
  %v4932 = vrot.slane %v4788, 2
  %v4933 = vrot.slane %v4790, 2
  %v4934 = vsel %vm2260, %v4932, %v4933
  %v4935 = vrot.slane %v4789, 2
  %v4936 = vrot.slane %v4791, 2
  %v4937 = vsel %vm2260, %v4935, %v4936
  %v4938 = vrot.slane %v4792, 2
  %v4939 = vrot.slane %v4794, 2
  %v4940 = vsel %vm2260, %v4938, %v4939
  %v4941 = vrot.slane %v4793, 2
  %v4942 = vrot.slane %v4795, 2
  %v4943 = vsel %vm2260, %v4941, %v4942
  %v4944 = vrot.slane %v4796, 2
  %v4945 = vrot.slane %v4798, 2
  %v4946 = vsel %vm2260, %v4944, %v4945
  %v4947 = vrot.slane %v4797, 2
  %v4948 = vrot.slane %v4799, 2
  %v4949 = vsel %vm2260, %v4947, %v4948
  %v4950 = vrot.slane %v4800, 2
  %v4951 = vrot.slane %v4802, 2
  %v4952 = vsel %vm2260, %v4950, %v4951
  %v4953 = vrot.slane %v4801, 2
  %v4954 = vrot.slane %v4803, 2
  %v4955 = vsel %vm2260, %v4953, %v4954
  %v4956 = vrot.slane %v4804, 2
  %v4957 = vrot.slane %v4806, 2
  %v4958 = vsel %vm2260, %v4956, %v4957
  %v4959 = vrot.slane %v4805, 2
  %v4960 = vrot.slane %v4807, 2
  %v4961 = vsel %vm2260, %v4959, %v4960
  %v4962 = vrot.slane %v4808, 2
  %v4963 = vrot.slane %v4810, 2
  %v4964 = vsel %vm2260, %v4962, %v4963
  %v4965 = vrot.slane %v4809, 2
  %v4966 = vrot.slane %v4811, 2
  %v4967 = vsel %vm2260, %v4965, %v4966
  %v4968 = vrot.slane %v4812, 2
  %v4969 = vrot.slane %v4814, 2
  %v4970 = vsel %vm2260, %v4968, %v4969
  %v4971 = vrot.slane %v4813, 2
  %v4972 = vrot.slane %v4815, 2
  %v4973 = vsel %vm2260, %v4971, %v4972
  %v4974 = vrot.slane %v4816, 2
  %v4975 = vrot.slane %v4818, 2
  %v4976 = vsel %vm2260, %v4974, %v4975
  %v4977 = vrot.slane %v4817, 2
  %v4978 = vrot.slane %v4819, 2
  %v4979 = vsel %vm2260, %v4977, %v4978
  %v5012 = vpack.c.bf16 %v4892, %v4886
  %v5013 = vpack.c.bf16 %v4895, %v4889
  %v5014 = vpack.c.bf16 %v4904, %v4898
  %v5015 = vpack.c.bf16 %v4907, %v4901
  %v5016 = vpack.c.bf16 %v4916, %v4910
  %v5017 = vpack.c.bf16 %v4919, %v4913
  %v5018 = vpack.c.bf16 %v4928, %v4922
  %v5019 = vpack.c.bf16 %v4931, %v4925
  %v5020 = vpack.c.bf16 %v4940, %v4934
  %v5021 = vpack.c.bf16 %v4943, %v4937
  %v5022 = vpack.c.bf16 %v4952, %v4946
  %v5023 = vpack.c.bf16 %v4955, %v4949
  %v5024 = vpack.c.bf16 %v4964, %v4958
  %v5025 = vpack.c.bf16 %v4967, %v4961
  %v5026 = vpack.c.bf16 %v4976, %v4970
  %v5027 = vpack.c.bf16 %v4979, %v4973
  %v5028 = vunpack.c.l.bf16 %v5012
  %v5029 = vunpack.c.l.bf16 %v5013
  %v5030 = vunpack.c.h.bf16 %v5012
  %v5031 = vunpack.c.h.bf16 %v5013
  %v5032 = vunpack.c.l.bf16 %v5014
  %v5033 = vunpack.c.l.bf16 %v5015
  %v5034 = vunpack.c.h.bf16 %v5014
  %v5035 = vunpack.c.h.bf16 %v5015
  %v5036 = vunpack.c.l.bf16 %v5016
  %v5037 = vunpack.c.l.bf16 %v5017
  %v5038 = vunpack.c.h.bf16 %v5016
  %v5039 = vunpack.c.h.bf16 %v5017
  %v5040 = vunpack.c.l.bf16 %v5018
  %v5041 = vunpack.c.l.bf16 %v5019
  %v5042 = vunpack.c.h.bf16 %v5018
  %v5043 = vunpack.c.h.bf16 %v5019
  %v5044 = vunpack.c.l.bf16 %v5020
  %v5045 = vunpack.c.l.bf16 %v5021
  %v5046 = vunpack.c.h.bf16 %v5020
  %v5047 = vunpack.c.h.bf16 %v5021
  %v5048 = vunpack.c.l.bf16 %v5022
  %v5049 = vunpack.c.l.bf16 %v5023
  %v5050 = vunpack.c.h.bf16 %v5022
  %v5051 = vunpack.c.h.bf16 %v5023
  %v5052 = vunpack.c.l.bf16 %v5024
  %v5053 = vunpack.c.l.bf16 %v5025
  %v5054 = vunpack.c.h.bf16 %v5024
  %v5055 = vunpack.c.h.bf16 %v5025
  %v5056 = vunpack.c.l.bf16 %v5026
  %v5057 = vunpack.c.l.bf16 %v5027
  %v5058 = vunpack.c.h.bf16 %v5026
  %v5059 = vunpack.c.h.bf16 %v5027
  %v5060 = vsub.f32 %v4886, %v5028
  %v5061 = vsub.f32 %v4889, %v5029
  %v5062 = vsub.f32 %v4892, %v5030
  %v5063 = vsub.f32 %v4895, %v5031
  %v5064 = vsub.f32 %v4898, %v5032
  %v5065 = vsub.f32 %v4901, %v5033
  %v5066 = vsub.f32 %v4904, %v5034
  %v5067 = vsub.f32 %v4907, %v5035
  %v5068 = vsub.f32 %v4910, %v5036
  %v5069 = vsub.f32 %v4913, %v5037
  %v5070 = vsub.f32 %v4916, %v5038
  %v5071 = vsub.f32 %v4919, %v5039
  %v5072 = vsub.f32 %v4922, %v5040
  %v5073 = vsub.f32 %v4925, %v5041
  %v5074 = vsub.f32 %v4928, %v5042
  %v5075 = vsub.f32 %v4931, %v5043
  %v5076 = vsub.f32 %v4934, %v5044
  %v5077 = vsub.f32 %v4937, %v5045
  %v5078 = vsub.f32 %v4940, %v5046
  %v5079 = vsub.f32 %v4943, %v5047
  %v5080 = vsub.f32 %v4946, %v5048
  %v5081 = vsub.f32 %v4949, %v5049
  %v5082 = vsub.f32 %v4952, %v5050
  %v5083 = vsub.f32 %v4955, %v5051
  %v5084 = vsub.f32 %v4958, %v5052
  %v5085 = vsub.f32 %v4961, %v5053
  %v5086 = vsub.f32 %v4964, %v5054
  %v5087 = vsub.f32 %v4967, %v5055
  %v5088 = vsub.f32 %v4970, %v5056
  %v5089 = vsub.f32 %v4973, %v5057
  %v5090 = vsub.f32 %v4976, %v5058
  %v5091 = vsub.f32 %v4979, %v5059
  %v5092 = vpack.c.bf16 %v5062, %v5060
  %v5093 = vpack.c.bf16 %v5063, %v5061
  %v5094 = vpack.c.bf16 %v5066, %v5064
  %v5095 = vpack.c.bf16 %v5067, %v5065
  %v5096 = vpack.c.bf16 %v5070, %v5068
  %v5097 = vpack.c.bf16 %v5071, %v5069
  %v5098 = vpack.c.bf16 %v5074, %v5072
  %v5099 = vpack.c.bf16 %v5075, %v5073
  %v5100 = vpack.c.bf16 %v5078, %v5076
  %v5101 = vpack.c.bf16 %v5079, %v5077
  %v5102 = vpack.c.bf16 %v5082, %v5080
  %v5103 = vpack.c.bf16 %v5083, %v5081
  %v5104 = vpack.c.bf16 %v5086, %v5084
  %v5105 = vpack.c.bf16 %v5087, %v5085
  %v5106 = vpack.c.bf16 %v5090, %v5088
  %v5107 = vpack.c.bf16 %v5091, %v5089
  %s5108 = scalar_lea.vmem %s1, 640
  %v5109 = vld [vmem:[%s5108] sm:$0xf]
  %v5110 = vld [vmem:[%s5108 + $0x4] sm:$0xf]
  %v5111 = vld [vmem:[%s5108 + $0x8] sm:$0xf]
  %v5112 = vld [vmem:[%s5108 + $0xc] sm:$0xf]
  %v5113 = vld [vmem:[%s5108 + $0x10] sm:$0xf]
  %v5114 = vld [vmem:[%s5108 + $0x14] sm:$0xf]
  %v5115 = vld [vmem:[%s5108 + $0x18] sm:$0xf]
  %v5116 = vld [vmem:[%s5108 + $0x1c] sm:$0xf]
  %v5117 = vld [vmem:[%s5108 + $0x20] sm:$0xf]
  %v5118 = vld [vmem:[%s5108 + $0x24] sm:$0xf]
  %v5119 = vld [vmem:[%s5108 + $0x28] sm:$0xf]
  %v5120 = vld [vmem:[%s5108 + $0x2c] sm:$0xf]
  %v5121 = vld [vmem:[%s5108 + $0x30] sm:$0xf]
  %v5122 = vld [vmem:[%s5108 + $0x34] sm:$0xf]
  %v5123 = vld [vmem:[%s5108 + $0x38] sm:$0xf]
  %v5124 = vld [vmem:[%s5108 + $0x3c] sm:$0xf]
  %v5125 = vld [vmem:[%s5108 + $0x40] sm:$0xf]
  %v5126 = vld [vmem:[%s5108 + $0x44] sm:$0xf]
  %v5127 = vld [vmem:[%s5108 + $0x48] sm:$0xf]
  %v5128 = vld [vmem:[%s5108 + $0x4c] sm:$0xf]
  %v5129 = vld [vmem:[%s5108 + $0x50] sm:$0xf]
  %v5130 = vld [vmem:[%s5108 + $0x54] sm:$0xf]
  %v5131 = vld [vmem:[%s5108 + $0x58] sm:$0xf]
  %v5132 = vld [vmem:[%s5108 + $0x5c] sm:$0xf]
  %v5133 = vld [vmem:[%s5108 + $0x60] sm:$0xf]
  %v5134 = vld [vmem:[%s5108 + $0x64] sm:$0xf]
  %v5135 = vld [vmem:[%s5108 + $0x68] sm:$0xf]
  %v5136 = vld [vmem:[%s5108 + $0x6c] sm:$0xf]
  %v5137 = vld [vmem:[%s5108 + $0x70] sm:$0xf]
  %v5138 = vld [vmem:[%s5108 + $0x74] sm:$0xf]
  %v5139 = vld [vmem:[%s5108 + $0x78] sm:$0xf]
  %v5140 = vld [vmem:[%s5108 + $0x7c] sm:$0xf]
  %s5141 = scalar_lea.vmem %s2, 640
  %v5142 = vld [vmem:[%s5141] sm:$0xf]
  %v5143 = vld [vmem:[%s5141 + $0x4] sm:$0xf]
  %v5144 = vld [vmem:[%s5141 + $0x8] sm:$0xf]
  %v5145 = vld [vmem:[%s5141 + $0xc] sm:$0xf]
  %v5146 = vld [vmem:[%s5141 + $0x10] sm:$0xf]
  %v5147 = vld [vmem:[%s5141 + $0x14] sm:$0xf]
  %v5148 = vld [vmem:[%s5141 + $0x18] sm:$0xf]
  %v5149 = vld [vmem:[%s5141 + $0x1c] sm:$0xf]
  %v5150 = vld [vmem:[%s5141 + $0x20] sm:$0xf]
  %v5151 = vld [vmem:[%s5141 + $0x24] sm:$0xf]
  %v5152 = vld [vmem:[%s5141 + $0x28] sm:$0xf]
  %v5153 = vld [vmem:[%s5141 + $0x2c] sm:$0xf]
  %v5154 = vld [vmem:[%s5141 + $0x30] sm:$0xf]
  %v5155 = vld [vmem:[%s5141 + $0x34] sm:$0xf]
  %v5156 = vld [vmem:[%s5141 + $0x38] sm:$0xf]
  %v5157 = vld [vmem:[%s5141 + $0x3c] sm:$0xf]
  %v5158 = vld [vmem:[%s5141 + $0x40] sm:$0xf]
  %v5159 = vld [vmem:[%s5141 + $0x44] sm:$0xf]
  %v5160 = vld [vmem:[%s5141 + $0x48] sm:$0xf]
  %v5161 = vld [vmem:[%s5141 + $0x4c] sm:$0xf]
  %v5162 = vld [vmem:[%s5141 + $0x50] sm:$0xf]
  %v5163 = vld [vmem:[%s5141 + $0x54] sm:$0xf]
  %v5164 = vld [vmem:[%s5141 + $0x58] sm:$0xf]
  %v5165 = vld [vmem:[%s5141 + $0x5c] sm:$0xf]
  %v5166 = vld [vmem:[%s5141 + $0x60] sm:$0xf]
  %v5167 = vld [vmem:[%s5141 + $0x64] sm:$0xf]
  %v5168 = vld [vmem:[%s5141 + $0x68] sm:$0xf]
  %v5169 = vld [vmem:[%s5141 + $0x6c] sm:$0xf]
  %v5170 = vld [vmem:[%s5141 + $0x70] sm:$0xf]
  %v5171 = vld [vmem:[%s5141 + $0x74] sm:$0xf]
  %v5172 = vld [vmem:[%s5141 + $0x78] sm:$0xf]
  %v5173 = vld [vmem:[%s5141 + $0x7c] sm:$0xf]
  %v5206 = vunpack.c.l.b16 %v5109
  %v5207 = vunpack.c.l.b16 %v5110
  %v5208 = vunpack.c.l.b16 %v5111
  %v5209 = vunpack.c.l.b16 %v5112
  %v5210 = vunpack.c.l.b16 %v5113
  %v5211 = vunpack.c.l.b16 %v5114
  %v5212 = vunpack.c.l.b16 %v5115
  %v5213 = vunpack.c.l.b16 %v5116
  %v5214 = vunpack.c.l.b16 %v5117
  %v5215 = vunpack.c.l.b16 %v5118
  %v5216 = vunpack.c.l.b16 %v5119
  %v5217 = vunpack.c.l.b16 %v5120
  %v5218 = vunpack.c.l.b16 %v5121
  %v5219 = vunpack.c.l.b16 %v5122
  %v5220 = vunpack.c.l.b16 %v5123
  %v5221 = vunpack.c.l.b16 %v5124
  %v5222 = vunpack.c.l.b16 %v5125
  %v5223 = vunpack.c.l.b16 %v5126
  %v5224 = vunpack.c.l.b16 %v5127
  %v5225 = vunpack.c.l.b16 %v5128
  %v5226 = vunpack.c.l.b16 %v5129
  %v5227 = vunpack.c.l.b16 %v5130
  %v5228 = vunpack.c.l.b16 %v5131
  %v5229 = vunpack.c.l.b16 %v5132
  %v5230 = vunpack.c.l.b16 %v5133
  %v5231 = vunpack.c.l.b16 %v5134
  %v5232 = vunpack.c.l.b16 %v5135
  %v5233 = vunpack.c.l.b16 %v5136
  %v5234 = vunpack.c.l.b16 %v5137
  %v5235 = vunpack.c.l.b16 %v5138
  %v5236 = vunpack.c.l.b16 %v5139
  %v5237 = vunpack.c.l.b16 %v5140
  %v5238 = vpack.c.b16 %v5207, %v5206
  %v5239 = vpack.c.b16 %v5209, %v5208
  %v5240 = vpack.c.b16 %v5211, %v5210
  %v5241 = vpack.c.b16 %v5213, %v5212
  %v5242 = vpack.c.b16 %v5215, %v5214
  %v5243 = vpack.c.b16 %v5217, %v5216
  %v5244 = vpack.c.b16 %v5219, %v5218
  %v5245 = vpack.c.b16 %v5221, %v5220
  %v5246 = vpack.c.b16 %v5223, %v5222
  %v5247 = vpack.c.b16 %v5225, %v5224
  %v5248 = vpack.c.b16 %v5227, %v5226
  %v5249 = vpack.c.b16 %v5229, %v5228
  %v5250 = vpack.c.b16 %v5231, %v5230
  %v5251 = vpack.c.b16 %v5233, %v5232
  %v5252 = vpack.c.b16 %v5235, %v5234
  %v5253 = vpack.c.b16 %v5237, %v5236
  %5270 = vmatprep.subr.bf16.mxu0 0
  %5271 = vmatpush1.bf16.msra.mxu0 %v5238
  %5272 = vmatprep.subr.bf16.mxu0 0
  %5273 = vmatpush1.bf16.msra.mxu0 %v5239
  %5274 = vmatprep.subr.bf16.mxu0 0
  %5275 = vmatpush1.bf16.msra.mxu0 %v5240
  %5276 = vmatprep.subr.bf16.mxu0 0
  %5277 = vmatpush1.bf16.msra.mxu0 %v5241
  %5278 = vmatprep.subr.bf16.mxu0 0
  %5279 = vmatpush1.bf16.msra.mxu0 %v5242
  %5280 = vmatprep.subr.bf16.mxu0 0
  %5281 = vmatpush1.bf16.msra.mxu0 %v5243
  %5282 = vmatprep.subr.bf16.mxu0 0
  %5283 = vmatpush1.bf16.msra.mxu0 %v5244
  %5284 = vmatprep.subr.bf16.mxu0 0
  %5285 = vmatpush1.bf16.msra.mxu0 %v5245
  %5286 = vmatprep.subr.bf16.mxu0 0
  %5287 = vmatpush1.bf16.msra.mxu0 %v5246
  %5288 = vmatprep.subr.bf16.mxu0 0
  %5289 = vmatpush1.bf16.msra.mxu0 %v5247
  %5290 = vmatprep.subr.bf16.mxu0 0
  %5291 = vmatpush1.bf16.msra.mxu0 %v5248
  %5292 = vmatprep.subr.bf16.mxu0 0
  %5293 = vmatpush1.bf16.msra.mxu0 %v5249
  %5294 = vmatprep.subr.bf16.mxu0 0
  %5295 = vmatpush1.bf16.msra.mxu0 %v5250
  %5296 = vmatprep.subr.bf16.mxu0 0
  %5297 = vmatpush1.bf16.msra.mxu0 %v5251
  %5298 = vmatprep.subr.bf16.mxu0 0
  %5299 = vmatpush1.bf16.msra.mxu0 %v5252
  %5300 = vmatprep.subr.bf16.mxu0 0
  %5301 = vmatpush1.bf16.msra.mxu0 %v5253
  %5302 = vmatprep.mubr.bf16.mxu0 %v5013
  %5303 = vmatmul.mubr.bf16.gmra.mrb[0].mxu0 %v5012
  %v5304 = vpop.f32.mrb[0].mxu0
  %v5305 = vadd.f32 0.0, %v5304
  %v5306 = vpop.f32.mrb[0].mxu0
  %v5307 = vpop.f32.mrb[0].mxu0
  %v5308 = vadd.f32 0.0, %v5307
  %v5309 = vpop.f32.mrb[0].mxu0
  %5310 = vmatprep.mubr.bf16.mxu0 %v5015
  %5311 = vmatmul.mubr.bf16.gmra.mrb[0].mxu0 %v5014
  %v5312 = vpop.f32.mrb[0].mxu0
  %v5313 = vadd.f32 0.0, %v5312
  %v5314 = vpop.f32.mrb[0].mxu0
  %v5315 = vpop.f32.mrb[0].mxu0
  %v5316 = vadd.f32 0.0, %v5315
  %v5317 = vpop.f32.mrb[0].mxu0
  %5318 = vmatprep.mubr.bf16.mxu0 %v5017
  %5319 = vmatmul.mubr.bf16.gmra.mrb[0].mxu0 %v5016
  %v5320 = vpop.f32.mrb[0].mxu0
  %v5321 = vadd.f32 0.0, %v5320
  %v5322 = vpop.f32.mrb[0].mxu0
  %v5323 = vpop.f32.mrb[0].mxu0
  %v5324 = vadd.f32 0.0, %v5323
  %v5325 = vpop.f32.mrb[0].mxu0
  %5326 = vmatprep.mubr.bf16.mxu0 %v5019
  %5327 = vmatmul.mubr.bf16.gmra.mrb[0].mxu0 %v5018
  %v5328 = vpop.f32.mrb[0].mxu0
  %v5329 = vadd.f32 0.0, %v5328
  %v5330 = vpop.f32.mrb[0].mxu0
  %v5331 = vpop.f32.mrb[0].mxu0
  %v5332 = vadd.f32 0.0, %v5331
  %v5333 = vpop.f32.mrb[0].mxu0
  %5334 = vmatprep.mubr.bf16.mxu0 %v5021
  %5335 = vmatmul.mubr.bf16.gmra.mrb[0].mxu0 %v5020
  %v5336 = vpop.f32.mrb[0].mxu0
  %v5337 = vadd.f32 0.0, %v5336
  %v5338 = vpop.f32.mrb[0].mxu0
  %v5339 = vpop.f32.mrb[0].mxu0
  %v5340 = vadd.f32 0.0, %v5339
  %v5341 = vpop.f32.mrb[0].mxu0
  %5342 = vmatprep.mubr.bf16.mxu0 %v5023
  %5343 = vmatmul.mubr.bf16.gmra.mrb[0].mxu0 %v5022
  %v5344 = vpop.f32.mrb[0].mxu0
  %v5345 = vadd.f32 0.0, %v5344
  %v5346 = vpop.f32.mrb[0].mxu0
  %v5347 = vpop.f32.mrb[0].mxu0
  %v5348 = vadd.f32 0.0, %v5347
  %v5349 = vpop.f32.mrb[0].mxu0
  %5350 = vmatprep.mubr.bf16.mxu0 %v5025
  %5351 = vmatmul.mubr.bf16.gmra.mrb[0].mxu0 %v5024
  %v5352 = vpop.f32.mrb[0].mxu0
  %v5353 = vadd.f32 0.0, %v5352
  %v5354 = vpop.f32.mrb[0].mxu0
  %v5355 = vpop.f32.mrb[0].mxu0
  %v5356 = vadd.f32 0.0, %v5355
  %v5357 = vpop.f32.mrb[0].mxu0
  %5358 = vmatprep.mubr.bf16.mxu0 %v5027
  %5359 = vmatmul.mubr.bf16.gmra.mrb[0].mxu0 %v5026
  %v5360 = vpop.f32.mrb[0].mxu0
  %v5361 = vadd.f32 0.0, %v5360
  %v5362 = vpop.f32.mrb[0].mxu0
  %v5363 = vpop.f32.mrb[0].mxu0
  %v5364 = vadd.f32 0.0, %v5363
  %v5365 = vpop.f32.mrb[0].mxu0
  %5366 = vdwg.mxu0
  %v5367 = vadd.f32 %v4740, %v5305
  %v5368 = vadd.f32 %v4741, %v5308
  %v5369 = vadd.f32 %v4742, %v5313
  %v5370 = vadd.f32 %v4743, %v5316
  %v5371 = vadd.f32 %v4744, %v5321
  %v5372 = vadd.f32 %v4745, %v5324
  %v5373 = vadd.f32 %v4746, %v5329
  %v5374 = vadd.f32 %v4747, %v5332
  %v5375 = vadd.f32 %v4748, %v5337
  %v5376 = vadd.f32 %v4749, %v5340
  %v5377 = vadd.f32 %v4750, %v5345
  %v5378 = vadd.f32 %v4751, %v5348
  %v5379 = vadd.f32 %v4752, %v5353
  %v5380 = vadd.f32 %v4753, %v5356
  %v5381 = vadd.f32 %v4754, %v5361
  %v5382 = vadd.f32 %v4755, %v5364
  %5383 = vmatprep.subr.bf16.mxu0 0
  %5384 = vmatpush1.bf16.msra.mxu0 %v5238
  %5385 = vmatprep.subr.bf16.mxu0 0
  %5386 = vmatpush1.bf16.msra.mxu0 %v5239
  %5387 = vmatprep.subr.bf16.mxu0 0
  %5388 = vmatpush1.bf16.msra.mxu0 %v5240
  %5389 = vmatprep.subr.bf16.mxu0 0
  %5390 = vmatpush1.bf16.msra.mxu0 %v5241
  %5391 = vmatprep.subr.bf16.mxu0 0
  %5392 = vmatpush1.bf16.msra.mxu0 %v5242
  %5393 = vmatprep.subr.bf16.mxu0 0
  %5394 = vmatpush1.bf16.msra.mxu0 %v5243
  %5395 = vmatprep.subr.bf16.mxu0 0
  %5396 = vmatpush1.bf16.msra.mxu0 %v5244
  %5397 = vmatprep.subr.bf16.mxu0 0
  %5398 = vmatpush1.bf16.msra.mxu0 %v5245
  %5399 = vmatprep.subr.bf16.mxu0 0
  %5400 = vmatpush1.bf16.msra.mxu0 %v5246
  %5401 = vmatprep.subr.bf16.mxu0 0
  %5402 = vmatpush1.bf16.msra.mxu0 %v5247
  %5403 = vmatprep.subr.bf16.mxu0 0
  %5404 = vmatpush1.bf16.msra.mxu0 %v5248
  %5405 = vmatprep.subr.bf16.mxu0 0
  %5406 = vmatpush1.bf16.msra.mxu0 %v5249
  %5407 = vmatprep.subr.bf16.mxu0 0
  %5408 = vmatpush1.bf16.msra.mxu0 %v5250
  %5409 = vmatprep.subr.bf16.mxu0 0
  %5410 = vmatpush1.bf16.msra.mxu0 %v5251
  %5411 = vmatprep.subr.bf16.mxu0 0
  %5412 = vmatpush1.bf16.msra.mxu0 %v5252
  %5413 = vmatprep.subr.bf16.mxu0 0
  %5414 = vmatpush1.bf16.msra.mxu0 %v5253
  %5415 = vmatprep.mubr.bf16.mxu0 %v5093
  %5416 = vmatmul.mubr.bf16.gmra.mrb[0].mxu0 %v5092
  %v5417 = vpop.f32.mrb[0].mxu0
  %v5418 = vadd.f32 0.0, %v5417
  %v5419 = vpop.f32.mrb[0].mxu0
  %v5420 = vpop.f32.mrb[0].mxu0
  %v5421 = vadd.f32 0.0, %v5420
  %v5422 = vpop.f32.mrb[0].mxu0
  %5423 = vmatprep.mubr.bf16.mxu0 %v5095
  %5424 = vmatmul.mubr.bf16.gmra.mrb[0].mxu0 %v5094
  %v5425 = vpop.f32.mrb[0].mxu0
  %v5426 = vadd.f32 0.0, %v5425
  %v5427 = vpop.f32.mrb[0].mxu0
  %v5428 = vpop.f32.mrb[0].mxu0
  %v5429 = vadd.f32 0.0, %v5428
  %v5430 = vpop.f32.mrb[0].mxu0
  %5431 = vmatprep.mubr.bf16.mxu0 %v5097
  %5432 = vmatmul.mubr.bf16.gmra.mrb[0].mxu0 %v5096
  %v5433 = vpop.f32.mrb[0].mxu0
  %v5434 = vadd.f32 0.0, %v5433
  %v5435 = vpop.f32.mrb[0].mxu0
  %v5436 = vpop.f32.mrb[0].mxu0
  %v5437 = vadd.f32 0.0, %v5436
  %v5438 = vpop.f32.mrb[0].mxu0
  %5439 = vmatprep.mubr.bf16.mxu0 %v5099
  %5440 = vmatmul.mubr.bf16.gmra.mrb[0].mxu0 %v5098
  %v5441 = vpop.f32.mrb[0].mxu0
  %v5442 = vadd.f32 0.0, %v5441
  %v5443 = vpop.f32.mrb[0].mxu0
  %v5444 = vpop.f32.mrb[0].mxu0
  %v5445 = vadd.f32 0.0, %v5444
  %v5446 = vpop.f32.mrb[0].mxu0
  %5447 = vmatprep.mubr.bf16.mxu0 %v5101
  %5448 = vmatmul.mubr.bf16.gmra.mrb[0].mxu0 %v5100
  %v5449 = vpop.f32.mrb[0].mxu0
  %v5450 = vadd.f32 0.0, %v5449
  %v5451 = vpop.f32.mrb[0].mxu0
  %v5452 = vpop.f32.mrb[0].mxu0
  %v5453 = vadd.f32 0.0, %v5452
  %v5454 = vpop.f32.mrb[0].mxu0
  %5455 = vmatprep.mubr.bf16.mxu0 %v5103
  %5456 = vmatmul.mubr.bf16.gmra.mrb[0].mxu0 %v5102
  %v5457 = vpop.f32.mrb[0].mxu0
  %v5458 = vadd.f32 0.0, %v5457
  %v5459 = vpop.f32.mrb[0].mxu0
  %v5460 = vpop.f32.mrb[0].mxu0
  %v5461 = vadd.f32 0.0, %v5460
  %v5462 = vpop.f32.mrb[0].mxu0
  %5463 = vmatprep.mubr.bf16.mxu0 %v5105
  %5464 = vmatmul.mubr.bf16.gmra.mrb[0].mxu0 %v5104
  %v5465 = vpop.f32.mrb[0].mxu0
  %v5466 = vadd.f32 0.0, %v5465
  %v5467 = vpop.f32.mrb[0].mxu0
  %v5468 = vpop.f32.mrb[0].mxu0
  %v5469 = vadd.f32 0.0, %v5468
  %v5470 = vpop.f32.mrb[0].mxu0
  %5471 = vmatprep.mubr.bf16.mxu0 %v5107
  %5472 = vmatmul.mubr.bf16.gmra.mrb[0].mxu0 %v5106
  %v5473 = vpop.f32.mrb[0].mxu0
  %v5474 = vadd.f32 0.0, %v5473
  %v5475 = vpop.f32.mrb[0].mxu0
  %v5476 = vpop.f32.mrb[0].mxu0
  %v5477 = vadd.f32 0.0, %v5476
  %v5478 = vpop.f32.mrb[0].mxu0
  %5479 = vdwg.mxu0
  %v5480 = vadd.f32 %v5367, %v5418
  %v5481 = vadd.f32 %v5368, %v5421
  %v5482 = vadd.f32 %v5369, %v5426
  %v5483 = vadd.f32 %v5370, %v5429
  %v5484 = vadd.f32 %v5371, %v5434
  %v5485 = vadd.f32 %v5372, %v5437
  %v5486 = vadd.f32 %v5373, %v5442
  %v5487 = vadd.f32 %v5374, %v5445
  %v5488 = vadd.f32 %v5375, %v5450
  %v5489 = vadd.f32 %v5376, %v5453
  %v5490 = vadd.f32 %v5377, %v5458
  %v5491 = vadd.f32 %v5378, %v5461
  %v5492 = vadd.f32 %v5379, %v5466
  %v5493 = vadd.f32 %v5380, %v5469
  %v5494 = vadd.f32 %v5381, %v5474
  %v5495 = vadd.f32 %v5382, %v5477
  %v5528 = vunpack.c.l.b16 %v5142
  %v5529 = vunpack.c.l.b16 %v5143
  %v5530 = vunpack.c.l.b16 %v5144
  %v5531 = vunpack.c.l.b16 %v5145
  %v5532 = vunpack.c.l.b16 %v5146
  %v5533 = vunpack.c.l.b16 %v5147
  %v5534 = vunpack.c.l.b16 %v5148
  %v5535 = vunpack.c.l.b16 %v5149
  %v5536 = vunpack.c.l.b16 %v5150
  %v5537 = vunpack.c.l.b16 %v5151
  %v5538 = vunpack.c.l.b16 %v5152
  %v5539 = vunpack.c.l.b16 %v5153
  %v5540 = vunpack.c.l.b16 %v5154
  %v5541 = vunpack.c.l.b16 %v5155
  %v5542 = vunpack.c.l.b16 %v5156
  %v5543 = vunpack.c.l.b16 %v5157
  %v5544 = vunpack.c.l.b16 %v5158
  %v5545 = vunpack.c.l.b16 %v5159
  %v5546 = vunpack.c.l.b16 %v5160
  %v5547 = vunpack.c.l.b16 %v5161
  %v5548 = vunpack.c.l.b16 %v5162
  %v5549 = vunpack.c.l.b16 %v5163
  %v5550 = vunpack.c.l.b16 %v5164
  %v5551 = vunpack.c.l.b16 %v5165
  %v5552 = vunpack.c.l.b16 %v5166
  %v5553 = vunpack.c.l.b16 %v5167
  %v5554 = vunpack.c.l.b16 %v5168
  %v5555 = vunpack.c.l.b16 %v5169
  %v5556 = vunpack.c.l.b16 %v5170
  %v5557 = vunpack.c.l.b16 %v5171
  %v5558 = vunpack.c.l.b16 %v5172
  %v5559 = vunpack.c.l.b16 %v5173
  %v5560 = vpack.c.b16 %v5529, %v5528
  %v5561 = vpack.c.b16 %v5531, %v5530
  %v5562 = vpack.c.b16 %v5533, %v5532
  %v5563 = vpack.c.b16 %v5535, %v5534
  %v5564 = vpack.c.b16 %v5537, %v5536
  %v5565 = vpack.c.b16 %v5539, %v5538
  %v5566 = vpack.c.b16 %v5541, %v5540
  %v5567 = vpack.c.b16 %v5543, %v5542
  %v5568 = vpack.c.b16 %v5545, %v5544
  %v5569 = vpack.c.b16 %v5547, %v5546
  %v5570 = vpack.c.b16 %v5549, %v5548
  %v5571 = vpack.c.b16 %v5551, %v5550
  %v5572 = vpack.c.b16 %v5553, %v5552
  %v5573 = vpack.c.b16 %v5555, %v5554
  %v5574 = vpack.c.b16 %v5557, %v5556
  %v5575 = vpack.c.b16 %v5559, %v5558
  %5592 = vmatprep.subr.bf16.mxu0 0
  %5593 = vmatpush1.bf16.msra.mxu0 %v5560
  %5594 = vmatprep.subr.bf16.mxu0 0
  %5595 = vmatpush1.bf16.msra.mxu0 %v5561
  %5596 = vmatprep.subr.bf16.mxu0 0
  %5597 = vmatpush1.bf16.msra.mxu0 %v5562
  %5598 = vmatprep.subr.bf16.mxu0 0
  %5599 = vmatpush1.bf16.msra.mxu0 %v5563
  %5600 = vmatprep.subr.bf16.mxu0 0
  %5601 = vmatpush1.bf16.msra.mxu0 %v5564
  %5602 = vmatprep.subr.bf16.mxu0 0
  %5603 = vmatpush1.bf16.msra.mxu0 %v5565
  %5604 = vmatprep.subr.bf16.mxu0 0
  %5605 = vmatpush1.bf16.msra.mxu0 %v5566
  %5606 = vmatprep.subr.bf16.mxu0 0
  %5607 = vmatpush1.bf16.msra.mxu0 %v5567
  %5608 = vmatprep.subr.bf16.mxu0 0
  %5609 = vmatpush1.bf16.msra.mxu0 %v5568
  %5610 = vmatprep.subr.bf16.mxu0 0
  %5611 = vmatpush1.bf16.msra.mxu0 %v5569
  %5612 = vmatprep.subr.bf16.mxu0 0
  %5613 = vmatpush1.bf16.msra.mxu0 %v5570
  %5614 = vmatprep.subr.bf16.mxu0 0
  %5615 = vmatpush1.bf16.msra.mxu0 %v5571
  %5616 = vmatprep.subr.bf16.mxu0 0
  %5617 = vmatpush1.bf16.msra.mxu0 %v5572
  %5618 = vmatprep.subr.bf16.mxu0 0
  %5619 = vmatpush1.bf16.msra.mxu0 %v5573
  %5620 = vmatprep.subr.bf16.mxu0 0
  %5621 = vmatpush1.bf16.msra.mxu0 %v5574
  %5622 = vmatprep.subr.bf16.mxu0 0
  %5623 = vmatpush1.bf16.msra.mxu0 %v5575
  %5624 = vmatprep.mubr.bf16.mxu0 %v5013
  %5625 = vmatmul.mubr.bf16.gmra.mrb[0].mxu0 %v5012
  %v5626 = vpop.f32.mrb[0].mxu0
  %v5627 = vadd.f32 0.0, %v5626
  %v5628 = vpop.f32.mrb[0].mxu0
  %v5629 = vpop.f32.mrb[0].mxu0
  %v5630 = vadd.f32 0.0, %v5629
  %v5631 = vpop.f32.mrb[0].mxu0
  %5632 = vmatprep.mubr.bf16.mxu0 %v5015
  %5633 = vmatmul.mubr.bf16.gmra.mrb[0].mxu0 %v5014
  %v5634 = vpop.f32.mrb[0].mxu0
  %v5635 = vadd.f32 0.0, %v5634
  %v5636 = vpop.f32.mrb[0].mxu0
  %v5637 = vpop.f32.mrb[0].mxu0
  %v5638 = vadd.f32 0.0, %v5637
  %v5639 = vpop.f32.mrb[0].mxu0
  %5640 = vmatprep.mubr.bf16.mxu0 %v5017
  %5641 = vmatmul.mubr.bf16.gmra.mrb[0].mxu0 %v5016
  %v5642 = vpop.f32.mrb[0].mxu0
  %v5643 = vadd.f32 0.0, %v5642
  %v5644 = vpop.f32.mrb[0].mxu0
  %v5645 = vpop.f32.mrb[0].mxu0
  %v5646 = vadd.f32 0.0, %v5645
  %v5647 = vpop.f32.mrb[0].mxu0
  %5648 = vmatprep.mubr.bf16.mxu0 %v5019
  %5649 = vmatmul.mubr.bf16.gmra.mrb[0].mxu0 %v5018
  %v5650 = vpop.f32.mrb[0].mxu0
  %v5651 = vadd.f32 0.0, %v5650
  %v5652 = vpop.f32.mrb[0].mxu0
  %v5653 = vpop.f32.mrb[0].mxu0
  %v5654 = vadd.f32 0.0, %v5653
  %v5655 = vpop.f32.mrb[0].mxu0
  %5656 = vmatprep.mubr.bf16.mxu0 %v5021
  %5657 = vmatmul.mubr.bf16.gmra.mrb[0].mxu0 %v5020
  %v5658 = vpop.f32.mrb[0].mxu0
  %v5659 = vadd.f32 0.0, %v5658
  %v5660 = vpop.f32.mrb[0].mxu0
  %v5661 = vpop.f32.mrb[0].mxu0
  %v5662 = vadd.f32 0.0, %v5661
  %v5663 = vpop.f32.mrb[0].mxu0
  %5664 = vmatprep.mubr.bf16.mxu0 %v5023
  %5665 = vmatmul.mubr.bf16.gmra.mrb[0].mxu0 %v5022
  %v5666 = vpop.f32.mrb[0].mxu0
  %v5667 = vadd.f32 0.0, %v5666
  %v5668 = vpop.f32.mrb[0].mxu0
  %v5669 = vpop.f32.mrb[0].mxu0
  %v5670 = vadd.f32 0.0, %v5669
  %v5671 = vpop.f32.mrb[0].mxu0
  %5672 = vmatprep.mubr.bf16.mxu0 %v5025
  %5673 = vmatmul.mubr.bf16.gmra.mrb[0].mxu0 %v5024
  %v5674 = vpop.f32.mrb[0].mxu0
  %v5675 = vadd.f32 0.0, %v5674
  %v5676 = vpop.f32.mrb[0].mxu0
  %v5677 = vpop.f32.mrb[0].mxu0
  %v5678 = vadd.f32 0.0, %v5677
  %v5679 = vpop.f32.mrb[0].mxu0
  %5680 = vmatprep.mubr.bf16.mxu0 %v5027
  %5681 = vmatmul.mubr.bf16.gmra.mrb[0].mxu0 %v5026
  %v5682 = vpop.f32.mrb[0].mxu0
  %v5683 = vadd.f32 0.0, %v5682
  %v5684 = vpop.f32.mrb[0].mxu0
  %v5685 = vpop.f32.mrb[0].mxu0
  %v5686 = vadd.f32 0.0, %v5685
  %v5687 = vpop.f32.mrb[0].mxu0
  %5688 = vdwg.mxu0
  %v5689 = vadd.f32 %v5480, %v5627
  %v5690 = vadd.f32 %v5481, %v5630
  %v5691 = vadd.f32 %v5482, %v5635
  %v5692 = vadd.f32 %v5483, %v5638
  %v5693 = vadd.f32 %v5484, %v5643
  %v5694 = vadd.f32 %v5485, %v5646
  %v5695 = vadd.f32 %v5486, %v5651
  %v5696 = vadd.f32 %v5487, %v5654
  %v5697 = vadd.f32 %v5488, %v5659
  %v5698 = vadd.f32 %v5489, %v5662
  %v5699 = vadd.f32 %v5490, %v5667
  %v5700 = vadd.f32 %v5491, %v5670
  %v5701 = vadd.f32 %v5492, %v5675
  %v5702 = vadd.f32 %v5493, %v5678
  %v5703 = vadd.f32 %v5494, %v5683
  %v5704 = vadd.f32 %v5495, %v5686
  %s5705 = scalar_lea.vmem [#allocation2], 64
  %v5706 = vld [vmem:[%s5705] sm:$0xff]
  %v5707 = vld [vmem:[%s5705 + $0x8] sm:$0xff]
  %v5708 = vld [vmem:[%s5705 + $0x20] sm:$0xff]
  %v5709 = vld [vmem:[%s5705 + $0x28] sm:$0xff]
  %v5710 = vld [vmem:[%s5705 + $0x40] sm:$0xff]
  %v5711 = vld [vmem:[%s5705 + $0x48] sm:$0xff]
  %v5712 = vld [vmem:[%s5705 + $0x60] sm:$0xff]
  %v5713 = vld [vmem:[%s5705 + $0x68] sm:$0xff]
  %v5714 = vld [vmem:[%s5705 + $0x80] sm:$0xff]
  %v5715 = vld [vmem:[%s5705 + $0x88] sm:$0xff]
  %v5716 = vld [vmem:[%s5705 + $0xa0] sm:$0xff]
  %v5717 = vld [vmem:[%s5705 + $0xa8] sm:$0xff]
  %v5718 = vld [vmem:[%s5705 + $0xc0] sm:$0xff]
  %v5719 = vld [vmem:[%s5705 + $0xc8] sm:$0xff]
  %v5720 = vld [vmem:[%s5705 + $0xe0] sm:$0xff]
  %v5721 = vld [vmem:[%s5705 + $0xe8] sm:$0xff]
  %v5722 = vld [vmem:[%s5705 + $0x140] sm:$0xff]
  %v5723 = vld [vmem:[%s5705 + $0x148] sm:$0xff]
  %v5724 = vld [vmem:[%s5705 + $0x160] sm:$0xff]
  %v5725 = vld [vmem:[%s5705 + $0x168] sm:$0xff]
  %v5726 = vld [vmem:[%s5705 + $0x180] sm:$0xff]
  %v5727 = vld [vmem:[%s5705 + $0x188] sm:$0xff]
  %v5728 = vld [vmem:[%s5705 + $0x1a0] sm:$0xff]
  %v5729 = vld [vmem:[%s5705 + $0x1a8] sm:$0xff]
  %v5730 = vld [vmem:[%s5705 + $0x1c0] sm:$0xff]
  %v5731 = vld [vmem:[%s5705 + $0x1c8] sm:$0xff]
  %v5732 = vld [vmem:[%s5705 + $0x1e0] sm:$0xff]
  %v5733 = vld [vmem:[%s5705 + $0x1e8] sm:$0xff]
  %v5734 = vld [vmem:[%s5705 + $0x200] sm:$0xff]
  %v5735 = vld [vmem:[%s5705 + $0x208] sm:$0xff]
  %v5736 = vld [vmem:[%s5705 + $0x220] sm:$0xff]
  %v5737 = vld [vmem:[%s5705 + $0x228] sm:$0xff]
  %v5738 = vpack.c.bf16 %v5708, %v5706
  %v5739 = vpack.c.bf16 %v5709, %v5707
  %v5740 = vpack.c.bf16 %v5712, %v5710
  %v5741 = vpack.c.bf16 %v5713, %v5711
  %v5742 = vpack.c.bf16 %v5716, %v5714
  %v5743 = vpack.c.bf16 %v5717, %v5715
  %v5744 = vpack.c.bf16 %v5720, %v5718
  %v5745 = vpack.c.bf16 %v5721, %v5719
  %v5746 = vpack.c.bf16 %v5724, %v5722
  %v5747 = vpack.c.bf16 %v5725, %v5723
  %v5748 = vpack.c.bf16 %v5728, %v5726
  %v5749 = vpack.c.bf16 %v5729, %v5727
  %v5750 = vpack.c.bf16 %v5732, %v5730
  %v5751 = vpack.c.bf16 %v5733, %v5731
  %v5752 = vpack.c.bf16 %v5736, %v5734
  %v5753 = vpack.c.bf16 %v5737, %v5735
  %v5754 = vunpack.c.l.bf16 %v5738
  %v5755 = vunpack.c.l.bf16 %v5739
  %v5756 = vunpack.c.h.bf16 %v5738
  %v5757 = vunpack.c.h.bf16 %v5739
  %v5758 = vunpack.c.l.bf16 %v5740
  %v5759 = vunpack.c.l.bf16 %v5741
  %v5760 = vunpack.c.h.bf16 %v5740
  %v5761 = vunpack.c.h.bf16 %v5741
  %v5762 = vunpack.c.l.bf16 %v5742
  %v5763 = vunpack.c.l.bf16 %v5743
  %v5764 = vunpack.c.h.bf16 %v5742
  %v5765 = vunpack.c.h.bf16 %v5743
  %v5766 = vunpack.c.l.bf16 %v5744
  %v5767 = vunpack.c.l.bf16 %v5745
  %v5768 = vunpack.c.h.bf16 %v5744
  %v5769 = vunpack.c.h.bf16 %v5745
  %v5770 = vunpack.c.l.bf16 %v5746
  %v5771 = vunpack.c.l.bf16 %v5747
  %v5772 = vunpack.c.h.bf16 %v5746
  %v5773 = vunpack.c.h.bf16 %v5747
  %v5774 = vunpack.c.l.bf16 %v5748
  %v5775 = vunpack.c.l.bf16 %v5749
  %v5776 = vunpack.c.h.bf16 %v5748
  %v5777 = vunpack.c.h.bf16 %v5749
  %v5778 = vunpack.c.l.bf16 %v5750
  %v5779 = vunpack.c.l.bf16 %v5751
  %v5780 = vunpack.c.h.bf16 %v5750
  %v5781 = vunpack.c.h.bf16 %v5751
  %v5782 = vunpack.c.l.bf16 %v5752
  %v5783 = vunpack.c.l.bf16 %v5753
  %v5784 = vunpack.c.h.bf16 %v5752
  %v5785 = vunpack.c.h.bf16 %v5753
  %v5786 = vsub.f32 %v5706, %v5754
  %v5787 = vsub.f32 %v5707, %v5755
  %v5788 = vsub.f32 %v5708, %v5756
  %v5789 = vsub.f32 %v5709, %v5757
  %v5790 = vsub.f32 %v5710, %v5758
  %v5791 = vsub.f32 %v5711, %v5759
  %v5792 = vsub.f32 %v5712, %v5760
  %v5793 = vsub.f32 %v5713, %v5761
  %v5794 = vsub.f32 %v5714, %v5762
  %v5795 = vsub.f32 %v5715, %v5763
  %v5796 = vsub.f32 %v5716, %v5764
  %v5797 = vsub.f32 %v5717, %v5765
  %v5798 = vsub.f32 %v5718, %v5766
  %v5799 = vsub.f32 %v5719, %v5767
  %v5800 = vsub.f32 %v5720, %v5768
  %v5801 = vsub.f32 %v5721, %v5769
  %v5802 = vsub.f32 %v5722, %v5770
  %v5803 = vsub.f32 %v5723, %v5771
  %v5804 = vsub.f32 %v5724, %v5772
  %v5805 = vsub.f32 %v5725, %v5773
  %v5806 = vsub.f32 %v5726, %v5774
  %v5807 = vsub.f32 %v5727, %v5775
  %v5808 = vsub.f32 %v5728, %v5776
  %v5809 = vsub.f32 %v5729, %v5777
  %v5810 = vsub.f32 %v5730, %v5778
  %v5811 = vsub.f32 %v5731, %v5779
  %v5812 = vsub.f32 %v5732, %v5780
  %v5813 = vsub.f32 %v5733, %v5781
  %v5814 = vsub.f32 %v5734, %v5782
  %v5815 = vsub.f32 %v5735, %v5783
  %v5816 = vsub.f32 %v5736, %v5784
  %v5817 = vsub.f32 %v5737, %v5785
  %v5818 = vpack.c.bf16 %v5788, %v5786
  %v5819 = vpack.c.bf16 %v5789, %v5787
  %v5820 = vpack.c.bf16 %v5792, %v5790
  %v5821 = vpack.c.bf16 %v5793, %v5791
  %v5822 = vpack.c.bf16 %v5796, %v5794
  %v5823 = vpack.c.bf16 %v5797, %v5795
  %v5824 = vpack.c.bf16 %v5800, %v5798
  %v5825 = vpack.c.bf16 %v5801, %v5799
  %v5826 = vpack.c.bf16 %v5804, %v5802
  %v5827 = vpack.c.bf16 %v5805, %v5803
  %v5828 = vpack.c.bf16 %v5808, %v5806
  %v5829 = vpack.c.bf16 %v5809, %v5807
  %v5830 = vpack.c.bf16 %v5812, %v5810
  %v5831 = vpack.c.bf16 %v5813, %v5811
  %v5832 = vpack.c.bf16 %v5816, %v5814
  %v5833 = vpack.c.bf16 %v5817, %v5815
  %s5834 = scalar_lea.vmem %s1, 768
  %v5835 = vld [vmem:[%s5834] sm:$0xf]
  %v5836 = vld [vmem:[%s5834 + $0x4] sm:$0xf]
  %v5837 = vld [vmem:[%s5834 + $0x8] sm:$0xf]
  %v5838 = vld [vmem:[%s5834 + $0xc] sm:$0xf]
  %v5839 = vld [vmem:[%s5834 + $0x10] sm:$0xf]
  %v5840 = vld [vmem:[%s5834 + $0x14] sm:$0xf]
  %v5841 = vld [vmem:[%s5834 + $0x18] sm:$0xf]
  %v5842 = vld [vmem:[%s5834 + $0x1c] sm:$0xf]
  %v5843 = vld [vmem:[%s5834 + $0x20] sm:$0xf]
  %v5844 = vld [vmem:[%s5834 + $0x24] sm:$0xf]
  %v5845 = vld [vmem:[%s5834 + $0x28] sm:$0xf]
  %v5846 = vld [vmem:[%s5834 + $0x2c] sm:$0xf]
  %v5847 = vld [vmem:[%s5834 + $0x30] sm:$0xf]
  %v5848 = vld [vmem:[%s5834 + $0x34] sm:$0xf]
  %v5849 = vld [vmem:[%s5834 + $0x38] sm:$0xf]
  %v5850 = vld [vmem:[%s5834 + $0x3c] sm:$0xf]
  %v5851 = vld [vmem:[%s5834 + $0x40] sm:$0xf]
  %v5852 = vld [vmem:[%s5834 + $0x44] sm:$0xf]
  %v5853 = vld [vmem:[%s5834 + $0x48] sm:$0xf]
  %v5854 = vld [vmem:[%s5834 + $0x4c] sm:$0xf]
  %v5855 = vld [vmem:[%s5834 + $0x50] sm:$0xf]
  %v5856 = vld [vmem:[%s5834 + $0x54] sm:$0xf]
  %v5857 = vld [vmem:[%s5834 + $0x58] sm:$0xf]
  %v5858 = vld [vmem:[%s5834 + $0x5c] sm:$0xf]
  %v5859 = vld [vmem:[%s5834 + $0x60] sm:$0xf]
  %v5860 = vld [vmem:[%s5834 + $0x64] sm:$0xf]
  %v5861 = vld [vmem:[%s5834 + $0x68] sm:$0xf]
  %v5862 = vld [vmem:[%s5834 + $0x6c] sm:$0xf]
  %v5863 = vld [vmem:[%s5834 + $0x70] sm:$0xf]
  %v5864 = vld [vmem:[%s5834 + $0x74] sm:$0xf]
  %v5865 = vld [vmem:[%s5834 + $0x78] sm:$0xf]
  %v5866 = vld [vmem:[%s5834 + $0x7c] sm:$0xf]
  %s5867 = scalar_lea.vmem %s2, 768
  %v5868 = vld [vmem:[%s5867] sm:$0xf]
  %v5869 = vld [vmem:[%s5867 + $0x4] sm:$0xf]
  %v5870 = vld [vmem:[%s5867 + $0x8] sm:$0xf]
  %v5871 = vld [vmem:[%s5867 + $0xc] sm:$0xf]
  %v5872 = vld [vmem:[%s5867 + $0x10] sm:$0xf]
  %v5873 = vld [vmem:[%s5867 + $0x14] sm:$0xf]
  %v5874 = vld [vmem:[%s5867 + $0x18] sm:$0xf]
  %v5875 = vld [vmem:[%s5867 + $0x1c] sm:$0xf]
  %v5876 = vld [vmem:[%s5867 + $0x20] sm:$0xf]
  %v5877 = vld [vmem:[%s5867 + $0x24] sm:$0xf]
  %v5878 = vld [vmem:[%s5867 + $0x28] sm:$0xf]
  %v5879 = vld [vmem:[%s5867 + $0x2c] sm:$0xf]
  %v5880 = vld [vmem:[%s5867 + $0x30] sm:$0xf]
  %v5881 = vld [vmem:[%s5867 + $0x34] sm:$0xf]
  %v5882 = vld [vmem:[%s5867 + $0x38] sm:$0xf]
  %v5883 = vld [vmem:[%s5867 + $0x3c] sm:$0xf]
  %v5884 = vld [vmem:[%s5867 + $0x40] sm:$0xf]
  %v5885 = vld [vmem:[%s5867 + $0x44] sm:$0xf]
  %v5886 = vld [vmem:[%s5867 + $0x48] sm:$0xf]
  %v5887 = vld [vmem:[%s5867 + $0x4c] sm:$0xf]
  %v5888 = vld [vmem:[%s5867 + $0x50] sm:$0xf]
  %v5889 = vld [vmem:[%s5867 + $0x54] sm:$0xf]
  %v5890 = vld [vmem:[%s5867 + $0x58] sm:$0xf]
  %v5891 = vld [vmem:[%s5867 + $0x5c] sm:$0xf]
  %v5892 = vld [vmem:[%s5867 + $0x60] sm:$0xf]
  %v5893 = vld [vmem:[%s5867 + $0x64] sm:$0xf]
  %v5894 = vld [vmem:[%s5867 + $0x68] sm:$0xf]
  %v5895 = vld [vmem:[%s5867 + $0x6c] sm:$0xf]
  %v5896 = vld [vmem:[%s5867 + $0x70] sm:$0xf]
  %v5897 = vld [vmem:[%s5867 + $0x74] sm:$0xf]
  %v5898 = vld [vmem:[%s5867 + $0x78] sm:$0xf]
  %v5899 = vld [vmem:[%s5867 + $0x7c] sm:$0xf]
  %v5932 = vunpack.c.l.b16 %v5835
  %v5933 = vunpack.c.l.b16 %v5836
  %v5934 = vunpack.c.l.b16 %v5837
  %v5935 = vunpack.c.l.b16 %v5838
  %v5936 = vunpack.c.l.b16 %v5839
  %v5937 = vunpack.c.l.b16 %v5840
  %v5938 = vunpack.c.l.b16 %v5841
  %v5939 = vunpack.c.l.b16 %v5842
  %v5940 = vunpack.c.l.b16 %v5843
  %v5941 = vunpack.c.l.b16 %v5844
  %v5942 = vunpack.c.l.b16 %v5845
  %v5943 = vunpack.c.l.b16 %v5846
  %v5944 = vunpack.c.l.b16 %v5847
  %v5945 = vunpack.c.l.b16 %v5848
  %v5946 = vunpack.c.l.b16 %v5849
  %v5947 = vunpack.c.l.b16 %v5850
  %v5948 = vunpack.c.l.b16 %v5851
  %v5949 = vunpack.c.l.b16 %v5852
  %v5950 = vunpack.c.l.b16 %v5853
  %v5951 = vunpack.c.l.b16 %v5854
  %v5952 = vunpack.c.l.b16 %v5855
  %v5953 = vunpack.c.l.b16 %v5856
  %v5954 = vunpack.c.l.b16 %v5857
  %v5955 = vunpack.c.l.b16 %v5858
  %v5956 = vunpack.c.l.b16 %v5859
  %v5957 = vunpack.c.l.b16 %v5860
  %v5958 = vunpack.c.l.b16 %v5861
  %v5959 = vunpack.c.l.b16 %v5862
  %v5960 = vunpack.c.l.b16 %v5863
  %v5961 = vunpack.c.l.b16 %v5864
  %v5962 = vunpack.c.l.b16 %v5865
  %v5963 = vunpack.c.l.b16 %v5866
  %v5964 = vpack.c.b16 %v5933, %v5932
  %v5965 = vpack.c.b16 %v5935, %v5934
  %v5966 = vpack.c.b16 %v5937, %v5936
  %v5967 = vpack.c.b16 %v5939, %v5938
  %v5968 = vpack.c.b16 %v5941, %v5940
  %v5969 = vpack.c.b16 %v5943, %v5942
  %v5970 = vpack.c.b16 %v5945, %v5944
  %v5971 = vpack.c.b16 %v5947, %v5946
  %v5972 = vpack.c.b16 %v5949, %v5948
  %v5973 = vpack.c.b16 %v5951, %v5950
  %v5974 = vpack.c.b16 %v5953, %v5952
  %v5975 = vpack.c.b16 %v5955, %v5954
  %v5976 = vpack.c.b16 %v5957, %v5956
  %v5977 = vpack.c.b16 %v5959, %v5958
  %v5978 = vpack.c.b16 %v5961, %v5960
  %v5979 = vpack.c.b16 %v5963, %v5962
  %5996 = vmatprep.subr.bf16.mxu0 0
  %5997 = vmatpush1.bf16.msra.mxu0 %v5964
  %5998 = vmatprep.subr.bf16.mxu0 0
  %5999 = vmatpush1.bf16.msra.mxu0 %v5965
  %6000 = vmatprep.subr.bf16.mxu0 0
  %6001 = vmatpush1.bf16.msra.mxu0 %v5966
  %6002 = vmatprep.subr.bf16.mxu0 0
  %6003 = vmatpush1.bf16.msra.mxu0 %v5967
  %6004 = vmatprep.subr.bf16.mxu0 0
  %6005 = vmatpush1.bf16.msra.mxu0 %v5968
  %6006 = vmatprep.subr.bf16.mxu0 0
  %6007 = vmatpush1.bf16.msra.mxu0 %v5969
  %6008 = vmatprep.subr.bf16.mxu0 0
  %6009 = vmatpush1.bf16.msra.mxu0 %v5970
  %6010 = vmatprep.subr.bf16.mxu0 0
  %6011 = vmatpush1.bf16.msra.mxu0 %v5971
  %6012 = vmatprep.subr.bf16.mxu0 0
  %6013 = vmatpush1.bf16.msra.mxu0 %v5972
  %6014 = vmatprep.subr.bf16.mxu0 0
  %6015 = vmatpush1.bf16.msra.mxu0 %v5973
  %6016 = vmatprep.subr.bf16.mxu0 0
  %6017 = vmatpush1.bf16.msra.mxu0 %v5974
  %6018 = vmatprep.subr.bf16.mxu0 0
  %6019 = vmatpush1.bf16.msra.mxu0 %v5975
  %6020 = vmatprep.subr.bf16.mxu0 0
  %6021 = vmatpush1.bf16.msra.mxu0 %v5976
  %6022 = vmatprep.subr.bf16.mxu0 0
  %6023 = vmatpush1.bf16.msra.mxu0 %v5977
  %6024 = vmatprep.subr.bf16.mxu0 0
  %6025 = vmatpush1.bf16.msra.mxu0 %v5978
  %6026 = vmatprep.subr.bf16.mxu0 0
  %6027 = vmatpush1.bf16.msra.mxu0 %v5979
  %6028 = vmatprep.mubr.bf16.mxu0 %v5739
  %6029 = vmatmul.mubr.bf16.gmra.mrb[0].mxu0 %v5738
  %v6030 = vpop.f32.mrb[0].mxu0
  %v6031 = vadd.f32 0.0, %v6030
  %v6032 = vpop.f32.mrb[0].mxu0
  %v6033 = vpop.f32.mrb[0].mxu0
  %v6034 = vadd.f32 0.0, %v6033
  %v6035 = vpop.f32.mrb[0].mxu0
  %6036 = vmatprep.mubr.bf16.mxu0 %v5741
  %6037 = vmatmul.mubr.bf16.gmra.mrb[0].mxu0 %v5740
  %v6038 = vpop.f32.mrb[0].mxu0
  %v6039 = vadd.f32 0.0, %v6038
  %v6040 = vpop.f32.mrb[0].mxu0
  %v6041 = vpop.f32.mrb[0].mxu0
  %v6042 = vadd.f32 0.0, %v6041
  %v6043 = vpop.f32.mrb[0].mxu0
  %6044 = vmatprep.mubr.bf16.mxu0 %v5743
  %6045 = vmatmul.mubr.bf16.gmra.mrb[0].mxu0 %v5742
  %v6046 = vpop.f32.mrb[0].mxu0
  %v6047 = vadd.f32 0.0, %v6046
  %v6048 = vpop.f32.mrb[0].mxu0
  %v6049 = vpop.f32.mrb[0].mxu0
  %v6050 = vadd.f32 0.0, %v6049
  %v6051 = vpop.f32.mrb[0].mxu0
  %6052 = vmatprep.mubr.bf16.mxu0 %v5745
  %6053 = vmatmul.mubr.bf16.gmra.mrb[0].mxu0 %v5744
  %v6054 = vpop.f32.mrb[0].mxu0
  %v6055 = vadd.f32 0.0, %v6054
  %v6056 = vpop.f32.mrb[0].mxu0
  %v6057 = vpop.f32.mrb[0].mxu0
  %v6058 = vadd.f32 0.0, %v6057
  %v6059 = vpop.f32.mrb[0].mxu0
  %6060 = vmatprep.mubr.bf16.mxu0 %v5747
  %6061 = vmatmul.mubr.bf16.gmra.mrb[0].mxu0 %v5746
  %v6062 = vpop.f32.mrb[0].mxu0
  %v6063 = vadd.f32 0.0, %v6062
  %v6064 = vpop.f32.mrb[0].mxu0
  %v6065 = vpop.f32.mrb[0].mxu0
  %v6066 = vadd.f32 0.0, %v6065
  %v6067 = vpop.f32.mrb[0].mxu0
  %6068 = vmatprep.mubr.bf16.mxu0 %v5749
  %6069 = vmatmul.mubr.bf16.gmra.mrb[0].mxu0 %v5748
  %v6070 = vpop.f32.mrb[0].mxu0
  %v6071 = vadd.f32 0.0, %v6070
  %v6072 = vpop.f32.mrb[0].mxu0
  %v6073 = vpop.f32.mrb[0].mxu0
  %v6074 = vadd.f32 0.0, %v6073
  %v6075 = vpop.f32.mrb[0].mxu0
  %6076 = vmatprep.mubr.bf16.mxu0 %v5751
  %6077 = vmatmul.mubr.bf16.gmra.mrb[0].mxu0 %v5750
  %v6078 = vpop.f32.mrb[0].mxu0
  %v6079 = vadd.f32 0.0, %v6078
  %v6080 = vpop.f32.mrb[0].mxu0
  %v6081 = vpop.f32.mrb[0].mxu0
  %v6082 = vadd.f32 0.0, %v6081
  %v6083 = vpop.f32.mrb[0].mxu0
  %6084 = vmatprep.mubr.bf16.mxu0 %v5753
  %6085 = vmatmul.mubr.bf16.gmra.mrb[0].mxu0 %v5752
  %v6086 = vpop.f32.mrb[0].mxu0
  %v6087 = vadd.f32 0.0, %v6086
  %v6088 = vpop.f32.mrb[0].mxu0
  %v6089 = vpop.f32.mrb[0].mxu0
  %v6090 = vadd.f32 0.0, %v6089
  %v6091 = vpop.f32.mrb[0].mxu0
  %6092 = vdwg.mxu0
  %v6093 = vadd.f32 %v5689, %v6031
  %v6094 = vadd.f32 %v5690, %v6034
  %v6095 = vadd.f32 %v5691, %v6039
  %v6096 = vadd.f32 %v5692, %v6042
  %v6097 = vadd.f32 %v5693, %v6047
  %v6098 = vadd.f32 %v5694, %v6050
  %v6099 = vadd.f32 %v5695, %v6055
  %v6100 = vadd.f32 %v5696, %v6058
  %v6101 = vadd.f32 %v5697, %v6063
  %v6102 = vadd.f32 %v5698, %v6066
  %v6103 = vadd.f32 %v5699, %v6071
  %v6104 = vadd.f32 %v5700, %v6074
  %v6105 = vadd.f32 %v5701, %v6079
  %v6106 = vadd.f32 %v5702, %v6082
  %v6107 = vadd.f32 %v5703, %v6087
  %v6108 = vadd.f32 %v5704, %v6090
  %6109 = vmatprep.subr.bf16.mxu0 0
  %6110 = vmatpush1.bf16.msra.mxu0 %v5964
  %6111 = vmatprep.subr.bf16.mxu0 0
  %6112 = vmatpush1.bf16.msra.mxu0 %v5965
  %6113 = vmatprep.subr.bf16.mxu0 0
  %6114 = vmatpush1.bf16.msra.mxu0 %v5966
  %6115 = vmatprep.subr.bf16.mxu0 0
  %6116 = vmatpush1.bf16.msra.mxu0 %v5967
  %6117 = vmatprep.subr.bf16.mxu0 0
  %6118 = vmatpush1.bf16.msra.mxu0 %v5968
  %6119 = vmatprep.subr.bf16.mxu0 0
  %6120 = vmatpush1.bf16.msra.mxu0 %v5969
  %6121 = vmatprep.subr.bf16.mxu0 0
  %6122 = vmatpush1.bf16.msra.mxu0 %v5970
  %6123 = vmatprep.subr.bf16.mxu0 0
  %6124 = vmatpush1.bf16.msra.mxu0 %v5971
  %6125 = vmatprep.subr.bf16.mxu0 0
  %6126 = vmatpush1.bf16.msra.mxu0 %v5972
  %6127 = vmatprep.subr.bf16.mxu0 0
  %6128 = vmatpush1.bf16.msra.mxu0 %v5973
  %6129 = vmatprep.subr.bf16.mxu0 0
  %6130 = vmatpush1.bf16.msra.mxu0 %v5974
  %6131 = vmatprep.subr.bf16.mxu0 0
  %6132 = vmatpush1.bf16.msra.mxu0 %v5975
  %6133 = vmatprep.subr.bf16.mxu0 0
  %6134 = vmatpush1.bf16.msra.mxu0 %v5976
  %6135 = vmatprep.subr.bf16.mxu0 0
  %6136 = vmatpush1.bf16.msra.mxu0 %v5977
  %6137 = vmatprep.subr.bf16.mxu0 0
  %6138 = vmatpush1.bf16.msra.mxu0 %v5978
  %6139 = vmatprep.subr.bf16.mxu0 0
  %6140 = vmatpush1.bf16.msra.mxu0 %v5979
  %6141 = vmatprep.mubr.bf16.mxu0 %v5819
  %6142 = vmatmul.mubr.bf16.gmra.mrb[0].mxu0 %v5818
  %v6143 = vpop.f32.mrb[0].mxu0
  %v6144 = vadd.f32 0.0, %v6143
  %v6145 = vpop.f32.mrb[0].mxu0
  %v6146 = vpop.f32.mrb[0].mxu0
  %v6147 = vadd.f32 0.0, %v6146
  %v6148 = vpop.f32.mrb[0].mxu0
  %6149 = vmatprep.mubr.bf16.mxu0 %v5821
  %6150 = vmatmul.mubr.bf16.gmra.mrb[0].mxu0 %v5820
  %v6151 = vpop.f32.mrb[0].mxu0
  %v6152 = vadd.f32 0.0, %v6151
  %v6153 = vpop.f32.mrb[0].mxu0
  %v6154 = vpop.f32.mrb[0].mxu0
  %v6155 = vadd.f32 0.0, %v6154
  %v6156 = vpop.f32.mrb[0].mxu0
  %6157 = vmatprep.mubr.bf16.mxu0 %v5823
  %6158 = vmatmul.mubr.bf16.gmra.mrb[0].mxu0 %v5822
  %v6159 = vpop.f32.mrb[0].mxu0
  %v6160 = vadd.f32 0.0, %v6159
  %v6161 = vpop.f32.mrb[0].mxu0
  %v6162 = vpop.f32.mrb[0].mxu0
  %v6163 = vadd.f32 0.0, %v6162
  %v6164 = vpop.f32.mrb[0].mxu0
  %6165 = vmatprep.mubr.bf16.mxu0 %v5825
  %6166 = vmatmul.mubr.bf16.gmra.mrb[0].mxu0 %v5824
  %v6167 = vpop.f32.mrb[0].mxu0
  %v6168 = vadd.f32 0.0, %v6167
  %v6169 = vpop.f32.mrb[0].mxu0
  %v6170 = vpop.f32.mrb[0].mxu0
  %v6171 = vadd.f32 0.0, %v6170
  %v6172 = vpop.f32.mrb[0].mxu0
  %6173 = vmatprep.mubr.bf16.mxu0 %v5827
  %6174 = vmatmul.mubr.bf16.gmra.mrb[0].mxu0 %v5826
  %v6175 = vpop.f32.mrb[0].mxu0
  %v6176 = vadd.f32 0.0, %v6175
  %v6177 = vpop.f32.mrb[0].mxu0
  %v6178 = vpop.f32.mrb[0].mxu0
  %v6179 = vadd.f32 0.0, %v6178
  %v6180 = vpop.f32.mrb[0].mxu0
  %6181 = vmatprep.mubr.bf16.mxu0 %v5829
  %6182 = vmatmul.mubr.bf16.gmra.mrb[0].mxu0 %v5828
  %v6183 = vpop.f32.mrb[0].mxu0
  %v6184 = vadd.f32 0.0, %v6183
  %v6185 = vpop.f32.mrb[0].mxu0
  %v6186 = vpop.f32.mrb[0].mxu0
  %v6187 = vadd.f32 0.0, %v6186
  %v6188 = vpop.f32.mrb[0].mxu0
  %6189 = vmatprep.mubr.bf16.mxu0 %v5831
  %6190 = vmatmul.mubr.bf16.gmra.mrb[0].mxu0 %v5830
  %v6191 = vpop.f32.mrb[0].mxu0
  %v6192 = vadd.f32 0.0, %v6191
  %v6193 = vpop.f32.mrb[0].mxu0
  %v6194 = vpop.f32.mrb[0].mxu0
  %v6195 = vadd.f32 0.0, %v6194
  %v6196 = vpop.f32.mrb[0].mxu0
  %6197 = vmatprep.mubr.bf16.mxu0 %v5833
  %6198 = vmatmul.mubr.bf16.gmra.mrb[0].mxu0 %v5832
  %v6199 = vpop.f32.mrb[0].mxu0
  %v6200 = vadd.f32 0.0, %v6199
  %v6201 = vpop.f32.mrb[0].mxu0
  %v6202 = vpop.f32.mrb[0].mxu0
  %v6203 = vadd.f32 0.0, %v6202
  %v6204 = vpop.f32.mrb[0].mxu0
  %6205 = vdwg.mxu0
  %v6206 = vadd.f32 %v6093, %v6144
  %v6207 = vadd.f32 %v6094, %v6147
  %v6208 = vadd.f32 %v6095, %v6152
  %v6209 = vadd.f32 %v6096, %v6155
  %v6210 = vadd.f32 %v6097, %v6160
  %v6211 = vadd.f32 %v6098, %v6163
  %v6212 = vadd.f32 %v6099, %v6168
  %v6213 = vadd.f32 %v6100, %v6171
  %v6214 = vadd.f32 %v6101, %v6176
  %v6215 = vadd.f32 %v6102, %v6179
  %v6216 = vadd.f32 %v6103, %v6184
  %v6217 = vadd.f32 %v6104, %v6187
  %v6218 = vadd.f32 %v6105, %v6192
  %v6219 = vadd.f32 %v6106, %v6195
  %v6220 = vadd.f32 %v6107, %v6200
  %v6221 = vadd.f32 %v6108, %v6203
  %v6254 = vunpack.c.l.b16 %v5868
  %v6255 = vunpack.c.l.b16 %v5869
  %v6256 = vunpack.c.l.b16 %v5870
  %v6257 = vunpack.c.l.b16 %v5871
  %v6258 = vunpack.c.l.b16 %v5872
  %v6259 = vunpack.c.l.b16 %v5873
  %v6260 = vunpack.c.l.b16 %v5874
  %v6261 = vunpack.c.l.b16 %v5875
  %v6262 = vunpack.c.l.b16 %v5876
  %v6263 = vunpack.c.l.b16 %v5877
  %v6264 = vunpack.c.l.b16 %v5878
  %v6265 = vunpack.c.l.b16 %v5879
  %v6266 = vunpack.c.l.b16 %v5880
  %v6267 = vunpack.c.l.b16 %v5881
  %v6268 = vunpack.c.l.b16 %v5882
  %v6269 = vunpack.c.l.b16 %v5883
  %v6270 = vunpack.c.l.b16 %v5884
  %v6271 = vunpack.c.l.b16 %v5885
  %v6272 = vunpack.c.l.b16 %v5886
  %v6273 = vunpack.c.l.b16 %v5887
  %v6274 = vunpack.c.l.b16 %v5888
  %v6275 = vunpack.c.l.b16 %v5889
  %v6276 = vunpack.c.l.b16 %v5890
  %v6277 = vunpack.c.l.b16 %v5891
  %v6278 = vunpack.c.l.b16 %v5892
  %v6279 = vunpack.c.l.b16 %v5893
  %v6280 = vunpack.c.l.b16 %v5894
  %v6281 = vunpack.c.l.b16 %v5895
  %v6282 = vunpack.c.l.b16 %v5896
  %v6283 = vunpack.c.l.b16 %v5897
  %v6284 = vunpack.c.l.b16 %v5898
  %v6285 = vunpack.c.l.b16 %v5899
  %v6286 = vpack.c.b16 %v6255, %v6254
  %v6287 = vpack.c.b16 %v6257, %v6256
  %v6288 = vpack.c.b16 %v6259, %v6258
  %v6289 = vpack.c.b16 %v6261, %v6260
  %v6290 = vpack.c.b16 %v6263, %v6262
  %v6291 = vpack.c.b16 %v6265, %v6264
  %v6292 = vpack.c.b16 %v6267, %v6266
  %v6293 = vpack.c.b16 %v6269, %v6268
  %v6294 = vpack.c.b16 %v6271, %v6270
  %v6295 = vpack.c.b16 %v6273, %v6272
  %v6296 = vpack.c.b16 %v6275, %v6274
  %v6297 = vpack.c.b16 %v6277, %v6276
  %v6298 = vpack.c.b16 %v6279, %v6278
  %v6299 = vpack.c.b16 %v6281, %v6280
  %v6300 = vpack.c.b16 %v6283, %v6282
  %v6301 = vpack.c.b16 %v6285, %v6284
  %6318 = vmatprep.subr.bf16.mxu0 0
  %6319 = vmatpush1.bf16.msra.mxu0 %v6286
  %6320 = vmatprep.subr.bf16.mxu0 0
  %6321 = vmatpush1.bf16.msra.mxu0 %v6287
  %6322 = vmatprep.subr.bf16.mxu0 0
  %6323 = vmatpush1.bf16.msra.mxu0 %v6288
  %6324 = vmatprep.subr.bf16.mxu0 0
  %6325 = vmatpush1.bf16.msra.mxu0 %v6289
  %6326 = vmatprep.subr.bf16.mxu0 0
  %6327 = vmatpush1.bf16.msra.mxu0 %v6290
  %6328 = vmatprep.subr.bf16.mxu0 0
  %6329 = vmatpush1.bf16.msra.mxu0 %v6291
  %6330 = vmatprep.subr.bf16.mxu0 0
  %6331 = vmatpush1.bf16.msra.mxu0 %v6292
  %6332 = vmatprep.subr.bf16.mxu0 0
  %6333 = vmatpush1.bf16.msra.mxu0 %v6293
  %6334 = vmatprep.subr.bf16.mxu0 0
  %6335 = vmatpush1.bf16.msra.mxu0 %v6294
  %6336 = vmatprep.subr.bf16.mxu0 0
  %6337 = vmatpush1.bf16.msra.mxu0 %v6295
  %6338 = vmatprep.subr.bf16.mxu0 0
  %6339 = vmatpush1.bf16.msra.mxu0 %v6296
  %6340 = vmatprep.subr.bf16.mxu0 0
  %6341 = vmatpush1.bf16.msra.mxu0 %v6297
  %6342 = vmatprep.subr.bf16.mxu0 0
  %6343 = vmatpush1.bf16.msra.mxu0 %v6298
  %6344 = vmatprep.subr.bf16.mxu0 0
  %6345 = vmatpush1.bf16.msra.mxu0 %v6299
  %6346 = vmatprep.subr.bf16.mxu0 0
  %6347 = vmatpush1.bf16.msra.mxu0 %v6300
  %6348 = vmatprep.subr.bf16.mxu0 0
  %6349 = vmatpush1.bf16.msra.mxu0 %v6301
  %6350 = vmatprep.mubr.bf16.mxu0 %v5739
  %6351 = vmatmul.mubr.bf16.gmra.mrb[0].mxu0 %v5738
  %v6352 = vpop.f32.mrb[0].mxu0
  %v6353 = vadd.f32 0.0, %v6352
  %v6354 = vpop.f32.mrb[0].mxu0
  %v6355 = vpop.f32.mrb[0].mxu0
  %v6356 = vadd.f32 0.0, %v6355
  %v6357 = vpop.f32.mrb[0].mxu0
  %6358 = vmatprep.mubr.bf16.mxu0 %v5741
  %6359 = vmatmul.mubr.bf16.gmra.mrb[0].mxu0 %v5740
  %v6360 = vpop.f32.mrb[0].mxu0
  %v6361 = vadd.f32 0.0, %v6360
  %v6362 = vpop.f32.mrb[0].mxu0
  %v6363 = vpop.f32.mrb[0].mxu0
  %v6364 = vadd.f32 0.0, %v6363
  %v6365 = vpop.f32.mrb[0].mxu0
  %6366 = vmatprep.mubr.bf16.mxu0 %v5743
  %6367 = vmatmul.mubr.bf16.gmra.mrb[0].mxu0 %v5742
  %v6368 = vpop.f32.mrb[0].mxu0
  %v6369 = vadd.f32 0.0, %v6368
  %v6370 = vpop.f32.mrb[0].mxu0
  %v6371 = vpop.f32.mrb[0].mxu0
  %v6372 = vadd.f32 0.0, %v6371
  %v6373 = vpop.f32.mrb[0].mxu0
  %6374 = vmatprep.mubr.bf16.mxu0 %v5745
  %6375 = vmatmul.mubr.bf16.gmra.mrb[0].mxu0 %v5744
  %v6376 = vpop.f32.mrb[0].mxu0
  %v6377 = vadd.f32 0.0, %v6376
  %v6378 = vpop.f32.mrb[0].mxu0
  %v6379 = vpop.f32.mrb[0].mxu0
  %v6380 = vadd.f32 0.0, %v6379
  %v6381 = vpop.f32.mrb[0].mxu0
  %6382 = vmatprep.mubr.bf16.mxu0 %v5747
  %6383 = vmatmul.mubr.bf16.gmra.mrb[0].mxu0 %v5746
  %v6384 = vpop.f32.mrb[0].mxu0
  %v6385 = vadd.f32 0.0, %v6384
  %v6386 = vpop.f32.mrb[0].mxu0
  %v6387 = vpop.f32.mrb[0].mxu0
  %v6388 = vadd.f32 0.0, %v6387
  %v6389 = vpop.f32.mrb[0].mxu0
  %6390 = vmatprep.mubr.bf16.mxu0 %v5749
  %6391 = vmatmul.mubr.bf16.gmra.mrb[0].mxu0 %v5748
  %v6392 = vpop.f32.mrb[0].mxu0
  %v6393 = vadd.f32 0.0, %v6392
  %v6394 = vpop.f32.mrb[0].mxu0
  %v6395 = vpop.f32.mrb[0].mxu0
  %v6396 = vadd.f32 0.0, %v6395
  %v6397 = vpop.f32.mrb[0].mxu0
  %6398 = vmatprep.mubr.bf16.mxu0 %v5751
  %6399 = vmatmul.mubr.bf16.gmra.mrb[0].mxu0 %v5750
  %v6400 = vpop.f32.mrb[0].mxu0
  %v6401 = vadd.f32 0.0, %v6400
  %v6402 = vpop.f32.mrb[0].mxu0
  %v6403 = vpop.f32.mrb[0].mxu0
  %v6404 = vadd.f32 0.0, %v6403
  %v6405 = vpop.f32.mrb[0].mxu0
  %6406 = vmatprep.mubr.bf16.mxu0 %v5753
  %6407 = vmatmul.mubr.bf16.gmra.mrb[0].mxu0 %v5752
  %v6408 = vpop.f32.mrb[0].mxu0
  %v6409 = vadd.f32 0.0, %v6408
  %v6410 = vpop.f32.mrb[0].mxu0
  %v6411 = vpop.f32.mrb[0].mxu0
  %v6412 = vadd.f32 0.0, %v6411
  %v6413 = vpop.f32.mrb[0].mxu0
  %6414 = vdwg.mxu0
  %v6415 = vadd.f32 %v6206, %v6353
  %v6416 = vadd.f32 %v6207, %v6356
  %v6417 = vadd.f32 %v6208, %v6361
  %v6418 = vadd.f32 %v6209, %v6364
  %v6419 = vadd.f32 %v6210, %v6369
  %v6420 = vadd.f32 %v6211, %v6372
  %v6421 = vadd.f32 %v6212, %v6377
  %v6422 = vadd.f32 %v6213, %v6380
  %v6423 = vadd.f32 %v6214, %v6385
  %v6424 = vadd.f32 %v6215, %v6388
  %v6425 = vadd.f32 %v6216, %v6393
  %v6426 = vadd.f32 %v6217, %v6396
  %v6427 = vadd.f32 %v6218, %v6401
  %v6428 = vadd.f32 %v6219, %v6404
  %v6429 = vadd.f32 %v6220, %v6409
  %v6430 = vadd.f32 %v6221, %v6412
  %v6431 = vld [vmem:[%s5705] sm:$0xfe]
  %v6432 = vld [vmem:[%s5705 + $0x8] sm:$0xfe]
  %v6433 = vld [vmem:[%s5705 + $0x10] sm:$0x1]
  %v6434 = vld [vmem:[%s5705 + $0x18] sm:$0x1]
  %v6435 = vld [vmem:[%s5705 + $0x20] sm:$0xfe]
  %v6436 = vld [vmem:[%s5705 + $0x28] sm:$0xfe]
  %v6437 = vld [vmem:[%s5705 + $0x30] sm:$0x1]
  %v6438 = vld [vmem:[%s5705 + $0x38] sm:$0x1]
  %v6439 = vld [vmem:[%s5705 + $0x40] sm:$0xfe]
  %v6440 = vld [vmem:[%s5705 + $0x48] sm:$0xfe]
  %v6441 = vld [vmem:[%s5705 + $0x50] sm:$0x1]
  %v6442 = vld [vmem:[%s5705 + $0x58] sm:$0x1]
  %v6443 = vld [vmem:[%s5705 + $0x60] sm:$0xfe]
  %v6444 = vld [vmem:[%s5705 + $0x68] sm:$0xfe]
  %v6445 = vld [vmem:[%s5705 + $0x70] sm:$0x1]
  %v6446 = vld [vmem:[%s5705 + $0x78] sm:$0x1]
  %v6447 = vld [vmem:[%s5705 + $0x80] sm:$0xfe]
  %v6448 = vld [vmem:[%s5705 + $0x88] sm:$0xfe]
  %v6449 = vld [vmem:[%s5705 + $0x90] sm:$0x1]
  %v6450 = vld [vmem:[%s5705 + $0x98] sm:$0x1]
  %v6451 = vld [vmem:[%s5705 + $0xa0] sm:$0xfe]
  %v6452 = vld [vmem:[%s5705 + $0xa8] sm:$0xfe]
  %v6453 = vld [vmem:[%s5705 + $0xb0] sm:$0x1]
  %v6454 = vld [vmem:[%s5705 + $0xb8] sm:$0x1]
  %v6455 = vld [vmem:[%s5705 + $0xc0] sm:$0xfe]
  %v6456 = vld [vmem:[%s5705 + $0xc8] sm:$0xfe]
  %v6457 = vld [vmem:[%s5705 + $0xd0] sm:$0x1]
  %v6458 = vld [vmem:[%s5705 + $0xd8] sm:$0x1]
  %v6459 = vld [vmem:[%s5705 + $0xe0] sm:$0xfe]
  %v6460 = vld [vmem:[%s5705 + $0xe8] sm:$0xfe]
  %v6461 = vld [vmem:[%s5705 + $0xf0] sm:$0x1]
  %v6462 = vld [vmem:[%s5705 + $0xf8] sm:$0x1]
  %v6463 = vld [vmem:[%s5705 + $0x140] sm:$0xfe]
  %v6464 = vld [vmem:[%s5705 + $0x148] sm:$0xfe]
  %v6465 = vld [vmem:[%s5705 + $0x150] sm:$0x1]
  %v6466 = vld [vmem:[%s5705 + $0x158] sm:$0x1]
  %v6467 = vld [vmem:[%s5705 + $0x160] sm:$0xfe]
  %v6468 = vld [vmem:[%s5705 + $0x168] sm:$0xfe]
  %v6469 = vld [vmem:[%s5705 + $0x170] sm:$0x1]
  %v6470 = vld [vmem:[%s5705 + $0x178] sm:$0x1]
  %v6471 = vld [vmem:[%s5705 + $0x180] sm:$0xfe]
  %v6472 = vld [vmem:[%s5705 + $0x188] sm:$0xfe]
  %v6473 = vld [vmem:[%s5705 + $0x190] sm:$0x1]
  %v6474 = vld [vmem:[%s5705 + $0x198] sm:$0x1]
  %v6475 = vld [vmem:[%s5705 + $0x1a0] sm:$0xfe]
  %v6476 = vld [vmem:[%s5705 + $0x1a8] sm:$0xfe]
  %v6477 = vld [vmem:[%s5705 + $0x1b0] sm:$0x1]
  %v6478 = vld [vmem:[%s5705 + $0x1b8] sm:$0x1]
  %v6479 = vld [vmem:[%s5705 + $0x1c0] sm:$0xfe]
  %v6480 = vld [vmem:[%s5705 + $0x1c8] sm:$0xfe]
  %v6481 = vld [vmem:[%s5705 + $0x1d0] sm:$0x1]
  %v6482 = vld [vmem:[%s5705 + $0x1d8] sm:$0x1]
  %v6483 = vld [vmem:[%s5705 + $0x1e0] sm:$0xfe]
  %v6484 = vld [vmem:[%s5705 + $0x1e8] sm:$0xfe]
  %v6485 = vld [vmem:[%s5705 + $0x1f0] sm:$0x1]
  %v6486 = vld [vmem:[%s5705 + $0x1f8] sm:$0x1]
  %v6487 = vld [vmem:[%s5705 + $0x200] sm:$0xfe]
  %v6488 = vld [vmem:[%s5705 + $0x208] sm:$0xfe]
  %v6489 = vld [vmem:[%s5705 + $0x210] sm:$0x1]
  %v6490 = vld [vmem:[%s5705 + $0x218] sm:$0x1]
  %v6491 = vld [vmem:[%s5705 + $0x220] sm:$0xfe]
  %v6492 = vld [vmem:[%s5705 + $0x228] sm:$0xfe]
  %v6493 = vld [vmem:[%s5705 + $0x230] sm:$0x1]
  %v6494 = vld [vmem:[%s5705 + $0x238] sm:$0x1]
  %v6559 = vrot.slane %v6431, 1
  %v6560 = vrot.slane %v6433, 1
  %v6561 = vsel %vm1310, %v6559, %v6560
  %v6562 = vrot.slane %v6432, 1
  %v6563 = vrot.slane %v6434, 1
  %v6564 = vsel %vm1310, %v6562, %v6563
  %v6565 = vrot.slane %v6435, 1
  %v6566 = vrot.slane %v6437, 1
  %v6567 = vsel %vm1310, %v6565, %v6566
  %v6568 = vrot.slane %v6436, 1
  %v6569 = vrot.slane %v6438, 1
  %v6570 = vsel %vm1310, %v6568, %v6569
  %v6571 = vrot.slane %v6439, 1
  %v6572 = vrot.slane %v6441, 1
  %v6573 = vsel %vm1310, %v6571, %v6572
  %v6574 = vrot.slane %v6440, 1
  %v6575 = vrot.slane %v6442, 1
  %v6576 = vsel %vm1310, %v6574, %v6575
  %v6577 = vrot.slane %v6443, 1
  %v6578 = vrot.slane %v6445, 1
  %v6579 = vsel %vm1310, %v6577, %v6578
  %v6580 = vrot.slane %v6444, 1
  %v6581 = vrot.slane %v6446, 1
  %v6582 = vsel %vm1310, %v6580, %v6581
  %v6583 = vrot.slane %v6447, 1
  %v6584 = vrot.slane %v6449, 1
  %v6585 = vsel %vm1310, %v6583, %v6584
  %v6586 = vrot.slane %v6448, 1
  %v6587 = vrot.slane %v6450, 1
  %v6588 = vsel %vm1310, %v6586, %v6587
  %v6589 = vrot.slane %v6451, 1
  %v6590 = vrot.slane %v6453, 1
  %v6591 = vsel %vm1310, %v6589, %v6590
  %v6592 = vrot.slane %v6452, 1
  %v6593 = vrot.slane %v6454, 1
  %v6594 = vsel %vm1310, %v6592, %v6593
  %v6595 = vrot.slane %v6455, 1
  %v6596 = vrot.slane %v6457, 1
  %v6597 = vsel %vm1310, %v6595, %v6596
  %v6598 = vrot.slane %v6456, 1
  %v6599 = vrot.slane %v6458, 1
  %v6600 = vsel %vm1310, %v6598, %v6599
  %v6601 = vrot.slane %v6459, 1
  %v6602 = vrot.slane %v6461, 1
  %v6603 = vsel %vm1310, %v6601, %v6602
  %v6604 = vrot.slane %v6460, 1
  %v6605 = vrot.slane %v6462, 1
  %v6606 = vsel %vm1310, %v6604, %v6605
  %v6607 = vrot.slane %v6463, 1
  %v6608 = vrot.slane %v6465, 1
  %v6609 = vsel %vm1310, %v6607, %v6608
  %v6610 = vrot.slane %v6464, 1
  %v6611 = vrot.slane %v6466, 1
  %v6612 = vsel %vm1310, %v6610, %v6611
  %v6613 = vrot.slane %v6467, 1
  %v6614 = vrot.slane %v6469, 1
  %v6615 = vsel %vm1310, %v6613, %v6614
  %v6616 = vrot.slane %v6468, 1
  %v6617 = vrot.slane %v6470, 1
  %v6618 = vsel %vm1310, %v6616, %v6617
  %v6619 = vrot.slane %v6471, 1
  %v6620 = vrot.slane %v6473, 1
  %v6621 = vsel %vm1310, %v6619, %v6620
  %v6622 = vrot.slane %v6472, 1
  %v6623 = vrot.slane %v6474, 1
  %v6624 = vsel %vm1310, %v6622, %v6623
  %v6625 = vrot.slane %v6475, 1
  %v6626 = vrot.slane %v6477, 1
  %v6627 = vsel %vm1310, %v6625, %v6626
  %v6628 = vrot.slane %v6476, 1
  %v6629 = vrot.slane %v6478, 1
  %v6630 = vsel %vm1310, %v6628, %v6629
  %v6631 = vrot.slane %v6479, 1
  %v6632 = vrot.slane %v6481, 1
  %v6633 = vsel %vm1310, %v6631, %v6632
  %v6634 = vrot.slane %v6480, 1
  %v6635 = vrot.slane %v6482, 1
  %v6636 = vsel %vm1310, %v6634, %v6635
  %v6637 = vrot.slane %v6483, 1
  %v6638 = vrot.slane %v6485, 1
  %v6639 = vsel %vm1310, %v6637, %v6638
  %v6640 = vrot.slane %v6484, 1
  %v6641 = vrot.slane %v6486, 1
  %v6642 = vsel %vm1310, %v6640, %v6641
  %v6643 = vrot.slane %v6487, 1
  %v6644 = vrot.slane %v6489, 1
  %v6645 = vsel %vm1310, %v6643, %v6644
  %v6646 = vrot.slane %v6488, 1
  %v6647 = vrot.slane %v6490, 1
  %v6648 = vsel %vm1310, %v6646, %v6647
  %v6649 = vrot.slane %v6491, 1
  %v6650 = vrot.slane %v6493, 1
  %v6651 = vsel %vm1310, %v6649, %v6650
  %v6652 = vrot.slane %v6492, 1
  %v6653 = vrot.slane %v6494, 1
  %v6654 = vsel %vm1310, %v6652, %v6653
  %v6687 = vpack.c.bf16 %v6567, %v6561
  %v6688 = vpack.c.bf16 %v6570, %v6564
  %v6689 = vpack.c.bf16 %v6579, %v6573
  %v6690 = vpack.c.bf16 %v6582, %v6576
  %v6691 = vpack.c.bf16 %v6591, %v6585
  %v6692 = vpack.c.bf16 %v6594, %v6588
  %v6693 = vpack.c.bf16 %v6603, %v6597
  %v6694 = vpack.c.bf16 %v6606, %v6600
  %v6695 = vpack.c.bf16 %v6615, %v6609
  %v6696 = vpack.c.bf16 %v6618, %v6612
  %v6697 = vpack.c.bf16 %v6627, %v6621
  %v6698 = vpack.c.bf16 %v6630, %v6624
  %v6699 = vpack.c.bf16 %v6639, %v6633
  %v6700 = vpack.c.bf16 %v6642, %v6636
  %v6701 = vpack.c.bf16 %v6651, %v6645
  %v6702 = vpack.c.bf16 %v6654, %v6648
  %v6703 = vunpack.c.l.bf16 %v6687
  %v6704 = vunpack.c.l.bf16 %v6688
  %v6705 = vunpack.c.h.bf16 %v6687
  %v6706 = vunpack.c.h.bf16 %v6688
  %v6707 = vunpack.c.l.bf16 %v6689
  %v6708 = vunpack.c.l.bf16 %v6690
  %v6709 = vunpack.c.h.bf16 %v6689
  %v6710 = vunpack.c.h.bf16 %v6690
  %v6711 = vunpack.c.l.bf16 %v6691
  %v6712 = vunpack.c.l.bf16 %v6692
  %v6713 = vunpack.c.h.bf16 %v6691
  %v6714 = vunpack.c.h.bf16 %v6692
  %v6715 = vunpack.c.l.bf16 %v6693
  %v6716 = vunpack.c.l.bf16 %v6694
  %v6717 = vunpack.c.h.bf16 %v6693
  %v6718 = vunpack.c.h.bf16 %v6694
  %v6719 = vunpack.c.l.bf16 %v6695
  %v6720 = vunpack.c.l.bf16 %v6696
  %v6721 = vunpack.c.h.bf16 %v6695
  %v6722 = vunpack.c.h.bf16 %v6696
  %v6723 = vunpack.c.l.bf16 %v6697
  %v6724 = vunpack.c.l.bf16 %v6698
  %v6725 = vunpack.c.h.bf16 %v6697
  %v6726 = vunpack.c.h.bf16 %v6698
  %v6727 = vunpack.c.l.bf16 %v6699
  %v6728 = vunpack.c.l.bf16 %v6700
  %v6729 = vunpack.c.h.bf16 %v6699
  %v6730 = vunpack.c.h.bf16 %v6700
  %v6731 = vunpack.c.l.bf16 %v6701
  %v6732 = vunpack.c.l.bf16 %v6702
  %v6733 = vunpack.c.h.bf16 %v6701
  %v6734 = vunpack.c.h.bf16 %v6702
  %v6735 = vsub.f32 %v6561, %v6703
  %v6736 = vsub.f32 %v6564, %v6704
  %v6737 = vsub.f32 %v6567, %v6705
  %v6738 = vsub.f32 %v6570, %v6706
  %v6739 = vsub.f32 %v6573, %v6707
  %v6740 = vsub.f32 %v6576, %v6708
  %v6741 = vsub.f32 %v6579, %v6709
  %v6742 = vsub.f32 %v6582, %v6710
  %v6743 = vsub.f32 %v6585, %v6711
  %v6744 = vsub.f32 %v6588, %v6712
  %v6745 = vsub.f32 %v6591, %v6713
  %v6746 = vsub.f32 %v6594, %v6714
  %v6747 = vsub.f32 %v6597, %v6715
  %v6748 = vsub.f32 %v6600, %v6716
  %v6749 = vsub.f32 %v6603, %v6717
  %v6750 = vsub.f32 %v6606, %v6718
  %v6751 = vsub.f32 %v6609, %v6719
  %v6752 = vsub.f32 %v6612, %v6720
  %v6753 = vsub.f32 %v6615, %v6721
  %v6754 = vsub.f32 %v6618, %v6722
  %v6755 = vsub.f32 %v6621, %v6723
  %v6756 = vsub.f32 %v6624, %v6724
  %v6757 = vsub.f32 %v6627, %v6725
  %v6758 = vsub.f32 %v6630, %v6726
  %v6759 = vsub.f32 %v6633, %v6727
  %v6760 = vsub.f32 %v6636, %v6728
  %v6761 = vsub.f32 %v6639, %v6729
  %v6762 = vsub.f32 %v6642, %v6730
  %v6763 = vsub.f32 %v6645, %v6731
  %v6764 = vsub.f32 %v6648, %v6732
  %v6765 = vsub.f32 %v6651, %v6733
  %v6766 = vsub.f32 %v6654, %v6734
  %v6767 = vpack.c.bf16 %v6737, %v6735
  %v6768 = vpack.c.bf16 %v6738, %v6736
  %v6769 = vpack.c.bf16 %v6741, %v6739
  %v6770 = vpack.c.bf16 %v6742, %v6740
  %v6771 = vpack.c.bf16 %v6745, %v6743
  %v6772 = vpack.c.bf16 %v6746, %v6744
  %v6773 = vpack.c.bf16 %v6749, %v6747
  %v6774 = vpack.c.bf16 %v6750, %v6748
  %v6775 = vpack.c.bf16 %v6753, %v6751
  %v6776 = vpack.c.bf16 %v6754, %v6752
  %v6777 = vpack.c.bf16 %v6757, %v6755
  %v6778 = vpack.c.bf16 %v6758, %v6756
  %v6779 = vpack.c.bf16 %v6761, %v6759
  %v6780 = vpack.c.bf16 %v6762, %v6760
  %v6781 = vpack.c.bf16 %v6765, %v6763
  %v6782 = vpack.c.bf16 %v6766, %v6764
  %s6783 = scalar_lea.vmem %s1, 896
  %v6784 = vld [vmem:[%s6783] sm:$0xf]
  %v6785 = vld [vmem:[%s6783 + $0x4] sm:$0xf]
  %v6786 = vld [vmem:[%s6783 + $0x8] sm:$0xf]
  %v6787 = vld [vmem:[%s6783 + $0xc] sm:$0xf]
  %v6788 = vld [vmem:[%s6783 + $0x10] sm:$0xf]
  %v6789 = vld [vmem:[%s6783 + $0x14] sm:$0xf]
  %v6790 = vld [vmem:[%s6783 + $0x18] sm:$0xf]
  %v6791 = vld [vmem:[%s6783 + $0x1c] sm:$0xf]
  %v6792 = vld [vmem:[%s6783 + $0x20] sm:$0xf]
  %v6793 = vld [vmem:[%s6783 + $0x24] sm:$0xf]
  %v6794 = vld [vmem:[%s6783 + $0x28] sm:$0xf]
  %v6795 = vld [vmem:[%s6783 + $0x2c] sm:$0xf]
  %v6796 = vld [vmem:[%s6783 + $0x30] sm:$0xf]
  %v6797 = vld [vmem:[%s6783 + $0x34] sm:$0xf]
  %v6798 = vld [vmem:[%s6783 + $0x38] sm:$0xf]
  %v6799 = vld [vmem:[%s6783 + $0x3c] sm:$0xf]
  %v6800 = vld [vmem:[%s6783 + $0x40] sm:$0xf]
  %v6801 = vld [vmem:[%s6783 + $0x44] sm:$0xf]
  %v6802 = vld [vmem:[%s6783 + $0x48] sm:$0xf]
  %v6803 = vld [vmem:[%s6783 + $0x4c] sm:$0xf]
  %v6804 = vld [vmem:[%s6783 + $0x50] sm:$0xf]
  %v6805 = vld [vmem:[%s6783 + $0x54] sm:$0xf]
  %v6806 = vld [vmem:[%s6783 + $0x58] sm:$0xf]
  %v6807 = vld [vmem:[%s6783 + $0x5c] sm:$0xf]
  %v6808 = vld [vmem:[%s6783 + $0x60] sm:$0xf]
  %v6809 = vld [vmem:[%s6783 + $0x64] sm:$0xf]
  %v6810 = vld [vmem:[%s6783 + $0x68] sm:$0xf]
  %v6811 = vld [vmem:[%s6783 + $0x6c] sm:$0xf]
  %v6812 = vld [vmem:[%s6783 + $0x70] sm:$0xf]
  %v6813 = vld [vmem:[%s6783 + $0x74] sm:$0xf]
  %v6814 = vld [vmem:[%s6783 + $0x78] sm:$0xf]
  %v6815 = vld [vmem:[%s6783 + $0x7c] sm:$0xf]
  %s6816 = scalar_lea.vmem %s2, 896
  %v6817 = vld [vmem:[%s6816] sm:$0xf]
  %v6818 = vld [vmem:[%s6816 + $0x4] sm:$0xf]
  %v6819 = vld [vmem:[%s6816 + $0x8] sm:$0xf]
  %v6820 = vld [vmem:[%s6816 + $0xc] sm:$0xf]
  %v6821 = vld [vmem:[%s6816 + $0x10] sm:$0xf]
  %v6822 = vld [vmem:[%s6816 + $0x14] sm:$0xf]
  %v6823 = vld [vmem:[%s6816 + $0x18] sm:$0xf]
  %v6824 = vld [vmem:[%s6816 + $0x1c] sm:$0xf]
  %v6825 = vld [vmem:[%s6816 + $0x20] sm:$0xf]
  %v6826 = vld [vmem:[%s6816 + $0x24] sm:$0xf]
  %v6827 = vld [vmem:[%s6816 + $0x28] sm:$0xf]
  %v6828 = vld [vmem:[%s6816 + $0x2c] sm:$0xf]
  %v6829 = vld [vmem:[%s6816 + $0x30] sm:$0xf]
  %v6830 = vld [vmem:[%s6816 + $0x34] sm:$0xf]
  %v6831 = vld [vmem:[%s6816 + $0x38] sm:$0xf]
  %v6832 = vld [vmem:[%s6816 + $0x3c] sm:$0xf]
  %v6833 = vld [vmem:[%s6816 + $0x40] sm:$0xf]
  %v6834 = vld [vmem:[%s6816 + $0x44] sm:$0xf]
  %v6835 = vld [vmem:[%s6816 + $0x48] sm:$0xf]
  %v6836 = vld [vmem:[%s6816 + $0x4c] sm:$0xf]
  %v6837 = vld [vmem:[%s6816 + $0x50] sm:$0xf]
  %v6838 = vld [vmem:[%s6816 + $0x54] sm:$0xf]
  %v6839 = vld [vmem:[%s6816 + $0x58] sm:$0xf]
  %v6840 = vld [vmem:[%s6816 + $0x5c] sm:$0xf]
  %v6841 = vld [vmem:[%s6816 + $0x60] sm:$0xf]
  %v6842 = vld [vmem:[%s6816 + $0x64] sm:$0xf]
  %v6843 = vld [vmem:[%s6816 + $0x68] sm:$0xf]
  %v6844 = vld [vmem:[%s6816 + $0x6c] sm:$0xf]
  %v6845 = vld [vmem:[%s6816 + $0x70] sm:$0xf]
  %v6846 = vld [vmem:[%s6816 + $0x74] sm:$0xf]
  %v6847 = vld [vmem:[%s6816 + $0x78] sm:$0xf]
  %v6848 = vld [vmem:[%s6816 + $0x7c] sm:$0xf]
  %v6881 = vunpack.c.l.b16 %v6784
  %v6882 = vunpack.c.l.b16 %v6785
  %v6883 = vunpack.c.l.b16 %v6786
  %v6884 = vunpack.c.l.b16 %v6787
  %v6885 = vunpack.c.l.b16 %v6788
  %v6886 = vunpack.c.l.b16 %v6789
  %v6887 = vunpack.c.l.b16 %v6790
  %v6888 = vunpack.c.l.b16 %v6791
  %v6889 = vunpack.c.l.b16 %v6792
  %v6890 = vunpack.c.l.b16 %v6793
  %v6891 = vunpack.c.l.b16 %v6794
  %v6892 = vunpack.c.l.b16 %v6795
  %v6893 = vunpack.c.l.b16 %v6796
  %v6894 = vunpack.c.l.b16 %v6797
  %v6895 = vunpack.c.l.b16 %v6798
  %v6896 = vunpack.c.l.b16 %v6799
  %v6897 = vunpack.c.l.b16 %v6800
  %v6898 = vunpack.c.l.b16 %v6801
  %v6899 = vunpack.c.l.b16 %v6802
  %v6900 = vunpack.c.l.b16 %v6803
  %v6901 = vunpack.c.l.b16 %v6804
  %v6902 = vunpack.c.l.b16 %v6805
  %v6903 = vunpack.c.l.b16 %v6806
  %v6904 = vunpack.c.l.b16 %v6807
  %v6905 = vunpack.c.l.b16 %v6808
  %v6906 = vunpack.c.l.b16 %v6809
  %v6907 = vunpack.c.l.b16 %v6810
  %v6908 = vunpack.c.l.b16 %v6811
  %v6909 = vunpack.c.l.b16 %v6812
  %v6910 = vunpack.c.l.b16 %v6813
  %v6911 = vunpack.c.l.b16 %v6814
  %v6912 = vunpack.c.l.b16 %v6815
  %v6913 = vpack.c.b16 %v6882, %v6881
  %v6914 = vpack.c.b16 %v6884, %v6883
  %v6915 = vpack.c.b16 %v6886, %v6885
  %v6916 = vpack.c.b16 %v6888, %v6887
  %v6917 = vpack.c.b16 %v6890, %v6889
  %v6918 = vpack.c.b16 %v6892, %v6891
  %v6919 = vpack.c.b16 %v6894, %v6893
  %v6920 = vpack.c.b16 %v6896, %v6895
  %v6921 = vpack.c.b16 %v6898, %v6897
  %v6922 = vpack.c.b16 %v6900, %v6899
  %v6923 = vpack.c.b16 %v6902, %v6901
  %v6924 = vpack.c.b16 %v6904, %v6903
  %v6925 = vpack.c.b16 %v6906, %v6905
  %v6926 = vpack.c.b16 %v6908, %v6907
  %v6927 = vpack.c.b16 %v6910, %v6909
  %v6928 = vpack.c.b16 %v6912, %v6911
  %6945 = vmatprep.subr.bf16.mxu0 0
  %6946 = vmatpush1.bf16.msra.mxu0 %v6913
  %6947 = vmatprep.subr.bf16.mxu0 0
  %6948 = vmatpush1.bf16.msra.mxu0 %v6914
  %6949 = vmatprep.subr.bf16.mxu0 0
  %6950 = vmatpush1.bf16.msra.mxu0 %v6915
  %6951 = vmatprep.subr.bf16.mxu0 0
  %6952 = vmatpush1.bf16.msra.mxu0 %v6916
  %6953 = vmatprep.subr.bf16.mxu0 0
  %6954 = vmatpush1.bf16.msra.mxu0 %v6917
  %6955 = vmatprep.subr.bf16.mxu0 0
  %6956 = vmatpush1.bf16.msra.mxu0 %v6918
  %6957 = vmatprep.subr.bf16.mxu0 0
  %6958 = vmatpush1.bf16.msra.mxu0 %v6919
  %6959 = vmatprep.subr.bf16.mxu0 0
  %6960 = vmatpush1.bf16.msra.mxu0 %v6920
  %6961 = vmatprep.subr.bf16.mxu0 0
  %6962 = vmatpush1.bf16.msra.mxu0 %v6921
  %6963 = vmatprep.subr.bf16.mxu0 0
  %6964 = vmatpush1.bf16.msra.mxu0 %v6922
  %6965 = vmatprep.subr.bf16.mxu0 0
  %6966 = vmatpush1.bf16.msra.mxu0 %v6923
  %6967 = vmatprep.subr.bf16.mxu0 0
  %6968 = vmatpush1.bf16.msra.mxu0 %v6924
  %6969 = vmatprep.subr.bf16.mxu0 0
  %6970 = vmatpush1.bf16.msra.mxu0 %v6925
  %6971 = vmatprep.subr.bf16.mxu0 0
  %6972 = vmatpush1.bf16.msra.mxu0 %v6926
  %6973 = vmatprep.subr.bf16.mxu0 0
  %6974 = vmatpush1.bf16.msra.mxu0 %v6927
  %6975 = vmatprep.subr.bf16.mxu0 0
  %6976 = vmatpush1.bf16.msra.mxu0 %v6928
  %6977 = vmatprep.mubr.bf16.mxu0 %v6688
  %6978 = vmatmul.mubr.bf16.gmra.mrb[0].mxu0 %v6687
  %v6979 = vpop.f32.mrb[0].mxu0
  %v6980 = vadd.f32 0.0, %v6979
  %v6981 = vpop.f32.mrb[0].mxu0
  %v6982 = vpop.f32.mrb[0].mxu0
  %v6983 = vadd.f32 0.0, %v6982
  %v6984 = vpop.f32.mrb[0].mxu0
  %6985 = vmatprep.mubr.bf16.mxu0 %v6690
  %6986 = vmatmul.mubr.bf16.gmra.mrb[0].mxu0 %v6689
  %v6987 = vpop.f32.mrb[0].mxu0
  %v6988 = vadd.f32 0.0, %v6987
  %v6989 = vpop.f32.mrb[0].mxu0
  %v6990 = vpop.f32.mrb[0].mxu0
  %v6991 = vadd.f32 0.0, %v6990
  %v6992 = vpop.f32.mrb[0].mxu0
  %6993 = vmatprep.mubr.bf16.mxu0 %v6692
  %6994 = vmatmul.mubr.bf16.gmra.mrb[0].mxu0 %v6691
  %v6995 = vpop.f32.mrb[0].mxu0
  %v6996 = vadd.f32 0.0, %v6995
  %v6997 = vpop.f32.mrb[0].mxu0
  %v6998 = vpop.f32.mrb[0].mxu0
  %v6999 = vadd.f32 0.0, %v6998
  %v7000 = vpop.f32.mrb[0].mxu0
  %7001 = vmatprep.mubr.bf16.mxu0 %v6694
  %7002 = vmatmul.mubr.bf16.gmra.mrb[0].mxu0 %v6693
  %v7003 = vpop.f32.mrb[0].mxu0
  %v7004 = vadd.f32 0.0, %v7003
  %v7005 = vpop.f32.mrb[0].mxu0
  %v7006 = vpop.f32.mrb[0].mxu0
  %v7007 = vadd.f32 0.0, %v7006
  %v7008 = vpop.f32.mrb[0].mxu0
  %7009 = vmatprep.mubr.bf16.mxu0 %v6696
  %7010 = vmatmul.mubr.bf16.gmra.mrb[0].mxu0 %v6695
  %v7011 = vpop.f32.mrb[0].mxu0
  %v7012 = vadd.f32 0.0, %v7011
  %v7013 = vpop.f32.mrb[0].mxu0
  %v7014 = vpop.f32.mrb[0].mxu0
  %v7015 = vadd.f32 0.0, %v7014
  %v7016 = vpop.f32.mrb[0].mxu0
  %7017 = vmatprep.mubr.bf16.mxu0 %v6698
  %7018 = vmatmul.mubr.bf16.gmra.mrb[0].mxu0 %v6697
  %v7019 = vpop.f32.mrb[0].mxu0
  %v7020 = vadd.f32 0.0, %v7019
  %v7021 = vpop.f32.mrb[0].mxu0
  %v7022 = vpop.f32.mrb[0].mxu0
  %v7023 = vadd.f32 0.0, %v7022
  %v7024 = vpop.f32.mrb[0].mxu0
  %7025 = vmatprep.mubr.bf16.mxu0 %v6700
  %7026 = vmatmul.mubr.bf16.gmra.mrb[0].mxu0 %v6699
  %v7027 = vpop.f32.mrb[0].mxu0
  %v7028 = vadd.f32 0.0, %v7027
  %v7029 = vpop.f32.mrb[0].mxu0
  %v7030 = vpop.f32.mrb[0].mxu0
  %v7031 = vadd.f32 0.0, %v7030
  %v7032 = vpop.f32.mrb[0].mxu0
  %7033 = vmatprep.mubr.bf16.mxu0 %v6702
  %7034 = vmatmul.mubr.bf16.gmra.mrb[0].mxu0 %v6701
  %v7035 = vpop.f32.mrb[0].mxu0
  %v7036 = vadd.f32 0.0, %v7035
  %v7037 = vpop.f32.mrb[0].mxu0
  %v7038 = vpop.f32.mrb[0].mxu0
  %v7039 = vadd.f32 0.0, %v7038
  %v7040 = vpop.f32.mrb[0].mxu0
  %7041 = vdwg.mxu0
  %v7042 = vadd.f32 %v6415, %v6980
  %v7043 = vadd.f32 %v6416, %v6983
  %v7044 = vadd.f32 %v6417, %v6988
  %v7045 = vadd.f32 %v6418, %v6991
  %v7046 = vadd.f32 %v6419, %v6996
  %v7047 = vadd.f32 %v6420, %v6999
  %v7048 = vadd.f32 %v6421, %v7004
  %v7049 = vadd.f32 %v6422, %v7007
  %v7050 = vadd.f32 %v6423, %v7012
  %v7051 = vadd.f32 %v6424, %v7015
  %v7052 = vadd.f32 %v6425, %v7020
  %v7053 = vadd.f32 %v6426, %v7023
  %v7054 = vadd.f32 %v6427, %v7028
  %v7055 = vadd.f32 %v6428, %v7031
  %v7056 = vadd.f32 %v6429, %v7036
  %v7057 = vadd.f32 %v6430, %v7039
  %7058 = vmatprep.subr.bf16.mxu0 0
  %7059 = vmatpush1.bf16.msra.mxu0 %v6913
  %7060 = vmatprep.subr.bf16.mxu0 0
  %7061 = vmatpush1.bf16.msra.mxu0 %v6914
  %7062 = vmatprep.subr.bf16.mxu0 0
  %7063 = vmatpush1.bf16.msra.mxu0 %v6915
  %7064 = vmatprep.subr.bf16.mxu0 0
  %7065 = vmatpush1.bf16.msra.mxu0 %v6916
  %7066 = vmatprep.subr.bf16.mxu0 0
  %7067 = vmatpush1.bf16.msra.mxu0 %v6917
  %7068 = vmatprep.subr.bf16.mxu0 0
  %7069 = vmatpush1.bf16.msra.mxu0 %v6918
  %7070 = vmatprep.subr.bf16.mxu0 0
  %7071 = vmatpush1.bf16.msra.mxu0 %v6919
  %7072 = vmatprep.subr.bf16.mxu0 0
  %7073 = vmatpush1.bf16.msra.mxu0 %v6920
  %7074 = vmatprep.subr.bf16.mxu0 0
  %7075 = vmatpush1.bf16.msra.mxu0 %v6921
  %7076 = vmatprep.subr.bf16.mxu0 0
  %7077 = vmatpush1.bf16.msra.mxu0 %v6922
  %7078 = vmatprep.subr.bf16.mxu0 0
  %7079 = vmatpush1.bf16.msra.mxu0 %v6923
  %7080 = vmatprep.subr.bf16.mxu0 0
  %7081 = vmatpush1.bf16.msra.mxu0 %v6924
  %7082 = vmatprep.subr.bf16.mxu0 0
  %7083 = vmatpush1.bf16.msra.mxu0 %v6925
  %7084 = vmatprep.subr.bf16.mxu0 0
  %7085 = vmatpush1.bf16.msra.mxu0 %v6926
  %7086 = vmatprep.subr.bf16.mxu0 0
  %7087 = vmatpush1.bf16.msra.mxu0 %v6927
  %7088 = vmatprep.subr.bf16.mxu0 0
  %7089 = vmatpush1.bf16.msra.mxu0 %v6928
  %7090 = vmatprep.mubr.bf16.mxu0 %v6768
  %7091 = vmatmul.mubr.bf16.gmra.mrb[0].mxu0 %v6767
  %v7092 = vpop.f32.mrb[0].mxu0
  %v7093 = vadd.f32 0.0, %v7092
  %v7094 = vpop.f32.mrb[0].mxu0
  %v7095 = vpop.f32.mrb[0].mxu0
  %v7096 = vadd.f32 0.0, %v7095
  %v7097 = vpop.f32.mrb[0].mxu0
  %7098 = vmatprep.mubr.bf16.mxu0 %v6770
  %7099 = vmatmul.mubr.bf16.gmra.mrb[0].mxu0 %v6769
  %v7100 = vpop.f32.mrb[0].mxu0
  %v7101 = vadd.f32 0.0, %v7100
  %v7102 = vpop.f32.mrb[0].mxu0
  %v7103 = vpop.f32.mrb[0].mxu0
  %v7104 = vadd.f32 0.0, %v7103
  %v7105 = vpop.f32.mrb[0].mxu0
  %7106 = vmatprep.mubr.bf16.mxu0 %v6772
  %7107 = vmatmul.mubr.bf16.gmra.mrb[0].mxu0 %v6771
  %v7108 = vpop.f32.mrb[0].mxu0
  %v7109 = vadd.f32 0.0, %v7108
  %v7110 = vpop.f32.mrb[0].mxu0
  %v7111 = vpop.f32.mrb[0].mxu0
  %v7112 = vadd.f32 0.0, %v7111
  %v7113 = vpop.f32.mrb[0].mxu0
  %7114 = vmatprep.mubr.bf16.mxu0 %v6774
  %7115 = vmatmul.mubr.bf16.gmra.mrb[0].mxu0 %v6773
  %v7116 = vpop.f32.mrb[0].mxu0
  %v7117 = vadd.f32 0.0, %v7116
  %v7118 = vpop.f32.mrb[0].mxu0
  %v7119 = vpop.f32.mrb[0].mxu0
  %v7120 = vadd.f32 0.0, %v7119
  %v7121 = vpop.f32.mrb[0].mxu0
  %7122 = vmatprep.mubr.bf16.mxu0 %v6776
  %7123 = vmatmul.mubr.bf16.gmra.mrb[0].mxu0 %v6775
  %v7124 = vpop.f32.mrb[0].mxu0
  %v7125 = vadd.f32 0.0, %v7124
  %v7126 = vpop.f32.mrb[0].mxu0
  %v7127 = vpop.f32.mrb[0].mxu0
  %v7128 = vadd.f32 0.0, %v7127
  %v7129 = vpop.f32.mrb[0].mxu0
  %7130 = vmatprep.mubr.bf16.mxu0 %v6778
  %7131 = vmatmul.mubr.bf16.gmra.mrb[0].mxu0 %v6777
  %v7132 = vpop.f32.mrb[0].mxu0
  %v7133 = vadd.f32 0.0, %v7132
  %v7134 = vpop.f32.mrb[0].mxu0
  %v7135 = vpop.f32.mrb[0].mxu0
  %v7136 = vadd.f32 0.0, %v7135
  %v7137 = vpop.f32.mrb[0].mxu0
  %7138 = vmatprep.mubr.bf16.mxu0 %v6780
  %7139 = vmatmul.mubr.bf16.gmra.mrb[0].mxu0 %v6779
  %v7140 = vpop.f32.mrb[0].mxu0
  %v7141 = vadd.f32 0.0, %v7140
  %v7142 = vpop.f32.mrb[0].mxu0
  %v7143 = vpop.f32.mrb[0].mxu0
  %v7144 = vadd.f32 0.0, %v7143
  %v7145 = vpop.f32.mrb[0].mxu0
  %7146 = vmatprep.mubr.bf16.mxu0 %v6782
  %7147 = vmatmul.mubr.bf16.gmra.mrb[0].mxu0 %v6781
  %v7148 = vpop.f32.mrb[0].mxu0
  %v7149 = vadd.f32 0.0, %v7148
  %v7150 = vpop.f32.mrb[0].mxu0
  %v7151 = vpop.f32.mrb[0].mxu0
  %v7152 = vadd.f32 0.0, %v7151
  %v7153 = vpop.f32.mrb[0].mxu0
  %7154 = vdwg.mxu0
  %v7155 = vadd.f32 %v7042, %v7093
  %v7156 = vadd.f32 %v7043, %v7096
  %v7157 = vadd.f32 %v7044, %v7101
  %v7158 = vadd.f32 %v7045, %v7104
  %v7159 = vadd.f32 %v7046, %v7109
  %v7160 = vadd.f32 %v7047, %v7112
  %v7161 = vadd.f32 %v7048, %v7117
  %v7162 = vadd.f32 %v7049, %v7120
  %v7163 = vadd.f32 %v7050, %v7125
  %v7164 = vadd.f32 %v7051, %v7128
  %v7165 = vadd.f32 %v7052, %v7133
  %v7166 = vadd.f32 %v7053, %v7136
  %v7167 = vadd.f32 %v7054, %v7141
  %v7168 = vadd.f32 %v7055, %v7144
  %v7169 = vadd.f32 %v7056, %v7149
  %v7170 = vadd.f32 %v7057, %v7152
  %v7203 = vunpack.c.l.b16 %v6817
  %v7204 = vunpack.c.l.b16 %v6818
  %v7205 = vunpack.c.l.b16 %v6819
  %v7206 = vunpack.c.l.b16 %v6820
  %v7207 = vunpack.c.l.b16 %v6821
  %v7208 = vunpack.c.l.b16 %v6822
  %v7209 = vunpack.c.l.b16 %v6823
  %v7210 = vunpack.c.l.b16 %v6824
  %v7211 = vunpack.c.l.b16 %v6825
  %v7212 = vunpack.c.l.b16 %v6826
  %v7213 = vunpack.c.l.b16 %v6827
  %v7214 = vunpack.c.l.b16 %v6828
  %v7215 = vunpack.c.l.b16 %v6829
  %v7216 = vunpack.c.l.b16 %v6830
  %v7217 = vunpack.c.l.b16 %v6831
  %v7218 = vunpack.c.l.b16 %v6832
  %v7219 = vunpack.c.l.b16 %v6833
  %v7220 = vunpack.c.l.b16 %v6834
  %v7221 = vunpack.c.l.b16 %v6835
  %v7222 = vunpack.c.l.b16 %v6836
  %v7223 = vunpack.c.l.b16 %v6837
  %v7224 = vunpack.c.l.b16 %v6838
  %v7225 = vunpack.c.l.b16 %v6839
  %v7226 = vunpack.c.l.b16 %v6840
  %v7227 = vunpack.c.l.b16 %v6841
  %v7228 = vunpack.c.l.b16 %v6842
  %v7229 = vunpack.c.l.b16 %v6843
  %v7230 = vunpack.c.l.b16 %v6844
  %v7231 = vunpack.c.l.b16 %v6845
  %v7232 = vunpack.c.l.b16 %v6846
  %v7233 = vunpack.c.l.b16 %v6847
  %v7234 = vunpack.c.l.b16 %v6848
  %v7235 = vpack.c.b16 %v7204, %v7203
  %v7236 = vpack.c.b16 %v7206, %v7205
  %v7237 = vpack.c.b16 %v7208, %v7207
  %v7238 = vpack.c.b16 %v7210, %v7209
  %v7239 = vpack.c.b16 %v7212, %v7211
  %v7240 = vpack.c.b16 %v7214, %v7213
  %v7241 = vpack.c.b16 %v7216, %v7215
  %v7242 = vpack.c.b16 %v7218, %v7217
  %v7243 = vpack.c.b16 %v7220, %v7219
  %v7244 = vpack.c.b16 %v7222, %v7221
  %v7245 = vpack.c.b16 %v7224, %v7223
  %v7246 = vpack.c.b16 %v7226, %v7225
  %v7247 = vpack.c.b16 %v7228, %v7227
  %v7248 = vpack.c.b16 %v7230, %v7229
  %v7249 = vpack.c.b16 %v7232, %v7231
  %v7250 = vpack.c.b16 %v7234, %v7233
  %7267 = vmatprep.subr.bf16.mxu0 0
  %7268 = vmatpush1.bf16.msra.mxu0 %v7235
  %7269 = vmatprep.subr.bf16.mxu0 0
  %7270 = vmatpush1.bf16.msra.mxu0 %v7236
  %7271 = vmatprep.subr.bf16.mxu0 0
  %7272 = vmatpush1.bf16.msra.mxu0 %v7237
  %7273 = vmatprep.subr.bf16.mxu0 0
  %7274 = vmatpush1.bf16.msra.mxu0 %v7238
  %7275 = vmatprep.subr.bf16.mxu0 0
  %7276 = vmatpush1.bf16.msra.mxu0 %v7239
  %7277 = vmatprep.subr.bf16.mxu0 0
  %7278 = vmatpush1.bf16.msra.mxu0 %v7240
  %7279 = vmatprep.subr.bf16.mxu0 0
  %7280 = vmatpush1.bf16.msra.mxu0 %v7241
  %7281 = vmatprep.subr.bf16.mxu0 0
  %7282 = vmatpush1.bf16.msra.mxu0 %v7242
  %7283 = vmatprep.subr.bf16.mxu0 0
  %7284 = vmatpush1.bf16.msra.mxu0 %v7243
  %7285 = vmatprep.subr.bf16.mxu0 0
  %7286 = vmatpush1.bf16.msra.mxu0 %v7244
  %7287 = vmatprep.subr.bf16.mxu0 0
  %7288 = vmatpush1.bf16.msra.mxu0 %v7245
  %7289 = vmatprep.subr.bf16.mxu0 0
  %7290 = vmatpush1.bf16.msra.mxu0 %v7246
  %7291 = vmatprep.subr.bf16.mxu0 0
  %7292 = vmatpush1.bf16.msra.mxu0 %v7247
  %7293 = vmatprep.subr.bf16.mxu0 0
  %7294 = vmatpush1.bf16.msra.mxu0 %v7248
  %7295 = vmatprep.subr.bf16.mxu0 0
  %7296 = vmatpush1.bf16.msra.mxu0 %v7249
  %7297 = vmatprep.subr.bf16.mxu0 0
  %7298 = vmatpush1.bf16.msra.mxu0 %v7250
  %7299 = vmatprep.mubr.bf16.mxu0 %v6688
  %7300 = vmatmul.mubr.bf16.gmra.mrb[0].mxu0 %v6687
  %v7301 = vpop.f32.mrb[0].mxu0
  %v7302 = vadd.f32 0.0, %v7301
  %v7303 = vpop.f32.mrb[0].mxu0
  %v7304 = vpop.f32.mrb[0].mxu0
  %v7305 = vadd.f32 0.0, %v7304
  %v7306 = vpop.f32.mrb[0].mxu0
  %7307 = vmatprep.mubr.bf16.mxu0 %v6690
  %7308 = vmatmul.mubr.bf16.gmra.mrb[0].mxu0 %v6689
  %v7309 = vpop.f32.mrb[0].mxu0
  %v7310 = vadd.f32 0.0, %v7309
  %v7311 = vpop.f32.mrb[0].mxu0
  %v7312 = vpop.f32.mrb[0].mxu0
  %v7313 = vadd.f32 0.0, %v7312
  %v7314 = vpop.f32.mrb[0].mxu0
  %7315 = vmatprep.mubr.bf16.mxu0 %v6692
  %7316 = vmatmul.mubr.bf16.gmra.mrb[0].mxu0 %v6691
  %v7317 = vpop.f32.mrb[0].mxu0
  %v7318 = vadd.f32 0.0, %v7317
  %v7319 = vpop.f32.mrb[0].mxu0
  %v7320 = vpop.f32.mrb[0].mxu0
  %v7321 = vadd.f32 0.0, %v7320
  %v7322 = vpop.f32.mrb[0].mxu0
  %7323 = vmatprep.mubr.bf16.mxu0 %v6694
  %7324 = vmatmul.mubr.bf16.gmra.mrb[0].mxu0 %v6693
  %v7325 = vpop.f32.mrb[0].mxu0
  %v7326 = vadd.f32 0.0, %v7325
  %v7327 = vpop.f32.mrb[0].mxu0
  %v7328 = vpop.f32.mrb[0].mxu0
  %v7329 = vadd.f32 0.0, %v7328
  %v7330 = vpop.f32.mrb[0].mxu0
  %7331 = vmatprep.mubr.bf16.mxu0 %v6696
  %7332 = vmatmul.mubr.bf16.gmra.mrb[0].mxu0 %v6695
  %v7333 = vpop.f32.mrb[0].mxu0
  %v7334 = vadd.f32 0.0, %v7333
  %v7335 = vpop.f32.mrb[0].mxu0
  %v7336 = vpop.f32.mrb[0].mxu0
  %v7337 = vadd.f32 0.0, %v7336
  %v7338 = vpop.f32.mrb[0].mxu0
  %7339 = vmatprep.mubr.bf16.mxu0 %v6698
  %7340 = vmatmul.mubr.bf16.gmra.mrb[0].mxu0 %v6697
  %v7341 = vpop.f32.mrb[0].mxu0
  %v7342 = vadd.f32 0.0, %v7341
  %v7343 = vpop.f32.mrb[0].mxu0
  %v7344 = vpop.f32.mrb[0].mxu0
  %v7345 = vadd.f32 0.0, %v7344
  %v7346 = vpop.f32.mrb[0].mxu0
  %7347 = vmatprep.mubr.bf16.mxu0 %v6700
  %7348 = vmatmul.mubr.bf16.gmra.mrb[0].mxu0 %v6699
  %v7349 = vpop.f32.mrb[0].mxu0
  %v7350 = vadd.f32 0.0, %v7349
  %v7351 = vpop.f32.mrb[0].mxu0
  %v7352 = vpop.f32.mrb[0].mxu0
  %v7353 = vadd.f32 0.0, %v7352
  %v7354 = vpop.f32.mrb[0].mxu0
  %7355 = vmatprep.mubr.bf16.mxu0 %v6702
  %7356 = vmatmul.mubr.bf16.gmra.mrb[0].mxu0 %v6701
  %v7357 = vpop.f32.mrb[0].mxu0
  %v7358 = vadd.f32 0.0, %v7357
  %v7359 = vpop.f32.mrb[0].mxu0
  %v7360 = vpop.f32.mrb[0].mxu0
  %v7361 = vadd.f32 0.0, %v7360
  %v7362 = vpop.f32.mrb[0].mxu0
  %7363 = vdwg.mxu0
  %v7364 = vadd.f32 %v7155, %v7302
  %v7365 = vadd.f32 %v7156, %v7305
  %v7366 = vadd.f32 %v7157, %v7310
  %v7367 = vadd.f32 %v7158, %v7313
  %v7368 = vadd.f32 %v7159, %v7318
  %v7369 = vadd.f32 %v7160, %v7321
  %v7370 = vadd.f32 %v7161, %v7326
  %v7371 = vadd.f32 %v7162, %v7329
  %v7372 = vadd.f32 %v7163, %v7334
  %v7373 = vadd.f32 %v7164, %v7337
  %v7374 = vadd.f32 %v7165, %v7342
  %v7375 = vadd.f32 %v7166, %v7345
  %v7376 = vadd.f32 %v7167, %v7350
  %v7377 = vadd.f32 %v7168, %v7353
  %v7378 = vadd.f32 %v7169, %v7358
  %v7379 = vadd.f32 %v7170, %v7361
  %v7380 = vld [vmem:[%s5705] sm:$0xfc]
  %v7381 = vld [vmem:[%s5705 + $0x8] sm:$0xfc]
  %v7382 = vld [vmem:[%s5705 + $0x10] sm:$0x3]
  %v7383 = vld [vmem:[%s5705 + $0x18] sm:$0x3]
  %v7384 = vld [vmem:[%s5705 + $0x20] sm:$0xfc]
  %v7385 = vld [vmem:[%s5705 + $0x28] sm:$0xfc]
  %v7386 = vld [vmem:[%s5705 + $0x30] sm:$0x3]
  %v7387 = vld [vmem:[%s5705 + $0x38] sm:$0x3]
  %v7388 = vld [vmem:[%s5705 + $0x40] sm:$0xfc]
  %v7389 = vld [vmem:[%s5705 + $0x48] sm:$0xfc]
  %v7390 = vld [vmem:[%s5705 + $0x50] sm:$0x3]
  %v7391 = vld [vmem:[%s5705 + $0x58] sm:$0x3]
  %v7392 = vld [vmem:[%s5705 + $0x60] sm:$0xfc]
  %v7393 = vld [vmem:[%s5705 + $0x68] sm:$0xfc]
  %v7394 = vld [vmem:[%s5705 + $0x70] sm:$0x3]
  %v7395 = vld [vmem:[%s5705 + $0x78] sm:$0x3]
  %v7396 = vld [vmem:[%s5705 + $0x80] sm:$0xfc]
  %v7397 = vld [vmem:[%s5705 + $0x88] sm:$0xfc]
  %v7398 = vld [vmem:[%s5705 + $0x90] sm:$0x3]
  %v7399 = vld [vmem:[%s5705 + $0x98] sm:$0x3]
  %v7400 = vld [vmem:[%s5705 + $0xa0] sm:$0xfc]
  %v7401 = vld [vmem:[%s5705 + $0xa8] sm:$0xfc]
  %v7402 = vld [vmem:[%s5705 + $0xb0] sm:$0x3]
  %v7403 = vld [vmem:[%s5705 + $0xb8] sm:$0x3]
  %v7404 = vld [vmem:[%s5705 + $0xc0] sm:$0xfc]
  %v7405 = vld [vmem:[%s5705 + $0xc8] sm:$0xfc]
  %v7406 = vld [vmem:[%s5705 + $0xd0] sm:$0x3]
  %v7407 = vld [vmem:[%s5705 + $0xd8] sm:$0x3]
  %v7408 = vld [vmem:[%s5705 + $0xe0] sm:$0xfc]
  %v7409 = vld [vmem:[%s5705 + $0xe8] sm:$0xfc]
  %v7410 = vld [vmem:[%s5705 + $0xf0] sm:$0x3]
  %v7411 = vld [vmem:[%s5705 + $0xf8] sm:$0x3]
  %v7412 = vld [vmem:[%s5705 + $0x140] sm:$0xfc]
  %v7413 = vld [vmem:[%s5705 + $0x148] sm:$0xfc]
  %v7414 = vld [vmem:[%s5705 + $0x150] sm:$0x3]
  %v7415 = vld [vmem:[%s5705 + $0x158] sm:$0x3]
  %v7416 = vld [vmem:[%s5705 + $0x160] sm:$0xfc]
  %v7417 = vld [vmem:[%s5705 + $0x168] sm:$0xfc]
  %v7418 = vld [vmem:[%s5705 + $0x170] sm:$0x3]
  %v7419 = vld [vmem:[%s5705 + $0x178] sm:$0x3]
  %v7420 = vld [vmem:[%s5705 + $0x180] sm:$0xfc]
  %v7421 = vld [vmem:[%s5705 + $0x188] sm:$0xfc]
  %v7422 = vld [vmem:[%s5705 + $0x190] sm:$0x3]
  %v7423 = vld [vmem:[%s5705 + $0x198] sm:$0x3]
  %v7424 = vld [vmem:[%s5705 + $0x1a0] sm:$0xfc]
  %v7425 = vld [vmem:[%s5705 + $0x1a8] sm:$0xfc]
  %v7426 = vld [vmem:[%s5705 + $0x1b0] sm:$0x3]
  %v7427 = vld [vmem:[%s5705 + $0x1b8] sm:$0x3]
  %v7428 = vld [vmem:[%s5705 + $0x1c0] sm:$0xfc]
  %v7429 = vld [vmem:[%s5705 + $0x1c8] sm:$0xfc]
  %v7430 = vld [vmem:[%s5705 + $0x1d0] sm:$0x3]
  %v7431 = vld [vmem:[%s5705 + $0x1d8] sm:$0x3]
  %v7432 = vld [vmem:[%s5705 + $0x1e0] sm:$0xfc]
  %v7433 = vld [vmem:[%s5705 + $0x1e8] sm:$0xfc]
  %v7434 = vld [vmem:[%s5705 + $0x1f0] sm:$0x3]
  %v7435 = vld [vmem:[%s5705 + $0x1f8] sm:$0x3]
  %v7436 = vld [vmem:[%s5705 + $0x200] sm:$0xfc]
  %v7437 = vld [vmem:[%s5705 + $0x208] sm:$0xfc]
  %v7438 = vld [vmem:[%s5705 + $0x210] sm:$0x3]
  %v7439 = vld [vmem:[%s5705 + $0x218] sm:$0x3]
  %v7440 = vld [vmem:[%s5705 + $0x220] sm:$0xfc]
  %v7441 = vld [vmem:[%s5705 + $0x228] sm:$0xfc]
  %v7442 = vld [vmem:[%s5705 + $0x230] sm:$0x3]
  %v7443 = vld [vmem:[%s5705 + $0x238] sm:$0x3]
  %v7508 = vrot.slane %v7380, 2
  %v7509 = vrot.slane %v7382, 2
  %v7510 = vsel %vm2260, %v7508, %v7509
  %v7511 = vrot.slane %v7381, 2
  %v7512 = vrot.slane %v7383, 2
  %v7513 = vsel %vm2260, %v7511, %v7512
  %v7514 = vrot.slane %v7384, 2
  %v7515 = vrot.slane %v7386, 2
  %v7516 = vsel %vm2260, %v7514, %v7515
  %v7517 = vrot.slane %v7385, 2
  %v7518 = vrot.slane %v7387, 2
  %v7519 = vsel %vm2260, %v7517, %v7518
  %v7520 = vrot.slane %v7388, 2
  %v7521 = vrot.slane %v7390, 2
  %v7522 = vsel %vm2260, %v7520, %v7521
  %v7523 = vrot.slane %v7389, 2
  %v7524 = vrot.slane %v7391, 2
  %v7525 = vsel %vm2260, %v7523, %v7524
  %v7526 = vrot.slane %v7392, 2
  %v7527 = vrot.slane %v7394, 2
  %v7528 = vsel %vm2260, %v7526, %v7527
  %v7529 = vrot.slane %v7393, 2
  %v7530 = vrot.slane %v7395, 2
  %v7531 = vsel %vm2260, %v7529, %v7530
  %v7532 = vrot.slane %v7396, 2
  %v7533 = vrot.slane %v7398, 2
  %v7534 = vsel %vm2260, %v7532, %v7533
  %v7535 = vrot.slane %v7397, 2
  %v7536 = vrot.slane %v7399, 2
  %v7537 = vsel %vm2260, %v7535, %v7536
  %v7538 = vrot.slane %v7400, 2
  %v7539 = vrot.slane %v7402, 2
  %v7540 = vsel %vm2260, %v7538, %v7539
  %v7541 = vrot.slane %v7401, 2
  %v7542 = vrot.slane %v7403, 2
  %v7543 = vsel %vm2260, %v7541, %v7542
  %v7544 = vrot.slane %v7404, 2
  %v7545 = vrot.slane %v7406, 2
  %v7546 = vsel %vm2260, %v7544, %v7545
  %v7547 = vrot.slane %v7405, 2
  %v7548 = vrot.slane %v7407, 2
  %v7549 = vsel %vm2260, %v7547, %v7548
  %v7550 = vrot.slane %v7408, 2
  %v7551 = vrot.slane %v7410, 2
  %v7552 = vsel %vm2260, %v7550, %v7551
  %v7553 = vrot.slane %v7409, 2
  %v7554 = vrot.slane %v7411, 2
  %v7555 = vsel %vm2260, %v7553, %v7554
  %v7556 = vrot.slane %v7412, 2
  %v7557 = vrot.slane %v7414, 2
  %v7558 = vsel %vm2260, %v7556, %v7557
  %v7559 = vrot.slane %v7413, 2
  %v7560 = vrot.slane %v7415, 2
  %v7561 = vsel %vm2260, %v7559, %v7560
  %v7562 = vrot.slane %v7416, 2
  %v7563 = vrot.slane %v7418, 2
  %v7564 = vsel %vm2260, %v7562, %v7563
  %v7565 = vrot.slane %v7417, 2
  %v7566 = vrot.slane %v7419, 2
  %v7567 = vsel %vm2260, %v7565, %v7566
  %v7568 = vrot.slane %v7420, 2
  %v7569 = vrot.slane %v7422, 2
  %v7570 = vsel %vm2260, %v7568, %v7569
  %v7571 = vrot.slane %v7421, 2
  %v7572 = vrot.slane %v7423, 2
  %v7573 = vsel %vm2260, %v7571, %v7572
  %v7574 = vrot.slane %v7424, 2
  %v7575 = vrot.slane %v7426, 2
  %v7576 = vsel %vm2260, %v7574, %v7575
  %v7577 = vrot.slane %v7425, 2
  %v7578 = vrot.slane %v7427, 2
  %v7579 = vsel %vm2260, %v7577, %v7578
  %v7580 = vrot.slane %v7428, 2
  %v7581 = vrot.slane %v7430, 2
  %v7582 = vsel %vm2260, %v7580, %v7581
  %v7583 = vrot.slane %v7429, 2
  %v7584 = vrot.slane %v7431, 2
  %v7585 = vsel %vm2260, %v7583, %v7584
  %v7586 = vrot.slane %v7432, 2
  %v7587 = vrot.slane %v7434, 2
  %v7588 = vsel %vm2260, %v7586, %v7587
  %v7589 = vrot.slane %v7433, 2
  %v7590 = vrot.slane %v7435, 2
  %v7591 = vsel %vm2260, %v7589, %v7590
  %v7592 = vrot.slane %v7436, 2
  %v7593 = vrot.slane %v7438, 2
  %v7594 = vsel %vm2260, %v7592, %v7593
  %v7595 = vrot.slane %v7437, 2
  %v7596 = vrot.slane %v7439, 2
  %v7597 = vsel %vm2260, %v7595, %v7596
  %v7598 = vrot.slane %v7440, 2
  %v7599 = vrot.slane %v7442, 2
  %v7600 = vsel %vm2260, %v7598, %v7599
  %v7601 = vrot.slane %v7441, 2
  %v7602 = vrot.slane %v7443, 2
  %v7603 = vsel %vm2260, %v7601, %v7602
  %v7636 = vpack.c.bf16 %v7516, %v7510
  %v7637 = vpack.c.bf16 %v7519, %v7513
  %v7638 = vpack.c.bf16 %v7528, %v7522
  %v7639 = vpack.c.bf16 %v7531, %v7525
  %v7640 = vpack.c.bf16 %v7540, %v7534
  %v7641 = vpack.c.bf16 %v7543, %v7537
  %v7642 = vpack.c.bf16 %v7552, %v7546
  %v7643 = vpack.c.bf16 %v7555, %v7549
  %v7644 = vpack.c.bf16 %v7564, %v7558
  %v7645 = vpack.c.bf16 %v7567, %v7561
  %v7646 = vpack.c.bf16 %v7576, %v7570
  %v7647 = vpack.c.bf16 %v7579, %v7573
  %v7648 = vpack.c.bf16 %v7588, %v7582
  %v7649 = vpack.c.bf16 %v7591, %v7585
  %v7650 = vpack.c.bf16 %v7600, %v7594
  %v7651 = vpack.c.bf16 %v7603, %v7597
  %v7652 = vunpack.c.l.bf16 %v7636
  %v7653 = vunpack.c.l.bf16 %v7637
  %v7654 = vunpack.c.h.bf16 %v7636
  %v7655 = vunpack.c.h.bf16 %v7637
  %v7656 = vunpack.c.l.bf16 %v7638
  %v7657 = vunpack.c.l.bf16 %v7639
  %v7658 = vunpack.c.h.bf16 %v7638
  %v7659 = vunpack.c.h.bf16 %v7639
  %v7660 = vunpack.c.l.bf16 %v7640
  %v7661 = vunpack.c.l.bf16 %v7641
  %v7662 = vunpack.c.h.bf16 %v7640
  %v7663 = vunpack.c.h.bf16 %v7641
  %v7664 = vunpack.c.l.bf16 %v7642
  %v7665 = vunpack.c.l.bf16 %v7643
  %v7666 = vunpack.c.h.bf16 %v7642
  %v7667 = vunpack.c.h.bf16 %v7643
  %v7668 = vunpack.c.l.bf16 %v7644
  %v7669 = vunpack.c.l.bf16 %v7645
  %v7670 = vunpack.c.h.bf16 %v7644
  %v7671 = vunpack.c.h.bf16 %v7645
  %v7672 = vunpack.c.l.bf16 %v7646
  %v7673 = vunpack.c.l.bf16 %v7647
  %v7674 = vunpack.c.h.bf16 %v7646
  %v7675 = vunpack.c.h.bf16 %v7647
  %v7676 = vunpack.c.l.bf16 %v7648
  %v7677 = vunpack.c.l.bf16 %v7649
  %v7678 = vunpack.c.h.bf16 %v7648
  %v7679 = vunpack.c.h.bf16 %v7649
  %v7680 = vunpack.c.l.bf16 %v7650
  %v7681 = vunpack.c.l.bf16 %v7651
  %v7682 = vunpack.c.h.bf16 %v7650
  %v7683 = vunpack.c.h.bf16 %v7651
  %v7684 = vsub.f32 %v7510, %v7652
  %v7685 = vsub.f32 %v7513, %v7653
  %v7686 = vsub.f32 %v7516, %v7654
  %v7687 = vsub.f32 %v7519, %v7655
  %v7688 = vsub.f32 %v7522, %v7656
  %v7689 = vsub.f32 %v7525, %v7657
  %v7690 = vsub.f32 %v7528, %v7658
  %v7691 = vsub.f32 %v7531, %v7659
  %v7692 = vsub.f32 %v7534, %v7660
  %v7693 = vsub.f32 %v7537, %v7661
  %v7694 = vsub.f32 %v7540, %v7662
  %v7695 = vsub.f32 %v7543, %v7663
  %v7696 = vsub.f32 %v7546, %v7664
  %v7697 = vsub.f32 %v7549, %v7665
  %v7698 = vsub.f32 %v7552, %v7666
  %v7699 = vsub.f32 %v7555, %v7667
  %v7700 = vsub.f32 %v7558, %v7668
  %v7701 = vsub.f32 %v7561, %v7669
  %v7702 = vsub.f32 %v7564, %v7670
  %v7703 = vsub.f32 %v7567, %v7671
  %v7704 = vsub.f32 %v7570, %v7672
  %v7705 = vsub.f32 %v7573, %v7673
  %v7706 = vsub.f32 %v7576, %v7674
  %v7707 = vsub.f32 %v7579, %v7675
  %v7708 = vsub.f32 %v7582, %v7676
  %v7709 = vsub.f32 %v7585, %v7677
  %v7710 = vsub.f32 %v7588, %v7678
  %v7711 = vsub.f32 %v7591, %v7679
  %v7712 = vsub.f32 %v7594, %v7680
  %v7713 = vsub.f32 %v7597, %v7681
  %v7714 = vsub.f32 %v7600, %v7682
  %v7715 = vsub.f32 %v7603, %v7683
  %v7716 = vpack.c.bf16 %v7686, %v7684
  %v7717 = vpack.c.bf16 %v7687, %v7685
  %v7718 = vpack.c.bf16 %v7690, %v7688
  %v7719 = vpack.c.bf16 %v7691, %v7689
  %v7720 = vpack.c.bf16 %v7694, %v7692
  %v7721 = vpack.c.bf16 %v7695, %v7693
  %v7722 = vpack.c.bf16 %v7698, %v7696
  %v7723 = vpack.c.bf16 %v7699, %v7697
  %v7724 = vpack.c.bf16 %v7702, %v7700
  %v7725 = vpack.c.bf16 %v7703, %v7701
  %v7726 = vpack.c.bf16 %v7706, %v7704
  %v7727 = vpack.c.bf16 %v7707, %v7705
  %v7728 = vpack.c.bf16 %v7710, %v7708
  %v7729 = vpack.c.bf16 %v7711, %v7709
  %v7730 = vpack.c.bf16 %v7714, %v7712
  %v7731 = vpack.c.bf16 %v7715, %v7713
  %s7732 = scalar_lea.vmem %s1, 1024
  %v7733 = vld [vmem:[%s7732] sm:$0xf]
  %v7734 = vld [vmem:[%s7732 + $0x4] sm:$0xf]
  %v7735 = vld [vmem:[%s7732 + $0x8] sm:$0xf]
  %v7736 = vld [vmem:[%s7732 + $0xc] sm:$0xf]
  %v7737 = vld [vmem:[%s7732 + $0x10] sm:$0xf]
  %v7738 = vld [vmem:[%s7732 + $0x14] sm:$0xf]
  %v7739 = vld [vmem:[%s7732 + $0x18] sm:$0xf]
  %v7740 = vld [vmem:[%s7732 + $0x1c] sm:$0xf]
  %v7741 = vld [vmem:[%s7732 + $0x20] sm:$0xf]
  %v7742 = vld [vmem:[%s7732 + $0x24] sm:$0xf]
  %v7743 = vld [vmem:[%s7732 + $0x28] sm:$0xf]
  %v7744 = vld [vmem:[%s7732 + $0x2c] sm:$0xf]
  %v7745 = vld [vmem:[%s7732 + $0x30] sm:$0xf]
  %v7746 = vld [vmem:[%s7732 + $0x34] sm:$0xf]
  %v7747 = vld [vmem:[%s7732 + $0x38] sm:$0xf]
  %v7748 = vld [vmem:[%s7732 + $0x3c] sm:$0xf]
  %v7749 = vld [vmem:[%s7732 + $0x40] sm:$0xf]
  %v7750 = vld [vmem:[%s7732 + $0x44] sm:$0xf]
  %v7751 = vld [vmem:[%s7732 + $0x48] sm:$0xf]
  %v7752 = vld [vmem:[%s7732 + $0x4c] sm:$0xf]
  %v7753 = vld [vmem:[%s7732 + $0x50] sm:$0xf]
  %v7754 = vld [vmem:[%s7732 + $0x54] sm:$0xf]
  %v7755 = vld [vmem:[%s7732 + $0x58] sm:$0xf]
  %v7756 = vld [vmem:[%s7732 + $0x5c] sm:$0xf]
  %v7757 = vld [vmem:[%s7732 + $0x60] sm:$0xf]
  %v7758 = vld [vmem:[%s7732 + $0x64] sm:$0xf]
  %v7759 = vld [vmem:[%s7732 + $0x68] sm:$0xf]
  %v7760 = vld [vmem:[%s7732 + $0x6c] sm:$0xf]
  %v7761 = vld [vmem:[%s7732 + $0x70] sm:$0xf]
  %v7762 = vld [vmem:[%s7732 + $0x74] sm:$0xf]
  %v7763 = vld [vmem:[%s7732 + $0x78] sm:$0xf]
  %v7764 = vld [vmem:[%s7732 + $0x7c] sm:$0xf]
  %s7765 = scalar_lea.vmem %s2, 1024
  %v7766 = vld [vmem:[%s7765] sm:$0xf]
  %v7767 = vld [vmem:[%s7765 + $0x4] sm:$0xf]
  %v7768 = vld [vmem:[%s7765 + $0x8] sm:$0xf]
  %v7769 = vld [vmem:[%s7765 + $0xc] sm:$0xf]
  %v7770 = vld [vmem:[%s7765 + $0x10] sm:$0xf]
  %v7771 = vld [vmem:[%s7765 + $0x14] sm:$0xf]
  %v7772 = vld [vmem:[%s7765 + $0x18] sm:$0xf]
  %v7773 = vld [vmem:[%s7765 + $0x1c] sm:$0xf]
  %v7774 = vld [vmem:[%s7765 + $0x20] sm:$0xf]
  %v7775 = vld [vmem:[%s7765 + $0x24] sm:$0xf]
  %v7776 = vld [vmem:[%s7765 + $0x28] sm:$0xf]
  %v7777 = vld [vmem:[%s7765 + $0x2c] sm:$0xf]
  %v7778 = vld [vmem:[%s7765 + $0x30] sm:$0xf]
  %v7779 = vld [vmem:[%s7765 + $0x34] sm:$0xf]
  %v7780 = vld [vmem:[%s7765 + $0x38] sm:$0xf]
  %v7781 = vld [vmem:[%s7765 + $0x3c] sm:$0xf]
  %v7782 = vld [vmem:[%s7765 + $0x40] sm:$0xf]
  %v7783 = vld [vmem:[%s7765 + $0x44] sm:$0xf]
  %v7784 = vld [vmem:[%s7765 + $0x48] sm:$0xf]
  %v7785 = vld [vmem:[%s7765 + $0x4c] sm:$0xf]
  %v7786 = vld [vmem:[%s7765 + $0x50] sm:$0xf]
  %v7787 = vld [vmem:[%s7765 + $0x54] sm:$0xf]
  %v7788 = vld [vmem:[%s7765 + $0x58] sm:$0xf]
  %v7789 = vld [vmem:[%s7765 + $0x5c] sm:$0xf]
  %v7790 = vld [vmem:[%s7765 + $0x60] sm:$0xf]
  %v7791 = vld [vmem:[%s7765 + $0x64] sm:$0xf]
  %v7792 = vld [vmem:[%s7765 + $0x68] sm:$0xf]
  %v7793 = vld [vmem:[%s7765 + $0x6c] sm:$0xf]
  %v7794 = vld [vmem:[%s7765 + $0x70] sm:$0xf]
  %v7795 = vld [vmem:[%s7765 + $0x74] sm:$0xf]
  %v7796 = vld [vmem:[%s7765 + $0x78] sm:$0xf]
  %v7797 = vld [vmem:[%s7765 + $0x7c] sm:$0xf]
  %v7830 = vunpack.c.l.b16 %v7733
  %v7831 = vunpack.c.l.b16 %v7734
  %v7832 = vunpack.c.l.b16 %v7735
  %v7833 = vunpack.c.l.b16 %v7736
  %v7834 = vunpack.c.l.b16 %v7737
  %v7835 = vunpack.c.l.b16 %v7738
  %v7836 = vunpack.c.l.b16 %v7739
  %v7837 = vunpack.c.l.b16 %v7740
  %v7838 = vunpack.c.l.b16 %v7741
  %v7839 = vunpack.c.l.b16 %v7742
  %v7840 = vunpack.c.l.b16 %v7743
  %v7841 = vunpack.c.l.b16 %v7744
  %v7842 = vunpack.c.l.b16 %v7745
  %v7843 = vunpack.c.l.b16 %v7746
  %v7844 = vunpack.c.l.b16 %v7747
  %v7845 = vunpack.c.l.b16 %v7748
  %v7846 = vunpack.c.l.b16 %v7749
  %v7847 = vunpack.c.l.b16 %v7750
  %v7848 = vunpack.c.l.b16 %v7751
  %v7849 = vunpack.c.l.b16 %v7752
  %v7850 = vunpack.c.l.b16 %v7753
  %v7851 = vunpack.c.l.b16 %v7754
  %v7852 = vunpack.c.l.b16 %v7755
  %v7853 = vunpack.c.l.b16 %v7756
  %v7854 = vunpack.c.l.b16 %v7757
  %v7855 = vunpack.c.l.b16 %v7758
  %v7856 = vunpack.c.l.b16 %v7759
  %v7857 = vunpack.c.l.b16 %v7760
  %v7858 = vunpack.c.l.b16 %v7761
  %v7859 = vunpack.c.l.b16 %v7762
  %v7860 = vunpack.c.l.b16 %v7763
  %v7861 = vunpack.c.l.b16 %v7764
  %v7862 = vpack.c.b16 %v7831, %v7830
  %v7863 = vpack.c.b16 %v7833, %v7832
  %v7864 = vpack.c.b16 %v7835, %v7834
  %v7865 = vpack.c.b16 %v7837, %v7836
  %v7866 = vpack.c.b16 %v7839, %v7838
  %v7867 = vpack.c.b16 %v7841, %v7840
  %v7868 = vpack.c.b16 %v7843, %v7842
  %v7869 = vpack.c.b16 %v7845, %v7844
  %v7870 = vpack.c.b16 %v7847, %v7846
  %v7871 = vpack.c.b16 %v7849, %v7848
  %v7872 = vpack.c.b16 %v7851, %v7850
  %v7873 = vpack.c.b16 %v7853, %v7852
  %v7874 = vpack.c.b16 %v7855, %v7854
  %v7875 = vpack.c.b16 %v7857, %v7856
  %v7876 = vpack.c.b16 %v7859, %v7858
  %v7877 = vpack.c.b16 %v7861, %v7860
  %7894 = vmatprep.subr.bf16.mxu0 0
  %7895 = vmatpush1.bf16.msra.mxu0 %v7862
  %7896 = vmatprep.subr.bf16.mxu0 0
  %7897 = vmatpush1.bf16.msra.mxu0 %v7863
  %7898 = vmatprep.subr.bf16.mxu0 0
  %7899 = vmatpush1.bf16.msra.mxu0 %v7864
  %7900 = vmatprep.subr.bf16.mxu0 0
  %7901 = vmatpush1.bf16.msra.mxu0 %v7865
  %7902 = vmatprep.subr.bf16.mxu0 0
  %7903 = vmatpush1.bf16.msra.mxu0 %v7866
  %7904 = vmatprep.subr.bf16.mxu0 0
  %7905 = vmatpush1.bf16.msra.mxu0 %v7867
  %7906 = vmatprep.subr.bf16.mxu0 0
  %7907 = vmatpush1.bf16.msra.mxu0 %v7868
  %7908 = vmatprep.subr.bf16.mxu0 0
  %7909 = vmatpush1.bf16.msra.mxu0 %v7869
  %7910 = vmatprep.subr.bf16.mxu0 0
  %7911 = vmatpush1.bf16.msra.mxu0 %v7870
  %7912 = vmatprep.subr.bf16.mxu0 0
  %7913 = vmatpush1.bf16.msra.mxu0 %v7871
  %7914 = vmatprep.subr.bf16.mxu0 0
  %7915 = vmatpush1.bf16.msra.mxu0 %v7872
  %7916 = vmatprep.subr.bf16.mxu0 0
  %7917 = vmatpush1.bf16.msra.mxu0 %v7873
  %7918 = vmatprep.subr.bf16.mxu0 0
  %7919 = vmatpush1.bf16.msra.mxu0 %v7874
  %7920 = vmatprep.subr.bf16.mxu0 0
  %7921 = vmatpush1.bf16.msra.mxu0 %v7875
  %7922 = vmatprep.subr.bf16.mxu0 0
  %7923 = vmatpush1.bf16.msra.mxu0 %v7876
  %7924 = vmatprep.subr.bf16.mxu0 0
  %7925 = vmatpush1.bf16.msra.mxu0 %v7877
  %7926 = vmatprep.mubr.bf16.mxu0 %v7637
  %7927 = vmatmul.mubr.bf16.gmra.mrb[0].mxu0 %v7636
  %v7928 = vpop.f32.mrb[0].mxu0
  %v7929 = vadd.f32 0.0, %v7928
  %v7930 = vpop.f32.mrb[0].mxu0
  %v7931 = vpop.f32.mrb[0].mxu0
  %v7932 = vadd.f32 0.0, %v7931
  %v7933 = vpop.f32.mrb[0].mxu0
  %7934 = vmatprep.mubr.bf16.mxu0 %v7639
  %7935 = vmatmul.mubr.bf16.gmra.mrb[0].mxu0 %v7638
  %v7936 = vpop.f32.mrb[0].mxu0
  %v7937 = vadd.f32 0.0, %v7936
  %v7938 = vpop.f32.mrb[0].mxu0
  %v7939 = vpop.f32.mrb[0].mxu0
  %v7940 = vadd.f32 0.0, %v7939
  %v7941 = vpop.f32.mrb[0].mxu0
  %7942 = vmatprep.mubr.bf16.mxu0 %v7641
  %7943 = vmatmul.mubr.bf16.gmra.mrb[0].mxu0 %v7640
  %v7944 = vpop.f32.mrb[0].mxu0
  %v7945 = vadd.f32 0.0, %v7944
  %v7946 = vpop.f32.mrb[0].mxu0
  %v7947 = vpop.f32.mrb[0].mxu0
  %v7948 = vadd.f32 0.0, %v7947
  %v7949 = vpop.f32.mrb[0].mxu0
  %7950 = vmatprep.mubr.bf16.mxu0 %v7643
  %7951 = vmatmul.mubr.bf16.gmra.mrb[0].mxu0 %v7642
  %v7952 = vpop.f32.mrb[0].mxu0
  %v7953 = vadd.f32 0.0, %v7952
  %v7954 = vpop.f32.mrb[0].mxu0
  %v7955 = vpop.f32.mrb[0].mxu0
  %v7956 = vadd.f32 0.0, %v7955
  %v7957 = vpop.f32.mrb[0].mxu0
  %7958 = vmatprep.mubr.bf16.mxu0 %v7645
  %7959 = vmatmul.mubr.bf16.gmra.mrb[0].mxu0 %v7644
  %v7960 = vpop.f32.mrb[0].mxu0
  %v7961 = vadd.f32 0.0, %v7960
  %v7962 = vpop.f32.mrb[0].mxu0
  %v7963 = vpop.f32.mrb[0].mxu0
  %v7964 = vadd.f32 0.0, %v7963
  %v7965 = vpop.f32.mrb[0].mxu0
  %7966 = vmatprep.mubr.bf16.mxu0 %v7647
  %7967 = vmatmul.mubr.bf16.gmra.mrb[0].mxu0 %v7646
  %v7968 = vpop.f32.mrb[0].mxu0
  %v7969 = vadd.f32 0.0, %v7968
  %v7970 = vpop.f32.mrb[0].mxu0
  %v7971 = vpop.f32.mrb[0].mxu0
  %v7972 = vadd.f32 0.0, %v7971
  %v7973 = vpop.f32.mrb[0].mxu0
  %7974 = vmatprep.mubr.bf16.mxu0 %v7649
  %7975 = vmatmul.mubr.bf16.gmra.mrb[0].mxu0 %v7648
  %v7976 = vpop.f32.mrb[0].mxu0
  %v7977 = vadd.f32 0.0, %v7976
  %v7978 = vpop.f32.mrb[0].mxu0
  %v7979 = vpop.f32.mrb[0].mxu0
  %v7980 = vadd.f32 0.0, %v7979
  %v7981 = vpop.f32.mrb[0].mxu0
  %7982 = vmatprep.mubr.bf16.mxu0 %v7651
  %7983 = vmatmul.mubr.bf16.gmra.mrb[0].mxu0 %v7650
  %v7984 = vpop.f32.mrb[0].mxu0
  %v7985 = vadd.f32 0.0, %v7984
  %v7986 = vpop.f32.mrb[0].mxu0
  %v7987 = vpop.f32.mrb[0].mxu0
  %v7988 = vadd.f32 0.0, %v7987
  %v7989 = vpop.f32.mrb[0].mxu0
  %7990 = vdwg.mxu0
  %v7991 = vadd.f32 %v7364, %v7929
  %v7992 = vadd.f32 %v7365, %v7932
  %v7993 = vadd.f32 %v7366, %v7937
  %v7994 = vadd.f32 %v7367, %v7940
  %v7995 = vadd.f32 %v7368, %v7945
  %v7996 = vadd.f32 %v7369, %v7948
  %v7997 = vadd.f32 %v7370, %v7953
  %v7998 = vadd.f32 %v7371, %v7956
  %v7999 = vadd.f32 %v7372, %v7961
  %v8000 = vadd.f32 %v7373, %v7964
  %v8001 = vadd.f32 %v7374, %v7969
  %v8002 = vadd.f32 %v7375, %v7972
  %v8003 = vadd.f32 %v7376, %v7977
  %v8004 = vadd.f32 %v7377, %v7980
  %v8005 = vadd.f32 %v7378, %v7985
  %v8006 = vadd.f32 %v7379, %v7988
  %8007 = vmatprep.subr.bf16.mxu0 0
  %8008 = vmatpush1.bf16.msra.mxu0 %v7862
  %8009 = vmatprep.subr.bf16.mxu0 0
  %8010 = vmatpush1.bf16.msra.mxu0 %v7863
  %8011 = vmatprep.subr.bf16.mxu0 0
  %8012 = vmatpush1.bf16.msra.mxu0 %v7864
  %8013 = vmatprep.subr.bf16.mxu0 0
  %8014 = vmatpush1.bf16.msra.mxu0 %v7865
  %8015 = vmatprep.subr.bf16.mxu0 0
  %8016 = vmatpush1.bf16.msra.mxu0 %v7866
  %8017 = vmatprep.subr.bf16.mxu0 0
  %8018 = vmatpush1.bf16.msra.mxu0 %v7867
  %8019 = vmatprep.subr.bf16.mxu0 0
  %8020 = vmatpush1.bf16.msra.mxu0 %v7868
  %8021 = vmatprep.subr.bf16.mxu0 0
  %8022 = vmatpush1.bf16.msra.mxu0 %v7869
  %8023 = vmatprep.subr.bf16.mxu0 0
  %8024 = vmatpush1.bf16.msra.mxu0 %v7870
  %8025 = vmatprep.subr.bf16.mxu0 0
  %8026 = vmatpush1.bf16.msra.mxu0 %v7871
  %8027 = vmatprep.subr.bf16.mxu0 0
  %8028 = vmatpush1.bf16.msra.mxu0 %v7872
  %8029 = vmatprep.subr.bf16.mxu0 0
  %8030 = vmatpush1.bf16.msra.mxu0 %v7873
  %8031 = vmatprep.subr.bf16.mxu0 0
  %8032 = vmatpush1.bf16.msra.mxu0 %v7874
  %8033 = vmatprep.subr.bf16.mxu0 0
  %8034 = vmatpush1.bf16.msra.mxu0 %v7875
  %8035 = vmatprep.subr.bf16.mxu0 0
  %8036 = vmatpush1.bf16.msra.mxu0 %v7876
  %8037 = vmatprep.subr.bf16.mxu0 0
  %8038 = vmatpush1.bf16.msra.mxu0 %v7877
  %8039 = vmatprep.mubr.bf16.mxu0 %v7717
  %8040 = vmatmul.mubr.bf16.gmra.mrb[0].mxu0 %v7716
  %v8041 = vpop.f32.mrb[0].mxu0
  %v8042 = vadd.f32 0.0, %v8041
  %v8043 = vpop.f32.mrb[0].mxu0
  %v8044 = vpop.f32.mrb[0].mxu0
  %v8045 = vadd.f32 0.0, %v8044
  %v8046 = vpop.f32.mrb[0].mxu0
  %8047 = vmatprep.mubr.bf16.mxu0 %v7719
  %8048 = vmatmul.mubr.bf16.gmra.mrb[0].mxu0 %v7718
  %v8049 = vpop.f32.mrb[0].mxu0
  %v8050 = vadd.f32 0.0, %v8049
  %v8051 = vpop.f32.mrb[0].mxu0
  %v8052 = vpop.f32.mrb[0].mxu0
  %v8053 = vadd.f32 0.0, %v8052
  %v8054 = vpop.f32.mrb[0].mxu0
  %8055 = vmatprep.mubr.bf16.mxu0 %v7721
  %8056 = vmatmul.mubr.bf16.gmra.mrb[0].mxu0 %v7720
  %v8057 = vpop.f32.mrb[0].mxu0
  %v8058 = vadd.f32 0.0, %v8057
  %v8059 = vpop.f32.mrb[0].mxu0
  %v8060 = vpop.f32.mrb[0].mxu0
  %v8061 = vadd.f32 0.0, %v8060
  %v8062 = vpop.f32.mrb[0].mxu0
  %8063 = vmatprep.mubr.bf16.mxu0 %v7723
  %8064 = vmatmul.mubr.bf16.gmra.mrb[0].mxu0 %v7722
  %v8065 = vpop.f32.mrb[0].mxu0
  %v8066 = vadd.f32 0.0, %v8065
  %v8067 = vpop.f32.mrb[0].mxu0
  %v8068 = vpop.f32.mrb[0].mxu0
  %v8069 = vadd.f32 0.0, %v8068
  %v8070 = vpop.f32.mrb[0].mxu0
  %8071 = vmatprep.mubr.bf16.mxu0 %v7725
  %8072 = vmatmul.mubr.bf16.gmra.mrb[0].mxu0 %v7724
  %v8073 = vpop.f32.mrb[0].mxu0
  %v8074 = vadd.f32 0.0, %v8073
  %v8075 = vpop.f32.mrb[0].mxu0
  %v8076 = vpop.f32.mrb[0].mxu0
  %v8077 = vadd.f32 0.0, %v8076
  %v8078 = vpop.f32.mrb[0].mxu0
  %8079 = vmatprep.mubr.bf16.mxu0 %v7727
  %8080 = vmatmul.mubr.bf16.gmra.mrb[0].mxu0 %v7726
  %v8081 = vpop.f32.mrb[0].mxu0
  %v8082 = vadd.f32 0.0, %v8081
  %v8083 = vpop.f32.mrb[0].mxu0
  %v8084 = vpop.f32.mrb[0].mxu0
  %v8085 = vadd.f32 0.0, %v8084
  %v8086 = vpop.f32.mrb[0].mxu0
  %8087 = vmatprep.mubr.bf16.mxu0 %v7729
  %8088 = vmatmul.mubr.bf16.gmra.mrb[0].mxu0 %v7728
  %v8089 = vpop.f32.mrb[0].mxu0
  %v8090 = vadd.f32 0.0, %v8089
  %v8091 = vpop.f32.mrb[0].mxu0
  %v8092 = vpop.f32.mrb[0].mxu0
  %v8093 = vadd.f32 0.0, %v8092
  %v8094 = vpop.f32.mrb[0].mxu0
  %8095 = vmatprep.mubr.bf16.mxu0 %v7731
  %8096 = vmatmul.mubr.bf16.gmra.mrb[0].mxu0 %v7730
  %v8097 = vpop.f32.mrb[0].mxu0
  %v8098 = vadd.f32 0.0, %v8097
  %v8099 = vpop.f32.mrb[0].mxu0
  %v8100 = vpop.f32.mrb[0].mxu0
  %v8101 = vadd.f32 0.0, %v8100
  %v8102 = vpop.f32.mrb[0].mxu0
  %8103 = vdwg.mxu0
  %v8104 = vadd.f32 %v7991, %v8042
  %v8105 = vadd.f32 %v7992, %v8045
  %v8106 = vadd.f32 %v7993, %v8050
  %v8107 = vadd.f32 %v7994, %v8053
  %v8108 = vadd.f32 %v7995, %v8058
  %v8109 = vadd.f32 %v7996, %v8061
  %v8110 = vadd.f32 %v7997, %v8066
  %v8111 = vadd.f32 %v7998, %v8069
  %v8112 = vadd.f32 %v7999, %v8074
  %v8113 = vadd.f32 %v8000, %v8077
  %v8114 = vadd.f32 %v8001, %v8082
  %v8115 = vadd.f32 %v8002, %v8085
  %v8116 = vadd.f32 %v8003, %v8090
  %v8117 = vadd.f32 %v8004, %v8093
  %v8118 = vadd.f32 %v8005, %v8098
  %v8119 = vadd.f32 %v8006, %v8101
  %v8152 = vunpack.c.l.b16 %v7766
  %v8153 = vunpack.c.l.b16 %v7767
  %v8154 = vunpack.c.l.b16 %v7768
  %v8155 = vunpack.c.l.b16 %v7769
  %v8156 = vunpack.c.l.b16 %v7770
  %v8157 = vunpack.c.l.b16 %v7771
  %v8158 = vunpack.c.l.b16 %v7772
  %v8159 = vunpack.c.l.b16 %v7773
  %v8160 = vunpack.c.l.b16 %v7774
  %v8161 = vunpack.c.l.b16 %v7775
  %v8162 = vunpack.c.l.b16 %v7776
  %v8163 = vunpack.c.l.b16 %v7777
  %v8164 = vunpack.c.l.b16 %v7778
  %v8165 = vunpack.c.l.b16 %v7779
  %v8166 = vunpack.c.l.b16 %v7780
  %v8167 = vunpack.c.l.b16 %v7781
  %v8168 = vunpack.c.l.b16 %v7782
  %v8169 = vunpack.c.l.b16 %v7783
  %v8170 = vunpack.c.l.b16 %v7784
  %v8171 = vunpack.c.l.b16 %v7785
  %v8172 = vunpack.c.l.b16 %v7786
  %v8173 = vunpack.c.l.b16 %v7787
  %v8174 = vunpack.c.l.b16 %v7788
  %v8175 = vunpack.c.l.b16 %v7789
  %v8176 = vunpack.c.l.b16 %v7790
  %v8177 = vunpack.c.l.b16 %v7791
  %v8178 = vunpack.c.l.b16 %v7792
  %v8179 = vunpack.c.l.b16 %v7793
  %v8180 = vunpack.c.l.b16 %v7794
  %v8181 = vunpack.c.l.b16 %v7795
  %v8182 = vunpack.c.l.b16 %v7796
  %v8183 = vunpack.c.l.b16 %v7797
  %v8184 = vpack.c.b16 %v8153, %v8152
  %v8185 = vpack.c.b16 %v8155, %v8154
  %v8186 = vpack.c.b16 %v8157, %v8156
  %v8187 = vpack.c.b16 %v8159, %v8158
  %v8188 = vpack.c.b16 %v8161, %v8160
  %v8189 = vpack.c.b16 %v8163, %v8162
  %v8190 = vpack.c.b16 %v8165, %v8164
  %v8191 = vpack.c.b16 %v8167, %v8166
  %v8192 = vpack.c.b16 %v8169, %v8168
  %v8193 = vpack.c.b16 %v8171, %v8170
  %v8194 = vpack.c.b16 %v8173, %v8172
  %v8195 = vpack.c.b16 %v8175, %v8174
  %v8196 = vpack.c.b16 %v8177, %v8176
  %v8197 = vpack.c.b16 %v8179, %v8178
  %v8198 = vpack.c.b16 %v8181, %v8180
  %v8199 = vpack.c.b16 %v8183, %v8182
  %8216 = vmatprep.subr.bf16.mxu0 0
  %8217 = vmatpush1.bf16.msra.mxu0 %v8184
  %8218 = vmatprep.subr.bf16.mxu0 0
  %8219 = vmatpush1.bf16.msra.mxu0 %v8185
  %8220 = vmatprep.subr.bf16.mxu0 0
  %8221 = vmatpush1.bf16.msra.mxu0 %v8186
  %8222 = vmatprep.subr.bf16.mxu0 0
  %8223 = vmatpush1.bf16.msra.mxu0 %v8187
  %8224 = vmatprep.subr.bf16.mxu0 0
  %8225 = vmatpush1.bf16.msra.mxu0 %v8188
  %8226 = vmatprep.subr.bf16.mxu0 0
  %8227 = vmatpush1.bf16.msra.mxu0 %v8189
  %8228 = vmatprep.subr.bf16.mxu0 0
  %8229 = vmatpush1.bf16.msra.mxu0 %v8190
  %8230 = vmatprep.subr.bf16.mxu0 0
  %8231 = vmatpush1.bf16.msra.mxu0 %v8191
  %8232 = vmatprep.subr.bf16.mxu0 0
  %8233 = vmatpush1.bf16.msra.mxu0 %v8192
  %8234 = vmatprep.subr.bf16.mxu0 0
  %8235 = vmatpush1.bf16.msra.mxu0 %v8193
  %8236 = vmatprep.subr.bf16.mxu0 0
  %8237 = vmatpush1.bf16.msra.mxu0 %v8194
  %8238 = vmatprep.subr.bf16.mxu0 0
  %8239 = vmatpush1.bf16.msra.mxu0 %v8195
  %8240 = vmatprep.subr.bf16.mxu0 0
  %8241 = vmatpush1.bf16.msra.mxu0 %v8196
  %8242 = vmatprep.subr.bf16.mxu0 0
  %8243 = vmatpush1.bf16.msra.mxu0 %v8197
  %8244 = vmatprep.subr.bf16.mxu0 0
  %8245 = vmatpush1.bf16.msra.mxu0 %v8198
  %8246 = vmatprep.subr.bf16.mxu0 0
  %8247 = vmatpush1.bf16.msra.mxu0 %v8199
  %8248 = vmatprep.mubr.bf16.mxu0 %v7637
  %8249 = vmatmul.mubr.bf16.gmra.mrb[0].mxu0 %v7636
  %v8250 = vpop.f32.mrb[0].mxu0
  %v8251 = vadd.f32 0.0, %v8250
  %v8252 = vpop.f32.mrb[0].mxu0
  %v8253 = vpop.f32.mrb[0].mxu0
  %v8254 = vadd.f32 0.0, %v8253
  %v8255 = vpop.f32.mrb[0].mxu0
  %8256 = vmatprep.mubr.bf16.mxu0 %v7639
  %8257 = vmatmul.mubr.bf16.gmra.mrb[0].mxu0 %v7638
  %v8258 = vpop.f32.mrb[0].mxu0
  %v8259 = vadd.f32 0.0, %v8258
  %v8260 = vpop.f32.mrb[0].mxu0
  %v8261 = vpop.f32.mrb[0].mxu0
  %v8262 = vadd.f32 0.0, %v8261
  %v8263 = vpop.f32.mrb[0].mxu0
  %8264 = vmatprep.mubr.bf16.mxu0 %v7641
  %8265 = vmatmul.mubr.bf16.gmra.mrb[0].mxu0 %v7640
  %v8266 = vpop.f32.mrb[0].mxu0
  %v8267 = vadd.f32 0.0, %v8266
  %v8268 = vpop.f32.mrb[0].mxu0
  %v8269 = vpop.f32.mrb[0].mxu0
  %v8270 = vadd.f32 0.0, %v8269
  %v8271 = vpop.f32.mrb[0].mxu0
  %8272 = vmatprep.mubr.bf16.mxu0 %v7643
  %8273 = vmatmul.mubr.bf16.gmra.mrb[0].mxu0 %v7642
  %v8274 = vpop.f32.mrb[0].mxu0
  %v8275 = vadd.f32 0.0, %v8274
  %v8276 = vpop.f32.mrb[0].mxu0
  %v8277 = vpop.f32.mrb[0].mxu0
  %v8278 = vadd.f32 0.0, %v8277
  %v8279 = vpop.f32.mrb[0].mxu0
  %8280 = vmatprep.mubr.bf16.mxu0 %v7645
  %8281 = vmatmul.mubr.bf16.gmra.mrb[0].mxu0 %v7644
  %v8282 = vpop.f32.mrb[0].mxu0
  %v8283 = vadd.f32 0.0, %v8282
  %v8284 = vpop.f32.mrb[0].mxu0
  %v8285 = vpop.f32.mrb[0].mxu0
  %v8286 = vadd.f32 0.0, %v8285
  %v8287 = vpop.f32.mrb[0].mxu0
  %8288 = vmatprep.mubr.bf16.mxu0 %v7647
  %8289 = vmatmul.mubr.bf16.gmra.mrb[0].mxu0 %v7646
  %v8290 = vpop.f32.mrb[0].mxu0
  %v8291 = vadd.f32 0.0, %v8290
  %v8292 = vpop.f32.mrb[0].mxu0
  %v8293 = vpop.f32.mrb[0].mxu0
  %v8294 = vadd.f32 0.0, %v8293
  %v8295 = vpop.f32.mrb[0].mxu0
  %8296 = vmatprep.mubr.bf16.mxu0 %v7649
  %8297 = vmatmul.mubr.bf16.gmra.mrb[0].mxu0 %v7648
  %v8298 = vpop.f32.mrb[0].mxu0
  %v8299 = vadd.f32 0.0, %v8298
  %v8300 = vpop.f32.mrb[0].mxu0
  %v8301 = vpop.f32.mrb[0].mxu0
  %v8302 = vadd.f32 0.0, %v8301
  %v8303 = vpop.f32.mrb[0].mxu0
  %8304 = vmatprep.mubr.bf16.mxu0 %v7651
  %8305 = vmatmul.mubr.bf16.gmra.mrb[0].mxu0 %v7650
  %v8306 = vpop.f32.mrb[0].mxu0
  %v8307 = vadd.f32 0.0, %v8306
  %v8308 = vpop.f32.mrb[0].mxu0
  %v8309 = vpop.f32.mrb[0].mxu0
  %v8310 = vadd.f32 0.0, %v8309
  %v8311 = vpop.f32.mrb[0].mxu0
  %8312 = vdwg.mxu0
  %v8313 = vadd.f32 %v8104, %v8251
  %v8314 = vadd.f32 %v8105, %v8254
  %v8315 = vadd.f32 %v8106, %v8259
  %v8316 = vadd.f32 %v8107, %v8262
  %v8317 = vadd.f32 %v8108, %v8267
  %v8318 = vadd.f32 %v8109, %v8270
  %v8319 = vadd.f32 %v8110, %v8275
  %v8320 = vadd.f32 %v8111, %v8278
  %v8321 = vadd.f32 %v8112, %v8283
  %v8322 = vadd.f32 %v8113, %v8286
  %v8323 = vadd.f32 %v8114, %v8291
  %v8324 = vadd.f32 %v8115, %v8294
  %v8325 = vadd.f32 %v8116, %v8299
  %v8326 = vadd.f32 %v8117, %v8302
  %v8327 = vadd.f32 %v8118, %v8307
  %v8328 = vadd.f32 %v8119, %v8310
  %v8329 = vld [vmem:[%s3] sm:$0x1]
  %v8331 = vlaneseq
  %v8332 = vshrl.u32 %v8331, 7
  %v8333 = vsub.s32 0, %v8332
  %v8334 = vrot.slane %v8329, %v8333
  %v8336 = vadd.f32 %v8313, %v8334
  %v8337 = vadd.f32 %v8314, %v8334
  %v8338 = vadd.f32 %v8315, %v8334
  %v8339 = vadd.f32 %v8316, %v8334
  %v8340 = vadd.f32 %v8317, %v8334
  %v8341 = vadd.f32 %v8318, %v8334
  %v8342 = vadd.f32 %v8319, %v8334
  %v8343 = vadd.f32 %v8320, %v8334
  %v8344 = vadd.f32 %v8321, %v8334
  %v8345 = vadd.f32 %v8322, %v8334
  %v8346 = vadd.f32 %v8323, %v8334
  %v8347 = vadd.f32 %v8324, %v8334
  %v8348 = vadd.f32 %v8325, %v8334
  %v8349 = vadd.f32 %v8326, %v8334
  %v8350 = vadd.f32 %v8327, %v8334
  %v8351 = vadd.f32 %v8328, %v8334
  %v8352 = vmax.f32 %v8336, 0.0
  %v8353 = vmax.f32 %v8337, 0.0
  %v8354 = vmax.f32 %v8338, 0.0
  %v8355 = vmax.f32 %v8339, 0.0
  %v8356 = vmax.f32 %v8340, 0.0
  %v8357 = vmax.f32 %v8341, 0.0
  %v8358 = vmax.f32 %v8342, 0.0
  %v8359 = vmax.f32 %v8343, 0.0
  %v8360 = vmax.f32 %v8344, 0.0
  %v8361 = vmax.f32 %v8345, 0.0
  %v8362 = vmax.f32 %v8346, 0.0
  %v8363 = vmax.f32 %v8347, 0.0
  %v8364 = vmax.f32 %v8348, 0.0
  %v8365 = vmax.f32 %v8349, 0.0
  %v8366 = vmax.f32 %v8350, 0.0
  %v8367 = vmax.f32 %v8351, 0.0
  %v8368 = vadd.f32 %v8352, %v8353
  %v8369 = vadd.f32 %v8368, %v8354
  %v8370 = vadd.f32 %v8369, %v8355
  %v8371 = vadd.f32 %v8370, %v8356
  %v8372 = vadd.f32 %v8371, %v8357
  %v8373 = vadd.f32 %v8372, %v8358
  %v8374 = vadd.f32 %v8373, %v8359
  %v8375 = vadd.f32 %v8374, %v8360
  %v8376 = vadd.f32 %v8375, %v8361
  %v8377 = vadd.f32 %v8376, %v8362
  %v8378 = vadd.f32 %v8377, %v8363
  %v8379 = vadd.f32 %v8378, %v8364
  %v8380 = vadd.f32 %v8379, %v8365
  %v8381 = vadd.f32 %v8380, %v8366
  %v8382 = vadd.f32 %v8381, %v8367
  %v8383 = vrot.slane %v8382, 4
  %v8384 = vadd.f32 %v8382, %v8383
  %v8385 = vrot.slane %v8384, 2
  %v8386 = vadd.f32 %v8384, %v8385
  %v8387 = vrot.slane %v8386, 1
  %v8388 = vadd.f32 %v8386, %v8387
  %v8389 = vmul.f32 %v8388, 0.0078125
  %v8390 = vsub.f32 %v8352, %v8389
  %v8391 = vsub.f32 %v8353, %v8389
  %v8392 = vsub.f32 %v8354, %v8389
  %v8393 = vsub.f32 %v8355, %v8389
  %v8394 = vsub.f32 %v8356, %v8389
  %v8395 = vsub.f32 %v8357, %v8389
  %v8396 = vsub.f32 %v8358, %v8389
  %v8397 = vsub.f32 %v8359, %v8389
  %v8398 = vsub.f32 %v8360, %v8389
  %v8399 = vsub.f32 %v8361, %v8389
  %v8400 = vsub.f32 %v8362, %v8389
  %v8401 = vsub.f32 %v8363, %v8389
  %v8402 = vsub.f32 %v8364, %v8389
  %v8403 = vsub.f32 %v8365, %v8389
  %v8404 = vsub.f32 %v8366, %v8389
  %v8405 = vsub.f32 %v8367, %v8389
  %v8406 = vmul.f32 %v8390, %v8390
  %v8407 = vmul.f32 %v8391, %v8391
  %v8408 = vmul.f32 %v8392, %v8392
  %v8409 = vmul.f32 %v8393, %v8393
  %v8410 = vmul.f32 %v8394, %v8394
  %v8411 = vmul.f32 %v8395, %v8395
  %v8412 = vmul.f32 %v8396, %v8396
  %v8413 = vmul.f32 %v8397, %v8397
  %v8414 = vmul.f32 %v8398, %v8398
  %v8415 = vmul.f32 %v8399, %v8399
  %v8416 = vmul.f32 %v8400, %v8400
  %v8417 = vmul.f32 %v8401, %v8401
  %v8418 = vmul.f32 %v8402, %v8402
  %v8419 = vmul.f32 %v8403, %v8403
  %v8420 = vmul.f32 %v8404, %v8404
  %v8421 = vmul.f32 %v8405, %v8405
  %v8422 = vadd.f32 %v8406, %v8407
  %v8423 = vadd.f32 %v8422, %v8408
  %v8424 = vadd.f32 %v8423, %v8409
  %v8425 = vadd.f32 %v8424, %v8410
  %v8426 = vadd.f32 %v8425, %v8411
  %v8427 = vadd.f32 %v8426, %v8412
  %v8428 = vadd.f32 %v8427, %v8413
  %v8429 = vadd.f32 %v8428, %v8414
  %v8430 = vadd.f32 %v8429, %v8415
  %v8431 = vadd.f32 %v8430, %v8416
  %v8432 = vadd.f32 %v8431, %v8417
  %v8433 = vadd.f32 %v8432, %v8418
  %v8434 = vadd.f32 %v8433, %v8419
  %v8435 = vadd.f32 %v8434, %v8420
  %v8436 = vadd.f32 %v8435, %v8421
  %v8437 = vrot.slane %v8436, 4
  %v8438 = vadd.f32 %v8436, %v8437
  %v8439 = vrot.slane %v8438, 2
  %v8440 = vadd.f32 %v8438, %v8439
  %v8441 = vrot.slane %v8440, 1
  %v8442 = vadd.f32 %v8440, %v8441
  %v8443 = vmul.f32 %v8442, 0.0078125
  %v8444 = vld [vmem:[%s4] sm:$0x1]
  %v8445 = vadd.f32 %v8443, 1e-05
  %v8446 = vrsqrt.pop %v8445
  %v8447 = vmul.f32 %v8444, %v8446
  %v8449 = vlaneseq
  %v8450 = vshrl.u32 %v8449, 7
  %v8451 = vsub.s32 0, %v8450
  %v8452 = vrot.slane %v8447, %v8451
  %v8454 = vmul.f32 %v8390, %v8452
  %v8455 = vmul.f32 %v8391, %v8452
  %v8456 = vmul.f32 %v8392, %v8452
  %v8457 = vmul.f32 %v8393, %v8452
  %v8458 = vmul.f32 %v8394, %v8452
  %v8459 = vmul.f32 %v8395, %v8452
  %v8460 = vmul.f32 %v8396, %v8452
  %v8461 = vmul.f32 %v8397, %v8452
  %v8462 = vmul.f32 %v8398, %v8452
  %v8463 = vmul.f32 %v8399, %v8452
  %v8464 = vmul.f32 %v8400, %v8452
  %v8465 = vmul.f32 %v8401, %v8452
  %v8466 = vmul.f32 %v8402, %v8452
  %v8467 = vmul.f32 %v8403, %v8452
  %v8468 = vmul.f32 %v8404, %v8452
  %v8469 = vmul.f32 %v8405, %v8452
  %v8470 = vld [vmem:[%s5] sm:$0x1]
  %v8472 = vlaneseq
  %v8473 = vshrl.u32 %v8472, 7
  %v8474 = vsub.s32 0, %v8473
  %v8475 = vrot.slane %v8470, %v8474
  %v8477 = vadd.f32 %v8454, %v8475
  %v8478 = vadd.f32 %v8455, %v8475
  %v8479 = vadd.f32 %v8456, %v8475
  %v8480 = vadd.f32 %v8457, %v8475
  %v8481 = vadd.f32 %v8458, %v8475
  %v8482 = vadd.f32 %v8459, %v8475
  %v8483 = vadd.f32 %v8460, %v8475
  %v8484 = vadd.f32 %v8461, %v8475
  %v8485 = vadd.f32 %v8462, %v8475
  %v8486 = vadd.f32 %v8463, %v8475
  %v8487 = vadd.f32 %v8464, %v8475
  %v8488 = vadd.f32 %v8465, %v8475
  %v8489 = vadd.f32 %v8466, %v8475
  %v8490 = vadd.f32 %v8467, %v8475
  %v8491 = vadd.f32 %v8468, %v8475
  %v8492 = vadd.f32 %v8469, %v8475
  %8493 = vst [vmem:[%s6] sm:$0xff] %v8477
  %8494 = vst [vmem:[%s6 + $0x8] sm:$0xff] %v8478
  %8495 = vst [vmem:[%s6 + $0x10] sm:$0xff] %v8479
  %8496 = vst [vmem:[%s6 + $0x18] sm:$0xff] %v8480
  %8497 = vst [vmem:[%s6 + $0x20] sm:$0xff] %v8481
  %8498 = vst [vmem:[%s6 + $0x28] sm:$0xff] %v8482
  %8499 = vst [vmem:[%s6 + $0x30] sm:$0xff] %v8483
  %8500 = vst [vmem:[%s6 + $0x38] sm:$0xff] %v8484
  %8501 = vst [vmem:[%s6 + $0x40] sm:$0xff] %v8485
  %8502 = vst [vmem:[%s6 + $0x48] sm:$0xff] %v8486
  %8503 = vst [vmem:[%s6 + $0x50] sm:$0xff] %v8487
  %8504 = vst [vmem:[%s6 + $0x58] sm:$0xff] %v8488
  %8505 = vst [vmem:[%s6 + $0x60] sm:$0xff] %v8489
  %8506 = vst [vmem:[%s6 + $0x68] sm:$0xff] %v8490
  %8507 = vst [vmem:[%s6 + $0x70] sm:$0xff] %v8491
  %8508 = vst [vmem:[%s6 + $0x78] sm:$0xff] %v8492
  // Predicated region
  $region26: #{pcba_forward.1} parent=0 // pred_check
    _
  $region27: #{pcba_forward.1} parent=0 // pred_check_branch
    %8510 = sbr.rel (0) target = $region29
  $region28: #{pcba_forward.1} parent=0 // pred_region
    _
  $region29: #{pcba_forward.1} parent=0 // pred_fallthru
    _
  // Predicated region
  $region30: #{pcba_forward.1} parent=0 // pred_check
    _
  $region31: #{pcba_forward.1} parent=0 // pred_check_branch
    %8512 = sbr.rel (0) target = $region33
  $region32: #{pcba_forward.1} parent=0 // pred_region
    _
  $region33: #{pcba_forward.1} parent=0 // pred_fallthru
    _

</llo_original>
